<compile_context>
chip_gen: v7x
topology: tpu7x:2x2x1
jax: 0.10.0
libtpu: 0.0.40
codegen_flags: <defaults>
</compile_context>

<pallas_src>
import functools

import jax
import jax.numpy as jnp
from jax.experimental import pallas as pl
from jax.experimental.pallas import tpu as pltpu


# --------------------------------------------------------------------------
# Pallas kernels
# --------------------------------------------------------------------------
def _matmul_bias_kernel(a_ref, b_ref, bias_ref, o_ref, *, activation):
    """(tm,tk) x (tk,tn) GEMM tile; accumulate in the resident f32 output
    block across the K grid axis; bias (+ optional sigmoid) fused at the
    last K step."""
    k = pl.program_id(2)

    @pl.when(k == 0)
    def _():
        o_ref[...] = jnp.zeros_like(o_ref)

    o_ref[...] += jnp.dot(a_ref[...], b_ref[...],
                          preferred_element_type=jnp.float32)

    @pl.when(k == pl.num_programs(2) - 1)
    def _():
        out = o_ref[...] + bias_ref[...]
        if activation == "sigmoid":
            out = 1.0 / (1.0 + jnp.exp(-out))
        o_ref[...] = out


def _inorm_kernel(x_ref, o_ref, *, relu):
    """InstanceNorm2d (affine=False, eps=1e-5) on a (1, H*W, C) NHWC slab:
    reduce over the H*W rows; channels stay lane-dense (f32 math)."""
    x = x_ref[...]
    mean = jnp.mean(x, axis=1, keepdims=True)
    xc = x - mean
    var = jnp.mean(xc * xc, axis=1, keepdims=True)
    y = xc * jax.lax.rsqrt(var + 1e-5)
    if relu:
        y = jnp.maximum(y, 0.0)
    o_ref[...] = y


def _inorm_add_kernel(x_ref, res_ref, o_ref):
    """InstanceNorm (no ReLU) + residual add, fused (second conv of a
    ResnetBlock)."""
    x = x_ref[...]
    mean = jnp.mean(x, axis=1, keepdims=True)
    xc = x - mean
    var = jnp.mean(xc * xc, axis=1, keepdims=True)
    y = xc * jax.lax.rsqrt(var + 1e-5)
    o_ref[...] = res_ref[...] + y


# --------------------------------------------------------------------------
# Pallas call wrappers
# --------------------------------------------------------------------------
def _round_up(x, m):
    return (x + m - 1) // m * m


def pallas_matmul_bias(a, b, bias, activation=None):
    """a:(M,K) @ b:(K,N) + bias:(N,) -> (M,N) f32.  bf16 MXU inputs,
    f32 accumulation, (M, N, K) tiling with parallel M/N grid axes."""
    M, K = a.shape
    _, N = b.shape
    # Tile sizes: large K tile to cut per-step pipeline overhead, M/N tiles
    # capped so the working set stays small even on v7x's 64 MiB VMEM.
    tm = min(512, _round_up(M, 8))
    tn = min(256, _round_up(N, 128))
    tk = min(512, _round_up(K, 128))
    Mp, Np, Kp = _round_up(M, tm), _round_up(N, tn), _round_up(K, tk)

    a_p = jnp.pad(a, ((0, Mp - M), (0, Kp - K))).astype(jnp.bfloat16)
    b_p = jnp.pad(b, ((0, Kp - K), (0, Np - N))).astype(jnp.bfloat16)
    bias_p = jnp.pad(bias, (0, Np - N)).astype(jnp.float32).reshape(1, Np)

    out = pl.pallas_call(
        functools.partial(_matmul_bias_kernel, activation=activation),
        out_shape=jax.ShapeDtypeStruct((Mp, Np), jnp.float32),
        grid=(Mp // tm, Np // tn, Kp // tk),
        in_specs=[
            pl.BlockSpec((tm, tk), lambda i, j, k: (i, k)),
            pl.BlockSpec((tk, tn), lambda i, j, k: (k, j)),
            pl.BlockSpec((1, tn), lambda i, j, k: (0, j)),
        ],
        out_specs=pl.BlockSpec((tm, tn), lambda i, j, k: (i, j)),
        compiler_params=pltpu.CompilerParams(
            dimension_semantics=("parallel", "parallel", "arbitrary")),
    )(a_p, b_p, bias_p)
    return out[:M, :N]


def instance_norm(x, relu, residual=None):
    """Lane-dense InstanceNorm(+ReLU / +residual add) on NHWC, grid over batch."""
    N, H, W, C = x.shape
    xr = x.reshape(N, H * W, C)
    if residual is None:
        kernel = functools.partial(_inorm_kernel, relu=relu)
        inputs = (xr,)
    else:
        kernel = _inorm_add_kernel
        inputs = (xr, residual.reshape(N, H * W, C))
    spec = pl.BlockSpec((1, H * W, C), lambda n: (n, 0, 0))
    y = pl.pallas_call(
        kernel,
        out_shape=jax.ShapeDtypeStruct((N, H * W, C), jnp.float32),
        grid=(N,),
        in_specs=[spec] * len(inputs),
        out_specs=spec,
        compiler_params=pltpu.CompilerParams(dimension_semantics=("parallel",)),
    )(*inputs)
    return y.reshape(N, H, W, C)


# --------------------------------------------------------------------------
# NN building blocks (JAX glue around the Pallas kernels)
# --------------------------------------------------------------------------
def reflect_pad(x, p):
    return jnp.pad(x, ((0, 0), (p, p), (p, p), (0, 0)), mode="reflect")


def zero_pad(x, p):
    return jnp.pad(x, ((0, 0), (p, p), (p, p), (0, 0)))


def conv2d(x, w, b, stride=1, dilation=1, activation=None):
    """x: NHWC (already padded), w: (Cout, Cin, kh, kw) PyTorch layout."""
    N, H, W, Cin = x.shape
    Cout, _, kh, kw = w.shape
    Ho = (H - dilation * (kh - 1) - 1) // stride + 1
    Wo = (W - dilation * (kw - 1) - 1) // stride + 1
    cols = []
    for i in range(kh):
        for j in range(kw):
            cols.append(
                x[:,
                  i * dilation:i * dilation + stride * (Ho - 1) + 1:stride,
                  j * dilation:j * dilation + stride * (Wo - 1) + 1:stride,
                  :])
    patches = jnp.stack(cols, axis=3)                       # (N,Ho,Wo,kh*kw,Cin)
    A = patches.reshape(N * Ho * Wo, kh * kw * Cin)
    Wm = w.transpose(2, 3, 1, 0).reshape(kh * kw * Cin, Cout)
    if b is None:
        b = jnp.zeros((Cout,), jnp.float32)
    out = pallas_matmul_bias(A, Wm, b, activation=activation)
    return out.reshape(N, Ho, Wo, Cout)


def conv_transpose2d(x, w_t, b):
    """ConvTranspose2d(k=4, stride=2, padding=1) via 4 phase-decomposed
    stride-1 2x2 convolutions.  w_t: (Cin, Cout, 4, 4)."""
    N, H, W, Cin = x.shape
    Cout = w_t.shape[1]
    # For output row 2m+a, the contributing (row-offset, kernel-h) taps are:
    #   a=0 : window offsets [0,1] <- kernel rows [3,1], input padded 1 on top
    #   a=1 : window offsets [0,1] <- kernel rows [2,0], input padded 1 at bottom
    # (identically along width).
    sel = {0: [3, 1], 1: [2, 0]}
    phases = []
    for a in (0, 1):
        xa = jnp.pad(x, ((0, 0), (1, 0) if a == 0 else (0, 1), (0, 0), (0, 0)))
        row = []
        for c in (0, 1):
            xac = jnp.pad(xa, ((0, 0), (0, 0),
                               (1, 0) if c == 0 else (0, 1), (0, 0)))
            w_sub = w_t[:, :, sel[a], :][:, :, :, sel[c]]    # (Cin,Cout,2,2)
            w_conv = jnp.transpose(w_sub, (1, 0, 2, 3))      # (Cout,Cin,2,2)
            row.append(conv2d(xac, w_conv, b))
        phases.append(row)
    # Interleave phases: y[n, 2m+a, 2j+c, :] = phases[a][c][n, m, j, :]
    y = jnp.stack([jnp.stack(phases[0], axis=3),
                   jnp.stack(phases[1], axis=3)], axis=2)    # (N,H,2,W,2,Cout)
    return y.reshape(N, 2 * H, 2 * W, Cout)


# --------------------------------------------------------------------------
# Parameters (deterministic synthetic init)
# --------------------------------------------------------------------------
def _conv_init(key, cout, cin, kh, kw, bias=True):
    k1, k2 = jax.random.split(key)
    w = jax.random.normal(k1, (cout, cin, kh, kw), jnp.float32) * 0.05
    b = (jax.random.normal(k2, (cout,), jnp.float32) * 0.05) if bias else None
    return w, b


def _convT_init(key, cin, cout, kh, kw):
    k1, k2 = jax.random.split(key)
    w = jax.random.normal(k1, (cin, cout, kh, kw), jnp.float32) * 0.05
    b = jax.random.normal(k2, (cout,), jnp.float32) * 0.05
    return w, b


def init_params(key, residual_blocks=8):
    keys = jax.random.split(key, 6 + 2 * residual_blocks)
    p = {}
    p["enc1_w"], p["enc1_b"] = _conv_init(keys[0], 64, 3, 7, 7)
    p["enc2_w"], p["enc2_b"] = _conv_init(keys[1], 128, 64, 4, 4)
    p["enc3_w"], p["enc3_b"] = _conv_init(keys[2], 256, 128, 4, 4)
    blocks = []
    for i in range(residual_blocks):
        w1, _ = _conv_init(keys[3 + 2 * i], 256, 256, 3, 3, bias=False)
        w2, _ = _conv_init(keys[4 + 2 * i], 256, 256, 3, 3, bias=False)
        blocks.append({"w1": w1, "w2": w2})
    p["blocks"] = blocks
    p["dec1_w"], p["dec1_b"] = _convT_init(keys[3 + 2 * residual_blocks], 256, 128, 4, 4)
    p["dec2_w"], p["dec2_b"] = _convT_init(keys[4 + 2 * residual_blocks], 128, 64, 4, 4)
    p["dec3_w"], p["dec3_b"] = _conv_init(keys[5 + 2 * residual_blocks], 1, 64, 7, 7)
    return p


# --------------------------------------------------------------------------
# Forward pass (mirrors EdgeNet.forward)
# --------------------------------------------------------------------------
def edgenet_forward(x_nhwc, params):
    # ---- encoder ----
    x = reflect_pad(x_nhwc, 3)
    x = conv2d(x, params["enc1_w"], params["enc1_b"])
    x = instance_norm(x, relu=True)

    x = conv2d(zero_pad(x, 1), params["enc2_w"], params["enc2_b"], stride=2)
    x = instance_norm(x, relu=True)

    x = conv2d(zero_pad(x, 1), params["enc3_w"], params["enc3_b"], stride=2)
    x = instance_norm(x, relu=True)

    # ---- middle: residual blocks (dilation=2, no conv bias) ----
    for blk in params["blocks"]:
        y = reflect_pad(x, 2)
        y = conv2d(y, blk["w1"], None, dilation=2)
        y = instance_norm(y, relu=True)
        y = reflect_pad(y, 1)
        y = conv2d(y, blk["w2"], None)
        x = instance_norm(y, relu=False, residual=x)     # IN + residual fused

    # ---- decoder ----
    x = conv_transpose2d(x, params["dec1_w"], params["dec1_b"])
    x = instance_norm(x, relu=True)
    x = conv_transpose2d(x, params["dec2_w"], params["dec2_b"])
    x = instance_norm(x, relu=True)
    x = reflect_pad(x, 3)
    x = conv2d(x, params["dec3_w"], params["dec3_b"], activation="sigmoid")
    return x


@jax.jit
def edgenet(x_nchw, params):
    x_nhwc = x_nchw.transpose(0, 2, 3, 1)
    y = edgenet_forward(x_nhwc, params)
    return y.transpose(0, 3, 1, 2)                          # back to NCHW


# --------------------------------------------------------------------------
if __name__ == "__main__":
    key = jax.random.PRNGKey(0)
    x = jax.random.normal(key, (2, 3, 16, 16), jnp.float32)  # NCHW like PyTorch
    params = init_params(jax.random.PRNGKey(1), residual_blocks=8)

    out = edgenet(x, params)
    out = jax.block_until_ready(out)

    assert out.shape == (2, 1, 16, 16), out.shape
    assert bool(jnp.all(jnp.isfinite(out)))
    assert bool(jnp.all((out >= 0.0) & (out <= 1.0)))        # sigmoid range
    print("KERNEL_OK")
</pallas_src>

<mosaic_0001>
module attributes {stable_mosaic.version = 11 : i64} {
  func.func @_inorm_kernel(%arg0: i32, %arg1: memref<1x256x64xf32, #tpu.memory_space<vmem>>, %arg2: memref<1x256x64xf32, #tpu.memory_space<vmem>>) attributes {dimension_semantics = [#tpu.dimension_semantics<parallel>], iteration_bounds = array<i64: 2>, scalar_prefetch = 0 : i64, scratch_operands = 0 : i64, tpu.core_type = #tpu.core_type<tc>, window_params = [{transform_indices = @transform_0, window_bounds = array<i64: 1, 256, 64>}, {transform_indices = @transform_1, window_bounds = array<i64: 1, 256, 64>}]} {
    %c0 = arith.constant 0 : index
    %c0_0 = arith.constant 0 : index
    %c0_1 = arith.constant 0 : index
    %0 = vector.load %arg1[%c0, %c0_0, %c0_1] : memref<1x256x64xf32, #tpu.memory_space<vmem>>, vector<1x256x64xf32>
    %cst = arith.constant dense<0.000000e+00> : vector<1x64xf32>
    %1 = vector.multi_reduction <add>, %0, %cst [1] : vector<1x256x64xf32> to vector<1x64xf32>
    %2 = vector.shape_cast %1 : vector<1x64xf32> to vector<1x1x64xf32>
    %cst_2 = arith.constant 2.560000e+02 : f32
    %3 = vector.broadcast %cst_2 : f32 to vector<1x1x64xf32>
    %4 = arith.divf %2, %3 : vector<1x1x64xf32>
    %5 = vector.broadcast %4 : vector<1x1x64xf32> to vector<1x256x64xf32>
    %6 = arith.subf %0, %5 : vector<1x256x64xf32>
    %7 = arith.mulf %6, %6 : vector<1x256x64xf32>
    %cst_3 = arith.constant dense<0.000000e+00> : vector<1x64xf32>
    %8 = vector.multi_reduction <add>, %7, %cst_3 [1] : vector<1x256x64xf32> to vector<1x64xf32>
    %9 = vector.shape_cast %8 : vector<1x64xf32> to vector<1x1x64xf32>
    %cst_4 = arith.constant 2.560000e+02 : f32
    %10 = vector.broadcast %cst_4 : f32 to vector<1x1x64xf32>
    %11 = arith.divf %9, %10 : vector<1x1x64xf32>
    %cst_5 = arith.constant 9.99999974E-6 : f32
    %12 = vector.broadcast %cst_5 : f32 to vector<1x1x64xf32>
    %13 = arith.addf %11, %12 : vector<1x1x64xf32>
    %14 = math.rsqrt %13 : vector<1x1x64xf32>
    %15 = vector.broadcast %14 : vector<1x1x64xf32> to vector<1x256x64xf32>
    %16 = arith.mulf %6, %15 : vector<1x256x64xf32>
    %cst_6 = arith.constant 0.000000e+00 : f32
    %17 = vector.broadcast %cst_6 : f32 to vector<1x256x64xf32>
    %18 = arith.maximumf %16, %17 : vector<1x256x64xf32>
    %c0_7 = arith.constant 0 : index
    %c0_8 = arith.constant 0 : index
    %c0_9 = arith.constant 0 : index
    %19 = vector.load %arg2[%c0_7, %c0_8, %c0_9] : memref<1x256x64xf32, #tpu.memory_space<vmem>>, vector<1x256x64xf32>
    tpu.vector_store %arg2[%c0_7, %c0_8, %c0_9], %18 {strides = array<i32>} : memref<1x256x64xf32, #tpu.memory_space<vmem>>, vector<1x256x64xf32>,
    return
  }
  func.func @transform_0(%arg0: i32) -> (i32, i32, i32) {
    %c0_i32 = arith.constant 0 : i32
    %c0_i32_0 = arith.constant 0 : i32
    %c0_i32_1 = arith.constant 0 : i32
    return %arg0, %c0_i32, %c0_i32_0 : i32, i32, i32
  }
  func.func @transform_1(%arg0: i32) -> (i32, i32, i32) {
    %c0_i32 = arith.constant 0 : i32
    %c0_i32_0 = arith.constant 0 : i32
    %c0_i32_1 = arith.constant 0 : i32
    return %arg0, %c0_i32, %c0_i32_0 : i32, i32, i32
  }
}

module attributes {stable_mosaic.version = 11 : i64} {
  func.func @_matmul_bias_kernel(%arg0: i32, %arg1: i32, %arg2: i32, %arg3: memref<512x256xbf16, #tpu.memory_space<vmem>>, %arg4: memref<256x128xbf16, #tpu.memory_space<vmem>>, %arg5: memref<1x128xf32, #tpu.memory_space<vmem>>, %arg6: memref<512x128xf32, #tpu.memory_space<vmem>>) attributes {dimension_semantics = [#tpu.dimension_semantics<parallel>, #tpu.dimension_semantics<parallel>, #tpu.dimension_semantics<arbitrary>], iteration_bounds = array<i64: 1, 1, 1>, scalar_prefetch = 0 : i64, scratch_operands = 0 : i64, tpu.core_type = #tpu.core_type<tc>, window_params = [{transform_indices = @transform_0, window_bounds = array<i64: 512, 256>}, {transform_indices = @transform_1, window_bounds = array<i64: 256, 128>}, {transform_indices = @transform_2, window_bounds = array<i64: 1, 128>}, {transform_indices = @transform_3, window_bounds = array<i64: 512, 128>}]} {
    %c0_i32 = arith.constant 0 : i32
    %0 = arith.cmpi eq, %arg2, %c0_i32 : i32
    %1 = arith.extui %0 : i1 to i32
    %c0_i32_0 = arith.constant 0 : i32
    %2 = arith.cmpi ne, %1, %c0_i32_0 : i32
    scf.if %2 {
      %cst_10 = arith.constant 0.000000e+00 : f32
      %12 = vector.broadcast %cst_10 : f32 to vector<512x128xf32>
      %c0_11 = arith.constant 0 : index
      %c0_12 = arith.constant 0 : index
      %13 = vector.load %arg6[%c0_11, %c0_12] : memref<512x128xf32, #tpu.memory_space<vmem>>, vector<512x128xf32>
      tpu.vector_store %arg6[%c0_11, %c0_12], %12 {strides = array<i32>} : memref<512x128xf32, #tpu.memory_space<vmem>>, vector<512x128xf32>,
    } else {
    }
    %c0 = arith.constant 0 : index
    %c0_1 = arith.constant 0 : index
    %3 = vector.load %arg6[%c0, %c0_1] : memref<512x128xf32, #tpu.memory_space<vmem>>, vector<512x128xf32>
    %c0_2 = arith.constant 0 : index
    %c0_3 = arith.constant 0 : index
    %4 = vector.load %arg3[%c0_2, %c0_3] : memref<512x256xbf16, #tpu.memory_space<vmem>>, vector<512x256xbf16>
    %c0_4 = arith.constant 0 : index
    %c0_5 = arith.constant 0 : index
    %5 = vector.load %arg4[%c0_4, %c0_5] : memref<256x128xbf16, #tpu.memory_space<vmem>>, vector<256x128xbf16>
    %cst = arith.constant dense<0.000000e+00> : vector<512x128xf32>
    %6 = tpu.matmul %4, %5, %cst {dimension_numbers = #tpu.dot_dimension_numbers<[1], [0], [0], [1], [0, 0, 1, 1], [], []>} : vector<512x256xbf16>, vector<256x128xbf16>, vector<512x128xf32> -> vector<512x128xf32>
    %7 = arith.addf %3, %6 : vector<512x128xf32>
    %c0_6 = arith.constant 0 : index
    %c0_7 = arith.constant 0 : index
    %8 = vector.load %arg6[%c0_6, %c0_7] : memref<512x128xf32, #tpu.memory_space<vmem>>, vector<512x128xf32>
    tpu.vector_store %arg6[%c0_6, %c0_7], %7 {strides = array<i32>} : memref<512x128xf32, #tpu.memory_space<vmem>>, vector<512x128xf32>,
    %c0_i32_8 = arith.constant 0 : i32
    %9 = arith.cmpi eq, %arg2, %c0_i32_8 : i32
    %10 = arith.extui %9 : i1 to i32
    %c0_i32_9 = arith.constant 0 : i32
    %11 = arith.cmpi ne, %10, %c0_i32_9 : i32
    scf.if %11 {
      %c0_10 = arith.constant 0 : index
      %c0_11 = arith.constant 0 : index
      %12 = vector.load %arg6[%c0_10, %c0_11] : memref<512x128xf32, #tpu.memory_space<vmem>>, vector<512x128xf32>
      %c0_12 = arith.constant 0 : index
      %c0_13 = arith.constant 0 : index
      %13 = vector.load %arg5[%c0_12, %c0_13] : memref<1x128xf32, #tpu.memory_space<vmem>>, vector<1x128xf32>
      %14 = vector.broadcast %13 : vector<1x128xf32> to vector<512x128xf32>
      %15 = arith.addf %12, %14 : vector<512x128xf32>
      %c0_14 = arith.constant 0 : index
      %c0_15 = arith.constant 0 : index
      %16 = vector.load %arg6[%c0_14, %c0_15] : memref<512x128xf32, #tpu.memory_space<vmem>>, vector<512x128xf32>
      tpu.vector_store %arg6[%c0_14, %c0_15], %15 {strides = array<i32>} : memref<512x128xf32, #tpu.memory_space<vmem>>, vector<512x128xf32>,
    } else {
    }
    return
  }
  func.func @transform_0(%arg0: i32, %arg1: i32, %arg2: i32) -> (i32, i32) {
    %c0_i32 = arith.constant 0 : i32
    return %arg0, %arg2 : i32, i32
  }
  func.func @transform_1(%arg0: i32, %arg1: i32, %arg2: i32) -> (i32, i32) {
    %c0_i32 = arith.constant 0 : i32
    return %arg2, %arg1 : i32, i32
  }
  func.func @transform_2(%arg0: i32, %arg1: i32, %arg2: i32) -> (i32, i32) {
    %c0_i32 = arith.constant 0 : i32
    %c0_i32_0 = arith.constant 0 : i32
    return %c0_i32, %arg1 : i32, i32
  }
  func.func @transform_3(%arg0: i32, %arg1: i32, %arg2: i32) -> (i32, i32) {
    %c0_i32 = arith.constant 0 : i32
    return %arg0, %arg1 : i32, i32
  }
}

module attributes {stable_mosaic.version = 11 : i64} {
  func.func @_matmul_bias_kernel(%arg0: i32, %arg1: i32, %arg2: i32, %arg3: memref<128x512xbf16, #tpu.memory_space<vmem>>, %arg4: memref<512x128xbf16, #tpu.memory_space<vmem>>, %arg5: memref<1x128xf32, #tpu.memory_space<vmem>>, %arg6: memref<128x128xf32, #tpu.memory_space<vmem>>) attributes {dimension_semantics = [#tpu.dimension_semantics<parallel>, #tpu.dimension_semantics<parallel>, #tpu.dimension_semantics<arbitrary>], iteration_bounds = array<i64: 1, 1, 2>, scalar_prefetch = 0 : i64, scratch_operands = 0 : i64, tpu.core_type = #tpu.core_type<tc>, window_params = [{transform_indices = @transform_0, window_bounds = array<i64: 128, 512>}, {transform_indices = @transform_1, window_bounds = array<i64: 512, 128>}, {transform_indices = @transform_2, window_bounds = array<i64: 1, 128>}, {transform_indices = @transform_3, window_bounds = array<i64: 128, 128>}]} {
    %c0_i32 = arith.constant 0 : i32
    %0 = arith.cmpi eq, %arg2, %c0_i32 : i32
    %1 = arith.extui %0 : i1 to i32
    %c0_i32_0 = arith.constant 0 : i32
    %2 = arith.cmpi ne, %1, %c0_i32_0 : i32
    scf.if %2 {
      %cst_9 = arith.constant 0.000000e+00 : f32
      %12 = vector.broadcast %cst_9 : f32 to vector<128x128xf32>
      %c0_10 = arith.constant 0 : index
      %c0_11 = arith.constant 0 : index
      %13 = vector.load %arg6[%c0_10, %c0_11] : memref<128x128xf32, #tpu.memory_space<vmem>>, vector<128x128xf32>
      tpu.vector_store %arg6[%c0_10, %c0_11], %12 {strides = array<i32>} : memref<128x128xf32, #tpu.memory_space<vmem>>, vector<128x128xf32>,
    } else {
    }
    %c0 = arith.constant 0 : index
    %c0_1 = arith.constant 0 : index
    %3 = vector.load %arg6[%c0, %c0_1] : memref<128x128xf32, #tpu.memory_space<vmem>>, vector<128x128xf32>
    %c0_2 = arith.constant 0 : index
    %c0_3 = arith.constant 0 : index
    %4 = vector.load %arg3[%c0_2, %c0_3] : memref<128x512xbf16, #tpu.memory_space<vmem>>, vector<128x512xbf16>
    %c0_4 = arith.constant 0 : index
    %c0_5 = arith.constant 0 : index
    %5 = vector.load %arg4[%c0_4, %c0_5] : memref<512x128xbf16, #tpu.memory_space<vmem>>, vector<512x128xbf16>
    %cst = arith.constant dense<0.000000e+00> : vector<128x128xf32>
    %6 = tpu.matmul %4, %5, %cst {dimension_numbers = #tpu.dot_dimension_numbers<[1], [0], [0], [1], [0, 0, 1, 1], [], []>} : vector<128x512xbf16>, vector<512x128xbf16>, vector<128x128xf32> -> vector<128x128xf32>
    %7 = arith.addf %3, %6 : vector<128x128xf32>
    %c0_6 = arith.constant 0 : index
    %c0_7 = arith.constant 0 : index
    %8 = vector.load %arg6[%c0_6, %c0_7] : memref<128x128xf32, #tpu.memory_space<vmem>>, vector<128x128xf32>
    tpu.vector_store %arg6[%c0_6, %c0_7], %7 {strides = array<i32>} : memref<128x128xf32, #tpu.memory_space<vmem>>, vector<128x128xf32>,
    %c1_i32 = arith.constant 1 : i32
    %9 = arith.cmpi eq, %arg2, %c1_i32 : i32
    %10 = arith.extui %9 : i1 to i32
    %c0_i32_8 = arith.constant 0 : i32
    %11 = arith.cmpi ne, %10, %c0_i32_8 : i32
    scf.if %11 {
      %c0_9 = arith.constant 0 : index
      %c0_10 = arith.constant 0 : index
      %12 = vector.load %arg6[%c0_9, %c0_10] : memref<128x128xf32, #tpu.memory_space<vmem>>, vector<128x128xf32>
      %c0_11 = arith.constant 0 : index
      %c0_12 = arith.constant 0 : index
      %13 = vector.load %arg5[%c0_11, %c0_12] : memref<1x128xf32, #tpu.memory_space<vmem>>, vector<1x128xf32>
      %14 = vector.broadcast %13 : vector<1x128xf32> to vector<128x128xf32>
      %15 = arith.addf %12, %14 : vector<128x128xf32>
      %c0_13 = arith.constant 0 : index
      %c0_14 = arith.constant 0 : index
      %16 = vector.load %arg6[%c0_13, %c0_14] : memref<128x128xf32, #tpu.memory_space<vmem>>, vector<128x128xf32>
      tpu.vector_store %arg6[%c0_13, %c0_14], %15 {strides = array<i32>} : memref<128x128xf32, #tpu.memory_space<vmem>>, vector<128x128xf32>,
    } else {
    }
    return
  }
  func.func @transform_0(%arg0: i32, %arg1: i32, %arg2: i32) -> (i32, i32) {
    %c0_i32 = arith.constant 0 : i32
    return %arg0, %arg2 : i32, i32
  }
  func.func @transform_1(%arg0: i32, %arg1: i32, %arg2: i32) -> (i32, i32) {
    %c0_i32 = arith.constant 0 : i32
    return %arg2, %arg1 : i32, i32
  }
  func.func @transform_2(%arg0: i32, %arg1: i32, %arg2: i32) -> (i32, i32) {
    %c0_i32 = arith.constant 0 : i32
    %c0_i32_0 = arith.constant 0 : i32
    return %c0_i32, %arg1 : i32, i32
  }
  func.func @transform_3(%arg0: i32, %arg1: i32, %arg2: i32) -> (i32, i32) {
    %c0_i32 = arith.constant 0 : i32
    return %arg0, %arg1 : i32, i32
  }
}

module attributes {stable_mosaic.version = 11 : i64} {
  func.func @_inorm_kernel(%arg0: i32, %arg1: memref<1x64x128xf32, #tpu.memory_space<vmem>>, %arg2: memref<1x64x128xf32, #tpu.memory_space<vmem>>) attributes {dimension_semantics = [#tpu.dimension_semantics<parallel>], iteration_bounds = array<i64: 2>, scalar_prefetch = 0 : i64, scratch_operands = 0 : i64, tpu.core_type = #tpu.core_type<tc>, window_params = [{transform_indices = @transform_0, window_bounds = array<i64: 1, 64, 128>}, {transform_indices = @transform_1, window_bounds = array<i64: 1, 64, 128>}]} {
    %c0 = arith.constant 0 : index
    %c0_0 = arith.constant 0 : index
    %c0_1 = arith.constant 0 : index
    %0 = vector.load %arg1[%c0, %c0_0, %c0_1] : memref<1x64x128xf32, #tpu.memory_space<vmem>>, vector<1x64x128xf32>
    %cst = arith.constant dense<0.000000e+00> : vector<1x128xf32>
    %1 = vector.multi_reduction <add>, %0, %cst [1] : vector<1x64x128xf32> to vector<1x128xf32>
    %2 = vector.shape_cast %1 : vector<1x128xf32> to vector<1x1x128xf32>
    %cst_2 = arith.constant 6.400000e+01 : f32
    %3 = vector.broadcast %cst_2 : f32 to vector<1x1x128xf32>
    %4 = arith.divf %2, %3 : vector<1x1x128xf32>
    %5 = vector.broadcast %4 : vector<1x1x128xf32> to vector<1x64x128xf32>
    %6 = arith.subf %0, %5 : vector<1x64x128xf32>
    %7 = arith.mulf %6, %6 : vector<1x64x128xf32>
    %cst_3 = arith.constant dense<0.000000e+00> : vector<1x128xf32>
    %8 = vector.multi_reduction <add>, %7, %cst_3 [1] : vector<1x64x128xf32> to vector<1x128xf32>
    %9 = vector.shape_cast %8 : vector<1x128xf32> to vector<1x1x128xf32>
    %cst_4 = arith.constant 6.400000e+01 : f32
    %10 = vector.broadcast %cst_4 : f32 to vector<1x1x128xf32>
    %11 = arith.divf %9, %10 : vector<1x1x128xf32>
    %cst_5 = arith.constant 9.99999974E-6 : f32
    %12 = vector.broadcast %cst_5 : f32 to vector<1x1x128xf32>
    %13 = arith.addf %11, %12 : vector<1x1x128xf32>
    %14 = math.rsqrt %13 : vector<1x1x128xf32>
    %15 = vector.broadcast %14 : vector<1x1x128xf32> to vector<1x64x128xf32>
    %16 = arith.mulf %6, %15 : vector<1x64x128xf32>
    %cst_6 = arith.constant 0.000000e+00 : f32
    %17 = vector.broadcast %cst_6 : f32 to vector<1x64x128xf32>
    %18 = arith.maximumf %16, %17 : vector<1x64x128xf32>
    %c0_7 = arith.constant 0 : index
    %c0_8 = arith.constant 0 : index
    %c0_9 = arith.constant 0 : index
    %19 = vector.load %arg2[%c0_7, %c0_8, %c0_9] : memref<1x64x128xf32, #tpu.memory_space<vmem>>, vector<1x64x128xf32>
    tpu.vector_store %arg2[%c0_7, %c0_8, %c0_9], %18 {strides = array<i32>} : memref<1x64x128xf32, #tpu.memory_space<vmem>>, vector<1x64x128xf32>,
    return
  }
  func.func @transform_0(%arg0: i32) -> (i32, i32, i32) {
    %c0_i32 = arith.constant 0 : i32
    %c0_i32_0 = arith.constant 0 : i32
    %c0_i32_1 = arith.constant 0 : i32
    return %arg0, %c0_i32, %c0_i32_0 : i32, i32, i32
  }
  func.func @transform_1(%arg0: i32) -> (i32, i32, i32) {
    %c0_i32 = arith.constant 0 : i32
    %c0_i32_0 = arith.constant 0 : i32
    %c0_i32_1 = arith.constant 0 : i32
    return %arg0, %c0_i32, %c0_i32_0 : i32, i32, i32
  }
}

module attributes {stable_mosaic.version = 11 : i64} {
  func.func @_matmul_bias_kernel(%arg0: i32, %arg1: i32, %arg2: i32, %arg3: memref<32x512xbf16, #tpu.memory_space<vmem>>, %arg4: memref<512x256xbf16, #tpu.memory_space<vmem>>, %arg5: memref<1x256xf32, #tpu.memory_space<vmem>>, %arg6: memref<32x256xf32, #tpu.memory_space<vmem>>) attributes {dimension_semantics = [#tpu.dimension_semantics<parallel>, #tpu.dimension_semantics<parallel>, #tpu.dimension_semantics<arbitrary>], iteration_bounds = array<i64: 1, 1, 4>, scalar_prefetch = 0 : i64, scratch_operands = 0 : i64, tpu.core_type = #tpu.core_type<tc>, window_params = [{transform_indices = @transform_0, window_bounds = array<i64: 32, 512>}, {transform_indices = @transform_1, window_bounds = array<i64: 512, 256>}, {transform_indices = @transform_2, window_bounds = array<i64: 1, 256>}, {transform_indices = @transform_3, window_bounds = array<i64: 32, 256>}]} {
    %c0_i32 = arith.constant 0 : i32
    %0 = arith.cmpi eq, %arg2, %c0_i32 : i32
    %1 = arith.extui %0 : i1 to i32
    %c0_i32_0 = arith.constant 0 : i32
    %2 = arith.cmpi ne, %1, %c0_i32_0 : i32
    scf.if %2 {
      %cst_9 = arith.constant 0.000000e+00 : f32
      %12 = vector.broadcast %cst_9 : f32 to vector<32x256xf32>
      %c0_10 = arith.constant 0 : index
      %c0_11 = arith.constant 0 : index
      %13 = vector.load %arg6[%c0_10, %c0_11] : memref<32x256xf32, #tpu.memory_space<vmem>>, vector<32x256xf32>
      tpu.vector_store %arg6[%c0_10, %c0_11], %12 {strides = array<i32>} : memref<32x256xf32, #tpu.memory_space<vmem>>, vector<32x256xf32>,
    } else {
    }
    %c0 = arith.constant 0 : index
    %c0_1 = arith.constant 0 : index
    %3 = vector.load %arg6[%c0, %c0_1] : memref<32x256xf32, #tpu.memory_space<vmem>>, vector<32x256xf32>
    %c0_2 = arith.constant 0 : index
    %c0_3 = arith.constant 0 : index
    %4 = vector.load %arg3[%c0_2, %c0_3] : memref<32x512xbf16, #tpu.memory_space<vmem>>, vector<32x512xbf16>
    %c0_4 = arith.constant 0 : index
    %c0_5 = arith.constant 0 : index
    %5 = vector.load %arg4[%c0_4, %c0_5] : memref<512x256xbf16, #tpu.memory_space<vmem>>, vector<512x256xbf16>
    %cst = arith.constant dense<0.000000e+00> : vector<32x256xf32>
    %6 = tpu.matmul %4, %5, %cst {dimension_numbers = #tpu.dot_dimension_numbers<[1], [0], [0], [1], [0, 0, 1, 1], [], []>} : vector<32x512xbf16>, vector<512x256xbf16>, vector<32x256xf32> -> vector<32x256xf32>
    %7 = arith.addf %3, %6 : vector<32x256xf32>
    %c0_6 = arith.constant 0 : index
    %c0_7 = arith.constant 0 : index
    %8 = vector.load %arg6[%c0_6, %c0_7] : memref<32x256xf32, #tpu.memory_space<vmem>>, vector<32x256xf32>
    tpu.vector_store %arg6[%c0_6, %c0_7], %7 {strides = array<i32>} : memref<32x256xf32, #tpu.memory_space<vmem>>, vector<32x256xf32>,
    %c3_i32 = arith.constant 3 : i32
    %9 = arith.cmpi eq, %arg2, %c3_i32 : i32
    %10 = arith.extui %9 : i1 to i32
    %c0_i32_8 = arith.constant 0 : i32
    %11 = arith.cmpi ne, %10, %c0_i32_8 : i32
    scf.if %11 {
      %c0_9 = arith.constant 0 : index
      %c0_10 = arith.constant 0 : index
      %12 = vector.load %arg6[%c0_9, %c0_10] : memref<32x256xf32, #tpu.memory_space<vmem>>, vector<32x256xf32>
      %c0_11 = arith.constant 0 : index
      %c0_12 = arith.constant 0 : index
      %13 = vector.load %arg5[%c0_11, %c0_12] : memref<1x256xf32, #tpu.memory_space<vmem>>, vector<1x256xf32>
      %14 = vector.broadcast %13 : vector<1x256xf32> to vector<32x256xf32>
      %15 = arith.addf %12, %14 : vector<32x256xf32>
      %c0_13 = arith.constant 0 : index
      %c0_14 = arith.constant 0 : index
      %16 = vector.load %arg6[%c0_13, %c0_14] : memref<32x256xf32, #tpu.memory_space<vmem>>, vector<32x256xf32>
      tpu.vector_store %arg6[%c0_13, %c0_14], %15 {strides = array<i32>} : memref<32x256xf32, #tpu.memory_space<vmem>>, vector<32x256xf32>,
    } else {
    }
    return
  }
  func.func @transform_0(%arg0: i32, %arg1: i32, %arg2: i32) -> (i32, i32) {
    %c0_i32 = arith.constant 0 : i32
    return %arg0, %arg2 : i32, i32
  }
  func.func @transform_1(%arg0: i32, %arg1: i32, %arg2: i32) -> (i32, i32) {
    %c0_i32 = arith.constant 0 : i32
    return %arg2, %arg1 : i32, i32
  }
  func.func @transform_2(%arg0: i32, %arg1: i32, %arg2: i32) -> (i32, i32) {
    %c0_i32 = arith.constant 0 : i32
    %c0_i32_0 = arith.constant 0 : i32
    return %c0_i32, %arg1 : i32, i32
  }
  func.func @transform_3(%arg0: i32, %arg1: i32, %arg2: i32) -> (i32, i32) {
    %c0_i32 = arith.constant 0 : i32
    return %arg0, %arg1 : i32, i32
  }
}

module attributes {stable_mosaic.version = 11 : i64} {
  func.func @_inorm_kernel(%arg0: i32, %arg1: memref<1x16x256xf32, #tpu.memory_space<vmem>>, %arg2: memref<1x16x256xf32, #tpu.memory_space<vmem>>) attributes {dimension_semantics = [#tpu.dimension_semantics<parallel>], iteration_bounds = array<i64: 2>, scalar_prefetch = 0 : i64, scratch_operands = 0 : i64, tpu.core_type = #tpu.core_type<tc>, window_params = [{transform_indices = @transform_0, window_bounds = array<i64: 1, 16, 256>}, {transform_indices = @transform_1, window_bounds = array<i64: 1, 16, 256>}]} {
    %c0 = arith.constant 0 : index
    %c0_0 = arith.constant 0 : index
    %c0_1 = arith.constant 0 : index
    %0 = vector.load %arg1[%c0, %c0_0, %c0_1] : memref<1x16x256xf32, #tpu.memory_space<vmem>>, vector<1x16x256xf32>
    %cst = arith.constant dense<0.000000e+00> : vector<1x256xf32>
    %1 = vector.multi_reduction <add>, %0, %cst [1] : vector<1x16x256xf32> to vector<1x256xf32>
    %2 = vector.shape_cast %1 : vector<1x256xf32> to vector<1x1x256xf32>
    %cst_2 = arith.constant 1.600000e+01 : f32
    %3 = vector.broadcast %cst_2 : f32 to vector<1x1x256xf32>
    %4 = arith.divf %2, %3 : vector<1x1x256xf32>
    %5 = vector.broadcast %4 : vector<1x1x256xf32> to vector<1x16x256xf32>
    %6 = arith.subf %0, %5 : vector<1x16x256xf32>
    %7 = arith.mulf %6, %6 : vector<1x16x256xf32>
    %cst_3 = arith.constant dense<0.000000e+00> : vector<1x256xf32>
    %8 = vector.multi_reduction <add>, %7, %cst_3 [1] : vector<1x16x256xf32> to vector<1x256xf32>
    %9 = vector.shape_cast %8 : vector<1x256xf32> to vector<1x1x256xf32>
    %cst_4 = arith.constant 1.600000e+01 : f32
    %10 = vector.broadcast %cst_4 : f32 to vector<1x1x256xf32>
    %11 = arith.divf %9, %10 : vector<1x1x256xf32>
    %cst_5 = arith.constant 9.99999974E-6 : f32
    %12 = vector.broadcast %cst_5 : f32 to vector<1x1x256xf32>
    %13 = arith.addf %11, %12 : vector<1x1x256xf32>
    %14 = math.rsqrt %13 : vector<1x1x256xf32>
    %15 = vector.broadcast %14 : vector<1x1x256xf32> to vector<1x16x256xf32>
    %16 = arith.mulf %6, %15 : vector<1x16x256xf32>
    %cst_6 = arith.constant 0.000000e+00 : f32
    %17 = vector.broadcast %cst_6 : f32 to vector<1x16x256xf32>
    %18 = arith.maximumf %16, %17 : vector<1x16x256xf32>
    %c0_7 = arith.constant 0 : index
    %c0_8 = arith.constant 0 : index
    %c0_9 = arith.constant 0 : index
    %19 = vector.load %arg2[%c0_7, %c0_8, %c0_9] : memref<1x16x256xf32, #tpu.memory_space<vmem>>, vector<1x16x256xf32>
    tpu.vector_store %arg2[%c0_7, %c0_8, %c0_9], %18 {strides = array<i32>} : memref<1x16x256xf32, #tpu.memory_space<vmem>>, vector<1x16x256xf32>,
    return
  }
  func.func @transform_0(%arg0: i32) -> (i32, i32, i32) {
    %c0_i32 = arith.constant 0 : i32
    %c0_i32_0 = arith.constant 0 : i32
    %c0_i32_1 = arith.constant 0 : i32
    return %arg0, %c0_i32, %c0_i32_0 : i32, i32, i32
  }
  func.func @transform_1(%arg0: i32) -> (i32, i32, i32) {
    %c0_i32 = arith.constant 0 : i32
    %c0_i32_0 = arith.constant 0 : i32
    %c0_i32_1 = arith.constant 0 : i32
    return %arg0, %c0_i32, %c0_i32_0 : i32, i32, i32
  }
}

module attributes {stable_mosaic.version = 11 : i64} {
  func.func @_matmul_bias_kernel(%arg0: i32, %arg1: i32, %arg2: i32, %arg3: memref<32x512xbf16, #tpu.memory_space<vmem>>, %arg4: memref<512x256xbf16, #tpu.memory_space<vmem>>, %arg5: memref<1x256xf32, #tpu.memory_space<vmem>>, %arg6: memref<32x256xf32, #tpu.memory_space<vmem>>) attributes {dimension_semantics = [#tpu.dimension_semantics<parallel>, #tpu.dimension_semantics<parallel>, #tpu.dimension_semantics<arbitrary>], iteration_bounds = array<i64: 1, 1, 5>, scalar_prefetch = 0 : i64, scratch_operands = 0 : i64, tpu.core_type = #tpu.core_type<tc>, window_params = [{transform_indices = @transform_0, window_bounds = array<i64: 32, 512>}, {transform_indices = @transform_1, window_bounds = array<i64: 512, 256>}, {transform_indices = @transform_2, window_bounds = array<i64: 1, 256>}, {transform_indices = @transform_3, window_bounds = array<i64: 32, 256>}]} {
    %c0_i32 = arith.constant 0 : i32
    %0 = arith.cmpi eq, %arg2, %c0_i32 : i32
    %1 = arith.extui %0 : i1 to i32
    %c0_i32_0 = arith.constant 0 : i32
    %2 = arith.cmpi ne, %1, %c0_i32_0 : i32
    scf.if %2 {
      %cst_9 = arith.constant 0.000000e+00 : f32
      %12 = vector.broadcast %cst_9 : f32 to vector<32x256xf32>
      %c0_10 = arith.constant 0 : index
      %c0_11 = arith.constant 0 : index
      %13 = vector.load %arg6[%c0_10, %c0_11] : memref<32x256xf32, #tpu.memory_space<vmem>>, vector<32x256xf32>
      tpu.vector_store %arg6[%c0_10, %c0_11], %12 {strides = array<i32>} : memref<32x256xf32, #tpu.memory_space<vmem>>, vector<32x256xf32>,
    } else {
    }
    %c0 = arith.constant 0 : index
    %c0_1 = arith.constant 0 : index
    %3 = vector.load %arg6[%c0, %c0_1] : memref<32x256xf32, #tpu.memory_space<vmem>>, vector<32x256xf32>
    %c0_2 = arith.constant 0 : index
    %c0_3 = arith.constant 0 : index
    %4 = vector.load %arg3[%c0_2, %c0_3] : memref<32x512xbf16, #tpu.memory_space<vmem>>, vector<32x512xbf16>
    %c0_4 = arith.constant 0 : index
    %c0_5 = arith.constant 0 : index
    %5 = vector.load %arg4[%c0_4, %c0_5] : memref<512x256xbf16, #tpu.memory_space<vmem>>, vector<512x256xbf16>
    %cst = arith.constant dense<0.000000e+00> : vector<32x256xf32>
    %6 = tpu.matmul %4, %5, %cst {dimension_numbers = #tpu.dot_dimension_numbers<[1], [0], [0], [1], [0, 0, 1, 1], [], []>} : vector<32x512xbf16>, vector<512x256xbf16>, vector<32x256xf32> -> vector<32x256xf32>
    %7 = arith.addf %3, %6 : vector<32x256xf32>
    %c0_6 = arith.constant 0 : index
    %c0_7 = arith.constant 0 : index
    %8 = vector.load %arg6[%c0_6, %c0_7] : memref<32x256xf32, #tpu.memory_space<vmem>>, vector<32x256xf32>
    tpu.vector_store %arg6[%c0_6, %c0_7], %7 {strides = array<i32>} : memref<32x256xf32, #tpu.memory_space<vmem>>, vector<32x256xf32>,
    %c4_i32 = arith.constant 4 : i32
    %9 = arith.cmpi eq, %arg2, %c4_i32 : i32
    %10 = arith.extui %9 : i1 to i32
    %c0_i32_8 = arith.constant 0 : i32
    %11 = arith.cmpi ne, %10, %c0_i32_8 : i32
    scf.if %11 {
      %c0_9 = arith.constant 0 : index
      %c0_10 = arith.constant 0 : index
      %12 = vector.load %arg6[%c0_9, %c0_10] : memref<32x256xf32, #tpu.memory_space<vmem>>, vector<32x256xf32>
      %c0_11 = arith.constant 0 : index
      %c0_12 = arith.constant 0 : index
      %13 = vector.load %arg5[%c0_11, %c0_12] : memref<1x256xf32, #tpu.memory_space<vmem>>, vector<1x256xf32>
      %14 = vector.broadcast %13 : vector<1x256xf32> to vector<32x256xf32>
      %15 = arith.addf %12, %14 : vector<32x256xf32>
      %c0_13 = arith.constant 0 : index
      %c0_14 = arith.constant 0 : index
      %16 = vector.load %arg6[%c0_13, %c0_14] : memref<32x256xf32, #tpu.memory_space<vmem>>, vector<32x256xf32>
      tpu.vector_store %arg6[%c0_13, %c0_14], %15 {strides = array<i32>} : memref<32x256xf32, #tpu.memory_space<vmem>>, vector<32x256xf32>,
    } else {
    }
    return
  }
  func.func @transform_0(%arg0: i32, %arg1: i32, %arg2: i32) -> (i32, i32) {
    %c0_i32 = arith.constant 0 : i32
    return %arg0, %arg2 : i32, i32
  }
  func.func @transform_1(%arg0: i32, %arg1: i32, %arg2: i32) -> (i32, i32) {
    %c0_i32 = arith.constant 0 : i32
    return %arg2, %arg1 : i32, i32
  }
  func.func @transform_2(%arg0: i32, %arg1: i32, %arg2: i32) -> (i32, i32) {
    %c0_i32 = arith.constant 0 : i32
    %c0_i32_0 = arith.constant 0 : i32
    return %c0_i32, %arg1 : i32, i32
  }
  func.func @transform_3(%arg0: i32, %arg1: i32, %arg2: i32) -> (i32, i32) {
    %c0_i32 = arith.constant 0 : i32
    return %arg0, %arg1 : i32, i32
  }
}

module attributes {stable_mosaic.version = 11 : i64} {
  func.func @_inorm_add_kernel(%arg0: i32, %arg1: memref<1x16x256xf32, #tpu.memory_space<vmem>>, %arg2: memref<1x16x256xf32, #tpu.memory_space<vmem>>, %arg3: memref<1x16x256xf32, #tpu.memory_space<vmem>>) attributes {dimension_semantics = [#tpu.dimension_semantics<parallel>], iteration_bounds = array<i64: 2>, scalar_prefetch = 0 : i64, scratch_operands = 0 : i64, tpu.core_type = #tpu.core_type<tc>, window_params = [{transform_indices = @transform_0, window_bounds = array<i64: 1, 16, 256>}, {transform_indices = @transform_1, window_bounds = array<i64: 1, 16, 256>}, {transform_indices = @transform_2, window_bounds = array<i64: 1, 16, 256>}]} {
    %c0 = arith.constant 0 : index
    %c0_0 = arith.constant 0 : index
    %c0_1 = arith.constant 0 : index
    %0 = vector.load %arg1[%c0, %c0_0, %c0_1] : memref<1x16x256xf32, #tpu.memory_space<vmem>>, vector<1x16x256xf32>
    %cst = arith.constant dense<0.000000e+00> : vector<1x256xf32>
    %1 = vector.multi_reduction <add>, %0, %cst [1] : vector<1x16x256xf32> to vector<1x256xf32>
    %2 = vector.shape_cast %1 : vector<1x256xf32> to vector<1x1x256xf32>
    %cst_2 = arith.constant 1.600000e+01 : f32
    %3 = vector.broadcast %cst_2 : f32 to vector<1x1x256xf32>
    %4 = arith.divf %2, %3 : vector<1x1x256xf32>
    %5 = vector.broadcast %4 : vector<1x1x256xf32> to vector<1x16x256xf32>
    %6 = arith.subf %0, %5 : vector<1x16x256xf32>
    %7 = arith.mulf %6, %6 : vector<1x16x256xf32>
    %cst_3 = arith.constant dense<0.000000e+00> : vector<1x256xf32>
    %8 = vector.multi_reduction <add>, %7, %cst_3 [1] : vector<1x16x256xf32> to vector<1x256xf32>
    %9 = vector.shape_cast %8 : vector<1x256xf32> to vector<1x1x256xf32>
    %cst_4 = arith.constant 1.600000e+01 : f32
    %10 = vector.broadcast %cst_4 : f32 to vector<1x1x256xf32>
    %11 = arith.divf %9, %10 : vector<1x1x256xf32>
    %cst_5 = arith.constant 9.99999974E-6 : f32
    %12 = vector.broadcast %cst_5 : f32 to vector<1x1x256xf32>
    %13 = arith.addf %11, %12 : vector<1x1x256xf32>
    %14 = math.rsqrt %13 : vector<1x1x256xf32>
    %15 = vector.broadcast %14 : vector<1x1x256xf32> to vector<1x16x256xf32>
    %16 = arith.mulf %6, %15 : vector<1x16x256xf32>
    %c0_6 = arith.constant 0 : index
    %c0_7 = arith.constant 0 : index
    %c0_8 = arith.constant 0 : index
    %17 = vector.load %arg2[%c0_6, %c0_7, %c0_8] : memref<1x16x256xf32, #tpu.memory_space<vmem>>, vector<1x16x256xf32>
    %18 = arith.addf %17, %16 : vector<1x16x256xf32>
    %c0_9 = arith.constant 0 : index
    %c0_10 = arith.constant 0 : index
    %c0_11 = arith.constant 0 : index
    %19 = vector.load %arg3[%c0_9, %c0_10, %c0_11] : memref<1x16x256xf32, #tpu.memory_space<vmem>>, vector<1x16x256xf32>
    tpu.vector_store %arg3[%c0_9, %c0_10, %c0_11], %18 {strides = array<i32>} : memref<1x16x256xf32, #tpu.memory_space<vmem>>, vector<1x16x256xf32>,
    return
  }
  func.func @transform_0(%arg0: i32) -> (i32, i32, i32) {
    %c0_i32 = arith.constant 0 : i32
    %c0_i32_0 = arith.constant 0 : i32
    %c0_i32_1 = arith.constant 0 : i32
    return %arg0, %c0_i32, %c0_i32_0 : i32, i32, i32
  }
  func.func @transform_1(%arg0: i32) -> (i32, i32, i32) {
    %c0_i32 = arith.constant 0 : i32
    %c0_i32_0 = arith.constant 0 : i32
    %c0_i32_1 = arith.constant 0 : i32
    return %arg0, %c0_i32, %c0_i32_0 : i32, i32, i32
  }
  func.func @transform_2(%arg0: i32) -> (i32, i32, i32) {
    %c0_i32 = arith.constant 0 : i32
    %c0_i32_0 = arith.constant 0 : i32
    %c0_i32_1 = arith.constant 0 : i32
    return %arg0, %c0_i32, %c0_i32_0 : i32, i32, i32
  }
}

module attributes {stable_mosaic.version = 11 : i64} {
  func.func @_matmul_bias_kernel(%arg0: i32, %arg1: i32, %arg2: i32, %arg3: memref<32x512xbf16, #tpu.memory_space<vmem>>, %arg4: memref<512x128xbf16, #tpu.memory_space<vmem>>, %arg5: memref<1x128xf32, #tpu.memory_space<vmem>>, %arg6: memref<32x128xf32, #tpu.memory_space<vmem>>) attributes {dimension_semantics = [#tpu.dimension_semantics<parallel>, #tpu.dimension_semantics<parallel>, #tpu.dimension_semantics<arbitrary>], iteration_bounds = array<i64: 1, 1, 2>, scalar_prefetch = 0 : i64, scratch_operands = 0 : i64, tpu.core_type = #tpu.core_type<tc>, window_params = [{transform_indices = @transform_0, window_bounds = array<i64: 32, 512>}, {transform_indices = @transform_1, window_bounds = array<i64: 512, 128>}, {transform_indices = @transform_2, window_bounds = array<i64: 1, 128>}, {transform_indices = @transform_3, window_bounds = array<i64: 32, 128>}]} {
    %c0_i32 = arith.constant 0 : i32
    %0 = arith.cmpi eq, %arg2, %c0_i32 : i32
    %1 = arith.extui %0 : i1 to i32
    %c0_i32_0 = arith.constant 0 : i32
    %2 = arith.cmpi ne, %1, %c0_i32_0 : i32
    scf.if %2 {
      %cst_9 = arith.constant 0.000000e+00 : f32
      %12 = vector.broadcast %cst_9 : f32 to vector<32x128xf32>
      %c0_10 = arith.constant 0 : index
      %c0_11 = arith.constant 0 : index
      %13 = vector.load %arg6[%c0_10, %c0_11] : memref<32x128xf32, #tpu.memory_space<vmem>>, vector<32x128xf32>
      tpu.vector_store %arg6[%c0_10, %c0_11], %12 {strides = array<i32>} : memref<32x128xf32, #tpu.memory_space<vmem>>, vector<32x128xf32>,
    } else {
    }
    %c0 = arith.constant 0 : index
    %c0_1 = arith.constant 0 : index
    %3 = vector.load %arg6[%c0, %c0_1] : memref<32x128xf32, #tpu.memory_space<vmem>>, vector<32x128xf32>
    %c0_2 = arith.constant 0 : index
    %c0_3 = arith.constant 0 : index
    %4 = vector.load %arg3[%c0_2, %c0_3] : memref<32x512xbf16, #tpu.memory_space<vmem>>, vector<32x512xbf16>
    %c0_4 = arith.constant 0 : index
    %c0_5 = arith.constant 0 : index
    %5 = vector.load %arg4[%c0_4, %c0_5] : memref<512x128xbf16, #tpu.memory_space<vmem>>, vector<512x128xbf16>
    %cst = arith.constant dense<0.000000e+00> : vector<32x128xf32>
    %6 = tpu.matmul %4, %5, %cst {dimension_numbers = #tpu.dot_dimension_numbers<[1], [0], [0], [1], [0, 0, 1, 1], [], []>} : vector<32x512xbf16>, vector<512x128xbf16>, vector<32x128xf32> -> vector<32x128xf32>
    %7 = arith.addf %3, %6 : vector<32x128xf32>
    %c0_6 = arith.constant 0 : index
    %c0_7 = arith.constant 0 : index
    %8 = vector.load %arg6[%c0_6, %c0_7] : memref<32x128xf32, #tpu.memory_space<vmem>>, vector<32x128xf32>
    tpu.vector_store %arg6[%c0_6, %c0_7], %7 {strides = array<i32>} : memref<32x128xf32, #tpu.memory_space<vmem>>, vector<32x128xf32>,
    %c1_i32 = arith.constant 1 : i32
    %9 = arith.cmpi eq, %arg2, %c1_i32 : i32
    %10 = arith.extui %9 : i1 to i32
    %c0_i32_8 = arith.constant 0 : i32
    %11 = arith.cmpi ne, %10, %c0_i32_8 : i32
    scf.if %11 {
      %c0_9 = arith.constant 0 : index
      %c0_10 = arith.constant 0 : index
      %12 = vector.load %arg6[%c0_9, %c0_10] : memref<32x128xf32, #tpu.memory_space<vmem>>, vector<32x128xf32>
      %c0_11 = arith.constant 0 : index
      %c0_12 = arith.constant 0 : index
      %13 = vector.load %arg5[%c0_11, %c0_12] : memref<1x128xf32, #tpu.memory_space<vmem>>, vector<1x128xf32>
      %14 = vector.broadcast %13 : vector<1x128xf32> to vector<32x128xf32>
      %15 = arith.addf %12, %14 : vector<32x128xf32>
      %c0_13 = arith.constant 0 : index
      %c0_14 = arith.constant 0 : index
      %16 = vector.load %arg6[%c0_13, %c0_14] : memref<32x128xf32, #tpu.memory_space<vmem>>, vector<32x128xf32>
      tpu.vector_store %arg6[%c0_13, %c0_14], %15 {strides = array<i32>} : memref<32x128xf32, #tpu.memory_space<vmem>>, vector<32x128xf32>,
    } else {
    }
    return
  }
  func.func @transform_0(%arg0: i32, %arg1: i32, %arg2: i32) -> (i32, i32) {
    %c0_i32 = arith.constant 0 : i32
    return %arg0, %arg2 : i32, i32
  }
  func.func @transform_1(%arg0: i32, %arg1: i32, %arg2: i32) -> (i32, i32) {
    %c0_i32 = arith.constant 0 : i32
    return %arg2, %arg1 : i32, i32
  }
  func.func @transform_2(%arg0: i32, %arg1: i32, %arg2: i32) -> (i32, i32) {
    %c0_i32 = arith.constant 0 : i32
    %c0_i32_0 = arith.constant 0 : i32
    return %c0_i32, %arg1 : i32, i32
  }
  func.func @transform_3(%arg0: i32, %arg1: i32, %arg2: i32) -> (i32, i32) {
    %c0_i32 = arith.constant 0 : i32
    return %arg0, %arg1 : i32, i32
  }
}

module attributes {stable_mosaic.version = 11 : i64} {
  func.func @_matmul_bias_kernel(%arg0: i32, %arg1: i32, %arg2: i32, %arg3: memref<128x512xbf16, #tpu.memory_space<vmem>>, %arg4: memref<512x128xbf16, #tpu.memory_space<vmem>>, %arg5: memref<1x128xf32, #tpu.memory_space<vmem>>, %arg6: memref<128x128xf32, #tpu.memory_space<vmem>>) attributes {dimension_semantics = [#tpu.dimension_semantics<parallel>, #tpu.dimension_semantics<parallel>, #tpu.dimension_semantics<arbitrary>], iteration_bounds = array<i64: 1, 1, 1>, scalar_prefetch = 0 : i64, scratch_operands = 0 : i64, tpu.core_type = #tpu.core_type<tc>, window_params = [{transform_indices = @transform_0, window_bounds = array<i64: 128, 512>}, {transform_indices = @transform_1, window_bounds = array<i64: 512, 128>}, {transform_indices = @transform_2, window_bounds = array<i64: 1, 128>}, {transform_indices = @transform_3, window_bounds = array<i64: 128, 128>}]} {
    %c0_i32 = arith.constant 0 : i32
    %0 = arith.cmpi eq, %arg2, %c0_i32 : i32
    %1 = arith.extui %0 : i1 to i32
    %c0_i32_0 = arith.constant 0 : i32
    %2 = arith.cmpi ne, %1, %c0_i32_0 : i32
    scf.if %2 {
      %cst_10 = arith.constant 0.000000e+00 : f32
      %12 = vector.broadcast %cst_10 : f32 to vector<128x128xf32>
      %c0_11 = arith.constant 0 : index
      %c0_12 = arith.constant 0 : index
      %13 = vector.load %arg6[%c0_11, %c0_12] : memref<128x128xf32, #tpu.memory_space<vmem>>, vector<128x128xf32>
      tpu.vector_store %arg6[%c0_11, %c0_12], %12 {strides = array<i32>} : memref<128x128xf32, #tpu.memory_space<vmem>>, vector<128x128xf32>,
    } else {
    }
    %c0 = arith.constant 0 : index
    %c0_1 = arith.constant 0 : index
    %3 = vector.load %arg6[%c0, %c0_1] : memref<128x128xf32, #tpu.memory_space<vmem>>, vector<128x128xf32>
    %c0_2 = arith.constant 0 : index
    %c0_3 = arith.constant 0 : index
    %4 = vector.load %arg3[%c0_2, %c0_3] : memref<128x512xbf16, #tpu.memory_space<vmem>>, vector<128x512xbf16>
    %c0_4 = arith.constant 0 : index
    %c0_5 = arith.constant 0 : index
    %5 = vector.load %arg4[%c0_4, %c0_5] : memref<512x128xbf16, #tpu.memory_space<vmem>>, vector<512x128xbf16>
    %cst = arith.constant dense<0.000000e+00> : vector<128x128xf32>
    %6 = tpu.matmul %4, %5, %cst {dimension_numbers = #tpu.dot_dimension_numbers<[1], [0], [0], [1], [0, 0, 1, 1], [], []>} : vector<128x512xbf16>, vector<512x128xbf16>, vector<128x128xf32> -> vector<128x128xf32>
    %7 = arith.addf %3, %6 : vector<128x128xf32>
    %c0_6 = arith.constant 0 : index
    %c0_7 = arith.constant 0 : index
    %8 = vector.load %arg6[%c0_6, %c0_7] : memref<128x128xf32, #tpu.memory_space<vmem>>, vector<128x128xf32>
    tpu.vector_store %arg6[%c0_6, %c0_7], %7 {strides = array<i32>} : memref<128x128xf32, #tpu.memory_space<vmem>>, vector<128x128xf32>,
    %c0_i32_8 = arith.constant 0 : i32
    %9 = arith.cmpi eq, %arg2, %c0_i32_8 : i32
    %10 = arith.extui %9 : i1 to i32
    %c0_i32_9 = arith.constant 0 : i32
    %11 = arith.cmpi ne, %10, %c0_i32_9 : i32
    scf.if %11 {
      %c0_10 = arith.constant 0 : index
      %c0_11 = arith.constant 0 : index
      %12 = vector.load %arg6[%c0_10, %c0_11] : memref<128x128xf32, #tpu.memory_space<vmem>>, vector<128x128xf32>
      %c0_12 = arith.constant 0 : index
      %c0_13 = arith.constant 0 : index
      %13 = vector.load %arg5[%c0_12, %c0_13] : memref<1x128xf32, #tpu.memory_space<vmem>>, vector<1x128xf32>
      %14 = vector.broadcast %13 : vector<1x128xf32> to vector<128x128xf32>
      %15 = arith.addf %12, %14 : vector<128x128xf32>
      %c0_14 = arith.constant 0 : index
      %c0_15 = arith.constant 0 : index
      %16 = vector.load %arg6[%c0_14, %c0_15] : memref<128x128xf32, #tpu.memory_space<vmem>>, vector<128x128xf32>
      tpu.vector_store %arg6[%c0_14, %c0_15], %15 {strides = array<i32>} : memref<128x128xf32, #tpu.memory_space<vmem>>, vector<128x128xf32>,
    } else {
    }
    return
  }
  func.func @transform_0(%arg0: i32, %arg1: i32, %arg2: i32) -> (i32, i32) {
    %c0_i32 = arith.constant 0 : i32
    return %arg0, %arg2 : i32, i32
  }
  func.func @transform_1(%arg0: i32, %arg1: i32, %arg2: i32) -> (i32, i32) {
    %c0_i32 = arith.constant 0 : i32
    return %arg2, %arg1 : i32, i32
  }
  func.func @transform_2(%arg0: i32, %arg1: i32, %arg2: i32) -> (i32, i32) {
    %c0_i32 = arith.constant 0 : i32
    %c0_i32_0 = arith.constant 0 : i32
    return %c0_i32, %arg1 : i32, i32
  }
  func.func @transform_3(%arg0: i32, %arg1: i32, %arg2: i32) -> (i32, i32) {
    %c0_i32 = arith.constant 0 : i32
    return %arg0, %arg1 : i32, i32
  }
}

module attributes {stable_mosaic.version = 11 : i64} {
  func.func @_matmul_bias_kernel(%arg0: i32, %arg1: i32, %arg2: i32, %arg3: memref<512x512xbf16, #tpu.memory_space<vmem>>, %arg4: memref<512x128xbf16, #tpu.memory_space<vmem>>, %arg5: memref<1x128xf32, #tpu.memory_space<vmem>>, %arg6: memref<512x128xf32, #tpu.memory_space<vmem>>) attributes {dimension_semantics = [#tpu.dimension_semantics<parallel>, #tpu.dimension_semantics<parallel>, #tpu.dimension_semantics<arbitrary>], iteration_bounds = array<i64: 1, 1, 7>, scalar_prefetch = 0 : i64, scratch_operands = 0 : i64, tpu.core_type = #tpu.core_type<tc>, window_params = [{transform_indices = @transform_0, window_bounds = array<i64: 512, 512>}, {transform_indices = @transform_1, window_bounds = array<i64: 512, 128>}, {transform_indices = @transform_2, window_bounds = array<i64: 1, 128>}, {transform_indices = @transform_3, window_bounds = array<i64: 512, 128>}]} {
    %c0_i32 = arith.constant 0 : i32
    %0 = arith.cmpi eq, %arg2, %c0_i32 : i32
    %1 = arith.extui %0 : i1 to i32
    %c0_i32_0 = arith.constant 0 : i32
    %2 = arith.cmpi ne, %1, %c0_i32_0 : i32
    scf.if %2 {
      %cst_9 = arith.constant 0.000000e+00 : f32
      %12 = vector.broadcast %cst_9 : f32 to vector<512x128xf32>
      %c0_10 = arith.constant 0 : index
      %c0_11 = arith.constant 0 : index
      %13 = vector.load %arg6[%c0_10, %c0_11] : memref<512x128xf32, #tpu.memory_space<vmem>>, vector<512x128xf32>
      tpu.vector_store %arg6[%c0_10, %c0_11], %12 {strides = array<i32>} : memref<512x128xf32, #tpu.memory_space<vmem>>, vector<512x128xf32>,
    } else {
    }
    %c0 = arith.constant 0 : index
    %c0_1 = arith.constant 0 : index
    %3 = vector.load %arg6[%c0, %c0_1] : memref<512x128xf32, #tpu.memory_space<vmem>>, vector<512x128xf32>
    %c0_2 = arith.constant 0 : index
    %c0_3 = arith.constant 0 : index
    %4 = vector.load %arg3[%c0_2, %c0_3] : memref<512x512xbf16, #tpu.memory_space<vmem>>, vector<512x512xbf16>
    %c0_4 = arith.constant 0 : index
    %c0_5 = arith.constant 0 : index
    %5 = vector.load %arg4[%c0_4, %c0_5] : memref<512x128xbf16, #tpu.memory_space<vmem>>, vector<512x128xbf16>
    %cst = arith.constant dense<0.000000e+00> : vector<512x128xf32>
    %6 = tpu.matmul %4, %5, %cst {dimension_numbers = #tpu.dot_dimension_numbers<[1], [0], [0], [1], [0, 0, 1, 1], [], []>} : vector<512x512xbf16>, vector<512x128xbf16>, vector<512x128xf32> -> vector<512x128xf32>
    %7 = arith.addf %3, %6 : vector<512x128xf32>
    %c0_6 = arith.constant 0 : index
    %c0_7 = arith.constant 0 : index
    %8 = vector.load %arg6[%c0_6, %c0_7] : memref<512x128xf32, #tpu.memory_space<vmem>>, vector<512x128xf32>
    tpu.vector_store %arg6[%c0_6, %c0_7], %7 {strides = array<i32>} : memref<512x128xf32, #tpu.memory_space<vmem>>, vector<512x128xf32>,
    %c6_i32 = arith.constant 6 : i32
    %9 = arith.cmpi eq, %arg2, %c6_i32 : i32
    %10 = arith.extui %9 : i1 to i32
    %c0_i32_8 = arith.constant 0 : i32
    %11 = arith.cmpi ne, %10, %c0_i32_8 : i32
    scf.if %11 {
      %c0_9 = arith.constant 0 : index
      %c0_10 = arith.constant 0 : index
      %12 = vector.load %arg6[%c0_9, %c0_10] : memref<512x128xf32, #tpu.memory_space<vmem>>, vector<512x128xf32>
      %c0_11 = arith.constant 0 : index
      %c0_12 = arith.constant 0 : index
      %13 = vector.load %arg5[%c0_11, %c0_12] : memref<1x128xf32, #tpu.memory_space<vmem>>, vector<1x128xf32>
      %14 = vector.broadcast %13 : vector<1x128xf32> to vector<512x128xf32>
      %15 = arith.addf %12, %14 : vector<512x128xf32>
      %cst_13 = arith.constant 0.000000e+00 : f32
      %16 = vector.broadcast %cst_13 : f32 to vector<512x128xf32>
      %17 = arith.subf %16, %15 : vector<512x128xf32>
      %18 = math.exp %17 : vector<512x128xf32>
      %cst_14 = arith.constant 1.000000e+00 : f32
      %19 = vector.broadcast %cst_14 : f32 to vector<512x128xf32>
      %20 = arith.addf %19, %18 : vector<512x128xf32>
      %cst_15 = arith.constant 1.000000e+00 : f32
      %21 = vector.broadcast %cst_15 : f32 to vector<512x128xf32>
      %22 = arith.divf %21, %20 : vector<512x128xf32>
      %c0_16 = arith.constant 0 : index
      %c0_17 = arith.constant 0 : index
      %23 = vector.load %arg6[%c0_16, %c0_17] : memref<512x128xf32, #tpu.memory_space<vmem>>, vector<512x128xf32>
      tpu.vector_store %arg6[%c0_16, %c0_17], %22 {strides = array<i32>} : memref<512x128xf32, #tpu.memory_space<vmem>>, vector<512x128xf32>,
    } else {
    }
    return
  }
  func.func @transform_0(%arg0: i32, %arg1: i32, %arg2: i32) -> (i32, i32) {
    %c0_i32 = arith.constant 0 : i32
    return %arg0, %arg2 : i32, i32
  }
  func.func @transform_1(%arg0: i32, %arg1: i32, %arg2: i32) -> (i32, i32) {
    %c0_i32 = arith.constant 0 : i32
    return %arg2, %arg1 : i32, i32
  }
  func.func @transform_2(%arg0: i32, %arg1: i32, %arg2: i32) -> (i32, i32) {
    %c0_i32 = arith.constant 0 : i32
    %c0_i32_0 = arith.constant 0 : i32
    return %c0_i32, %arg1 : i32, i32
  }
  func.func @transform_3(%arg0: i32, %arg1: i32, %arg2: i32) -> (i32, i32) {
    %c0_i32 = arith.constant 0 : i32
    return %arg0, %arg1 : i32, i32
  }
}

</mosaic_0001>

<llo_original>
// kernel: edgenet.50
$region0: #{edgenet.50}
  #allocation0 [shape = 'u32[]', space=smem, size = 0x4, offset = 0x4, fixed_abs, tag = 'smem constant byte address 0x4 - core index']
  #allocation1 [shape = 'u32[144,128]{1,0:T(1,128)}', space=vmem, size = 0x12000, scoped, tag = 'internal scratch']
  %s0 = inlined_call_operand.vmem [shape: f32[2,256,64], index: 0, kind: input, shape index: {}]
  %s1 = inlined_call_operand.vmem [shape: f32[2,256,64], index: 1, kind: output, shape index: {}]
  %s2 = sld [smem:[#allocation0]]
  $region37: #{edgenet.50} parent=0
    _
  %s4 = ssub.s32 1, %s2
  %s5 = scalar_select 0, %s4, %s2
  loop: start=0, step=1, limit=4
  $region2: #{edgenet.50} parent=0 // loop_pre_header
    _
  $region3: #{edgenet.50} parent=0 // loop_header
    %s7 = sphi 0, %s11
    %p8 = scmp.ge.s32.totalorder %s7, 4
    %s17 = sphi 0, %s19
    %s20 = sphi 0, %s17
    %s21 = sphi 0, %s20
    %s37 = sphi 0, %s21
    %s43 = sphi 0, %s45
    %s46 = sphi 0, %s43
    %s47 = sphi 0, %s46
    %s63 = sphi 0, %s47
  $region4: #{edgenet.50} parent=0 // loop_header_branch
    %10 = sbr.rel (%p8) target = $region8
  $region5: #{edgenet.50} parent=0 // loop_body
    %s12 = ssub.s32 %s7, 1
    %s13 = ssub.s32 %s7, 2
    %s14 = sadd.s32 %s7, 1
    %s15 = ssub.s32 %s7, %s14
    %p16 = scmp.eq.s32.totalorder %s15, 0
    %s18 = sadd.s32 %s17, 1
    %s19 = scalar_select %p16, %s17, %s18
    %p22 = pneg %p16
    %p23 = scmp.eq.s32.totalorder %s7, 1
    %p24 = por %p22, %p23
    %p25 = scmp.ne.s32.totalorder %s17, %s20
    %p26 = scmp.eq.s32.totalorder %s7, 0
    %p27 = por %p25, %p26
    %p28 = scmp.ne.s32.totalorder %s17, %s20
    %p29 = scmp.eq.s32.totalorder %s12, 1
    %p30 = por %p28, %p29
    %p31 = scmp.ne.s32.totalorder %s20, %s21
    %p32 = scmp.eq.s32.totalorder %s12, 0
    %p33 = por %p31, %p32
    %p34 = scmp.ne.s32.totalorder %s20, %s21
    %p35 = scmp.eq.s32.totalorder %s13, 1
    %p36 = por %p34, %p35
    %p38 = scmp.ne.s32.totalorder %s21, %s37
    %p39 = scmp.eq.s32.totalorder %s13, 0
    %p40 = por %p38, %p39
    %s41 = ssub.s32 %s7, %s14
    %p42 = scmp.eq.s32.totalorder %s41, 0
    %s44 = sadd.s32 %s43, 1
    %s45 = scalar_select %p42, %s43, %s44
    %p48 = pneg %p42
    %p49 = scmp.eq.s32.totalorder %s7, 1
    %p50 = por %p48, %p49
    %p51 = scmp.ne.s32.totalorder %s43, %s46
    %p52 = scmp.eq.s32.totalorder %s7, 0
    %p53 = por %p51, %p52
    %p54 = scmp.ne.s32.totalorder %s43, %s46
    %p55 = scmp.eq.s32.totalorder %s12, 1
    %p56 = por %p54, %p55
    %p57 = scmp.ne.s32.totalorder %s46, %s47
    %p58 = scmp.eq.s32.totalorder %s12, 0
    %p59 = por %p57, %p58
    %p60 = scmp.ne.s32.totalorder %s46, %s47
    %p61 = scmp.eq.s32.totalorder %s13, 1
    %p62 = por %p60, %p61
    %p64 = scmp.ne.s32.totalorder %s47, %s63
    %p65 = scmp.eq.s32.totalorder %s13, 0
    %p66 = por %p64, %p65
    %p67 = scmp.le.s32.totalorder 1, %s7
    %p68 = scmp.lt.s32.totalorder %s7, 3
    %p69 = pnand %p67, %p68
    %p70 = pneg %p69
    // Predicated region
    $region9: #{edgenet.50} parent=5 // pred_check
      _
    $region10: #{edgenet.50} parent=5 // pred_check_branch
      %72 = sbr.rel (%p69) target = $region12
    $region11: #{edgenet.50} parent=5 // pred_region
      %s73 = ssub.s32 %s7, 1
    $region12: #{edgenet.50} parent=5 // pred_fallthru
      _
    %p74 = scmp.lt.s32.totalorder %s7, 2
    // Predicated region
    $region13: #{edgenet.50} parent=5 // pred_check
      %p75 = pneg %p74
    $region14: #{edgenet.50} parent=5 // pred_check_branch
      %77 = sbr.rel (%p75) target = $region16
    $region15: #{edgenet.50} parent=5 // pred_region
      // Predicated region
      $region17: #{edgenet.50} parent=15 // pred_check
        %p78 = pneg %p27
      $region18: #{edgenet.50} parent=15 // pred_check_branch
        %80 = sbr.rel (%p78) target = $region20
      $region19: #{edgenet.50} parent=15 // pred_region
        %p81 = scmp.lt.s32.totalorder %s7, 1
        %s82 = scalar_select %p81, %s7, 1
        %s83 = smul.addr %s82, 32
        %s84 = smul.addr %s83, 8
        %s85 = scalar_lea.vmem %s0, %s84
      $region20: #{edgenet.50} parent=15 // pred_fallthru
        _
    $region16: #{edgenet.50} parent=5 // pred_fallthru
      _
    %p86 = scmp.le.s32.totalorder 1, %s7
    %p87 = scmp.lt.s32.totalorder %s7, 3
    %p88 = pnand %p86, %p87
    %p89 = pneg %p88
    // Predicated region
    $region21: #{edgenet.50} parent=5 // pred_check
      _
    $region22: #{edgenet.50} parent=5 // pred_check_branch
      %91 = sbr.rel (%p88) target = $region24
    $region23: #{edgenet.50} parent=5 // pred_region
      %s92 = ssub.s32 %s7, 1
      %p93 = scmp.lt.s32.totalorder %s12, 1
      %s94 = scalar_select %p93, %s12, 1
      %s95 = smul.addr %s94, 32
      %s96 = smul.addr %s95, 8
      %s97 = scalar_lea.vmem %s0, %s96
      %p98 = pneg %p33
      %p99 = pneg %p30
      %p100 = pneg %p59
      %p101 = pneg %p56
      %p102 = scmp.lt.s32.totalorder %s12, 1
      %s103 = scalar_select %p102, %s12, 1
      %s104 = smul.addr %s103, 32
      %s105 = smul.addr %s104, 8
      %s106 = scalar_lea.vmem %s1, %s105
      %p107 = scmp.lt.s32.totalorder %s12, 1
      %s108 = scalar_select %p107, %s12, 1
      %s109 = smul.addr %s108, 32
      %s110 = smul.addr %s109, 8
      %s111 = scalar_lea.vmem %s0, %s110
      %p112 = scmp.lt.s32.totalorder %s12, 1
      %s113 = scalar_select %p112, %s12, 1
      %s114 = smul.addr %s113, 32
      %s115 = smul.addr %s114, 8
      %s116 = scalar_lea.vmem %s1, %s115
      %v117 = vld [vmem:[%s111] sm:$0xff]
      %v118 = vld [vmem:[%s111 + $0x8] sm:$0xff]
      %v119 = vld [vmem:[%s111 + $0x10] sm:$0xff]
      %v120 = vld [vmem:[%s111 + $0x18] sm:$0xff]
      %v121 = vld [vmem:[%s111 + $0x20] sm:$0xff]
      %v122 = vld [vmem:[%s111 + $0x28] sm:$0xff]
      %v123 = vld [vmem:[%s111 + $0x30] sm:$0xff]
      %v124 = vld [vmem:[%s111 + $0x38] sm:$0xff]
      %v125 = vld [vmem:[%s111 + $0x40] sm:$0xff]
      %v126 = vld [vmem:[%s111 + $0x48] sm:$0xff]
      %v127 = vld [vmem:[%s111 + $0x50] sm:$0xff]
      %v128 = vld [vmem:[%s111 + $0x58] sm:$0xff]
      %v129 = vld [vmem:[%s111 + $0x60] sm:$0xff]
      %v130 = vld [vmem:[%s111 + $0x68] sm:$0xff]
      %v131 = vld [vmem:[%s111 + $0x70] sm:$0xff]
      %v132 = vld [vmem:[%s111 + $0x78] sm:$0xff]
      %v133 = vld [vmem:[%s111 + $0x80] sm:$0xff]
      %v134 = vld [vmem:[%s111 + $0x88] sm:$0xff]
      %v135 = vld [vmem:[%s111 + $0x90] sm:$0xff]
      %v136 = vld [vmem:[%s111 + $0x98] sm:$0xff]
      %v137 = vld [vmem:[%s111 + $0xa0] sm:$0xff]
      %v138 = vld [vmem:[%s111 + $0xa8] sm:$0xff]
      %v139 = vld [vmem:[%s111 + $0xb0] sm:$0xff]
      %v140 = vld [vmem:[%s111 + $0xb8] sm:$0xff]
      %v141 = vld [vmem:[%s111 + $0xc0] sm:$0xff]
      %v142 = vld [vmem:[%s111 + $0xc8] sm:$0xff]
      %v143 = vld [vmem:[%s111 + $0xd0] sm:$0xff]
      %v144 = vld [vmem:[%s111 + $0xd8] sm:$0xff]
      %v145 = vld [vmem:[%s111 + $0xe0] sm:$0xff]
      %v146 = vld [vmem:[%s111 + $0xe8] sm:$0xff]
      %v147 = vld [vmem:[%s111 + $0xf0] sm:$0xff]
      %v148 = vld [vmem:[%s111 + $0xf8] sm:$0xff]
      %vm149 = vcmask 523264
      %v150 = vsel %vm149, %v117, 0.0
      %v151 = vsel %vm149, %v118, 0.0
      %v152 = vadd.f32 %v150, %v151
      %v153 = vsel %vm149, %v119, 0.0
      %v154 = vadd.f32 %v152, %v153
      %v155 = vsel %vm149, %v120, 0.0
      %v156 = vadd.f32 %v154, %v155
      %v157 = vsel %vm149, %v121, 0.0
      %v158 = vadd.f32 %v156, %v157
      %v159 = vsel %vm149, %v122, 0.0
      %v160 = vadd.f32 %v158, %v159
      %v161 = vsel %vm149, %v123, 0.0
      %v162 = vadd.f32 %v160, %v161
      %v163 = vsel %vm149, %v124, 0.0
      %v164 = vadd.f32 %v162, %v163
      %v165 = vsel %vm149, %v125, 0.0
      %v166 = vadd.f32 %v164, %v165
      %v167 = vsel %vm149, %v126, 0.0
      %v168 = vadd.f32 %v166, %v167
      %v169 = vsel %vm149, %v127, 0.0
      %v170 = vadd.f32 %v168, %v169
      %v171 = vsel %vm149, %v128, 0.0
      %v172 = vadd.f32 %v170, %v171
      %v173 = vsel %vm149, %v129, 0.0
      %v174 = vadd.f32 %v172, %v173
      %v175 = vsel %vm149, %v130, 0.0
      %v176 = vadd.f32 %v174, %v175
      %v177 = vsel %vm149, %v131, 0.0
      %v178 = vadd.f32 %v176, %v177
      %v179 = vsel %vm149, %v132, 0.0
      %v180 = vadd.f32 %v178, %v179
      %v181 = vsel %vm149, %v133, 0.0
      %v182 = vadd.f32 %v180, %v181
      %v183 = vsel %vm149, %v134, 0.0
      %v184 = vadd.f32 %v182, %v183
      %v185 = vsel %vm149, %v135, 0.0
      %v186 = vadd.f32 %v184, %v185
      %v187 = vsel %vm149, %v136, 0.0
      %v188 = vadd.f32 %v186, %v187
      %v189 = vsel %vm149, %v137, 0.0
      %v190 = vadd.f32 %v188, %v189
      %v191 = vsel %vm149, %v138, 0.0
      %v192 = vadd.f32 %v190, %v191
      %v193 = vsel %vm149, %v139, 0.0
      %v194 = vadd.f32 %v192, %v193
      %v195 = vsel %vm149, %v140, 0.0
      %v196 = vadd.f32 %v194, %v195
      %v197 = vsel %vm149, %v141, 0.0
      %v198 = vadd.f32 %v196, %v197
      %v199 = vsel %vm149, %v142, 0.0
      %v200 = vadd.f32 %v198, %v199
      %v201 = vsel %vm149, %v143, 0.0
      %v202 = vadd.f32 %v200, %v201
      %v203 = vsel %vm149, %v144, 0.0
      %v204 = vadd.f32 %v202, %v203
      %v205 = vsel %vm149, %v145, 0.0
      %v206 = vadd.f32 %v204, %v205
      %v207 = vsel %vm149, %v146, 0.0
      %v208 = vadd.f32 %v206, %v207
      %v209 = vsel %vm149, %v147, 0.0
      %v210 = vadd.f32 %v208, %v209
      %v211 = vsel %vm149, %v148, 0.0
      %v212 = vadd.f32 %v210, %v211
      %v213 = vrot.slane %v212, 4
      %v214 = vadd.f32 %v212, %v213
      %v215 = vrot.slane %v214, 2
      %v216 = vadd.f32 %v214, %v215
      %v217 = vrot.slane %v216, 1
      %v218 = vadd.f32 %v216, %v217
      %v219 = vrcp.pop 256.0
      %v220 = vmul.f32 %v218, %v219
      %v221 = vsub.f32 %v117, %v220
      %v222 = vsub.f32 %v118, %v220
      %v223 = vsub.f32 %v119, %v220
      %v224 = vsub.f32 %v120, %v220
      %v225 = vsub.f32 %v121, %v220
      %v226 = vsub.f32 %v122, %v220
      %v227 = vsub.f32 %v123, %v220
      %v228 = vsub.f32 %v124, %v220
      %v229 = vsub.f32 %v125, %v220
      %v230 = vsub.f32 %v126, %v220
      %v231 = vsub.f32 %v127, %v220
      %v232 = vsub.f32 %v128, %v220
      %v233 = vsub.f32 %v129, %v220
      %v234 = vsub.f32 %v130, %v220
      %v235 = vsub.f32 %v131, %v220
      %v236 = vsub.f32 %v132, %v220
      %v237 = vsub.f32 %v133, %v220
      %v238 = vsub.f32 %v134, %v220
      %v239 = vsub.f32 %v135, %v220
      %v240 = vsub.f32 %v136, %v220
      %v241 = vsub.f32 %v137, %v220
      %v242 = vsub.f32 %v138, %v220
      %v243 = vsub.f32 %v139, %v220
      %v244 = vsub.f32 %v140, %v220
      %v245 = vsub.f32 %v141, %v220
      %v246 = vsub.f32 %v142, %v220
      %v247 = vsub.f32 %v143, %v220
      %v248 = vsub.f32 %v144, %v220
      %v249 = vsub.f32 %v145, %v220
      %v250 = vsub.f32 %v146, %v220
      %v251 = vsub.f32 %v147, %v220
      %v252 = vsub.f32 %v148, %v220
      %v253 = vmul.f32 %v221, %v221
      %v254 = vmul.f32 %v222, %v222
      %v255 = vmul.f32 %v223, %v223
      %v256 = vmul.f32 %v224, %v224
      %v257 = vmul.f32 %v225, %v225
      %v258 = vmul.f32 %v226, %v226
      %v259 = vmul.f32 %v227, %v227
      %v260 = vmul.f32 %v228, %v228
      %v261 = vmul.f32 %v229, %v229
      %v262 = vmul.f32 %v230, %v230
      %v263 = vmul.f32 %v231, %v231
      %v264 = vmul.f32 %v232, %v232
      %v265 = vmul.f32 %v233, %v233
      %v266 = vmul.f32 %v234, %v234
      %v267 = vmul.f32 %v235, %v235
      %v268 = vmul.f32 %v236, %v236
      %v269 = vmul.f32 %v237, %v237
      %v270 = vmul.f32 %v238, %v238
      %v271 = vmul.f32 %v239, %v239
      %v272 = vmul.f32 %v240, %v240
      %v273 = vmul.f32 %v241, %v241
      %v274 = vmul.f32 %v242, %v242
      %v275 = vmul.f32 %v243, %v243
      %v276 = vmul.f32 %v244, %v244
      %v277 = vmul.f32 %v245, %v245
      %v278 = vmul.f32 %v246, %v246
      %v279 = vmul.f32 %v247, %v247
      %v280 = vmul.f32 %v248, %v248
      %v281 = vmul.f32 %v249, %v249
      %v282 = vmul.f32 %v250, %v250
      %v283 = vmul.f32 %v251, %v251
      %v284 = vmul.f32 %v252, %v252
      %v285 = vsel %vm149, %v253, 0.0
      %v286 = vsel %vm149, %v254, 0.0
      %v287 = vadd.f32 %v285, %v286
      %v288 = vsel %vm149, %v255, 0.0
      %v289 = vadd.f32 %v287, %v288
      %v290 = vsel %vm149, %v256, 0.0
      %v291 = vadd.f32 %v289, %v290
      %v292 = vsel %vm149, %v257, 0.0
      %v293 = vadd.f32 %v291, %v292
      %v294 = vsel %vm149, %v258, 0.0
      %v295 = vadd.f32 %v293, %v294
      %v296 = vsel %vm149, %v259, 0.0
      %v297 = vadd.f32 %v295, %v296
      %v298 = vsel %vm149, %v260, 0.0
      %v299 = vadd.f32 %v297, %v298
      %v300 = vsel %vm149, %v261, 0.0
      %v301 = vadd.f32 %v299, %v300
      %v302 = vsel %vm149, %v262, 0.0
      %v303 = vadd.f32 %v301, %v302
      %v304 = vsel %vm149, %v263, 0.0
      %v305 = vadd.f32 %v303, %v304
      %v306 = vsel %vm149, %v264, 0.0
      %v307 = vadd.f32 %v305, %v306
      %v308 = vsel %vm149, %v265, 0.0
      %v309 = vadd.f32 %v307, %v308
      %v310 = vsel %vm149, %v266, 0.0
      %v311 = vadd.f32 %v309, %v310
      %v312 = vsel %vm149, %v267, 0.0
      %v313 = vadd.f32 %v311, %v312
      %v314 = vsel %vm149, %v268, 0.0
      %v315 = vadd.f32 %v313, %v314
      %v316 = vsel %vm149, %v269, 0.0
      %v317 = vadd.f32 %v315, %v316
      %v318 = vsel %vm149, %v270, 0.0
      %v319 = vadd.f32 %v317, %v318
      %v320 = vsel %vm149, %v271, 0.0
      %v321 = vadd.f32 %v319, %v320
      %v322 = vsel %vm149, %v272, 0.0
      %v323 = vadd.f32 %v321, %v322
      %v324 = vsel %vm149, %v273, 0.0
      %v325 = vadd.f32 %v323, %v324
      %v326 = vsel %vm149, %v274, 0.0
      %v327 = vadd.f32 %v325, %v326
      %v328 = vsel %vm149, %v275, 0.0
      %v329 = vadd.f32 %v327, %v328
      %v330 = vsel %vm149, %v276, 0.0
      %v331 = vadd.f32 %v329, %v330
      %v332 = vsel %vm149, %v277, 0.0
      %v333 = vadd.f32 %v331, %v332
      %v334 = vsel %vm149, %v278, 0.0
      %v335 = vadd.f32 %v333, %v334
      %v336 = vsel %vm149, %v279, 0.0
      %v337 = vadd.f32 %v335, %v336
      %v338 = vsel %vm149, %v280, 0.0
      %v339 = vadd.f32 %v337, %v338
      %v340 = vsel %vm149, %v281, 0.0
      %v341 = vadd.f32 %v339, %v340
      %v342 = vsel %vm149, %v282, 0.0
      %v343 = vadd.f32 %v341, %v342
      %v344 = vsel %vm149, %v283, 0.0
      %v345 = vadd.f32 %v343, %v344
      %v346 = vsel %vm149, %v284, 0.0
      %v347 = vadd.f32 %v345, %v346
      %v348 = vrot.slane %v347, 4
      %v349 = vadd.f32 %v347, %v348
      %v350 = vrot.slane %v349, 2
      %v351 = vadd.f32 %v349, %v350
      %v352 = vrot.slane %v351, 1
      %v353 = vadd.f32 %v351, %v352
      %v354 = vmul.f32 %v353, %v219
      %v355 = vadd.f32 %v354, 1e-05
      %v356 = vrsqrt.pop %v355
      %v357 = vmul.f32 %v221, %v356
      %v358 = vmul.f32 %v222, %v356
      %v359 = vmul.f32 %v223, %v356
      %v360 = vmul.f32 %v224, %v356
      %v361 = vmul.f32 %v225, %v356
      %v362 = vmul.f32 %v226, %v356
      %v363 = vmul.f32 %v227, %v356
      %v364 = vmul.f32 %v228, %v356
      %v365 = vmul.f32 %v229, %v356
      %v366 = vmul.f32 %v230, %v356
      %v367 = vmul.f32 %v231, %v356
      %v368 = vmul.f32 %v232, %v356
      %v369 = vmul.f32 %v233, %v356
      %v370 = vmul.f32 %v234, %v356
      %v371 = vmul.f32 %v235, %v356
      %v372 = vmul.f32 %v236, %v356
      %v373 = vmul.f32 %v237, %v356
      %v374 = vmul.f32 %v238, %v356
      %v375 = vmul.f32 %v239, %v356
      %v376 = vmul.f32 %v240, %v356
      %v377 = vmul.f32 %v241, %v356
      %v378 = vmul.f32 %v242, %v356
      %v379 = vmul.f32 %v243, %v356
      %v380 = vmul.f32 %v244, %v356
      %v381 = vmul.f32 %v245, %v356
      %v382 = vmul.f32 %v246, %v356
      %v383 = vmul.f32 %v247, %v356
      %v384 = vmul.f32 %v248, %v356
      %v385 = vmul.f32 %v249, %v356
      %v386 = vmul.f32 %v250, %v356
      %v387 = vmul.f32 %v251, %v356
      %v388 = vmul.f32 %v252, %v356
      %v389 = vmax.f32 %v357, 0.0
      %v390 = vmax.f32 %v358, 0.0
      %v391 = vmax.f32 %v359, 0.0
      %v392 = vmax.f32 %v360, 0.0
      %v393 = vmax.f32 %v361, 0.0
      %v394 = vmax.f32 %v362, 0.0
      %v395 = vmax.f32 %v363, 0.0
      %v396 = vmax.f32 %v364, 0.0
      %v397 = vmax.f32 %v365, 0.0
      %v398 = vmax.f32 %v366, 0.0
      %v399 = vmax.f32 %v367, 0.0
      %v400 = vmax.f32 %v368, 0.0
      %v401 = vmax.f32 %v369, 0.0
      %v402 = vmax.f32 %v370, 0.0
      %v403 = vmax.f32 %v371, 0.0
      %v404 = vmax.f32 %v372, 0.0
      %v405 = vmax.f32 %v373, 0.0
      %v406 = vmax.f32 %v374, 0.0
      %v407 = vmax.f32 %v375, 0.0
      %v408 = vmax.f32 %v376, 0.0
      %v409 = vmax.f32 %v377, 0.0
      %v410 = vmax.f32 %v378, 0.0
      %v411 = vmax.f32 %v379, 0.0
      %v412 = vmax.f32 %v380, 0.0
      %v413 = vmax.f32 %v381, 0.0
      %v414 = vmax.f32 %v382, 0.0
      %v415 = vmax.f32 %v383, 0.0
      %v416 = vmax.f32 %v384, 0.0
      %v417 = vmax.f32 %v385, 0.0
      %v418 = vmax.f32 %v386, 0.0
      %v419 = vmax.f32 %v387, 0.0
      %v420 = vmax.f32 %v388, 0.0
      %421 = vst.msk [vmem:[%s116] sm:$0xff] %vm149, %v389
      %422 = vst.msk [vmem:[%s116 + $0x8] sm:$0xff] %vm149, %v390
      %423 = vst.msk [vmem:[%s116 + $0x10] sm:$0xff] %vm149, %v391
      %424 = vst.msk [vmem:[%s116 + $0x18] sm:$0xff] %vm149, %v392
      %425 = vst.msk [vmem:[%s116 + $0x20] sm:$0xff] %vm149, %v393
      %426 = vst.msk [vmem:[%s116 + $0x28] sm:$0xff] %vm149, %v394
      %427 = vst.msk [vmem:[%s116 + $0x30] sm:$0xff] %vm149, %v395
      %428 = vst.msk [vmem:[%s116 + $0x38] sm:$0xff] %vm149, %v396
      %429 = vst.msk [vmem:[%s116 + $0x40] sm:$0xff] %vm149, %v397
      %430 = vst.msk [vmem:[%s116 + $0x48] sm:$0xff] %vm149, %v398
      %431 = vst.msk [vmem:[%s116 + $0x50] sm:$0xff] %vm149, %v399
      %432 = vst.msk [vmem:[%s116 + $0x58] sm:$0xff] %vm149, %v400
      %433 = vst.msk [vmem:[%s116 + $0x60] sm:$0xff] %vm149, %v401
      %434 = vst.msk [vmem:[%s116 + $0x68] sm:$0xff] %vm149, %v402
      %435 = vst.msk [vmem:[%s116 + $0x70] sm:$0xff] %vm149, %v403
      %436 = vst.msk [vmem:[%s116 + $0x78] sm:$0xff] %vm149, %v404
      %437 = vst.msk [vmem:[%s116 + $0x80] sm:$0xff] %vm149, %v405
      %438 = vst.msk [vmem:[%s116 + $0x88] sm:$0xff] %vm149, %v406
      %439 = vst.msk [vmem:[%s116 + $0x90] sm:$0xff] %vm149, %v407
      %440 = vst.msk [vmem:[%s116 + $0x98] sm:$0xff] %vm149, %v408
      %441 = vst.msk [vmem:[%s116 + $0xa0] sm:$0xff] %vm149, %v409
      %442 = vst.msk [vmem:[%s116 + $0xa8] sm:$0xff] %vm149, %v410
      %443 = vst.msk [vmem:[%s116 + $0xb0] sm:$0xff] %vm149, %v411
      %444 = vst.msk [vmem:[%s116 + $0xb8] sm:$0xff] %vm149, %v412
      %445 = vst.msk [vmem:[%s116 + $0xc0] sm:$0xff] %vm149, %v413
      %446 = vst.msk [vmem:[%s116 + $0xc8] sm:$0xff] %vm149, %v414
      %447 = vst.msk [vmem:[%s116 + $0xd0] sm:$0xff] %vm149, %v415
      %448 = vst.msk [vmem:[%s116 + $0xd8] sm:$0xff] %vm149, %v416
      %449 = vst.msk [vmem:[%s116 + $0xe0] sm:$0xff] %vm149, %v417
      %450 = vst.msk [vmem:[%s116 + $0xe8] sm:$0xff] %vm149, %v418
      %451 = vst.msk [vmem:[%s116 + $0xf0] sm:$0xff] %vm149, %v419
      %452 = vst.msk [vmem:[%s116 + $0xf8] sm:$0xff] %vm149, %v420
      %p453 = scmp.lt.s32.totalorder %s12, 1
      %s454 = scalar_select %p453, %s12, 1
      %s455 = smul.addr %s454, 32
      %s456 = smul.addr %s455, 8
      %s457 = scalar_lea.vmem %s1, %s456
      // Predicated region
      $region25: #{edgenet.50} parent=23 // pred_check
        %p458 = pneg %p56
      $region26: #{edgenet.50} parent=23 // pred_check_branch
        %460 = sbr.rel (%p458) target = $region28
      $region27: #{edgenet.50} parent=23 // pred_region
        _
      $region28: #{edgenet.50} parent=23 // pred_fallthru
        _
    $region24: #{edgenet.50} parent=5 // pred_fallthru
      _
    %p461 = scmp.le.s32.totalorder 2, %s7
    // Predicated region
    $region29: #{edgenet.50} parent=5 // pred_check
      %p462 = pneg %p461
    $region30: #{edgenet.50} parent=5 // pred_check_branch
      %464 = sbr.rel (%p462) target = $region32
    $region31: #{edgenet.50} parent=5 // pred_region
      %s465 = ssub.s32 %s7, 2
      // Predicated region
      $region33: #{edgenet.50} parent=31 // pred_check
        %p466 = pneg %p62
      $region34: #{edgenet.50} parent=31 // pred_check_branch
        %468 = sbr.rel (%p466) target = $region36
      $region35: #{edgenet.50} parent=31 // pred_region
        %p469 = scmp.lt.s32.totalorder %s13, 1
        %s470 = scalar_select %p469, %s13, 1
        %s471 = smul.addr %s470, 32
        %s472 = smul.addr %s471, 8
        %s473 = scalar_lea.vmem %s1, %s472
      $region36: #{edgenet.50} parent=31 // pred_fallthru
        _
    $region32: #{edgenet.50} parent=5 // pred_fallthru
      _
  $region6: #{edgenet.50} parent=0 // loop_footer
    %s11 = sadd.s32 1, %s7
  $region7: #{edgenet.50} parent=0 // loop_footer_branch
    %6 = sbr.rel target = $region3
  $region8: #{edgenet.50} parent=0 // loop_exit
    _

// kernel: edgenet.49
$region0: #{edgenet.49}
  #allocation0 [shape = 'u32[]', space=smem, size = 0x4, offset = 0x4, fixed_abs, tag = 'smem constant byte address 0x4 - core index']
  #allocation1 [shape = 'u32[144,128]{1,0:T(1,128)}', space=vmem, size = 0x12000, scoped, tag = 'internal scratch']
  %s0 = inlined_call_operand.vmem [shape: bf16[512,256], index: 0, kind: input, shape index: {}]
  %s1 = inlined_call_operand.vmem [shape: bf16[256,128], index: 1, kind: input, shape index: {}]
  %s2 = inlined_call_operand.vmem [shape: f32[1,128], index: 2, kind: input, shape index: {}]
  %s3 = inlined_call_operand.vmem [shape: f32[512,128], index: 3, kind: output, shape index: {}]
  %s4 = sld [smem:[#allocation0]]
  $region30: #{edgenet.49} parent=0
    _
  %s6 = ssub.s32 1, %s4
  %s7 = scalar_select 0, %s6, %s4
  // Predicated region
  $region2: #{edgenet.49} parent=0 // pred_check
    _
  $region3: #{edgenet.49} parent=0 // pred_check_branch
    %9 = sbr.rel (0) target = $region5
  $region4: #{edgenet.49} parent=0 // pred_region
    _
  $region5: #{edgenet.49} parent=0 // pred_fallthru
    _
  // Predicated region
  $region6: #{edgenet.49} parent=0 // pred_check
    _
  $region7: #{edgenet.49} parent=0 // pred_check_branch
    %11 = sbr.rel (0) target = $region9
  $region8: #{edgenet.49} parent=0 // pred_region
    _
  $region9: #{edgenet.49} parent=0 // pred_fallthru
    _
  // Predicated region
  $region10: #{edgenet.49} parent=0 // pred_check
    _
  $region11: #{edgenet.49} parent=0 // pred_check_branch
    %13 = sbr.rel (0) target = $region13
  $region12: #{edgenet.49} parent=0 // pred_region
    _
  $region13: #{edgenet.49} parent=0 // pred_fallthru
    _
  %p15 = scmp.eq.s32.totalorder 0, 0
  // Predicated region
  $region14: #{edgenet.49} parent=0 // pred_check
    %p16 = pneg %p15
  $region15: #{edgenet.49} parent=0 // pred_check_branch
    %18 = sbr.rel (%p16) target = $region17
  $region16: #{edgenet.49} parent=0 // pred_region
    %19 = vst [vmem:[%s3] sm:$0xff] 0.0
    %20 = vst [vmem:[%s3 + $0x8] sm:$0xff] 0.0
    %21 = vst [vmem:[%s3 + $0x10] sm:$0xff] 0.0
    %22 = vst [vmem:[%s3 + $0x18] sm:$0xff] 0.0
    %23 = vst [vmem:[%s3 + $0x20] sm:$0xff] 0.0
    %24 = vst [vmem:[%s3 + $0x28] sm:$0xff] 0.0
    %25 = vst [vmem:[%s3 + $0x30] sm:$0xff] 0.0
    %26 = vst [vmem:[%s3 + $0x38] sm:$0xff] 0.0
    %27 = vst [vmem:[%s3 + $0x40] sm:$0xff] 0.0
    %28 = vst [vmem:[%s3 + $0x48] sm:$0xff] 0.0
    %29 = vst [vmem:[%s3 + $0x50] sm:$0xff] 0.0
    %30 = vst [vmem:[%s3 + $0x58] sm:$0xff] 0.0
    %31 = vst [vmem:[%s3 + $0x60] sm:$0xff] 0.0
    %32 = vst [vmem:[%s3 + $0x68] sm:$0xff] 0.0
    %33 = vst [vmem:[%s3 + $0x70] sm:$0xff] 0.0
    %34 = vst [vmem:[%s3 + $0x78] sm:$0xff] 0.0
    %35 = vst [vmem:[%s3 + $0x80] sm:$0xff] 0.0
    %36 = vst [vmem:[%s3 + $0x88] sm:$0xff] 0.0
    %37 = vst [vmem:[%s3 + $0x90] sm:$0xff] 0.0
    %38 = vst [vmem:[%s3 + $0x98] sm:$0xff] 0.0
    %39 = vst [vmem:[%s3 + $0xa0] sm:$0xff] 0.0
    %40 = vst [vmem:[%s3 + $0xa8] sm:$0xff] 0.0
    %41 = vst [vmem:[%s3 + $0xb0] sm:$0xff] 0.0
    %42 = vst [vmem:[%s3 + $0xb8] sm:$0xff] 0.0
    %43 = vst [vmem:[%s3 + $0xc0] sm:$0xff] 0.0
    %44 = vst [vmem:[%s3 + $0xc8] sm:$0xff] 0.0
    %45 = vst [vmem:[%s3 + $0xd0] sm:$0xff] 0.0
    %46 = vst [vmem:[%s3 + $0xd8] sm:$0xff] 0.0
    %47 = vst [vmem:[%s3 + $0xe0] sm:$0xff] 0.0
    %48 = vst [vmem:[%s3 + $0xe8] sm:$0xff] 0.0
    %49 = vst [vmem:[%s3 + $0xf0] sm:$0xff] 0.0
    %50 = vst [vmem:[%s3 + $0xf8] sm:$0xff] 0.0
    %51 = vst [vmem:[%s3 + $0x100] sm:$0xff] 0.0
    %52 = vst [vmem:[%s3 + $0x108] sm:$0xff] 0.0
    %53 = vst [vmem:[%s3 + $0x110] sm:$0xff] 0.0
    %54 = vst [vmem:[%s3 + $0x118] sm:$0xff] 0.0
    %55 = vst [vmem:[%s3 + $0x120] sm:$0xff] 0.0
    %56 = vst [vmem:[%s3 + $0x128] sm:$0xff] 0.0
    %57 = vst [vmem:[%s3 + $0x130] sm:$0xff] 0.0
    %58 = vst [vmem:[%s3 + $0x138] sm:$0xff] 0.0
    %59 = vst [vmem:[%s3 + $0x140] sm:$0xff] 0.0
    %60 = vst [vmem:[%s3 + $0x148] sm:$0xff] 0.0
    %61 = vst [vmem:[%s3 + $0x150] sm:$0xff] 0.0
    %62 = vst [vmem:[%s3 + $0x158] sm:$0xff] 0.0
    %63 = vst [vmem:[%s3 + $0x160] sm:$0xff] 0.0
    %64 = vst [vmem:[%s3 + $0x168] sm:$0xff] 0.0
    %65 = vst [vmem:[%s3 + $0x170] sm:$0xff] 0.0
    %66 = vst [vmem:[%s3 + $0x178] sm:$0xff] 0.0
    %67 = vst [vmem:[%s3 + $0x180] sm:$0xff] 0.0
    %68 = vst [vmem:[%s3 + $0x188] sm:$0xff] 0.0
    %69 = vst [vmem:[%s3 + $0x190] sm:$0xff] 0.0
    %70 = vst [vmem:[%s3 + $0x198] sm:$0xff] 0.0
    %71 = vst [vmem:[%s3 + $0x1a0] sm:$0xff] 0.0
    %72 = vst [vmem:[%s3 + $0x1a8] sm:$0xff] 0.0
    %73 = vst [vmem:[%s3 + $0x1b0] sm:$0xff] 0.0
    %74 = vst [vmem:[%s3 + $0x1b8] sm:$0xff] 0.0
    %75 = vst [vmem:[%s3 + $0x1c0] sm:$0xff] 0.0
    %76 = vst [vmem:[%s3 + $0x1c8] sm:$0xff] 0.0
    %77 = vst [vmem:[%s3 + $0x1d0] sm:$0xff] 0.0
    %78 = vst [vmem:[%s3 + $0x1d8] sm:$0xff] 0.0
    %79 = vst [vmem:[%s3 + $0x1e0] sm:$0xff] 0.0
    %80 = vst [vmem:[%s3 + $0x1e8] sm:$0xff] 0.0
    %81 = vst [vmem:[%s3 + $0x1f0] sm:$0xff] 0.0
    %82 = vst [vmem:[%s3 + $0x1f8] sm:$0xff] 0.0
  $region17: #{edgenet.49} parent=0 // pred_fallthru
    _
  %v83 = vld [vmem:[%s3] sm:$0xff]
  %v84 = vld [vmem:[%s3 + $0x8] sm:$0xff]
  %v85 = vld [vmem:[%s3 + $0x10] sm:$0xff]
  %v86 = vld [vmem:[%s3 + $0x18] sm:$0xff]
  %v87 = vld [vmem:[%s3 + $0x20] sm:$0xff]
  %v88 = vld [vmem:[%s3 + $0x28] sm:$0xff]
  %v89 = vld [vmem:[%s3 + $0x30] sm:$0xff]
  %v90 = vld [vmem:[%s3 + $0x38] sm:$0xff]
  %v91 = vld [vmem:[%s3 + $0x40] sm:$0xff]
  %v92 = vld [vmem:[%s3 + $0x48] sm:$0xff]
  %v93 = vld [vmem:[%s3 + $0x50] sm:$0xff]
  %v94 = vld [vmem:[%s3 + $0x58] sm:$0xff]
  %v95 = vld [vmem:[%s3 + $0x60] sm:$0xff]
  %v96 = vld [vmem:[%s3 + $0x68] sm:$0xff]
  %v97 = vld [vmem:[%s3 + $0x70] sm:$0xff]
  %v98 = vld [vmem:[%s3 + $0x78] sm:$0xff]
  %v99 = vld [vmem:[%s3 + $0x80] sm:$0xff]
  %v100 = vld [vmem:[%s3 + $0x88] sm:$0xff]
  %v101 = vld [vmem:[%s3 + $0x90] sm:$0xff]
  %v102 = vld [vmem:[%s3 + $0x98] sm:$0xff]
  %v103 = vld [vmem:[%s3 + $0xa0] sm:$0xff]
  %v104 = vld [vmem:[%s3 + $0xa8] sm:$0xff]
  %v105 = vld [vmem:[%s3 + $0xb0] sm:$0xff]
  %v106 = vld [vmem:[%s3 + $0xb8] sm:$0xff]
  %v107 = vld [vmem:[%s3 + $0xc0] sm:$0xff]
  %v108 = vld [vmem:[%s3 + $0xc8] sm:$0xff]
  %v109 = vld [vmem:[%s3 + $0xd0] sm:$0xff]
  %v110 = vld [vmem:[%s3 + $0xd8] sm:$0xff]
  %v111 = vld [vmem:[%s3 + $0xe0] sm:$0xff]
  %v112 = vld [vmem:[%s3 + $0xe8] sm:$0xff]
  %v113 = vld [vmem:[%s3 + $0xf0] sm:$0xff]
  %v114 = vld [vmem:[%s3 + $0xf8] sm:$0xff]
  %v115 = vld [vmem:[%s3 + $0x100] sm:$0xff]
  %v116 = vld [vmem:[%s3 + $0x108] sm:$0xff]
  %v117 = vld [vmem:[%s3 + $0x110] sm:$0xff]
  %v118 = vld [vmem:[%s3 + $0x118] sm:$0xff]
  %v119 = vld [vmem:[%s3 + $0x120] sm:$0xff]
  %v120 = vld [vmem:[%s3 + $0x128] sm:$0xff]
  %v121 = vld [vmem:[%s3 + $0x130] sm:$0xff]
  %v122 = vld [vmem:[%s3 + $0x138] sm:$0xff]
  %v123 = vld [vmem:[%s3 + $0x140] sm:$0xff]
  %v124 = vld [vmem:[%s3 + $0x148] sm:$0xff]
  %v125 = vld [vmem:[%s3 + $0x150] sm:$0xff]
  %v126 = vld [vmem:[%s3 + $0x158] sm:$0xff]
  %v127 = vld [vmem:[%s3 + $0x160] sm:$0xff]
  %v128 = vld [vmem:[%s3 + $0x168] sm:$0xff]
  %v129 = vld [vmem:[%s3 + $0x170] sm:$0xff]
  %v130 = vld [vmem:[%s3 + $0x178] sm:$0xff]
  %v131 = vld [vmem:[%s3 + $0x180] sm:$0xff]
  %v132 = vld [vmem:[%s3 + $0x188] sm:$0xff]
  %v133 = vld [vmem:[%s3 + $0x190] sm:$0xff]
  %v134 = vld [vmem:[%s3 + $0x198] sm:$0xff]
  %v135 = vld [vmem:[%s3 + $0x1a0] sm:$0xff]
  %v136 = vld [vmem:[%s3 + $0x1a8] sm:$0xff]
  %v137 = vld [vmem:[%s3 + $0x1b0] sm:$0xff]
  %v138 = vld [vmem:[%s3 + $0x1b8] sm:$0xff]
  %v139 = vld [vmem:[%s3 + $0x1c0] sm:$0xff]
  %v140 = vld [vmem:[%s3 + $0x1c8] sm:$0xff]
  %v141 = vld [vmem:[%s3 + $0x1d0] sm:$0xff]
  %v142 = vld [vmem:[%s3 + $0x1d8] sm:$0xff]
  %v143 = vld [vmem:[%s3 + $0x1e0] sm:$0xff]
  %v144 = vld [vmem:[%s3 + $0x1e8] sm:$0xff]
  %v145 = vld [vmem:[%s3 + $0x1f0] sm:$0xff]
  %v146 = vld [vmem:[%s3 + $0x1f8] sm:$0xff]
  %v147 = vld [vmem:[%s0] sm:$0xff]
  %v148 = vld [vmem:[%s0 + $0x8] sm:$0xff]
  %v149 = vld [vmem:[%s0 + $0x10] sm:$0xff]
  %v150 = vld [vmem:[%s0 + $0x18] sm:$0xff]
  %v151 = vld [vmem:[%s0 + $0x20] sm:$0xff]
  %v152 = vld [vmem:[%s0 + $0x28] sm:$0xff]
  %v153 = vld [vmem:[%s0 + $0x30] sm:$0xff]
  %v154 = vld [vmem:[%s0 + $0x38] sm:$0xff]
  %v155 = vld [vmem:[%s0 + $0x40] sm:$0xff]
  %v156 = vld [vmem:[%s0 + $0x48] sm:$0xff]
  %v157 = vld [vmem:[%s0 + $0x50] sm:$0xff]
  %v158 = vld [vmem:[%s0 + $0x58] sm:$0xff]
  %v159 = vld [vmem:[%s0 + $0x60] sm:$0xff]
  %v160 = vld [vmem:[%s0 + $0x68] sm:$0xff]
  %v161 = vld [vmem:[%s0 + $0x70] sm:$0xff]
  %v162 = vld [vmem:[%s0 + $0x78] sm:$0xff]
  %v163 = vld [vmem:[%s0 + $0x80] sm:$0xff]
  %v164 = vld [vmem:[%s0 + $0x88] sm:$0xff]
  %v165 = vld [vmem:[%s0 + $0x90] sm:$0xff]
  %v166 = vld [vmem:[%s0 + $0x98] sm:$0xff]
  %v167 = vld [vmem:[%s0 + $0xa0] sm:$0xff]
  %v168 = vld [vmem:[%s0 + $0xa8] sm:$0xff]
  %v169 = vld [vmem:[%s0 + $0xb0] sm:$0xff]
  %v170 = vld [vmem:[%s0 + $0xb8] sm:$0xff]
  %v171 = vld [vmem:[%s0 + $0xc0] sm:$0xff]
  %v172 = vld [vmem:[%s0 + $0xc8] sm:$0xff]
  %v173 = vld [vmem:[%s0 + $0xd0] sm:$0xff]
  %v174 = vld [vmem:[%s0 + $0xd8] sm:$0xff]
  %v175 = vld [vmem:[%s0 + $0xe0] sm:$0xff]
  %v176 = vld [vmem:[%s0 + $0xe8] sm:$0xff]
  %v177 = vld [vmem:[%s0 + $0xf0] sm:$0xff]
  %v178 = vld [vmem:[%s0 + $0xf8] sm:$0xff]
  %v179 = vld [vmem:[%s0 + $0x100] sm:$0xff]
  %v180 = vld [vmem:[%s0 + $0x108] sm:$0xff]
  %v181 = vld [vmem:[%s0 + $0x110] sm:$0xff]
  %v182 = vld [vmem:[%s0 + $0x118] sm:$0xff]
  %v183 = vld [vmem:[%s0 + $0x120] sm:$0xff]
  %v184 = vld [vmem:[%s0 + $0x128] sm:$0xff]
  %v185 = vld [vmem:[%s0 + $0x130] sm:$0xff]
  %v186 = vld [vmem:[%s0 + $0x138] sm:$0xff]
  %v187 = vld [vmem:[%s0 + $0x140] sm:$0xff]
  %v188 = vld [vmem:[%s0 + $0x148] sm:$0xff]
  %v189 = vld [vmem:[%s0 + $0x150] sm:$0xff]
  %v190 = vld [vmem:[%s0 + $0x158] sm:$0xff]
  %v191 = vld [vmem:[%s0 + $0x160] sm:$0xff]
  %v192 = vld [vmem:[%s0 + $0x168] sm:$0xff]
  %v193 = vld [vmem:[%s0 + $0x170] sm:$0xff]
  %v194 = vld [vmem:[%s0 + $0x178] sm:$0xff]
  %v195 = vld [vmem:[%s0 + $0x180] sm:$0xff]
  %v196 = vld [vmem:[%s0 + $0x188] sm:$0xff]
  %v197 = vld [vmem:[%s0 + $0x190] sm:$0xff]
  %v198 = vld [vmem:[%s0 + $0x198] sm:$0xff]
  %v199 = vld [vmem:[%s0 + $0x1a0] sm:$0xff]
  %v200 = vld [vmem:[%s0 + $0x1a8] sm:$0xff]
  %v201 = vld [vmem:[%s0 + $0x1b0] sm:$0xff]
  %v202 = vld [vmem:[%s0 + $0x1b8] sm:$0xff]
  %v203 = vld [vmem:[%s0 + $0x1c0] sm:$0xff]
  %v204 = vld [vmem:[%s0 + $0x1c8] sm:$0xff]
  %v205 = vld [vmem:[%s0 + $0x1d0] sm:$0xff]
  %v206 = vld [vmem:[%s0 + $0x1d8] sm:$0xff]
  %v207 = vld [vmem:[%s0 + $0x1e0] sm:$0xff]
  %v208 = vld [vmem:[%s0 + $0x1e8] sm:$0xff]
  %v209 = vld [vmem:[%s0 + $0x1f0] sm:$0xff]
  %v210 = vld [vmem:[%s0 + $0x1f8] sm:$0xff]
  %v211 = vld [vmem:[%s1] sm:$0xf]
  %v212 = vld [vmem:[%s1 + $0x4] sm:$0xf]
  %v213 = vld [vmem:[%s1 + $0x8] sm:$0xf]
  %v214 = vld [vmem:[%s1 + $0xc] sm:$0xf]
  %v215 = vld [vmem:[%s1 + $0x10] sm:$0xf]
  %v216 = vld [vmem:[%s1 + $0x14] sm:$0xf]
  %v217 = vld [vmem:[%s1 + $0x18] sm:$0xf]
  %v218 = vld [vmem:[%s1 + $0x1c] sm:$0xf]
  %v219 = vld [vmem:[%s1 + $0x20] sm:$0xf]
  %v220 = vld [vmem:[%s1 + $0x24] sm:$0xf]
  %v221 = vld [vmem:[%s1 + $0x28] sm:$0xf]
  %v222 = vld [vmem:[%s1 + $0x2c] sm:$0xf]
  %v223 = vld [vmem:[%s1 + $0x30] sm:$0xf]
  %v224 = vld [vmem:[%s1 + $0x34] sm:$0xf]
  %v225 = vld [vmem:[%s1 + $0x38] sm:$0xf]
  %v226 = vld [vmem:[%s1 + $0x3c] sm:$0xf]
  %v227 = vld [vmem:[%s1 + $0x40] sm:$0xf]
  %v228 = vld [vmem:[%s1 + $0x44] sm:$0xf]
  %v229 = vld [vmem:[%s1 + $0x48] sm:$0xf]
  %v230 = vld [vmem:[%s1 + $0x4c] sm:$0xf]
  %v231 = vld [vmem:[%s1 + $0x50] sm:$0xf]
  %v232 = vld [vmem:[%s1 + $0x54] sm:$0xf]
  %v233 = vld [vmem:[%s1 + $0x58] sm:$0xf]
  %v234 = vld [vmem:[%s1 + $0x5c] sm:$0xf]
  %v235 = vld [vmem:[%s1 + $0x60] sm:$0xf]
  %v236 = vld [vmem:[%s1 + $0x64] sm:$0xf]
  %v237 = vld [vmem:[%s1 + $0x68] sm:$0xf]
  %v238 = vld [vmem:[%s1 + $0x6c] sm:$0xf]
  %v239 = vld [vmem:[%s1 + $0x70] sm:$0xf]
  %v240 = vld [vmem:[%s1 + $0x74] sm:$0xf]
  %v241 = vld [vmem:[%s1 + $0x78] sm:$0xf]
  %v242 = vld [vmem:[%s1 + $0x7c] sm:$0xf]
  %v307 = vunpack.c.l.b16 %v147
  %v308 = vunpack.c.h.b16 %v147
  %v309 = vunpack.c.l.b16 %v148
  %v310 = vunpack.c.h.b16 %v148
  %v311 = vunpack.c.l.b16 %v149
  %v312 = vunpack.c.h.b16 %v149
  %v313 = vunpack.c.l.b16 %v150
  %v314 = vunpack.c.h.b16 %v150
  %v315 = vunpack.c.l.b16 %v151
  %v316 = vunpack.c.h.b16 %v151
  %v317 = vunpack.c.l.b16 %v152
  %v318 = vunpack.c.h.b16 %v152
  %v319 = vunpack.c.l.b16 %v153
  %v320 = vunpack.c.h.b16 %v153
  %v321 = vunpack.c.l.b16 %v154
  %v322 = vunpack.c.h.b16 %v154
  %v323 = vunpack.c.l.b16 %v155
  %v324 = vunpack.c.h.b16 %v155
  %v325 = vunpack.c.l.b16 %v156
  %v326 = vunpack.c.h.b16 %v156
  %v327 = vunpack.c.l.b16 %v157
  %v328 = vunpack.c.h.b16 %v157
  %v329 = vunpack.c.l.b16 %v158
  %v330 = vunpack.c.h.b16 %v158
  %v331 = vunpack.c.l.b16 %v159
  %v332 = vunpack.c.h.b16 %v159
  %v333 = vunpack.c.l.b16 %v160
  %v334 = vunpack.c.h.b16 %v160
  %v335 = vunpack.c.l.b16 %v161
  %v336 = vunpack.c.h.b16 %v161
  %v337 = vunpack.c.l.b16 %v162
  %v338 = vunpack.c.h.b16 %v162
  %v339 = vunpack.c.l.b16 %v163
  %v340 = vunpack.c.h.b16 %v163
  %v341 = vunpack.c.l.b16 %v164
  %v342 = vunpack.c.h.b16 %v164
  %v343 = vunpack.c.l.b16 %v165
  %v344 = vunpack.c.h.b16 %v165
  %v345 = vunpack.c.l.b16 %v166
  %v346 = vunpack.c.h.b16 %v166
  %v347 = vunpack.c.l.b16 %v167
  %v348 = vunpack.c.h.b16 %v167
  %v349 = vunpack.c.l.b16 %v168
  %v350 = vunpack.c.h.b16 %v168
  %v351 = vunpack.c.l.b16 %v169
  %v352 = vunpack.c.h.b16 %v169
  %v353 = vunpack.c.l.b16 %v170
  %v354 = vunpack.c.h.b16 %v170
  %v355 = vunpack.c.l.b16 %v171
  %v356 = vunpack.c.h.b16 %v171
  %v357 = vunpack.c.l.b16 %v172
  %v358 = vunpack.c.h.b16 %v172
  %v359 = vunpack.c.l.b16 %v173
  %v360 = vunpack.c.h.b16 %v173
  %v361 = vunpack.c.l.b16 %v174
  %v362 = vunpack.c.h.b16 %v174
  %v363 = vunpack.c.l.b16 %v175
  %v364 = vunpack.c.h.b16 %v175
  %v365 = vunpack.c.l.b16 %v176
  %v366 = vunpack.c.h.b16 %v176
  %v367 = vunpack.c.l.b16 %v177
  %v368 = vunpack.c.h.b16 %v177
  %v369 = vunpack.c.l.b16 %v178
  %v370 = vunpack.c.h.b16 %v178
  %v371 = vunpack.c.l.b16 %v179
  %v372 = vunpack.c.h.b16 %v179
  %v373 = vunpack.c.l.b16 %v180
  %v374 = vunpack.c.h.b16 %v180
  %v375 = vunpack.c.l.b16 %v181
  %v376 = vunpack.c.h.b16 %v181
  %v377 = vunpack.c.l.b16 %v182
  %v378 = vunpack.c.h.b16 %v182
  %v379 = vunpack.c.l.b16 %v183
  %v380 = vunpack.c.h.b16 %v183
  %v381 = vunpack.c.l.b16 %v184
  %v382 = vunpack.c.h.b16 %v184
  %v383 = vunpack.c.l.b16 %v185
  %v384 = vunpack.c.h.b16 %v185
  %v385 = vunpack.c.l.b16 %v186
  %v386 = vunpack.c.h.b16 %v186
  %v387 = vunpack.c.l.b16 %v187
  %v388 = vunpack.c.h.b16 %v187
  %v389 = vunpack.c.l.b16 %v188
  %v390 = vunpack.c.h.b16 %v188
  %v391 = vunpack.c.l.b16 %v189
  %v392 = vunpack.c.h.b16 %v189
  %v393 = vunpack.c.l.b16 %v190
  %v394 = vunpack.c.h.b16 %v190
  %v395 = vunpack.c.l.b16 %v191
  %v396 = vunpack.c.h.b16 %v191
  %v397 = vunpack.c.l.b16 %v192
  %v398 = vunpack.c.h.b16 %v192
  %v399 = vunpack.c.l.b16 %v193
  %v400 = vunpack.c.h.b16 %v193
  %v401 = vunpack.c.l.b16 %v194
  %v402 = vunpack.c.h.b16 %v194
  %v403 = vunpack.c.l.b16 %v195
  %v404 = vunpack.c.h.b16 %v195
  %v405 = vunpack.c.l.b16 %v196
  %v406 = vunpack.c.h.b16 %v196
  %v407 = vunpack.c.l.b16 %v197
  %v408 = vunpack.c.h.b16 %v197
  %v409 = vunpack.c.l.b16 %v198
  %v410 = vunpack.c.h.b16 %v198
  %v411 = vunpack.c.l.b16 %v199
  %v412 = vunpack.c.h.b16 %v199
  %v413 = vunpack.c.l.b16 %v200
  %v414 = vunpack.c.h.b16 %v200
  %v415 = vunpack.c.l.b16 %v201
  %v416 = vunpack.c.h.b16 %v201
  %v417 = vunpack.c.l.b16 %v202
  %v418 = vunpack.c.h.b16 %v202
  %v419 = vunpack.c.l.b16 %v203
  %v420 = vunpack.c.h.b16 %v203
  %v421 = vunpack.c.l.b16 %v204
  %v422 = vunpack.c.h.b16 %v204
  %v423 = vunpack.c.l.b16 %v205
  %v424 = vunpack.c.h.b16 %v205
  %v425 = vunpack.c.l.b16 %v206
  %v426 = vunpack.c.h.b16 %v206
  %v427 = vunpack.c.l.b16 %v207
  %v428 = vunpack.c.h.b16 %v207
  %v429 = vunpack.c.l.b16 %v208
  %v430 = vunpack.c.h.b16 %v208
  %v431 = vunpack.c.l.b16 %v209
  %v432 = vunpack.c.h.b16 %v209
  %v433 = vunpack.c.l.b16 %v210
  %v434 = vunpack.c.h.b16 %v210
  %v435 = vpack.c.b16 %v309, %v307
  %v436 = vpack.c.b16 %v310, %v308
  %v437 = vpack.c.b16 %v313, %v311
  %v438 = vpack.c.b16 %v314, %v312
  %v439 = vpack.c.b16 %v317, %v315
  %v440 = vpack.c.b16 %v318, %v316
  %v441 = vpack.c.b16 %v321, %v319
  %v442 = vpack.c.b16 %v322, %v320
  %v443 = vpack.c.b16 %v325, %v323
  %v444 = vpack.c.b16 %v326, %v324
  %v445 = vpack.c.b16 %v329, %v327
  %v446 = vpack.c.b16 %v330, %v328
  %v447 = vpack.c.b16 %v333, %v331
  %v448 = vpack.c.b16 %v334, %v332
  %v449 = vpack.c.b16 %v337, %v335
  %v450 = vpack.c.b16 %v338, %v336
  %v451 = vpack.c.b16 %v341, %v339
  %v452 = vpack.c.b16 %v342, %v340
  %v453 = vpack.c.b16 %v345, %v343
  %v454 = vpack.c.b16 %v346, %v344
  %v455 = vpack.c.b16 %v349, %v347
  %v456 = vpack.c.b16 %v350, %v348
  %v457 = vpack.c.b16 %v353, %v351
  %v458 = vpack.c.b16 %v354, %v352
  %v459 = vpack.c.b16 %v357, %v355
  %v460 = vpack.c.b16 %v358, %v356
  %v461 = vpack.c.b16 %v361, %v359
  %v462 = vpack.c.b16 %v362, %v360
  %v463 = vpack.c.b16 %v365, %v363
  %v464 = vpack.c.b16 %v366, %v364
  %v465 = vpack.c.b16 %v369, %v367
  %v466 = vpack.c.b16 %v370, %v368
  %v467 = vpack.c.b16 %v373, %v371
  %v468 = vpack.c.b16 %v374, %v372
  %v469 = vpack.c.b16 %v377, %v375
  %v470 = vpack.c.b16 %v378, %v376
  %v471 = vpack.c.b16 %v381, %v379
  %v472 = vpack.c.b16 %v382, %v380
  %v473 = vpack.c.b16 %v385, %v383
  %v474 = vpack.c.b16 %v386, %v384
  %v475 = vpack.c.b16 %v389, %v387
  %v476 = vpack.c.b16 %v390, %v388
  %v477 = vpack.c.b16 %v393, %v391
  %v478 = vpack.c.b16 %v394, %v392
  %v479 = vpack.c.b16 %v397, %v395
  %v480 = vpack.c.b16 %v398, %v396
  %v481 = vpack.c.b16 %v401, %v399
  %v482 = vpack.c.b16 %v402, %v400
  %v483 = vpack.c.b16 %v405, %v403
  %v484 = vpack.c.b16 %v406, %v404
  %v485 = vpack.c.b16 %v409, %v407
  %v486 = vpack.c.b16 %v410, %v408
  %v487 = vpack.c.b16 %v413, %v411
  %v488 = vpack.c.b16 %v414, %v412
  %v489 = vpack.c.b16 %v417, %v415
  %v490 = vpack.c.b16 %v418, %v416
  %v491 = vpack.c.b16 %v421, %v419
  %v492 = vpack.c.b16 %v422, %v420
  %v493 = vpack.c.b16 %v425, %v423
  %v494 = vpack.c.b16 %v426, %v424
  %v495 = vpack.c.b16 %v429, %v427
  %v496 = vpack.c.b16 %v430, %v428
  %v497 = vpack.c.b16 %v433, %v431
  %v498 = vpack.c.b16 %v434, %v432
  %v595 = vunpack.c.l.b16 %v211
  %v596 = vunpack.c.l.b16 %v212
  %v597 = vunpack.c.l.b16 %v213
  %v598 = vunpack.c.l.b16 %v214
  %v599 = vunpack.c.l.b16 %v215
  %v600 = vunpack.c.l.b16 %v216
  %v601 = vunpack.c.l.b16 %v217
  %v602 = vunpack.c.l.b16 %v218
  %v603 = vunpack.c.l.b16 %v219
  %v604 = vunpack.c.l.b16 %v220
  %v605 = vunpack.c.l.b16 %v221
  %v606 = vunpack.c.l.b16 %v222
  %v607 = vunpack.c.l.b16 %v223
  %v608 = vunpack.c.l.b16 %v224
  %v609 = vunpack.c.l.b16 %v225
  %v610 = vunpack.c.l.b16 %v226
  %v611 = vunpack.c.l.b16 %v227
  %v612 = vunpack.c.l.b16 %v228
  %v613 = vunpack.c.l.b16 %v229
  %v614 = vunpack.c.l.b16 %v230
  %v615 = vunpack.c.l.b16 %v231
  %v616 = vunpack.c.l.b16 %v232
  %v617 = vunpack.c.l.b16 %v233
  %v618 = vunpack.c.l.b16 %v234
  %v619 = vunpack.c.l.b16 %v235
  %v620 = vunpack.c.l.b16 %v236
  %v621 = vunpack.c.l.b16 %v237
  %v622 = vunpack.c.l.b16 %v238
  %v623 = vunpack.c.l.b16 %v239
  %v624 = vunpack.c.l.b16 %v240
  %v625 = vunpack.c.l.b16 %v241
  %v626 = vunpack.c.l.b16 %v242
  %v627 = vpack.c.b16 %v596, %v595
  %v628 = vpack.c.b16 %v598, %v597
  %v629 = vpack.c.b16 %v600, %v599
  %v630 = vpack.c.b16 %v602, %v601
  %v631 = vpack.c.b16 %v604, %v603
  %v632 = vpack.c.b16 %v606, %v605
  %v633 = vpack.c.b16 %v608, %v607
  %v634 = vpack.c.b16 %v610, %v609
  %v635 = vpack.c.b16 %v612, %v611
  %v636 = vpack.c.b16 %v614, %v613
  %v637 = vpack.c.b16 %v616, %v615
  %v638 = vpack.c.b16 %v618, %v617
  %v639 = vpack.c.b16 %v620, %v619
  %v640 = vpack.c.b16 %v622, %v621
  %v641 = vpack.c.b16 %v624, %v623
  %v642 = vpack.c.b16 %v626, %v625
  %659 = vmatprep.subr.bf16.mxu0 0
  %660 = vmatpush1.bf16.msra.mxu0 %v627
  %661 = vmatprep.subr.bf16.mxu0 0
  %662 = vmatpush1.bf16.msra.mxu0 %v628
  %663 = vmatprep.subr.bf16.mxu0 0
  %664 = vmatpush1.bf16.msra.mxu0 %v629
  %665 = vmatprep.subr.bf16.mxu0 0
  %666 = vmatpush1.bf16.msra.mxu0 %v630
  %667 = vmatprep.subr.bf16.mxu0 0
  %668 = vmatpush1.bf16.msra.mxu0 %v631
  %669 = vmatprep.subr.bf16.mxu0 0
  %670 = vmatpush1.bf16.msra.mxu0 %v632
  %671 = vmatprep.subr.bf16.mxu0 0
  %672 = vmatpush1.bf16.msra.mxu0 %v633
  %673 = vmatprep.subr.bf16.mxu0 0
  %674 = vmatpush1.bf16.msra.mxu0 %v634
  %675 = vmatprep.subr.bf16.mxu0 0
  %676 = vmatpush1.bf16.msra.mxu0 %v635
  %677 = vmatprep.subr.bf16.mxu0 0
  %678 = vmatpush1.bf16.msra.mxu0 %v636
  %679 = vmatprep.subr.bf16.mxu0 0
  %680 = vmatpush1.bf16.msra.mxu0 %v637
  %681 = vmatprep.subr.bf16.mxu0 0
  %682 = vmatpush1.bf16.msra.mxu0 %v638
  %683 = vmatprep.subr.bf16.mxu0 0
  %684 = vmatpush1.bf16.msra.mxu0 %v639
  %685 = vmatprep.subr.bf16.mxu0 0
  %686 = vmatpush1.bf16.msra.mxu0 %v640
  %687 = vmatprep.subr.bf16.mxu0 0
  %688 = vmatpush1.bf16.msra.mxu0 %v641
  %689 = vmatprep.subr.bf16.mxu0 0
  %690 = vmatpush1.bf16.msra.mxu0 %v642
  %691 = vmatprep.mubr.bf16.mxu0 %v436
  %692 = vmatmul.mubr.bf16.gmra.mrb[0].mxu0 %v435
  %v693 = vpop.f32.mrb[0].mxu0
  %v694 = vadd.f32 0.0, %v693
  %v695 = vpop.f32.mrb[0].mxu0
  %v696 = vpop.f32.mrb[0].mxu0
  %v697 = vadd.f32 0.0, %v696
  %v698 = vpop.f32.mrb[0].mxu0
  %699 = vmatprep.mubr.bf16.mxu0 %v438
  %700 = vmatmul.mubr.bf16.gmra.mrb[0].mxu0 %v437
  %v701 = vpop.f32.mrb[0].mxu0
  %v702 = vadd.f32 0.0, %v701
  %v703 = vpop.f32.mrb[0].mxu0
  %v704 = vpop.f32.mrb[0].mxu0
  %v705 = vadd.f32 0.0, %v704
  %v706 = vpop.f32.mrb[0].mxu0
  %707 = vmatprep.mubr.bf16.mxu0 %v440
  %708 = vmatmul.mubr.bf16.gmra.mrb[0].mxu0 %v439
  %v709 = vpop.f32.mrb[0].mxu0
  %v710 = vadd.f32 0.0, %v709
  %v711 = vpop.f32.mrb[0].mxu0
  %v712 = vpop.f32.mrb[0].mxu0
  %v713 = vadd.f32 0.0, %v712
  %v714 = vpop.f32.mrb[0].mxu0
  %715 = vmatprep.mubr.bf16.mxu0 %v442
  %716 = vmatmul.mubr.bf16.gmra.mrb[0].mxu0 %v441
  %v717 = vpop.f32.mrb[0].mxu0
  %v718 = vadd.f32 0.0, %v717
  %v719 = vpop.f32.mrb[0].mxu0
  %v720 = vpop.f32.mrb[0].mxu0
  %v721 = vadd.f32 0.0, %v720
  %v722 = vpop.f32.mrb[0].mxu0
  %723 = vmatprep.mubr.bf16.mxu0 %v444
  %724 = vmatmul.mubr.bf16.gmra.mrb[0].mxu0 %v443
  %v725 = vpop.f32.mrb[0].mxu0
  %v726 = vadd.f32 0.0, %v725
  %v727 = vpop.f32.mrb[0].mxu0
  %v728 = vpop.f32.mrb[0].mxu0
  %v729 = vadd.f32 0.0, %v728
  %v730 = vpop.f32.mrb[0].mxu0
  %731 = vmatprep.mubr.bf16.mxu0 %v446
  %732 = vmatmul.mubr.bf16.gmra.mrb[0].mxu0 %v445
  %v733 = vpop.f32.mrb[0].mxu0
  %v734 = vadd.f32 0.0, %v733
  %v735 = vpop.f32.mrb[0].mxu0
  %v736 = vpop.f32.mrb[0].mxu0
  %v737 = vadd.f32 0.0, %v736
  %v738 = vpop.f32.mrb[0].mxu0
  %739 = vmatprep.mubr.bf16.mxu0 %v448
  %740 = vmatmul.mubr.bf16.gmra.mrb[0].mxu0 %v447
  %v741 = vpop.f32.mrb[0].mxu0
  %v742 = vadd.f32 0.0, %v741
  %v743 = vpop.f32.mrb[0].mxu0
  %v744 = vpop.f32.mrb[0].mxu0
  %v745 = vadd.f32 0.0, %v744
  %v746 = vpop.f32.mrb[0].mxu0
  %747 = vmatprep.mubr.bf16.mxu0 %v450
  %748 = vmatmul.mubr.bf16.gmra.mrb[0].mxu0 %v449
  %v749 = vpop.f32.mrb[0].mxu0
  %v750 = vadd.f32 0.0, %v749
  %v751 = vpop.f32.mrb[0].mxu0
  %v752 = vpop.f32.mrb[0].mxu0
  %v753 = vadd.f32 0.0, %v752
  %v754 = vpop.f32.mrb[0].mxu0
  %755 = vmatprep.mubr.bf16.mxu0 %v452
  %756 = vmatmul.mubr.bf16.gmra.mrb[0].mxu0 %v451
  %v757 = vpop.f32.mrb[0].mxu0
  %v758 = vadd.f32 0.0, %v757
  %v759 = vpop.f32.mrb[0].mxu0
  %v760 = vpop.f32.mrb[0].mxu0
  %v761 = vadd.f32 0.0, %v760
  %v762 = vpop.f32.mrb[0].mxu0
  %763 = vmatprep.mubr.bf16.mxu0 %v454
  %764 = vmatmul.mubr.bf16.gmra.mrb[0].mxu0 %v453
  %v765 = vpop.f32.mrb[0].mxu0
  %v766 = vadd.f32 0.0, %v765
  %v767 = vpop.f32.mrb[0].mxu0
  %v768 = vpop.f32.mrb[0].mxu0
  %v769 = vadd.f32 0.0, %v768
  %v770 = vpop.f32.mrb[0].mxu0
  %771 = vmatprep.mubr.bf16.mxu0 %v456
  %772 = vmatmul.mubr.bf16.gmra.mrb[0].mxu0 %v455
  %v773 = vpop.f32.mrb[0].mxu0
  %v774 = vadd.f32 0.0, %v773
  %v775 = vpop.f32.mrb[0].mxu0
  %v776 = vpop.f32.mrb[0].mxu0
  %v777 = vadd.f32 0.0, %v776
  %v778 = vpop.f32.mrb[0].mxu0
  %779 = vmatprep.mubr.bf16.mxu0 %v458
  %780 = vmatmul.mubr.bf16.gmra.mrb[0].mxu0 %v457
  %v781 = vpop.f32.mrb[0].mxu0
  %v782 = vadd.f32 0.0, %v781
  %v783 = vpop.f32.mrb[0].mxu0
  %v784 = vpop.f32.mrb[0].mxu0
  %v785 = vadd.f32 0.0, %v784
  %v786 = vpop.f32.mrb[0].mxu0
  %787 = vmatprep.mubr.bf16.mxu0 %v460
  %788 = vmatmul.mubr.bf16.gmra.mrb[0].mxu0 %v459
  %v789 = vpop.f32.mrb[0].mxu0
  %v790 = vadd.f32 0.0, %v789
  %v791 = vpop.f32.mrb[0].mxu0
  %v792 = vpop.f32.mrb[0].mxu0
  %v793 = vadd.f32 0.0, %v792
  %v794 = vpop.f32.mrb[0].mxu0
  %795 = vmatprep.mubr.bf16.mxu0 %v462
  %796 = vmatmul.mubr.bf16.gmra.mrb[0].mxu0 %v461
  %v797 = vpop.f32.mrb[0].mxu0
  %v798 = vadd.f32 0.0, %v797
  %v799 = vpop.f32.mrb[0].mxu0
  %v800 = vpop.f32.mrb[0].mxu0
  %v801 = vadd.f32 0.0, %v800
  %v802 = vpop.f32.mrb[0].mxu0
  %803 = vmatprep.mubr.bf16.mxu0 %v464
  %804 = vmatmul.mubr.bf16.gmra.mrb[0].mxu0 %v463
  %v805 = vpop.f32.mrb[0].mxu0
  %v806 = vadd.f32 0.0, %v805
  %v807 = vpop.f32.mrb[0].mxu0
  %v808 = vpop.f32.mrb[0].mxu0
  %v809 = vadd.f32 0.0, %v808
  %v810 = vpop.f32.mrb[0].mxu0
  %811 = vmatprep.mubr.bf16.mxu0 %v466
  %812 = vmatmul.mubr.bf16.gmra.mrb[0].mxu0 %v465
  %v813 = vpop.f32.mrb[0].mxu0
  %v814 = vadd.f32 0.0, %v813
  %v815 = vpop.f32.mrb[0].mxu0
  %v816 = vpop.f32.mrb[0].mxu0
  %v817 = vadd.f32 0.0, %v816
  %v818 = vpop.f32.mrb[0].mxu0
  %819 = vmatprep.mubr.bf16.mxu0 %v468
  %820 = vmatmul.mubr.bf16.gmra.mrb[0].mxu0 %v467
  %v821 = vpop.f32.mrb[0].mxu0
  %v822 = vadd.f32 0.0, %v821
  %v823 = vpop.f32.mrb[0].mxu0
  %v824 = vpop.f32.mrb[0].mxu0
  %v825 = vadd.f32 0.0, %v824
  %v826 = vpop.f32.mrb[0].mxu0
  %827 = vmatprep.mubr.bf16.mxu0 %v470
  %828 = vmatmul.mubr.bf16.gmra.mrb[0].mxu0 %v469
  %v829 = vpop.f32.mrb[0].mxu0
  %v830 = vadd.f32 0.0, %v829
  %v831 = vpop.f32.mrb[0].mxu0
  %v832 = vpop.f32.mrb[0].mxu0
  %v833 = vadd.f32 0.0, %v832
  %v834 = vpop.f32.mrb[0].mxu0
  %835 = vmatprep.mubr.bf16.mxu0 %v472
  %836 = vmatmul.mubr.bf16.gmra.mrb[0].mxu0 %v471
  %v837 = vpop.f32.mrb[0].mxu0
  %v838 = vadd.f32 0.0, %v837
  %v839 = vpop.f32.mrb[0].mxu0
  %v840 = vpop.f32.mrb[0].mxu0
  %v841 = vadd.f32 0.0, %v840
  %v842 = vpop.f32.mrb[0].mxu0
  %843 = vmatprep.mubr.bf16.mxu0 %v474
  %844 = vmatmul.mubr.bf16.gmra.mrb[0].mxu0 %v473
  %v845 = vpop.f32.mrb[0].mxu0
  %v846 = vadd.f32 0.0, %v845
  %v847 = vpop.f32.mrb[0].mxu0
  %v848 = vpop.f32.mrb[0].mxu0
  %v849 = vadd.f32 0.0, %v848
  %v850 = vpop.f32.mrb[0].mxu0
  %851 = vmatprep.mubr.bf16.mxu0 %v476
  %852 = vmatmul.mubr.bf16.gmra.mrb[0].mxu0 %v475
  %v853 = vpop.f32.mrb[0].mxu0
  %v854 = vadd.f32 0.0, %v853
  %v855 = vpop.f32.mrb[0].mxu0
  %v856 = vpop.f32.mrb[0].mxu0
  %v857 = vadd.f32 0.0, %v856
  %v858 = vpop.f32.mrb[0].mxu0
  %859 = vmatprep.mubr.bf16.mxu0 %v478
  %860 = vmatmul.mubr.bf16.gmra.mrb[0].mxu0 %v477
  %v861 = vpop.f32.mrb[0].mxu0
  %v862 = vadd.f32 0.0, %v861
  %v863 = vpop.f32.mrb[0].mxu0
  %v864 = vpop.f32.mrb[0].mxu0
  %v865 = vadd.f32 0.0, %v864
  %v866 = vpop.f32.mrb[0].mxu0
  %867 = vmatprep.mubr.bf16.mxu0 %v480
  %868 = vmatmul.mubr.bf16.gmra.mrb[0].mxu0 %v479
  %v869 = vpop.f32.mrb[0].mxu0
  %v870 = vadd.f32 0.0, %v869
  %v871 = vpop.f32.mrb[0].mxu0
  %v872 = vpop.f32.mrb[0].mxu0
  %v873 = vadd.f32 0.0, %v872
  %v874 = vpop.f32.mrb[0].mxu0
  %875 = vmatprep.mubr.bf16.mxu0 %v482
  %876 = vmatmul.mubr.bf16.gmra.mrb[0].mxu0 %v481
  %v877 = vpop.f32.mrb[0].mxu0
  %v878 = vadd.f32 0.0, %v877
  %v879 = vpop.f32.mrb[0].mxu0
  %v880 = vpop.f32.mrb[0].mxu0
  %v881 = vadd.f32 0.0, %v880
  %v882 = vpop.f32.mrb[0].mxu0
  %883 = vmatprep.mubr.bf16.mxu0 %v484
  %884 = vmatmul.mubr.bf16.gmra.mrb[0].mxu0 %v483
  %v885 = vpop.f32.mrb[0].mxu0
  %v886 = vadd.f32 0.0, %v885
  %v887 = vpop.f32.mrb[0].mxu0
  %v888 = vpop.f32.mrb[0].mxu0
  %v889 = vadd.f32 0.0, %v888
  %v890 = vpop.f32.mrb[0].mxu0
  %891 = vmatprep.mubr.bf16.mxu0 %v486
  %892 = vmatmul.mubr.bf16.gmra.mrb[0].mxu0 %v485
  %v893 = vpop.f32.mrb[0].mxu0
  %v894 = vadd.f32 0.0, %v893
  %v895 = vpop.f32.mrb[0].mxu0
  %v896 = vpop.f32.mrb[0].mxu0
  %v897 = vadd.f32 0.0, %v896
  %v898 = vpop.f32.mrb[0].mxu0
  %899 = vmatprep.mubr.bf16.mxu0 %v488
  %900 = vmatmul.mubr.bf16.gmra.mrb[0].mxu0 %v487
  %v901 = vpop.f32.mrb[0].mxu0
  %v902 = vadd.f32 0.0, %v901
  %v903 = vpop.f32.mrb[0].mxu0
  %v904 = vpop.f32.mrb[0].mxu0
  %v905 = vadd.f32 0.0, %v904
  %v906 = vpop.f32.mrb[0].mxu0
  %907 = vmatprep.mubr.bf16.mxu0 %v490
  %908 = vmatmul.mubr.bf16.gmra.mrb[0].mxu0 %v489
  %v909 = vpop.f32.mrb[0].mxu0
  %v910 = vadd.f32 0.0, %v909
  %v911 = vpop.f32.mrb[0].mxu0
  %v912 = vpop.f32.mrb[0].mxu0
  %v913 = vadd.f32 0.0, %v912
  %v914 = vpop.f32.mrb[0].mxu0
  %915 = vmatprep.mubr.bf16.mxu0 %v492
  %916 = vmatmul.mubr.bf16.gmra.mrb[0].mxu0 %v491
  %v917 = vpop.f32.mrb[0].mxu0
  %v918 = vadd.f32 0.0, %v917
  %v919 = vpop.f32.mrb[0].mxu0
  %v920 = vpop.f32.mrb[0].mxu0
  %v921 = vadd.f32 0.0, %v920
  %v922 = vpop.f32.mrb[0].mxu0
  %923 = vmatprep.mubr.bf16.mxu0 %v494
  %924 = vmatmul.mubr.bf16.gmra.mrb[0].mxu0 %v493
  %v925 = vpop.f32.mrb[0].mxu0
  %v926 = vadd.f32 0.0, %v925
  %v927 = vpop.f32.mrb[0].mxu0
  %v928 = vpop.f32.mrb[0].mxu0
  %v929 = vadd.f32 0.0, %v928
  %v930 = vpop.f32.mrb[0].mxu0
  %931 = vmatprep.mubr.bf16.mxu0 %v496
  %932 = vmatmul.mubr.bf16.gmra.mrb[0].mxu0 %v495
  %v933 = vpop.f32.mrb[0].mxu0
  %v934 = vadd.f32 0.0, %v933
  %v935 = vpop.f32.mrb[0].mxu0
  %v936 = vpop.f32.mrb[0].mxu0
  %v937 = vadd.f32 0.0, %v936
  %v938 = vpop.f32.mrb[0].mxu0
  %939 = vmatprep.mubr.bf16.mxu0 %v498
  %940 = vmatmul.mubr.bf16.gmra.mrb[0].mxu0 %v497
  %v941 = vpop.f32.mrb[0].mxu0
  %v942 = vadd.f32 0.0, %v941
  %v943 = vpop.f32.mrb[0].mxu0
  %v944 = vpop.f32.mrb[0].mxu0
  %v945 = vadd.f32 0.0, %v944
  %v946 = vpop.f32.mrb[0].mxu0
  %947 = vdwg.mxu0
  %v948 = vadd.f32 %v83, %v694
  %v949 = vadd.f32 %v84, %v697
  %v950 = vadd.f32 %v85, %v702
  %v951 = vadd.f32 %v86, %v705
  %v952 = vadd.f32 %v87, %v710
  %v953 = vadd.f32 %v88, %v713
  %v954 = vadd.f32 %v89, %v718
  %v955 = vadd.f32 %v90, %v721
  %v956 = vadd.f32 %v91, %v726
  %v957 = vadd.f32 %v92, %v729
  %v958 = vadd.f32 %v93, %v734
  %v959 = vadd.f32 %v94, %v737
  %v960 = vadd.f32 %v95, %v742
  %v961 = vadd.f32 %v96, %v745
  %v962 = vadd.f32 %v97, %v750
  %v963 = vadd.f32 %v98, %v753
  %v964 = vadd.f32 %v99, %v758
  %v965 = vadd.f32 %v100, %v761
  %v966 = vadd.f32 %v101, %v766
  %v967 = vadd.f32 %v102, %v769
  %v968 = vadd.f32 %v103, %v774
  %v969 = vadd.f32 %v104, %v777
  %v970 = vadd.f32 %v105, %v782
  %v971 = vadd.f32 %v106, %v785
  %v972 = vadd.f32 %v107, %v790
  %v973 = vadd.f32 %v108, %v793
  %v974 = vadd.f32 %v109, %v798
  %v975 = vadd.f32 %v110, %v801
  %v976 = vadd.f32 %v111, %v806
  %v977 = vadd.f32 %v112, %v809
  %v978 = vadd.f32 %v113, %v814
  %v979 = vadd.f32 %v114, %v817
  %v980 = vadd.f32 %v115, %v822
  %v981 = vadd.f32 %v116, %v825
  %v982 = vadd.f32 %v117, %v830
  %v983 = vadd.f32 %v118, %v833
  %v984 = vadd.f32 %v119, %v838
  %v985 = vadd.f32 %v120, %v841
  %v986 = vadd.f32 %v121, %v846
  %v987 = vadd.f32 %v122, %v849
  %v988 = vadd.f32 %v123, %v854
  %v989 = vadd.f32 %v124, %v857
  %v990 = vadd.f32 %v125, %v862
  %v991 = vadd.f32 %v126, %v865
  %v992 = vadd.f32 %v127, %v870
  %v993 = vadd.f32 %v128, %v873
  %v994 = vadd.f32 %v129, %v878
  %v995 = vadd.f32 %v130, %v881
  %v996 = vadd.f32 %v131, %v886
  %v997 = vadd.f32 %v132, %v889
  %v998 = vadd.f32 %v133, %v894
  %v999 = vadd.f32 %v134, %v897
  %v1000 = vadd.f32 %v135, %v902
  %v1001 = vadd.f32 %v136, %v905
  %v1002 = vadd.f32 %v137, %v910
  %v1003 = vadd.f32 %v138, %v913
  %v1004 = vadd.f32 %v139, %v918
  %v1005 = vadd.f32 %v140, %v921
  %v1006 = vadd.f32 %v141, %v926
  %v1007 = vadd.f32 %v142, %v929
  %v1008 = vadd.f32 %v143, %v934
  %v1009 = vadd.f32 %v144, %v937
  %v1010 = vadd.f32 %v145, %v942
  %v1011 = vadd.f32 %v146, %v945
  %1012 = vst [vmem:[%s3] sm:$0xff] %v948
  %1013 = vst [vmem:[%s3 + $0x8] sm:$0xff] %v949
  %1014 = vst [vmem:[%s3 + $0x10] sm:$0xff] %v950
  %1015 = vst [vmem:[%s3 + $0x18] sm:$0xff] %v951
  %1016 = vst [vmem:[%s3 + $0x20] sm:$0xff] %v952
  %1017 = vst [vmem:[%s3 + $0x28] sm:$0xff] %v953
  %1018 = vst [vmem:[%s3 + $0x30] sm:$0xff] %v954
  %1019 = vst [vmem:[%s3 + $0x38] sm:$0xff] %v955
  %1020 = vst [vmem:[%s3 + $0x40] sm:$0xff] %v956
  %1021 = vst [vmem:[%s3 + $0x48] sm:$0xff] %v957
  %1022 = vst [vmem:[%s3 + $0x50] sm:$0xff] %v958
  %1023 = vst [vmem:[%s3 + $0x58] sm:$0xff] %v959
  %1024 = vst [vmem:[%s3 + $0x60] sm:$0xff] %v960
  %1025 = vst [vmem:[%s3 + $0x68] sm:$0xff] %v961
  %1026 = vst [vmem:[%s3 + $0x70] sm:$0xff] %v962
  %1027 = vst [vmem:[%s3 + $0x78] sm:$0xff] %v963
  %1028 = vst [vmem:[%s3 + $0x80] sm:$0xff] %v964
  %1029 = vst [vmem:[%s3 + $0x88] sm:$0xff] %v965
  %1030 = vst [vmem:[%s3 + $0x90] sm:$0xff] %v966
  %1031 = vst [vmem:[%s3 + $0x98] sm:$0xff] %v967
  %1032 = vst [vmem:[%s3 + $0xa0] sm:$0xff] %v968
  %1033 = vst [vmem:[%s3 + $0xa8] sm:$0xff] %v969
  %1034 = vst [vmem:[%s3 + $0xb0] sm:$0xff] %v970
  %1035 = vst [vmem:[%s3 + $0xb8] sm:$0xff] %v971
  %1036 = vst [vmem:[%s3 + $0xc0] sm:$0xff] %v972
  %1037 = vst [vmem:[%s3 + $0xc8] sm:$0xff] %v973
  %1038 = vst [vmem:[%s3 + $0xd0] sm:$0xff] %v974
  %1039 = vst [vmem:[%s3 + $0xd8] sm:$0xff] %v975
  %1040 = vst [vmem:[%s3 + $0xe0] sm:$0xff] %v976
  %1041 = vst [vmem:[%s3 + $0xe8] sm:$0xff] %v977
  %1042 = vst [vmem:[%s3 + $0xf0] sm:$0xff] %v978
  %1043 = vst [vmem:[%s3 + $0xf8] sm:$0xff] %v979
  %1044 = vst [vmem:[%s3 + $0x100] sm:$0xff] %v980
  %1045 = vst [vmem:[%s3 + $0x108] sm:$0xff] %v981
  %1046 = vst [vmem:[%s3 + $0x110] sm:$0xff] %v982
  %1047 = vst [vmem:[%s3 + $0x118] sm:$0xff] %v983
  %1048 = vst [vmem:[%s3 + $0x120] sm:$0xff] %v984
  %1049 = vst [vmem:[%s3 + $0x128] sm:$0xff] %v985
  %1050 = vst [vmem:[%s3 + $0x130] sm:$0xff] %v986
  %1051 = vst [vmem:[%s3 + $0x138] sm:$0xff] %v987
  %1052 = vst [vmem:[%s3 + $0x140] sm:$0xff] %v988
  %1053 = vst [vmem:[%s3 + $0x148] sm:$0xff] %v989
  %1054 = vst [vmem:[%s3 + $0x150] sm:$0xff] %v990
  %1055 = vst [vmem:[%s3 + $0x158] sm:$0xff] %v991
  %1056 = vst [vmem:[%s3 + $0x160] sm:$0xff] %v992
  %1057 = vst [vmem:[%s3 + $0x168] sm:$0xff] %v993
  %1058 = vst [vmem:[%s3 + $0x170] sm:$0xff] %v994
  %1059 = vst [vmem:[%s3 + $0x178] sm:$0xff] %v995
  %1060 = vst [vmem:[%s3 + $0x180] sm:$0xff] %v996
  %1061 = vst [vmem:[%s3 + $0x188] sm:$0xff] %v997
  %1062 = vst [vmem:[%s3 + $0x190] sm:$0xff] %v998
  %1063 = vst [vmem:[%s3 + $0x198] sm:$0xff] %v999
  %1064 = vst [vmem:[%s3 + $0x1a0] sm:$0xff] %v1000
  %1065 = vst [vmem:[%s3 + $0x1a8] sm:$0xff] %v1001
  %1066 = vst [vmem:[%s3 + $0x1b0] sm:$0xff] %v1002
  %1067 = vst [vmem:[%s3 + $0x1b8] sm:$0xff] %v1003
  %1068 = vst [vmem:[%s3 + $0x1c0] sm:$0xff] %v1004
  %1069 = vst [vmem:[%s3 + $0x1c8] sm:$0xff] %v1005
  %1070 = vst [vmem:[%s3 + $0x1d0] sm:$0xff] %v1006
  %1071 = vst [vmem:[%s3 + $0x1d8] sm:$0xff] %v1007
  %1072 = vst [vmem:[%s3 + $0x1e0] sm:$0xff] %v1008
  %1073 = vst [vmem:[%s3 + $0x1e8] sm:$0xff] %v1009
  %1074 = vst [vmem:[%s3 + $0x1f0] sm:$0xff] %v1010
  %1075 = vst [vmem:[%s3 + $0x1f8] sm:$0xff] %v1011
  // Predicated region
  $region18: #{edgenet.49} parent=0 // pred_check
    %p1076 = pneg %p15
  $region19: #{edgenet.49} parent=0 // pred_check_branch
    %1078 = sbr.rel (%p1076) target = $region21
  $region20: #{edgenet.49} parent=0 // pred_region
    %v1079 = vld [vmem:[%s3] sm:$0xff]
    %v1080 = vld [vmem:[%s3 + $0x8] sm:$0xff]
    %v1081 = vld [vmem:[%s3 + $0x10] sm:$0xff]
    %v1082 = vld [vmem:[%s3 + $0x18] sm:$0xff]
    %v1083 = vld [vmem:[%s3 + $0x20] sm:$0xff]
    %v1084 = vld [vmem:[%s3 + $0x28] sm:$0xff]
    %v1085 = vld [vmem:[%s3 + $0x30] sm:$0xff]
    %v1086 = vld [vmem:[%s3 + $0x38] sm:$0xff]
    %v1087 = vld [vmem:[%s3 + $0x40] sm:$0xff]
    %v1088 = vld [vmem:[%s3 + $0x48] sm:$0xff]
    %v1089 = vld [vmem:[%s3 + $0x50] sm:$0xff]
    %v1090 = vld [vmem:[%s3 + $0x58] sm:$0xff]
    %v1091 = vld [vmem:[%s3 + $0x60] sm:$0xff]
    %v1092 = vld [vmem:[%s3 + $0x68] sm:$0xff]
    %v1093 = vld [vmem:[%s3 + $0x70] sm:$0xff]
    %v1094 = vld [vmem:[%s3 + $0x78] sm:$0xff]
    %v1095 = vld [vmem:[%s3 + $0x80] sm:$0xff]
    %v1096 = vld [vmem:[%s3 + $0x88] sm:$0xff]
    %v1097 = vld [vmem:[%s3 + $0x90] sm:$0xff]
    %v1098 = vld [vmem:[%s3 + $0x98] sm:$0xff]
    %v1099 = vld [vmem:[%s3 + $0xa0] sm:$0xff]
    %v1100 = vld [vmem:[%s3 + $0xa8] sm:$0xff]
    %v1101 = vld [vmem:[%s3 + $0xb0] sm:$0xff]
    %v1102 = vld [vmem:[%s3 + $0xb8] sm:$0xff]
    %v1103 = vld [vmem:[%s3 + $0xc0] sm:$0xff]
    %v1104 = vld [vmem:[%s3 + $0xc8] sm:$0xff]
    %v1105 = vld [vmem:[%s3 + $0xd0] sm:$0xff]
    %v1106 = vld [vmem:[%s3 + $0xd8] sm:$0xff]
    %v1107 = vld [vmem:[%s3 + $0xe0] sm:$0xff]
    %v1108 = vld [vmem:[%s3 + $0xe8] sm:$0xff]
    %v1109 = vld [vmem:[%s3 + $0xf0] sm:$0xff]
    %v1110 = vld [vmem:[%s3 + $0xf8] sm:$0xff]
    %v1111 = vld [vmem:[%s3 + $0x100] sm:$0xff]
    %v1112 = vld [vmem:[%s3 + $0x108] sm:$0xff]
    %v1113 = vld [vmem:[%s3 + $0x110] sm:$0xff]
    %v1114 = vld [vmem:[%s3 + $0x118] sm:$0xff]
    %v1115 = vld [vmem:[%s3 + $0x120] sm:$0xff]
    %v1116 = vld [vmem:[%s3 + $0x128] sm:$0xff]
    %v1117 = vld [vmem:[%s3 + $0x130] sm:$0xff]
    %v1118 = vld [vmem:[%s3 + $0x138] sm:$0xff]
    %v1119 = vld [vmem:[%s3 + $0x140] sm:$0xff]
    %v1120 = vld [vmem:[%s3 + $0x148] sm:$0xff]
    %v1121 = vld [vmem:[%s3 + $0x150] sm:$0xff]
    %v1122 = vld [vmem:[%s3 + $0x158] sm:$0xff]
    %v1123 = vld [vmem:[%s3 + $0x160] sm:$0xff]
    %v1124 = vld [vmem:[%s3 + $0x168] sm:$0xff]
    %v1125 = vld [vmem:[%s3 + $0x170] sm:$0xff]
    %v1126 = vld [vmem:[%s3 + $0x178] sm:$0xff]
    %v1127 = vld [vmem:[%s3 + $0x180] sm:$0xff]
    %v1128 = vld [vmem:[%s3 + $0x188] sm:$0xff]
    %v1129 = vld [vmem:[%s3 + $0x190] sm:$0xff]
    %v1130 = vld [vmem:[%s3 + $0x198] sm:$0xff]
    %v1131 = vld [vmem:[%s3 + $0x1a0] sm:$0xff]
    %v1132 = vld [vmem:[%s3 + $0x1a8] sm:$0xff]
    %v1133 = vld [vmem:[%s3 + $0x1b0] sm:$0xff]
    %v1134 = vld [vmem:[%s3 + $0x1b8] sm:$0xff]
    %v1135 = vld [vmem:[%s3 + $0x1c0] sm:$0xff]
    %v1136 = vld [vmem:[%s3 + $0x1c8] sm:$0xff]
    %v1137 = vld [vmem:[%s3 + $0x1d0] sm:$0xff]
    %v1138 = vld [vmem:[%s3 + $0x1d8] sm:$0xff]
    %v1139 = vld [vmem:[%s3 + $0x1e0] sm:$0xff]
    %v1140 = vld [vmem:[%s3 + $0x1e8] sm:$0xff]
    %v1141 = vld [vmem:[%s3 + $0x1f0] sm:$0xff]
    %v1142 = vld [vmem:[%s3 + $0x1f8] sm:$0xff]
    %v1143 = vld [vmem:[%s2] sm:$0x1]
    %v1145 = vlaneseq
    %v1146 = vshrl.u32 %v1145, 7
    %v1147 = vsub.s32 0, %v1146
    %v1148 = vrot.slane %v1143, %v1147
    %v1150 = vadd.f32 %v1079, %v1148
    %v1151 = vadd.f32 %v1080, %v1148
    %v1152 = vadd.f32 %v1081, %v1148
    %v1153 = vadd.f32 %v1082, %v1148
    %v1154 = vadd.f32 %v1083, %v1148
    %v1155 = vadd.f32 %v1084, %v1148
    %v1156 = vadd.f32 %v1085, %v1148
    %v1157 = vadd.f32 %v1086, %v1148
    %v1158 = vadd.f32 %v1087, %v1148
    %v1159 = vadd.f32 %v1088, %v1148
    %v1160 = vadd.f32 %v1089, %v1148
    %v1161 = vadd.f32 %v1090, %v1148
    %v1162 = vadd.f32 %v1091, %v1148
    %v1163 = vadd.f32 %v1092, %v1148
    %v1164 = vadd.f32 %v1093, %v1148
    %v1165 = vadd.f32 %v1094, %v1148
    %v1166 = vadd.f32 %v1095, %v1148
    %v1167 = vadd.f32 %v1096, %v1148
    %v1168 = vadd.f32 %v1097, %v1148
    %v1169 = vadd.f32 %v1098, %v1148
    %v1170 = vadd.f32 %v1099, %v1148
    %v1171 = vadd.f32 %v1100, %v1148
    %v1172 = vadd.f32 %v1101, %v1148
    %v1173 = vadd.f32 %v1102, %v1148
    %v1174 = vadd.f32 %v1103, %v1148
    %v1175 = vadd.f32 %v1104, %v1148
    %v1176 = vadd.f32 %v1105, %v1148
    %v1177 = vadd.f32 %v1106, %v1148
    %v1178 = vadd.f32 %v1107, %v1148
    %v1179 = vadd.f32 %v1108, %v1148
    %v1180 = vadd.f32 %v1109, %v1148
    %v1181 = vadd.f32 %v1110, %v1148
    %v1182 = vadd.f32 %v1111, %v1148
    %v1183 = vadd.f32 %v1112, %v1148
    %v1184 = vadd.f32 %v1113, %v1148
    %v1185 = vadd.f32 %v1114, %v1148
    %v1186 = vadd.f32 %v1115, %v1148
    %v1187 = vadd.f32 %v1116, %v1148
    %v1188 = vadd.f32 %v1117, %v1148
    %v1189 = vadd.f32 %v1118, %v1148
    %v1190 = vadd.f32 %v1119, %v1148
    %v1191 = vadd.f32 %v1120, %v1148
    %v1192 = vadd.f32 %v1121, %v1148
    %v1193 = vadd.f32 %v1122, %v1148
    %v1194 = vadd.f32 %v1123, %v1148
    %v1195 = vadd.f32 %v1124, %v1148
    %v1196 = vadd.f32 %v1125, %v1148
    %v1197 = vadd.f32 %v1126, %v1148
    %v1198 = vadd.f32 %v1127, %v1148
    %v1199 = vadd.f32 %v1128, %v1148
    %v1200 = vadd.f32 %v1129, %v1148
    %v1201 = vadd.f32 %v1130, %v1148
    %v1202 = vadd.f32 %v1131, %v1148
    %v1203 = vadd.f32 %v1132, %v1148
    %v1204 = vadd.f32 %v1133, %v1148
    %v1205 = vadd.f32 %v1134, %v1148
    %v1206 = vadd.f32 %v1135, %v1148
    %v1207 = vadd.f32 %v1136, %v1148
    %v1208 = vadd.f32 %v1137, %v1148
    %v1209 = vadd.f32 %v1138, %v1148
    %v1210 = vadd.f32 %v1139, %v1148
    %v1211 = vadd.f32 %v1140, %v1148
    %v1212 = vadd.f32 %v1141, %v1148
    %v1213 = vadd.f32 %v1142, %v1148
    %1214 = vst [vmem:[%s3] sm:$0xff] %v1150
    %1215 = vst [vmem:[%s3 + $0x8] sm:$0xff] %v1151
    %1216 = vst [vmem:[%s3 + $0x10] sm:$0xff] %v1152
    %1217 = vst [vmem:[%s3 + $0x18] sm:$0xff] %v1153
    %1218 = vst [vmem:[%s3 + $0x20] sm:$0xff] %v1154
    %1219 = vst [vmem:[%s3 + $0x28] sm:$0xff] %v1155
    %1220 = vst [vmem:[%s3 + $0x30] sm:$0xff] %v1156
    %1221 = vst [vmem:[%s3 + $0x38] sm:$0xff] %v1157
    %1222 = vst [vmem:[%s3 + $0x40] sm:$0xff] %v1158
    %1223 = vst [vmem:[%s3 + $0x48] sm:$0xff] %v1159
    %1224 = vst [vmem:[%s3 + $0x50] sm:$0xff] %v1160
    %1225 = vst [vmem:[%s3 + $0x58] sm:$0xff] %v1161
    %1226 = vst [vmem:[%s3 + $0x60] sm:$0xff] %v1162
    %1227 = vst [vmem:[%s3 + $0x68] sm:$0xff] %v1163
    %1228 = vst [vmem:[%s3 + $0x70] sm:$0xff] %v1164
    %1229 = vst [vmem:[%s3 + $0x78] sm:$0xff] %v1165
    %1230 = vst [vmem:[%s3 + $0x80] sm:$0xff] %v1166
    %1231 = vst [vmem:[%s3 + $0x88] sm:$0xff] %v1167
    %1232 = vst [vmem:[%s3 + $0x90] sm:$0xff] %v1168
    %1233 = vst [vmem:[%s3 + $0x98] sm:$0xff] %v1169
    %1234 = vst [vmem:[%s3 + $0xa0] sm:$0xff] %v1170
    %1235 = vst [vmem:[%s3 + $0xa8] sm:$0xff] %v1171
    %1236 = vst [vmem:[%s3 + $0xb0] sm:$0xff] %v1172
    %1237 = vst [vmem:[%s3 + $0xb8] sm:$0xff] %v1173
    %1238 = vst [vmem:[%s3 + $0xc0] sm:$0xff] %v1174
    %1239 = vst [vmem:[%s3 + $0xc8] sm:$0xff] %v1175
    %1240 = vst [vmem:[%s3 + $0xd0] sm:$0xff] %v1176
    %1241 = vst [vmem:[%s3 + $0xd8] sm:$0xff] %v1177
    %1242 = vst [vmem:[%s3 + $0xe0] sm:$0xff] %v1178
    %1243 = vst [vmem:[%s3 + $0xe8] sm:$0xff] %v1179
    %1244 = vst [vmem:[%s3 + $0xf0] sm:$0xff] %v1180
    %1245 = vst [vmem:[%s3 + $0xf8] sm:$0xff] %v1181
    %1246 = vst [vmem:[%s3 + $0x100] sm:$0xff] %v1182
    %1247 = vst [vmem:[%s3 + $0x108] sm:$0xff] %v1183
    %1248 = vst [vmem:[%s3 + $0x110] sm:$0xff] %v1184
    %1249 = vst [vmem:[%s3 + $0x118] sm:$0xff] %v1185
    %1250 = vst [vmem:[%s3 + $0x120] sm:$0xff] %v1186
    %1251 = vst [vmem:[%s3 + $0x128] sm:$0xff] %v1187
    %1252 = vst [vmem:[%s3 + $0x130] sm:$0xff] %v1188
    %1253 = vst [vmem:[%s3 + $0x138] sm:$0xff] %v1189
    %1254 = vst [vmem:[%s3 + $0x140] sm:$0xff] %v1190
    %1255 = vst [vmem:[%s3 + $0x148] sm:$0xff] %v1191
    %1256 = vst [vmem:[%s3 + $0x150] sm:$0xff] %v1192
    %1257 = vst [vmem:[%s3 + $0x158] sm:$0xff] %v1193
    %1258 = vst [vmem:[%s3 + $0x160] sm:$0xff] %v1194
    %1259 = vst [vmem:[%s3 + $0x168] sm:$0xff] %v1195
    %1260 = vst [vmem:[%s3 + $0x170] sm:$0xff] %v1196
    %1261 = vst [vmem:[%s3 + $0x178] sm:$0xff] %v1197
    %1262 = vst [vmem:[%s3 + $0x180] sm:$0xff] %v1198
    %1263 = vst [vmem:[%s3 + $0x188] sm:$0xff] %v1199
    %1264 = vst [vmem:[%s3 + $0x190] sm:$0xff] %v1200
    %1265 = vst [vmem:[%s3 + $0x198] sm:$0xff] %v1201
    %1266 = vst [vmem:[%s3 + $0x1a0] sm:$0xff] %v1202
    %1267 = vst [vmem:[%s3 + $0x1a8] sm:$0xff] %v1203
    %1268 = vst [vmem:[%s3 + $0x1b0] sm:$0xff] %v1204
    %1269 = vst [vmem:[%s3 + $0x1b8] sm:$0xff] %v1205
    %1270 = vst [vmem:[%s3 + $0x1c0] sm:$0xff] %v1206
    %1271 = vst [vmem:[%s3 + $0x1c8] sm:$0xff] %v1207
    %1272 = vst [vmem:[%s3 + $0x1d0] sm:$0xff] %v1208
    %1273 = vst [vmem:[%s3 + $0x1d8] sm:$0xff] %v1209
    %1274 = vst [vmem:[%s3 + $0x1e0] sm:$0xff] %v1210
    %1275 = vst [vmem:[%s3 + $0x1e8] sm:$0xff] %v1211
    %1276 = vst [vmem:[%s3 + $0x1f0] sm:$0xff] %v1212
    %1277 = vst [vmem:[%s3 + $0x1f8] sm:$0xff] %v1213
  $region21: #{edgenet.49} parent=0 // pred_fallthru
    _
  // Predicated region
  $region22: #{edgenet.49} parent=0 // pred_check
    _
  $region23: #{edgenet.49} parent=0 // pred_check_branch
    %1279 = sbr.rel (0) target = $region25
  $region24: #{edgenet.49} parent=0 // pred_region
    _
  $region25: #{edgenet.49} parent=0 // pred_fallthru
    _
  // Predicated region
  $region26: #{edgenet.49} parent=0 // pred_check
    _
  $region27: #{edgenet.49} parent=0 // pred_check_branch
    %1281 = sbr.rel (0) target = $region29
  $region28: #{edgenet.49} parent=0 // pred_region
    _
  $region29: #{edgenet.49} parent=0 // pred_fallthru
    _

// kernel: edgenet.51
$region0: #{edgenet.51}
  #allocation0 [shape = 'u32[]', space=smem, size = 0x4, offset = 0x4, fixed_abs, tag = 'smem constant byte address 0x4 - core index']
  #allocation1 [shape = 'u32[144,128]{1,0:T(1,128)}', space=vmem, size = 0x12000, scoped, tag = 'internal scratch']
  %s0 = inlined_call_operand.vmem [shape: bf16[128,1024], index: 0, kind: input, shape index: {}]
  %s1 = inlined_call_operand.vmem [shape: bf16[1024,128], index: 1, kind: input, shape index: {}]
  %s2 = inlined_call_operand.vmem [shape: f32[1,128], index: 2, kind: input, shape index: {}]
  %s3 = inlined_call_operand.vmem [shape: f32[128,128], index: 3, kind: output, shape index: {}]
  %s4 = sld [smem:[#allocation0]]
  $region76: #{edgenet.51} parent=0
    _
  %s6 = ssub.s32 1, %s4
  %s7 = scalar_select 0, %s6, %s4
  $region1: #{edgenet.51} parent=0
    #allocation2 [shape = 'u8[262144]{0}', space=vmem, size = 0x40000, scoped, tag = 'input window, operand 0']
    loop: start=0, step=1, limit=4
    $region2: #{edgenet.51} parent=1 // loop_pre_header
      _
    $region3: #{edgenet.51} parent=1 // loop_header
      %s9 = sphi 0, %s13
      %p10 = scmp.ge.s32.totalorder %s9, 4
      %s16 = sphi 0, %s35
      %s17 = sphi 0, %s31
      %s18 = sphi 0, %s27
      %s19 = sphi 0, %s16
      %s20 = sphi 0, %s17
      %s21 = sphi 0, %s18
      %s22 = sphi 0, %s19
      %s23 = sphi 0, %s20
      %s24 = sphi 0, %s21
      %s40 = sphi 0, %s42
      %s43 = sphi 0, %s40
      %s44 = sphi 0, %s43
      %s60 = sphi 0, %s44
      %s68 = sphi 0, %s70
      %s71 = sphi 0, %s68
      %s72 = sphi 0, %s71
      %s88 = sphi 0, %s72
      %s94 = sphi 0, %s96
      %s97 = sphi 0, %s94
      %s98 = sphi 0, %s97
      %s114 = sphi 0, %s98
      %s122 = sphi 0, %s124
      %s125 = sphi 0, %s122
      %s126 = sphi 0, %s125
      %s142 = sphi 0, %s126
    $region4: #{edgenet.51} parent=1 // loop_header_branch
      %12 = sbr.rel (%p10) target = $region8
    $region5: #{edgenet.51} parent=1 // loop_body
      %s14 = ssub.s32 %s9, 1
      %s15 = ssub.s32 %s9, 2
      %s25 = sadd.s32 1, %s18
      %p26 = scmp.ge.s32.totalorder %s25, 2
      %s27 = scalar_select %p26, 0, %s25
      %s28 = sadd.s32 1, %s17
      %s29 = scalar_select %p26, %s28, %s17
      %p30 = scmp.ge.s32.totalorder %s29, 1
      %s31 = scalar_select %p30, 0, %s29
      %s32 = sadd.s32 1, %s16
      %s33 = scalar_select %p30, %s32, %s16
      %p34 = scmp.ge.s32.totalorder %s33, 1
      %s35 = scalar_select %p34, 0, %s33
      %s36 = ssub.s32 %s16, %s35
      %s37 = ssub.s32 %s18, %s27
      %s38 = sor.u32 %s36, %s37
      %p39 = scmp.eq.s32.totalorder %s38, 0
      %s41 = sadd.s32 %s40, 1
      %s42 = scalar_select %p39, %s40, %s41
      %p45 = pneg %p39
      %p46 = scmp.eq.s32.totalorder %s9, 1
      %p47 = por %p45, %p46
      %p48 = scmp.ne.s32.totalorder %s40, %s43
      %p49 = scmp.eq.s32.totalorder %s9, 0
      %p50 = por %p48, %p49
      %p51 = scmp.ne.s32.totalorder %s40, %s43
      %p52 = scmp.eq.s32.totalorder %s14, 1
      %p53 = por %p51, %p52
      %p54 = scmp.ne.s32.totalorder %s43, %s44
      %p55 = scmp.eq.s32.totalorder %s14, 0
      %p56 = por %p54, %p55
      %p57 = scmp.ne.s32.totalorder %s43, %s44
      %p58 = scmp.eq.s32.totalorder %s15, 1
      %p59 = por %p57, %p58
      %p61 = scmp.ne.s32.totalorder %s44, %s60
      %p62 = scmp.eq.s32.totalorder %s15, 0
      %p63 = por %p61, %p62
      %s64 = ssub.s32 %s18, %s27
      %s65 = ssub.s32 %s17, %s31
      %s66 = sor.u32 %s64, %s65
      %p67 = scmp.eq.s32.totalorder %s66, 0
      %s69 = sadd.s32 %s68, 1
      %s70 = scalar_select %p67, %s68, %s69
      %p73 = pneg %p67
      %p74 = scmp.eq.s32.totalorder %s9, 1
      %p75 = por %p73, %p74
      %p76 = scmp.ne.s32.totalorder %s68, %s71
      %p77 = scmp.eq.s32.totalorder %s9, 0
      %p78 = por %p76, %p77
      %p79 = scmp.ne.s32.totalorder %s68, %s71
      %p80 = scmp.eq.s32.totalorder %s14, 1
      %p81 = por %p79, %p80
      %p82 = scmp.ne.s32.totalorder %s71, %s72
      %p83 = scmp.eq.s32.totalorder %s14, 0
      %p84 = por %p82, %p83
      %p85 = scmp.ne.s32.totalorder %s71, %s72
      %p86 = scmp.eq.s32.totalorder %s15, 1
      %p87 = por %p85, %p86
      %p89 = scmp.ne.s32.totalorder %s72, %s88
      %p90 = scmp.eq.s32.totalorder %s15, 0
      %p91 = por %p89, %p90
      %s92 = ssub.s32 %s17, %s31
      %p93 = scmp.eq.s32.totalorder %s92, 0
      %s95 = sadd.s32 %s94, 1
      %s96 = scalar_select %p93, %s94, %s95
      %p99 = pneg %p93
      %p100 = scmp.eq.s32.totalorder %s9, 1
      %p101 = por %p99, %p100
      %p102 = scmp.ne.s32.totalorder %s94, %s97
      %p103 = scmp.eq.s32.totalorder %s9, 0
      %p104 = por %p102, %p103
      %p105 = scmp.ne.s32.totalorder %s94, %s97
      %p106 = scmp.eq.s32.totalorder %s14, 1
      %p107 = por %p105, %p106
      %p108 = scmp.ne.s32.totalorder %s97, %s98
      %p109 = scmp.eq.s32.totalorder %s14, 0
      %p110 = por %p108, %p109
      %p111 = scmp.ne.s32.totalorder %s97, %s98
      %p112 = scmp.eq.s32.totalorder %s15, 1
      %p113 = por %p111, %p112
      %p115 = scmp.ne.s32.totalorder %s98, %s114
      %p116 = scmp.eq.s32.totalorder %s15, 0
      %p117 = por %p115, %p116
      %s118 = ssub.s32 %s16, %s35
      %s119 = ssub.s32 %s17, %s31
      %s120 = sor.u32 %s118, %s119
      %p121 = scmp.eq.s32.totalorder %s120, 0
      %s123 = sadd.s32 %s122, 1
      %s124 = scalar_select %p121, %s122, %s123
      %p127 = pneg %p121
      %p128 = scmp.eq.s32.totalorder %s9, 1
      %p129 = por %p127, %p128
      %p130 = scmp.ne.s32.totalorder %s122, %s125
      %p131 = scmp.eq.s32.totalorder %s9, 0
      %p132 = por %p130, %p131
      %p133 = scmp.ne.s32.totalorder %s122, %s125
      %p134 = scmp.eq.s32.totalorder %s14, 1
      %p135 = por %p133, %p134
      %p136 = scmp.ne.s32.totalorder %s125, %s126
      %p137 = scmp.eq.s32.totalorder %s14, 0
      %p138 = por %p136, %p137
      %p139 = scmp.ne.s32.totalorder %s125, %s126
      %p140 = scmp.eq.s32.totalorder %s15, 1
      %p141 = por %p139, %p140
      %p143 = scmp.ne.s32.totalorder %s126, %s142
      %p144 = scmp.eq.s32.totalorder %s15, 0
      %p145 = por %p143, %p144
      %p146 = scmp.le.s32.totalorder 1, %s9
      %p147 = scmp.lt.s32.totalorder %s9, 3
      %p148 = pnand %p146, %p147
      %p149 = pneg %p148
      // Predicated region
      $region9: #{edgenet.51} parent=5 // pred_check
        _
      $region10: #{edgenet.51} parent=5 // pred_check_branch
        %151 = sbr.rel (%p148) target = $region12
      $region11: #{edgenet.51} parent=5 // pred_region
        %s152 = ssub.s32 %s9, 1
        // Predicated region
        $region13: #{edgenet.51} parent=11 // pred_check
          %p153 = pneg %p110
        $region14: #{edgenet.51} parent=11 // pred_check_branch
          %155 = sbr.rel (%p153) target = $region16
        $region15: #{edgenet.51} parent=11 // pred_region
          %p156 = scmp.lt.s32.totalorder %s20, 0
          %s157 = scalar_select %p156, %s20, 0
          %s158 = scalar_lea.vmem %s2, %s157
        $region16: #{edgenet.51} parent=11 // pred_fallthru
          _
      $region12: #{edgenet.51} parent=5 // pred_fallthru
        _
      %p159 = scmp.lt.s32.totalorder %s9, 2
      // Predicated region
      $region17: #{edgenet.51} parent=5 // pred_check
        %p160 = pneg %p159
      $region18: #{edgenet.51} parent=5 // pred_check_branch
        %162 = sbr.rel (%p160) target = $region20
      $region19: #{edgenet.51} parent=5 // pred_region
        // Predicated region
        $region21: #{edgenet.51} parent=19 // pred_check
          %p163 = pneg %p50
        $region22: #{edgenet.51} parent=19 // pred_check_branch
          %165 = sbr.rel (%p163) target = $region24
        $region23: #{edgenet.51} parent=19 // pred_region
          %s166 = sand.u32 %s40, 1
          %s167 = sand.u32 %s40, 1
          %s168 = smul.addr %s167, 256
          %s169 = scalar_lea.vmem [#allocation2], %s168
          %s170 = smul.u32 16, %s16
          %s171 = smul.u32 4, %s18
          %s172 = smul.addr %s170, 8
          %s173 = sadd.s32 %s171, %s172
          %s174 = smul.addr %s173, 4
          %s175 = scalar_lea.vmem %s0, %s174
          // Predicated region
          $region25: #{edgenet.51} parent=23 // pred_check
            _
          $region26: #{edgenet.51} parent=23 // pred_check_branch
            %177 = sbr.rel (0) target = $region28
          $region27: #{edgenet.51} parent=23 // pred_region
            // Predicated region
            $region29: #{edgenet.51} parent=27 // pred_check
              _
            $region30: #{edgenet.51} parent=27 // pred_check_branch
              %179 = sbr.rel (0) target = $region32
            $region31: #{edgenet.51} parent=27 // pred_region
              loop: start=0, step=1, limit=1
              $region33: #{edgenet.51} parent=31 // loop_pre_header
                _
              $region34: #{edgenet.51} parent=31 // loop_header
                %s181 = sphi 0, %s185
                %p182 = scmp.ge.s32.totalorder %s181, 1
                %s186 = sphi %s175, %s175
                %s187 = sphi %s169, %s169
              $region35: #{edgenet.51} parent=31 // loop_header_branch
                %184 = sbr.rel (%p182) target = $region39
              $region36: #{edgenet.51} parent=31 // loop_body
                %v188 = vld [vmem:[%s186] sm:$0xff]
                %189 = vst [vmem:[%s187] sm:$0xff] %v188
                %v190 = vld [vmem:[%s186 + $0x8] sm:$0xff]
                %191 = vst [vmem:[%s187 + $0x8] sm:$0xff] %v190
                %v192 = vld [vmem:[%s186 + $0x20] sm:$0xff]
                %193 = vst [vmem:[%s187 + $0x10] sm:$0xff] %v192
                %v194 = vld [vmem:[%s186 + $0x28] sm:$0xff]
                %195 = vst [vmem:[%s187 + $0x18] sm:$0xff] %v194
                %v196 = vld [vmem:[%s186 + $0x40] sm:$0xff]
                %197 = vst [vmem:[%s187 + $0x20] sm:$0xff] %v196
                %v198 = vld [vmem:[%s186 + $0x48] sm:$0xff]
                %199 = vst [vmem:[%s187 + $0x28] sm:$0xff] %v198
                %v200 = vld [vmem:[%s186 + $0x60] sm:$0xff]
                %201 = vst [vmem:[%s187 + $0x30] sm:$0xff] %v200
                %v202 = vld [vmem:[%s186 + $0x68] sm:$0xff]
                %203 = vst [vmem:[%s187 + $0x38] sm:$0xff] %v202
                %v204 = vld [vmem:[%s186 + $0x80] sm:$0xff]
                %205 = vst [vmem:[%s187 + $0x40] sm:$0xff] %v204
                %v206 = vld [vmem:[%s186 + $0x88] sm:$0xff]
                %207 = vst [vmem:[%s187 + $0x48] sm:$0xff] %v206
                %v208 = vld [vmem:[%s186 + $0xa0] sm:$0xff]
                %209 = vst [vmem:[%s187 + $0x50] sm:$0xff] %v208
                %v210 = vld [vmem:[%s186 + $0xa8] sm:$0xff]
                %211 = vst [vmem:[%s187 + $0x58] sm:$0xff] %v210
                %v212 = vld [vmem:[%s186 + $0xc0] sm:$0xff]
                %213 = vst [vmem:[%s187 + $0x60] sm:$0xff] %v212
                %v214 = vld [vmem:[%s186 + $0xc8] sm:$0xff]
                %215 = vst [vmem:[%s187 + $0x68] sm:$0xff] %v214
                %v216 = vld [vmem:[%s186 + $0xe0] sm:$0xff]
                %217 = vst [vmem:[%s187 + $0x70] sm:$0xff] %v216
                %v218 = vld [vmem:[%s186 + $0xe8] sm:$0xff]
                %219 = vst [vmem:[%s187 + $0x78] sm:$0xff] %v218
                %v220 = vld [vmem:[%s186 + $0x100] sm:$0xff]
                %221 = vst [vmem:[%s187 + $0x80] sm:$0xff] %v220
                %v222 = vld [vmem:[%s186 + $0x108] sm:$0xff]
                %223 = vst [vmem:[%s187 + $0x88] sm:$0xff] %v222
                %v224 = vld [vmem:[%s186 + $0x120] sm:$0xff]
                %225 = vst [vmem:[%s187 + $0x90] sm:$0xff] %v224
                %v226 = vld [vmem:[%s186 + $0x128] sm:$0xff]
                %227 = vst [vmem:[%s187 + $0x98] sm:$0xff] %v226
                %v228 = vld [vmem:[%s186 + $0x140] sm:$0xff]
                %229 = vst [vmem:[%s187 + $0xa0] sm:$0xff] %v228
                %v230 = vld [vmem:[%s186 + $0x148] sm:$0xff]
                %231 = vst [vmem:[%s187 + $0xa8] sm:$0xff] %v230
                %v232 = vld [vmem:[%s186 + $0x160] sm:$0xff]
                %233 = vst [vmem:[%s187 + $0xb0] sm:$0xff] %v232
                %v234 = vld [vmem:[%s186 + $0x168] sm:$0xff]
                %235 = vst [vmem:[%s187 + $0xb8] sm:$0xff] %v234
                %v236 = vld [vmem:[%s186 + $0x180] sm:$0xff]
                %237 = vst [vmem:[%s187 + $0xc0] sm:$0xff] %v236
                %v238 = vld [vmem:[%s186 + $0x188] sm:$0xff]
                %239 = vst [vmem:[%s187 + $0xc8] sm:$0xff] %v238
                %v240 = vld [vmem:[%s186 + $0x1a0] sm:$0xff]
                %241 = vst [vmem:[%s187 + $0xd0] sm:$0xff] %v240
                %v242 = vld [vmem:[%s186 + $0x1a8] sm:$0xff]
                %243 = vst [vmem:[%s187 + $0xd8] sm:$0xff] %v242
                %v244 = vld [vmem:[%s186 + $0x1c0] sm:$0xff]
                %245 = vst [vmem:[%s187 + $0xe0] sm:$0xff] %v244
                %v246 = vld [vmem:[%s186 + $0x1c8] sm:$0xff]
                %247 = vst [vmem:[%s187 + $0xe8] sm:$0xff] %v246
                %v248 = vld [vmem:[%s186 + $0x1e0] sm:$0xff]
                %249 = vst [vmem:[%s187 + $0xf0] sm:$0xff] %v248
                %v250 = vld [vmem:[%s186 + $0x1e8] sm:$0xff]
                %251 = vst [vmem:[%s187 + $0xf8] sm:$0xff] %v250
              $region37: #{edgenet.51} parent=31 // loop_footer
                %s185 = sadd.s32 1, %s181
              $region38: #{edgenet.51} parent=31 // loop_footer_branch
                %180 = sbr.rel target = $region34
              $region39: #{edgenet.51} parent=31 // loop_exit
                _
            $region32: #{edgenet.51} parent=27 // pred_fallthru
              _
            // Predicated region
            $region40: #{edgenet.51} parent=27 // pred_check
              _
            $region41: #{edgenet.51} parent=27 // pred_check_branch
              %253 = sbr.rel target = $region43
            $region42: #{edgenet.51} parent=27 // pred_region
              _
            $region43: #{edgenet.51} parent=27 // pred_fallthru
              _
          $region28: #{edgenet.51} parent=23 // pred_fallthru
            _
          %254 = vnop
        $region24: #{edgenet.51} parent=19 // pred_fallthru
          _
        // Predicated region
        $region44: #{edgenet.51} parent=19 // pred_check
          %p255 = pneg %p78
        $region45: #{edgenet.51} parent=19 // pred_check_branch
          %257 = sbr.rel (%p255) target = $region47
        $region46: #{edgenet.51} parent=19 // pred_region
          %s258 = smul.u32 64, %s18
          %p259 = scmp.lt.s32.totalorder %s258, 127
          %s260 = scalar_select %p259, %s258, 127
          %p261 = scmp.lt.s32.totalorder %s17, 0
          %s262 = scalar_select %p261, %s17, 0
          %s263 = sadd.s32 %s262, %s260
          %s264 = smul.addr %s263, 4
          %s265 = scalar_lea.vmem %s1, %s264
          %s266 = smul.u32 64, %s18
        $region47: #{edgenet.51} parent=19 // pred_fallthru
          _
      $region20: #{edgenet.51} parent=5 // pred_fallthru
        _
      %p267 = scmp.le.s32.totalorder 1, %s9
      %p268 = scmp.lt.s32.totalorder %s9, 3
      %p269 = pnand %p267, %p268
      %p270 = pneg %p269
      // Predicated region
      $region48: #{edgenet.51} parent=5 // pred_check
        _
      $region49: #{edgenet.51} parent=5 // pred_check_branch
        %272 = sbr.rel (%p269) target = $region51
      $region50: #{edgenet.51} parent=5 // pred_region
        %s273 = ssub.s32 %s9, 1
        %s274 = sand.u32 %s43, 1
        %s275 = sand.u32 %s43, 1
        %s276 = smul.addr %s275, 256
        %s277 = scalar_lea.vmem [#allocation2], %s276
        // Predicated region
        $region52: #{edgenet.51} parent=50 // pred_check
          %p278 = pneg %p56
        $region53: #{edgenet.51} parent=50 // pred_check_branch
          %280 = sbr.rel (%p278) target = $region55
        $region54: #{edgenet.51} parent=50 // pred_region
          _
        $region55: #{edgenet.51} parent=50 // pred_fallthru
          _
        %s281 = sand.u32 %s43, 1
        %s282 = sand.u32 %s43, 1
        %s283 = smul.addr %s282, 256
        %s284 = scalar_lea.vmem [#allocation2], %s283
        %p285 = pneg %p56
        %p286 = pneg %p53
        %s287 = smul.u32 64, %s21
        %p288 = scmp.lt.s32.totalorder %s287, 127
        %s289 = scalar_select %p288, %s287, 127
        %p290 = scmp.lt.s32.totalorder %s20, 0
        %s291 = scalar_select %p290, %s20, 0
        %s292 = sadd.s32 %s291, %s289
        %s293 = smul.addr %s292, 4
        %s294 = scalar_lea.vmem %s1, %s293
        %p295 = pneg %p84
        %p296 = pneg %p81
        %p297 = scmp.lt.s32.totalorder %s20, 0
        %s298 = scalar_select %p297, %s20, 0
        %s299 = scalar_lea.vmem %s2, %s298
        %p300 = pneg %p110
        %p301 = pneg %p107
        %p302 = pneg %p138
        %p303 = pneg %p135
        %s304 = smul.u32 16, %s19
        %p305 = scmp.lt.s32.totalorder %s304, 15
        %s306 = scalar_select %p305, %s304, 15
        %p307 = scmp.lt.s32.totalorder %s20, 0
        %s308 = scalar_select %p307, %s20, 0
        %s309 = sadd.s32 %s308, %s306
        %s310 = smul.addr %s309, 8
        %s311 = scalar_lea.vmem %s3, %s310
        %s312 = smul.u32 16, %s19
        %s313 = smul.u32 4, %s21
        %s314 = smul.u32 64, %s21
        %p315 = scmp.lt.s32.totalorder %s314, 127
        %s316 = scalar_select %p315, %s314, 127
        %p317 = scmp.lt.s32.totalorder %s20, 0
        %s318 = scalar_select %p317, %s20, 0
        %s319 = sadd.s32 %s318, %s316
        %s320 = smul.addr %s319, 4
        %s321 = scalar_lea.vmem %s1, %s320
        %s322 = smul.u32 64, %s21
        %p323 = scmp.lt.s32.totalorder %s20, 0
        %s324 = scalar_select %p323, %s20, 0
        %s325 = scalar_lea.vmem %s2, %s324
        %s326 = smul.u32 16, %s19
        %p327 = scmp.lt.s32.totalorder %s326, 15
        %s328 = scalar_select %p327, %s326, 15
        %p329 = scmp.lt.s32.totalorder %s20, 0
        %s330 = scalar_select %p329, %s20, 0
        %s331 = sadd.s32 %s330, %s328
        %s332 = smul.addr %s331, 8
        %s333 = scalar_lea.vmem %s3, %s332
        %s334 = smul.u32 16, %s19
        %p336 = scmp.eq.s32.totalorder %s21, 0
        // Predicated region
        $region56: #{edgenet.51} parent=50 // pred_check
          %p337 = pneg %p336
        $region57: #{edgenet.51} parent=50 // pred_check_branch
          %339 = sbr.rel (%p337) target = $region59
        $region58: #{edgenet.51} parent=50 // pred_region
          %340 = vst [vmem:[%s333] sm:$0xff] 0.0
          %341 = vst [vmem:[%s333 + $0x8] sm:$0xff] 0.0
          %342 = vst [vmem:[%s333 + $0x10] sm:$0xff] 0.0
          %343 = vst [vmem:[%s333 + $0x18] sm:$0xff] 0.0
          %344 = vst [vmem:[%s333 + $0x20] sm:$0xff] 0.0
          %345 = vst [vmem:[%s333 + $0x28] sm:$0xff] 0.0
          %346 = vst [vmem:[%s333 + $0x30] sm:$0xff] 0.0
          %347 = vst [vmem:[%s333 + $0x38] sm:$0xff] 0.0
          %348 = vst [vmem:[%s333 + $0x40] sm:$0xff] 0.0
          %349 = vst [vmem:[%s333 + $0x48] sm:$0xff] 0.0
          %350 = vst [vmem:[%s333 + $0x50] sm:$0xff] 0.0
          %351 = vst [vmem:[%s333 + $0x58] sm:$0xff] 0.0
          %352 = vst [vmem:[%s333 + $0x60] sm:$0xff] 0.0
          %353 = vst [vmem:[%s333 + $0x68] sm:$0xff] 0.0
          %354 = vst [vmem:[%s333 + $0x70] sm:$0xff] 0.0
          %355 = vst [vmem:[%s333 + $0x78] sm:$0xff] 0.0
        $region59: #{edgenet.51} parent=50 // pred_fallthru
          _
        %v356 = vld [vmem:[%s333] sm:$0xff]
        %v357 = vld [vmem:[%s333 + $0x8] sm:$0xff]
        %v358 = vld [vmem:[%s333 + $0x10] sm:$0xff]
        %v359 = vld [vmem:[%s333 + $0x18] sm:$0xff]
        %v360 = vld [vmem:[%s333 + $0x20] sm:$0xff]
        %v361 = vld [vmem:[%s333 + $0x28] sm:$0xff]
        %v362 = vld [vmem:[%s333 + $0x30] sm:$0xff]
        %v363 = vld [vmem:[%s333 + $0x38] sm:$0xff]
        %v364 = vld [vmem:[%s333 + $0x40] sm:$0xff]
        %v365 = vld [vmem:[%s333 + $0x48] sm:$0xff]
        %v366 = vld [vmem:[%s333 + $0x50] sm:$0xff]
        %v367 = vld [vmem:[%s333 + $0x58] sm:$0xff]
        %v368 = vld [vmem:[%s333 + $0x60] sm:$0xff]
        %v369 = vld [vmem:[%s333 + $0x68] sm:$0xff]
        %v370 = vld [vmem:[%s333 + $0x70] sm:$0xff]
        %v371 = vld [vmem:[%s333 + $0x78] sm:$0xff]
        %v372 = vld [vmem:[%s277] sm:$0xff]
        %v373 = vld [vmem:[%s277 + $0x8] sm:$0xff]
        %v374 = vld [vmem:[%s277 + $0x10] sm:$0xff]
        %v375 = vld [vmem:[%s277 + $0x18] sm:$0xff]
        %v376 = vld [vmem:[%s277 + $0x20] sm:$0xff]
        %v377 = vld [vmem:[%s277 + $0x28] sm:$0xff]
        %v378 = vld [vmem:[%s277 + $0x30] sm:$0xff]
        %v379 = vld [vmem:[%s277 + $0x38] sm:$0xff]
        %v380 = vld [vmem:[%s277 + $0x40] sm:$0xff]
        %v381 = vld [vmem:[%s277 + $0x48] sm:$0xff]
        %v382 = vld [vmem:[%s277 + $0x50] sm:$0xff]
        %v383 = vld [vmem:[%s277 + $0x58] sm:$0xff]
        %v384 = vld [vmem:[%s277 + $0x60] sm:$0xff]
        %v385 = vld [vmem:[%s277 + $0x68] sm:$0xff]
        %v386 = vld [vmem:[%s277 + $0x70] sm:$0xff]
        %v387 = vld [vmem:[%s277 + $0x78] sm:$0xff]
        %v388 = vld [vmem:[%s277 + $0x80] sm:$0xff]
        %v389 = vld [vmem:[%s277 + $0x88] sm:$0xff]
        %v390 = vld [vmem:[%s277 + $0x90] sm:$0xff]
        %v391 = vld [vmem:[%s277 + $0x98] sm:$0xff]
        %v392 = vld [vmem:[%s277 + $0xa0] sm:$0xff]
        %v393 = vld [vmem:[%s277 + $0xa8] sm:$0xff]
        %v394 = vld [vmem:[%s277 + $0xb0] sm:$0xff]
        %v395 = vld [vmem:[%s277 + $0xb8] sm:$0xff]
        %v396 = vld [vmem:[%s277 + $0xc0] sm:$0xff]
        %v397 = vld [vmem:[%s277 + $0xc8] sm:$0xff]
        %v398 = vld [vmem:[%s277 + $0xd0] sm:$0xff]
        %v399 = vld [vmem:[%s277 + $0xd8] sm:$0xff]
        %v400 = vld [vmem:[%s277 + $0xe0] sm:$0xff]
        %v401 = vld [vmem:[%s277 + $0xe8] sm:$0xff]
        %v402 = vld [vmem:[%s277 + $0xf0] sm:$0xff]
        %v403 = vld [vmem:[%s277 + $0xf8] sm:$0xff]
        %v404 = vld [vmem:[%s321] sm:$0xf]
        %v405 = vld [vmem:[%s321 + $0x4] sm:$0xf]
        %v406 = vld [vmem:[%s321 + $0x8] sm:$0xf]
        %v407 = vld [vmem:[%s321 + $0xc] sm:$0xf]
        %v408 = vld [vmem:[%s321 + $0x10] sm:$0xf]
        %v409 = vld [vmem:[%s321 + $0x14] sm:$0xf]
        %v410 = vld [vmem:[%s321 + $0x18] sm:$0xf]
        %v411 = vld [vmem:[%s321 + $0x1c] sm:$0xf]
        %v412 = vld [vmem:[%s321 + $0x20] sm:$0xf]
        %v413 = vld [vmem:[%s321 + $0x24] sm:$0xf]
        %v414 = vld [vmem:[%s321 + $0x28] sm:$0xf]
        %v415 = vld [vmem:[%s321 + $0x2c] sm:$0xf]
        %v416 = vld [vmem:[%s321 + $0x30] sm:$0xf]
        %v417 = vld [vmem:[%s321 + $0x34] sm:$0xf]
        %v418 = vld [vmem:[%s321 + $0x38] sm:$0xf]
        %v419 = vld [vmem:[%s321 + $0x3c] sm:$0xf]
        %v420 = vld [vmem:[%s321 + $0x40] sm:$0xf]
        %v421 = vld [vmem:[%s321 + $0x44] sm:$0xf]
        %v422 = vld [vmem:[%s321 + $0x48] sm:$0xf]
        %v423 = vld [vmem:[%s321 + $0x4c] sm:$0xf]
        %v424 = vld [vmem:[%s321 + $0x50] sm:$0xf]
        %v425 = vld [vmem:[%s321 + $0x54] sm:$0xf]
        %v426 = vld [vmem:[%s321 + $0x58] sm:$0xf]
        %v427 = vld [vmem:[%s321 + $0x5c] sm:$0xf]
        %v428 = vld [vmem:[%s321 + $0x60] sm:$0xf]
        %v429 = vld [vmem:[%s321 + $0x64] sm:$0xf]
        %v430 = vld [vmem:[%s321 + $0x68] sm:$0xf]
        %v431 = vld [vmem:[%s321 + $0x6c] sm:$0xf]
        %v432 = vld [vmem:[%s321 + $0x70] sm:$0xf]
        %v433 = vld [vmem:[%s321 + $0x74] sm:$0xf]
        %v434 = vld [vmem:[%s321 + $0x78] sm:$0xf]
        %v435 = vld [vmem:[%s321 + $0x7c] sm:$0xf]
        %v436 = vld [vmem:[%s321 + $0x80] sm:$0xf]
        %v437 = vld [vmem:[%s321 + $0x84] sm:$0xf]
        %v438 = vld [vmem:[%s321 + $0x88] sm:$0xf]
        %v439 = vld [vmem:[%s321 + $0x8c] sm:$0xf]
        %v440 = vld [vmem:[%s321 + $0x90] sm:$0xf]
        %v441 = vld [vmem:[%s321 + $0x94] sm:$0xf]
        %v442 = vld [vmem:[%s321 + $0x98] sm:$0xf]
        %v443 = vld [vmem:[%s321 + $0x9c] sm:$0xf]
        %v444 = vld [vmem:[%s321 + $0xa0] sm:$0xf]
        %v445 = vld [vmem:[%s321 + $0xa4] sm:$0xf]
        %v446 = vld [vmem:[%s321 + $0xa8] sm:$0xf]
        %v447 = vld [vmem:[%s321 + $0xac] sm:$0xf]
        %v448 = vld [vmem:[%s321 + $0xb0] sm:$0xf]
        %v449 = vld [vmem:[%s321 + $0xb4] sm:$0xf]
        %v450 = vld [vmem:[%s321 + $0xb8] sm:$0xf]
        %v451 = vld [vmem:[%s321 + $0xbc] sm:$0xf]
        %v452 = vld [vmem:[%s321 + $0xc0] sm:$0xf]
        %v453 = vld [vmem:[%s321 + $0xc4] sm:$0xf]
        %v454 = vld [vmem:[%s321 + $0xc8] sm:$0xf]
        %v455 = vld [vmem:[%s321 + $0xcc] sm:$0xf]
        %v456 = vld [vmem:[%s321 + $0xd0] sm:$0xf]
        %v457 = vld [vmem:[%s321 + $0xd4] sm:$0xf]
        %v458 = vld [vmem:[%s321 + $0xd8] sm:$0xf]
        %v459 = vld [vmem:[%s321 + $0xdc] sm:$0xf]
        %v460 = vld [vmem:[%s321 + $0xe0] sm:$0xf]
        %v461 = vld [vmem:[%s321 + $0xe4] sm:$0xf]
        %v462 = vld [vmem:[%s321 + $0xe8] sm:$0xf]
        %v463 = vld [vmem:[%s321 + $0xec] sm:$0xf]
        %v464 = vld [vmem:[%s321 + $0xf0] sm:$0xf]
        %v465 = vld [vmem:[%s321 + $0xf4] sm:$0xf]
        %v466 = vld [vmem:[%s321 + $0xf8] sm:$0xf]
        %v467 = vld [vmem:[%s321 + $0xfc] sm:$0xf]
        %v500 = vunpack.c.l.b16 %v372
        %v501 = vunpack.c.h.b16 %v372
        %v502 = vunpack.c.l.b16 %v373
        %v503 = vunpack.c.h.b16 %v373
        %v504 = vunpack.c.l.b16 %v374
        %v505 = vunpack.c.h.b16 %v374
        %v506 = vunpack.c.l.b16 %v375
        %v507 = vunpack.c.h.b16 %v375
        %v508 = vunpack.c.l.b16 %v376
        %v509 = vunpack.c.h.b16 %v376
        %v510 = vunpack.c.l.b16 %v377
        %v511 = vunpack.c.h.b16 %v377
        %v512 = vunpack.c.l.b16 %v378
        %v513 = vunpack.c.h.b16 %v378
        %v514 = vunpack.c.l.b16 %v379
        %v515 = vunpack.c.h.b16 %v379
        %v516 = vunpack.c.l.b16 %v380
        %v517 = vunpack.c.h.b16 %v380
        %v518 = vunpack.c.l.b16 %v381
        %v519 = vunpack.c.h.b16 %v381
        %v520 = vunpack.c.l.b16 %v382
        %v521 = vunpack.c.h.b16 %v382
        %v522 = vunpack.c.l.b16 %v383
        %v523 = vunpack.c.h.b16 %v383
        %v524 = vunpack.c.l.b16 %v384
        %v525 = vunpack.c.h.b16 %v384
        %v526 = vunpack.c.l.b16 %v385
        %v527 = vunpack.c.h.b16 %v385
        %v528 = vunpack.c.l.b16 %v386
        %v529 = vunpack.c.h.b16 %v386
        %v530 = vunpack.c.l.b16 %v387
        %v531 = vunpack.c.h.b16 %v387
        %v532 = vunpack.c.l.b16 %v388
        %v533 = vunpack.c.h.b16 %v388
        %v534 = vunpack.c.l.b16 %v389
        %v535 = vunpack.c.h.b16 %v389
        %v536 = vunpack.c.l.b16 %v390
        %v537 = vunpack.c.h.b16 %v390
        %v538 = vunpack.c.l.b16 %v391
        %v539 = vunpack.c.h.b16 %v391
        %v540 = vunpack.c.l.b16 %v392
        %v541 = vunpack.c.h.b16 %v392
        %v542 = vunpack.c.l.b16 %v393
        %v543 = vunpack.c.h.b16 %v393
        %v544 = vunpack.c.l.b16 %v394
        %v545 = vunpack.c.h.b16 %v394
        %v546 = vunpack.c.l.b16 %v395
        %v547 = vunpack.c.h.b16 %v395
        %v548 = vunpack.c.l.b16 %v396
        %v549 = vunpack.c.h.b16 %v396
        %v550 = vunpack.c.l.b16 %v397
        %v551 = vunpack.c.h.b16 %v397
        %v552 = vunpack.c.l.b16 %v398
        %v553 = vunpack.c.h.b16 %v398
        %v554 = vunpack.c.l.b16 %v399
        %v555 = vunpack.c.h.b16 %v399
        %v556 = vunpack.c.l.b16 %v400
        %v557 = vunpack.c.h.b16 %v400
        %v558 = vunpack.c.l.b16 %v401
        %v559 = vunpack.c.h.b16 %v401
        %v560 = vunpack.c.l.b16 %v402
        %v561 = vunpack.c.h.b16 %v402
        %v562 = vunpack.c.l.b16 %v403
        %v563 = vunpack.c.h.b16 %v403
        %v564 = vpack.c.b16 %v504, %v500
        %v565 = vpack.c.b16 %v505, %v501
        %v566 = vpack.c.b16 %v506, %v502
        %v567 = vpack.c.b16 %v507, %v503
        %v568 = vpack.c.b16 %v512, %v508
        %v569 = vpack.c.b16 %v513, %v509
        %v570 = vpack.c.b16 %v514, %v510
        %v571 = vpack.c.b16 %v515, %v511
        %v572 = vpack.c.b16 %v520, %v516
        %v573 = vpack.c.b16 %v521, %v517
        %v574 = vpack.c.b16 %v522, %v518
        %v575 = vpack.c.b16 %v523, %v519
        %v576 = vpack.c.b16 %v528, %v524
        %v577 = vpack.c.b16 %v529, %v525
        %v578 = vpack.c.b16 %v530, %v526
        %v579 = vpack.c.b16 %v531, %v527
        %v580 = vpack.c.b16 %v536, %v532
        %v581 = vpack.c.b16 %v537, %v533
        %v582 = vpack.c.b16 %v538, %v534
        %v583 = vpack.c.b16 %v539, %v535
        %v584 = vpack.c.b16 %v544, %v540
        %v585 = vpack.c.b16 %v545, %v541
        %v586 = vpack.c.b16 %v546, %v542
        %v587 = vpack.c.b16 %v547, %v543
        %v588 = vpack.c.b16 %v552, %v548
        %v589 = vpack.c.b16 %v553, %v549
        %v590 = vpack.c.b16 %v554, %v550
        %v591 = vpack.c.b16 %v555, %v551
        %v592 = vpack.c.b16 %v560, %v556
        %v593 = vpack.c.b16 %v561, %v557
        %v594 = vpack.c.b16 %v562, %v558
        %v595 = vpack.c.b16 %v563, %v559
        %v692 = vunpack.c.l.b16 %v404
        %v693 = vunpack.c.l.b16 %v405
        %v694 = vunpack.c.l.b16 %v406
        %v695 = vunpack.c.l.b16 %v407
        %v696 = vunpack.c.l.b16 %v408
        %v697 = vunpack.c.l.b16 %v409
        %v698 = vunpack.c.l.b16 %v410
        %v699 = vunpack.c.l.b16 %v411
        %v700 = vunpack.c.l.b16 %v412
        %v701 = vunpack.c.l.b16 %v413
        %v702 = vunpack.c.l.b16 %v414
        %v703 = vunpack.c.l.b16 %v415
        %v704 = vunpack.c.l.b16 %v416
        %v705 = vunpack.c.l.b16 %v417
        %v706 = vunpack.c.l.b16 %v418
        %v707 = vunpack.c.l.b16 %v419
        %v708 = vunpack.c.l.b16 %v420
        %v709 = vunpack.c.l.b16 %v421
        %v710 = vunpack.c.l.b16 %v422
        %v711 = vunpack.c.l.b16 %v423
        %v712 = vunpack.c.l.b16 %v424
        %v713 = vunpack.c.l.b16 %v425
        %v714 = vunpack.c.l.b16 %v426
        %v715 = vunpack.c.l.b16 %v427
        %v716 = vunpack.c.l.b16 %v428
        %v717 = vunpack.c.l.b16 %v429
        %v718 = vunpack.c.l.b16 %v430
        %v719 = vunpack.c.l.b16 %v431
        %v720 = vunpack.c.l.b16 %v432
        %v721 = vunpack.c.l.b16 %v433
        %v722 = vunpack.c.l.b16 %v434
        %v723 = vunpack.c.l.b16 %v435
        %v724 = vunpack.c.l.b16 %v436
        %v725 = vunpack.c.l.b16 %v437
        %v726 = vunpack.c.l.b16 %v438
        %v727 = vunpack.c.l.b16 %v439
        %v728 = vunpack.c.l.b16 %v440
        %v729 = vunpack.c.l.b16 %v441
        %v730 = vunpack.c.l.b16 %v442
        %v731 = vunpack.c.l.b16 %v443
        %v732 = vunpack.c.l.b16 %v444
        %v733 = vunpack.c.l.b16 %v445
        %v734 = vunpack.c.l.b16 %v446
        %v735 = vunpack.c.l.b16 %v447
        %v736 = vunpack.c.l.b16 %v448
        %v737 = vunpack.c.l.b16 %v449
        %v738 = vunpack.c.l.b16 %v450
        %v739 = vunpack.c.l.b16 %v451
        %v740 = vunpack.c.l.b16 %v452
        %v741 = vunpack.c.l.b16 %v453
        %v742 = vunpack.c.l.b16 %v454
        %v743 = vunpack.c.l.b16 %v455
        %v744 = vunpack.c.l.b16 %v456
        %v745 = vunpack.c.l.b16 %v457
        %v746 = vunpack.c.l.b16 %v458
        %v747 = vunpack.c.l.b16 %v459
        %v748 = vunpack.c.l.b16 %v460
        %v749 = vunpack.c.l.b16 %v461
        %v750 = vunpack.c.l.b16 %v462
        %v751 = vunpack.c.l.b16 %v463
        %v752 = vunpack.c.l.b16 %v464
        %v753 = vunpack.c.l.b16 %v465
        %v754 = vunpack.c.l.b16 %v466
        %v755 = vunpack.c.l.b16 %v467
        %v756 = vpack.c.b16 %v693, %v692
        %v757 = vpack.c.b16 %v695, %v694
        %v758 = vpack.c.b16 %v697, %v696
        %v759 = vpack.c.b16 %v699, %v698
        %v760 = vpack.c.b16 %v701, %v700
        %v761 = vpack.c.b16 %v703, %v702
        %v762 = vpack.c.b16 %v705, %v704
        %v763 = vpack.c.b16 %v707, %v706
        %v764 = vpack.c.b16 %v709, %v708
        %v765 = vpack.c.b16 %v711, %v710
        %v766 = vpack.c.b16 %v713, %v712
        %v767 = vpack.c.b16 %v715, %v714
        %v768 = vpack.c.b16 %v717, %v716
        %v769 = vpack.c.b16 %v719, %v718
        %v770 = vpack.c.b16 %v721, %v720
        %v771 = vpack.c.b16 %v723, %v722
        %v772 = vpack.c.b16 %v725, %v724
        %v773 = vpack.c.b16 %v727, %v726
        %v774 = vpack.c.b16 %v729, %v728
        %v775 = vpack.c.b16 %v731, %v730
        %v776 = vpack.c.b16 %v733, %v732
        %v777 = vpack.c.b16 %v735, %v734
        %v778 = vpack.c.b16 %v737, %v736
        %v779 = vpack.c.b16 %v739, %v738
        %v780 = vpack.c.b16 %v741, %v740
        %v781 = vpack.c.b16 %v743, %v742
        %v782 = vpack.c.b16 %v745, %v744
        %v783 = vpack.c.b16 %v747, %v746
        %v784 = vpack.c.b16 %v749, %v748
        %v785 = vpack.c.b16 %v751, %v750
        %v786 = vpack.c.b16 %v753, %v752
        %v787 = vpack.c.b16 %v755, %v754
        %820 = vmatprep.subr.bf16.mxu0 0
        %821 = vmatpush1.bf16.msra.mxu0 %v756
        %822 = vmatprep.subr.bf16.mxu0 0
        %823 = vmatpush1.bf16.msra.mxu0 %v757
        %824 = vmatprep.subr.bf16.mxu0 0
        %825 = vmatpush1.bf16.msra.mxu0 %v758
        %826 = vmatprep.subr.bf16.mxu0 0
        %827 = vmatpush1.bf16.msra.mxu0 %v759
        %828 = vmatprep.subr.bf16.mxu0 0
        %829 = vmatpush1.bf16.msra.mxu0 %v760
        %830 = vmatprep.subr.bf16.mxu0 0
        %831 = vmatpush1.bf16.msra.mxu0 %v761
        %832 = vmatprep.subr.bf16.mxu0 0
        %833 = vmatpush1.bf16.msra.mxu0 %v762
        %834 = vmatprep.subr.bf16.mxu0 0
        %835 = vmatpush1.bf16.msra.mxu0 %v763
        %836 = vmatprep.subr.bf16.mxu0 0
        %837 = vmatpush1.bf16.msra.mxu0 %v764
        %838 = vmatprep.subr.bf16.mxu0 0
        %839 = vmatpush1.bf16.msra.mxu0 %v765
        %840 = vmatprep.subr.bf16.mxu0 0
        %841 = vmatpush1.bf16.msra.mxu0 %v766
        %842 = vmatprep.subr.bf16.mxu0 0
        %843 = vmatpush1.bf16.msra.mxu0 %v767
        %844 = vmatprep.subr.bf16.mxu0 0
        %845 = vmatpush1.bf16.msra.mxu0 %v768
        %846 = vmatprep.subr.bf16.mxu0 0
        %847 = vmatpush1.bf16.msra.mxu0 %v769
        %848 = vmatprep.subr.bf16.mxu0 0
        %849 = vmatpush1.bf16.msra.mxu0 %v770
        %850 = vmatprep.subr.bf16.mxu0 0
        %851 = vmatpush1.bf16.msra.mxu0 %v771
        %852 = vmatprep.mubr.bf16.mxu0 %v565
        %853 = vmatmul.mubr.bf16.gmra.mrb[0].mxu0 %v564
        %v854 = vpop.f32.mrb[0].mxu0
        %v855 = vadd.f32 0.0, %v854
        %v856 = vpop.f32.mrb[0].mxu0
        %v857 = vpop.f32.mrb[0].mxu0
        %v858 = vadd.f32 0.0, %v857
        %v859 = vpop.f32.mrb[0].mxu0
        %860 = vmatprep.mubr.bf16.mxu0 %v569
        %861 = vmatmul.mubr.bf16.gmra.mrb[0].mxu0 %v568
        %v862 = vpop.f32.mrb[0].mxu0
        %v863 = vadd.f32 0.0, %v862
        %v864 = vpop.f32.mrb[0].mxu0
        %v865 = vpop.f32.mrb[0].mxu0
        %v866 = vadd.f32 0.0, %v865
        %v867 = vpop.f32.mrb[0].mxu0
        %868 = vmatprep.mubr.bf16.mxu0 %v573
        %869 = vmatmul.mubr.bf16.gmra.mrb[0].mxu0 %v572
        %v870 = vpop.f32.mrb[0].mxu0
        %v871 = vadd.f32 0.0, %v870
        %v872 = vpop.f32.mrb[0].mxu0
        %v873 = vpop.f32.mrb[0].mxu0
        %v874 = vadd.f32 0.0, %v873
        %v875 = vpop.f32.mrb[0].mxu0
        %876 = vmatprep.mubr.bf16.mxu0 %v577
        %877 = vmatmul.mubr.bf16.gmra.mrb[0].mxu0 %v576
        %v878 = vpop.f32.mrb[0].mxu0
        %v879 = vadd.f32 0.0, %v878
        %v880 = vpop.f32.mrb[0].mxu0
        %v881 = vpop.f32.mrb[0].mxu0
        %v882 = vadd.f32 0.0, %v881
        %v883 = vpop.f32.mrb[0].mxu0
        %884 = vmatprep.mubr.bf16.mxu0 %v581
        %885 = vmatmul.mubr.bf16.gmra.mrb[0].mxu0 %v580
        %v886 = vpop.f32.mrb[0].mxu0
        %v887 = vadd.f32 0.0, %v886
        %v888 = vpop.f32.mrb[0].mxu0
        %v889 = vpop.f32.mrb[0].mxu0
        %v890 = vadd.f32 0.0, %v889
        %v891 = vpop.f32.mrb[0].mxu0
        %892 = vmatprep.mubr.bf16.mxu0 %v585
        %893 = vmatmul.mubr.bf16.gmra.mrb[0].mxu0 %v584
        %v894 = vpop.f32.mrb[0].mxu0
        %v895 = vadd.f32 0.0, %v894
        %v896 = vpop.f32.mrb[0].mxu0
        %v897 = vpop.f32.mrb[0].mxu0
        %v898 = vadd.f32 0.0, %v897
        %v899 = vpop.f32.mrb[0].mxu0
        %900 = vmatprep.mubr.bf16.mxu0 %v589
        %901 = vmatmul.mubr.bf16.gmra.mrb[0].mxu0 %v588
        %v902 = vpop.f32.mrb[0].mxu0
        %v903 = vadd.f32 0.0, %v902
        %v904 = vpop.f32.mrb[0].mxu0
        %v905 = vpop.f32.mrb[0].mxu0
        %v906 = vadd.f32 0.0, %v905
        %v907 = vpop.f32.mrb[0].mxu0
        %908 = vmatprep.mubr.bf16.mxu0 %v593
        %909 = vmatmul.mubr.bf16.gmra.mrb[0].mxu0 %v592
        %v910 = vpop.f32.mrb[0].mxu0
        %v911 = vadd.f32 0.0, %v910
        %v912 = vpop.f32.mrb[0].mxu0
        %v913 = vpop.f32.mrb[0].mxu0
        %v914 = vadd.f32 0.0, %v913
        %v915 = vpop.f32.mrb[0].mxu0
        %916 = vdwg.mxu0
        %917 = vmatprep.subr.bf16.mxu0 0
        %918 = vmatpush1.bf16.msra.mxu0 %v772
        %919 = vmatprep.subr.bf16.mxu0 0
        %920 = vmatpush1.bf16.msra.mxu0 %v773
        %921 = vmatprep.subr.bf16.mxu0 0
        %922 = vmatpush1.bf16.msra.mxu0 %v774
        %923 = vmatprep.subr.bf16.mxu0 0
        %924 = vmatpush1.bf16.msra.mxu0 %v775
        %925 = vmatprep.subr.bf16.mxu0 0
        %926 = vmatpush1.bf16.msra.mxu0 %v776
        %927 = vmatprep.subr.bf16.mxu0 0
        %928 = vmatpush1.bf16.msra.mxu0 %v777
        %929 = vmatprep.subr.bf16.mxu0 0
        %930 = vmatpush1.bf16.msra.mxu0 %v778
        %931 = vmatprep.subr.bf16.mxu0 0
        %932 = vmatpush1.bf16.msra.mxu0 %v779
        %933 = vmatprep.subr.bf16.mxu0 0
        %934 = vmatpush1.bf16.msra.mxu0 %v780
        %935 = vmatprep.subr.bf16.mxu0 0
        %936 = vmatpush1.bf16.msra.mxu0 %v781
        %937 = vmatprep.subr.bf16.mxu0 0
        %938 = vmatpush1.bf16.msra.mxu0 %v782
        %939 = vmatprep.subr.bf16.mxu0 0
        %940 = vmatpush1.bf16.msra.mxu0 %v783
        %941 = vmatprep.subr.bf16.mxu0 0
        %942 = vmatpush1.bf16.msra.mxu0 %v784
        %943 = vmatprep.subr.bf16.mxu0 0
        %944 = vmatpush1.bf16.msra.mxu0 %v785
        %945 = vmatprep.subr.bf16.mxu0 0
        %946 = vmatpush1.bf16.msra.mxu0 %v786
        %947 = vmatprep.subr.bf16.mxu0 0
        %948 = vmatpush1.bf16.msra.mxu0 %v787
        %949 = vmatprep.mubr.bf16.mxu0 %v567
        %950 = vmatmul.mubr.bf16.gmra.mrb[0].mxu0 %v566
        %v951 = vpop.f32.mrb[0].mxu0
        %v952 = vadd.f32 %v855, %v951
        %v953 = vpop.f32.mrb[0].mxu0
        %v954 = vpop.f32.mrb[0].mxu0
        %v955 = vadd.f32 %v858, %v954
        %v956 = vpop.f32.mrb[0].mxu0
        %957 = vmatprep.mubr.bf16.mxu0 %v571
        %958 = vmatmul.mubr.bf16.gmra.mrb[0].mxu0 %v570
        %v959 = vpop.f32.mrb[0].mxu0
        %v960 = vadd.f32 %v863, %v959
        %v961 = vpop.f32.mrb[0].mxu0
        %v962 = vpop.f32.mrb[0].mxu0
        %v963 = vadd.f32 %v866, %v962
        %v964 = vpop.f32.mrb[0].mxu0
        %965 = vmatprep.mubr.bf16.mxu0 %v575
        %966 = vmatmul.mubr.bf16.gmra.mrb[0].mxu0 %v574
        %v967 = vpop.f32.mrb[0].mxu0
        %v968 = vadd.f32 %v871, %v967
        %v969 = vpop.f32.mrb[0].mxu0
        %v970 = vpop.f32.mrb[0].mxu0
        %v971 = vadd.f32 %v874, %v970
        %v972 = vpop.f32.mrb[0].mxu0
        %973 = vmatprep.mubr.bf16.mxu0 %v579
        %974 = vmatmul.mubr.bf16.gmra.mrb[0].mxu0 %v578
        %v975 = vpop.f32.mrb[0].mxu0
        %v976 = vadd.f32 %v879, %v975
        %v977 = vpop.f32.mrb[0].mxu0
        %v978 = vpop.f32.mrb[0].mxu0
        %v979 = vadd.f32 %v882, %v978
        %v980 = vpop.f32.mrb[0].mxu0
        %981 = vmatprep.mubr.bf16.mxu0 %v583
        %982 = vmatmul.mubr.bf16.gmra.mrb[0].mxu0 %v582
        %v983 = vpop.f32.mrb[0].mxu0
        %v984 = vadd.f32 %v887, %v983
        %v985 = vpop.f32.mrb[0].mxu0
        %v986 = vpop.f32.mrb[0].mxu0
        %v987 = vadd.f32 %v890, %v986
        %v988 = vpop.f32.mrb[0].mxu0
        %989 = vmatprep.mubr.bf16.mxu0 %v587
        %990 = vmatmul.mubr.bf16.gmra.mrb[0].mxu0 %v586
        %v991 = vpop.f32.mrb[0].mxu0
        %v992 = vadd.f32 %v895, %v991
        %v993 = vpop.f32.mrb[0].mxu0
        %v994 = vpop.f32.mrb[0].mxu0
        %v995 = vadd.f32 %v898, %v994
        %v996 = vpop.f32.mrb[0].mxu0
        %997 = vmatprep.mubr.bf16.mxu0 %v591
        %998 = vmatmul.mubr.bf16.gmra.mrb[0].mxu0 %v590
        %v999 = vpop.f32.mrb[0].mxu0
        %v1000 = vadd.f32 %v903, %v999
        %v1001 = vpop.f32.mrb[0].mxu0
        %v1002 = vpop.f32.mrb[0].mxu0
        %v1003 = vadd.f32 %v906, %v1002
        %v1004 = vpop.f32.mrb[0].mxu0
        %1005 = vmatprep.mubr.bf16.mxu0 %v595
        %1006 = vmatmul.mubr.bf16.gmra.mrb[0].mxu0 %v594
        %v1007 = vpop.f32.mrb[0].mxu0
        %v1008 = vadd.f32 %v911, %v1007
        %v1009 = vpop.f32.mrb[0].mxu0
        %v1010 = vpop.f32.mrb[0].mxu0
        %v1011 = vadd.f32 %v914, %v1010
        %v1012 = vpop.f32.mrb[0].mxu0
        %1013 = vdwg.mxu0
        %v1014 = vadd.f32 %v356, %v952
        %v1015 = vadd.f32 %v357, %v955
        %v1016 = vadd.f32 %v358, %v960
        %v1017 = vadd.f32 %v359, %v963
        %v1018 = vadd.f32 %v360, %v968
        %v1019 = vadd.f32 %v361, %v971
        %v1020 = vadd.f32 %v362, %v976
        %v1021 = vadd.f32 %v363, %v979
        %v1022 = vadd.f32 %v364, %v984
        %v1023 = vadd.f32 %v365, %v987
        %v1024 = vadd.f32 %v366, %v992
        %v1025 = vadd.f32 %v367, %v995
        %v1026 = vadd.f32 %v368, %v1000
        %v1027 = vadd.f32 %v369, %v1003
        %v1028 = vadd.f32 %v370, %v1008
        %v1029 = vadd.f32 %v371, %v1011
        %1030 = vst [vmem:[%s333] sm:$0xff] %v1014
        %1031 = vst [vmem:[%s333 + $0x8] sm:$0xff] %v1015
        %1032 = vst [vmem:[%s333 + $0x10] sm:$0xff] %v1016
        %1033 = vst [vmem:[%s333 + $0x18] sm:$0xff] %v1017
        %1034 = vst [vmem:[%s333 + $0x20] sm:$0xff] %v1018
        %1035 = vst [vmem:[%s333 + $0x28] sm:$0xff] %v1019
        %1036 = vst [vmem:[%s333 + $0x30] sm:$0xff] %v1020
        %1037 = vst [vmem:[%s333 + $0x38] sm:$0xff] %v1021
        %1038 = vst [vmem:[%s333 + $0x40] sm:$0xff] %v1022
        %1039 = vst [vmem:[%s333 + $0x48] sm:$0xff] %v1023
        %1040 = vst [vmem:[%s333 + $0x50] sm:$0xff] %v1024
        %1041 = vst [vmem:[%s333 + $0x58] sm:$0xff] %v1025
        %1042 = vst [vmem:[%s333 + $0x60] sm:$0xff] %v1026
        %1043 = vst [vmem:[%s333 + $0x68] sm:$0xff] %v1027
        %1044 = vst [vmem:[%s333 + $0x70] sm:$0xff] %v1028
        %1045 = vst [vmem:[%s333 + $0x78] sm:$0xff] %v1029
        %p1046 = scmp.eq.s32.totalorder %s21, 1
        // Predicated region
        $region60: #{edgenet.51} parent=50 // pred_check
          %p1047 = pneg %p1046
        $region61: #{edgenet.51} parent=50 // pred_check_branch
          %1049 = sbr.rel (%p1047) target = $region63
        $region62: #{edgenet.51} parent=50 // pred_region
          %v1050 = vld [vmem:[%s333] sm:$0xff]
          %v1051 = vld [vmem:[%s333 + $0x8] sm:$0xff]
          %v1052 = vld [vmem:[%s333 + $0x10] sm:$0xff]
          %v1053 = vld [vmem:[%s333 + $0x18] sm:$0xff]
          %v1054 = vld [vmem:[%s333 + $0x20] sm:$0xff]
          %v1055 = vld [vmem:[%s333 + $0x28] sm:$0xff]
          %v1056 = vld [vmem:[%s333 + $0x30] sm:$0xff]
          %v1057 = vld [vmem:[%s333 + $0x38] sm:$0xff]
          %v1058 = vld [vmem:[%s333 + $0x40] sm:$0xff]
          %v1059 = vld [vmem:[%s333 + $0x48] sm:$0xff]
          %v1060 = vld [vmem:[%s333 + $0x50] sm:$0xff]
          %v1061 = vld [vmem:[%s333 + $0x58] sm:$0xff]
          %v1062 = vld [vmem:[%s333 + $0x60] sm:$0xff]
          %v1063 = vld [vmem:[%s333 + $0x68] sm:$0xff]
          %v1064 = vld [vmem:[%s333 + $0x70] sm:$0xff]
          %v1065 = vld [vmem:[%s333 + $0x78] sm:$0xff]
          %v1066 = vld [vmem:[%s325] sm:$0x1]
          %v1068 = vlaneseq
          %v1069 = vshrl.u32 %v1068, 7
          %v1070 = vsub.s32 0, %v1069
          %v1071 = vrot.slane %v1066, %v1070
          %v1073 = vadd.f32 %v1050, %v1071
          %v1074 = vadd.f32 %v1051, %v1071
          %v1075 = vadd.f32 %v1052, %v1071
          %v1076 = vadd.f32 %v1053, %v1071
          %v1077 = vadd.f32 %v1054, %v1071
          %v1078 = vadd.f32 %v1055, %v1071
          %v1079 = vadd.f32 %v1056, %v1071
          %v1080 = vadd.f32 %v1057, %v1071
          %v1081 = vadd.f32 %v1058, %v1071
          %v1082 = vadd.f32 %v1059, %v1071
          %v1083 = vadd.f32 %v1060, %v1071
          %v1084 = vadd.f32 %v1061, %v1071
          %v1085 = vadd.f32 %v1062, %v1071
          %v1086 = vadd.f32 %v1063, %v1071
          %v1087 = vadd.f32 %v1064, %v1071
          %v1088 = vadd.f32 %v1065, %v1071
          %1089 = vst [vmem:[%s333] sm:$0xff] %v1073
          %1090 = vst [vmem:[%s333 + $0x8] sm:$0xff] %v1074
          %1091 = vst [vmem:[%s333 + $0x10] sm:$0xff] %v1075
          %1092 = vst [vmem:[%s333 + $0x18] sm:$0xff] %v1076
          %1093 = vst [vmem:[%s333 + $0x20] sm:$0xff] %v1077
          %1094 = vst [vmem:[%s333 + $0x28] sm:$0xff] %v1078
          %1095 = vst [vmem:[%s333 + $0x30] sm:$0xff] %v1079
          %1096 = vst [vmem:[%s333 + $0x38] sm:$0xff] %v1080
          %1097 = vst [vmem:[%s333 + $0x40] sm:$0xff] %v1081
          %1098 = vst [vmem:[%s333 + $0x48] sm:$0xff] %v1082
          %1099 = vst [vmem:[%s333 + $0x50] sm:$0xff] %v1083
          %1100 = vst [vmem:[%s333 + $0x58] sm:$0xff] %v1084
          %1101 = vst [vmem:[%s333 + $0x60] sm:$0xff] %v1085
          %1102 = vst [vmem:[%s333 + $0x68] sm:$0xff] %v1086
          %1103 = vst [vmem:[%s333 + $0x70] sm:$0xff] %v1087
          %1104 = vst [vmem:[%s333 + $0x78] sm:$0xff] %v1088
        $region63: #{edgenet.51} parent=50 // pred_fallthru
          _
        %s1105 = smul.u32 16, %s19
        %p1106 = scmp.lt.s32.totalorder %s1105, 15
        %s1107 = scalar_select %p1106, %s1105, 15
        %p1108 = scmp.lt.s32.totalorder %s20, 0
        %s1109 = scalar_select %p1108, %s20, 0
        %s1110 = sadd.s32 %s1109, %s1107
        %s1111 = smul.addr %s1110, 8
        %s1112 = scalar_lea.vmem %s3, %s1111
        // Predicated region
        $region64: #{edgenet.51} parent=50 // pred_check
          %p1113 = pneg %p135
        $region65: #{edgenet.51} parent=50 // pred_check_branch
          %1115 = sbr.rel (%p1113) target = $region67
        $region66: #{edgenet.51} parent=50 // pred_region
          %s1116 = smul.u32 16, %s19
        $region67: #{edgenet.51} parent=50 // pred_fallthru
          _
        // Predicated region
        $region68: #{edgenet.51} parent=50 // pred_check
          %p1117 = pneg %p135
        $region69: #{edgenet.51} parent=50 // pred_check_branch
          %1119 = sbr.rel (%p1117) target = $region71
        $region70: #{edgenet.51} parent=50 // pred_region
          %s1120 = smul.u32 16, %s19
          %p1121 = scmp.lt.s32.totalorder %s1120, 15
          %s1122 = scalar_select %p1121, %s1120, 15
          %p1123 = scmp.lt.s32.totalorder %s20, 0
          %s1124 = scalar_select %p1123, %s20, 0
          %s1125 = sadd.s32 %s1124, %s1122
          %s1126 = smul.addr %s1125, 8
          %s1127 = scalar_lea.vmem %s3, %s1126
        $region71: #{edgenet.51} parent=50 // pred_fallthru
          _
      $region51: #{edgenet.51} parent=5 // pred_fallthru
        _
      %p1128 = scmp.le.s32.totalorder 2, %s9
      // Predicated region
      $region72: #{edgenet.51} parent=5 // pred_check
        %p1129 = pneg %p1128
      $region73: #{edgenet.51} parent=5 // pred_check_branch
        %1131 = sbr.rel (%p1129) target = $region75
      $region74: #{edgenet.51} parent=5 // pred_region
        %s1132 = ssub.s32 %s9, 2
      $region75: #{edgenet.51} parent=5 // pred_fallthru
        _
    $region6: #{edgenet.51} parent=1 // loop_footer
      %s13 = sadd.s32 1, %s9
    $region7: #{edgenet.51} parent=1 // loop_footer_branch
      %8 = sbr.rel target = $region3
    $region8: #{edgenet.51} parent=1 // loop_exit
      _

// kernel: edgenet.52
$region0: #{edgenet.52}
  #allocation0 [shape = 'u32[]', space=smem, size = 0x4, offset = 0x4, fixed_abs, tag = 'smem constant byte address 0x4 - core index']
  #allocation1 [shape = 'u32[144,128]{1,0:T(1,128)}', space=vmem, size = 0x12000, scoped, tag = 'internal scratch']
  %s0 = inlined_call_operand.vmem [shape: f32[2,64,128], index: 0, kind: input, shape index: {}]
  %s1 = inlined_call_operand.vmem [shape: f32[2,64,128], index: 1, kind: output, shape index: {}]
  %s2 = sld [smem:[#allocation0]]
  $region37: #{edgenet.52} parent=0
    _
  %s4 = ssub.s32 1, %s2
  %s5 = scalar_select 0, %s4, %s2
  loop: start=0, step=1, limit=4
  $region2: #{edgenet.52} parent=0 // loop_pre_header
    _
  $region3: #{edgenet.52} parent=0 // loop_header
    %s7 = sphi 0, %s11
    %p8 = scmp.ge.s32.totalorder %s7, 4
    %s17 = sphi 0, %s19
    %s20 = sphi 0, %s17
    %s21 = sphi 0, %s20
    %s37 = sphi 0, %s21
    %s43 = sphi 0, %s45
    %s46 = sphi 0, %s43
    %s47 = sphi 0, %s46
    %s63 = sphi 0, %s47
  $region4: #{edgenet.52} parent=0 // loop_header_branch
    %10 = sbr.rel (%p8) target = $region8
  $region5: #{edgenet.52} parent=0 // loop_body
    %s12 = ssub.s32 %s7, 1
    %s13 = ssub.s32 %s7, 2
    %s14 = sadd.s32 %s7, 1
    %s15 = ssub.s32 %s7, %s14
    %p16 = scmp.eq.s32.totalorder %s15, 0
    %s18 = sadd.s32 %s17, 1
    %s19 = scalar_select %p16, %s17, %s18
    %p22 = pneg %p16
    %p23 = scmp.eq.s32.totalorder %s7, 1
    %p24 = por %p22, %p23
    %p25 = scmp.ne.s32.totalorder %s17, %s20
    %p26 = scmp.eq.s32.totalorder %s7, 0
    %p27 = por %p25, %p26
    %p28 = scmp.ne.s32.totalorder %s17, %s20
    %p29 = scmp.eq.s32.totalorder %s12, 1
    %p30 = por %p28, %p29
    %p31 = scmp.ne.s32.totalorder %s20, %s21
    %p32 = scmp.eq.s32.totalorder %s12, 0
    %p33 = por %p31, %p32
    %p34 = scmp.ne.s32.totalorder %s20, %s21
    %p35 = scmp.eq.s32.totalorder %s13, 1
    %p36 = por %p34, %p35
    %p38 = scmp.ne.s32.totalorder %s21, %s37
    %p39 = scmp.eq.s32.totalorder %s13, 0
    %p40 = por %p38, %p39
    %s41 = ssub.s32 %s7, %s14
    %p42 = scmp.eq.s32.totalorder %s41, 0
    %s44 = sadd.s32 %s43, 1
    %s45 = scalar_select %p42, %s43, %s44
    %p48 = pneg %p42
    %p49 = scmp.eq.s32.totalorder %s7, 1
    %p50 = por %p48, %p49
    %p51 = scmp.ne.s32.totalorder %s43, %s46
    %p52 = scmp.eq.s32.totalorder %s7, 0
    %p53 = por %p51, %p52
    %p54 = scmp.ne.s32.totalorder %s43, %s46
    %p55 = scmp.eq.s32.totalorder %s12, 1
    %p56 = por %p54, %p55
    %p57 = scmp.ne.s32.totalorder %s46, %s47
    %p58 = scmp.eq.s32.totalorder %s12, 0
    %p59 = por %p57, %p58
    %p60 = scmp.ne.s32.totalorder %s46, %s47
    %p61 = scmp.eq.s32.totalorder %s13, 1
    %p62 = por %p60, %p61
    %p64 = scmp.ne.s32.totalorder %s47, %s63
    %p65 = scmp.eq.s32.totalorder %s13, 0
    %p66 = por %p64, %p65
    %p67 = scmp.le.s32.totalorder 1, %s7
    %p68 = scmp.lt.s32.totalorder %s7, 3
    %p69 = pnand %p67, %p68
    %p70 = pneg %p69
    // Predicated region
    $region9: #{edgenet.52} parent=5 // pred_check
      _
    $region10: #{edgenet.52} parent=5 // pred_check_branch
      %72 = sbr.rel (%p69) target = $region12
    $region11: #{edgenet.52} parent=5 // pred_region
      %s73 = ssub.s32 %s7, 1
    $region12: #{edgenet.52} parent=5 // pred_fallthru
      _
    %p74 = scmp.lt.s32.totalorder %s7, 2
    // Predicated region
    $region13: #{edgenet.52} parent=5 // pred_check
      %p75 = pneg %p74
    $region14: #{edgenet.52} parent=5 // pred_check_branch
      %77 = sbr.rel (%p75) target = $region16
    $region15: #{edgenet.52} parent=5 // pred_region
      // Predicated region
      $region17: #{edgenet.52} parent=15 // pred_check
        %p78 = pneg %p27
      $region18: #{edgenet.52} parent=15 // pred_check_branch
        %80 = sbr.rel (%p78) target = $region20
      $region19: #{edgenet.52} parent=15 // pred_region
        %p81 = scmp.lt.s32.totalorder %s7, 1
        %s82 = scalar_select %p81, %s7, 1
        %s83 = smul.addr %s82, 8
        %s84 = smul.addr %s83, 8
        %s85 = scalar_lea.vmem %s0, %s84
      $region20: #{edgenet.52} parent=15 // pred_fallthru
        _
    $region16: #{edgenet.52} parent=5 // pred_fallthru
      _
    %p86 = scmp.le.s32.totalorder 1, %s7
    %p87 = scmp.lt.s32.totalorder %s7, 3
    %p88 = pnand %p86, %p87
    %p89 = pneg %p88
    // Predicated region
    $region21: #{edgenet.52} parent=5 // pred_check
      _
    $region22: #{edgenet.52} parent=5 // pred_check_branch
      %91 = sbr.rel (%p88) target = $region24
    $region23: #{edgenet.52} parent=5 // pred_region
      %s92 = ssub.s32 %s7, 1
      %p93 = scmp.lt.s32.totalorder %s12, 1
      %s94 = scalar_select %p93, %s12, 1
      %s95 = smul.addr %s94, 8
      %s96 = smul.addr %s95, 8
      %s97 = scalar_lea.vmem %s0, %s96
      %p98 = pneg %p33
      %p99 = pneg %p30
      %p100 = pneg %p59
      %p101 = pneg %p56
      %p102 = scmp.lt.s32.totalorder %s12, 1
      %s103 = scalar_select %p102, %s12, 1
      %s104 = smul.addr %s103, 8
      %s105 = smul.addr %s104, 8
      %s106 = scalar_lea.vmem %s1, %s105
      %p107 = scmp.lt.s32.totalorder %s12, 1
      %s108 = scalar_select %p107, %s12, 1
      %s109 = smul.addr %s108, 8
      %s110 = smul.addr %s109, 8
      %s111 = scalar_lea.vmem %s0, %s110
      %p112 = scmp.lt.s32.totalorder %s12, 1
      %s113 = scalar_select %p112, %s12, 1
      %s114 = smul.addr %s113, 8
      %s115 = smul.addr %s114, 8
      %s116 = scalar_lea.vmem %s1, %s115
      %v117 = vld [vmem:[%s111] sm:$0xff]
      %v118 = vld [vmem:[%s111 + $0x8] sm:$0xff]
      %v119 = vld [vmem:[%s111 + $0x10] sm:$0xff]
      %v120 = vld [vmem:[%s111 + $0x18] sm:$0xff]
      %v121 = vld [vmem:[%s111 + $0x20] sm:$0xff]
      %v122 = vld [vmem:[%s111 + $0x28] sm:$0xff]
      %v123 = vld [vmem:[%s111 + $0x30] sm:$0xff]
      %v124 = vld [vmem:[%s111 + $0x38] sm:$0xff]
      %v125 = vadd.f32 %v117, %v118
      %v126 = vadd.f32 %v125, %v119
      %v127 = vadd.f32 %v126, %v120
      %v128 = vadd.f32 %v127, %v121
      %v129 = vadd.f32 %v128, %v122
      %v130 = vadd.f32 %v129, %v123
      %v131 = vadd.f32 %v130, %v124
      %v132 = vrot.slane %v131, 4
      %v133 = vadd.f32 %v131, %v132
      %v134 = vrot.slane %v133, 2
      %v135 = vadd.f32 %v133, %v134
      %v136 = vrot.slane %v135, 1
      %v137 = vadd.f32 %v135, %v136
      %v138 = vrcp.pop 64.0
      %v139 = vmul.f32 %v137, %v138
      %v140 = vsub.f32 %v117, %v139
      %v141 = vsub.f32 %v118, %v139
      %v142 = vsub.f32 %v119, %v139
      %v143 = vsub.f32 %v120, %v139
      %v144 = vsub.f32 %v121, %v139
      %v145 = vsub.f32 %v122, %v139
      %v146 = vsub.f32 %v123, %v139
      %v147 = vsub.f32 %v124, %v139
      %v148 = vmul.f32 %v140, %v140
      %v149 = vmul.f32 %v141, %v141
      %v150 = vmul.f32 %v142, %v142
      %v151 = vmul.f32 %v143, %v143
      %v152 = vmul.f32 %v144, %v144
      %v153 = vmul.f32 %v145, %v145
      %v154 = vmul.f32 %v146, %v146
      %v155 = vmul.f32 %v147, %v147
      %v156 = vadd.f32 %v148, %v149
      %v157 = vadd.f32 %v156, %v150
      %v158 = vadd.f32 %v157, %v151
      %v159 = vadd.f32 %v158, %v152
      %v160 = vadd.f32 %v159, %v153
      %v161 = vadd.f32 %v160, %v154
      %v162 = vadd.f32 %v161, %v155
      %v163 = vrot.slane %v162, 4
      %v164 = vadd.f32 %v162, %v163
      %v165 = vrot.slane %v164, 2
      %v166 = vadd.f32 %v164, %v165
      %v167 = vrot.slane %v166, 1
      %v168 = vadd.f32 %v166, %v167
      %v169 = vmul.f32 %v168, %v138
      %v170 = vadd.f32 %v169, 1e-05
      %v171 = vrsqrt.pop %v170
      %v172 = vmul.f32 %v140, %v171
      %v173 = vmul.f32 %v141, %v171
      %v174 = vmul.f32 %v142, %v171
      %v175 = vmul.f32 %v143, %v171
      %v176 = vmul.f32 %v144, %v171
      %v177 = vmul.f32 %v145, %v171
      %v178 = vmul.f32 %v146, %v171
      %v179 = vmul.f32 %v147, %v171
      %v180 = vmax.f32 %v172, 0.0
      %v181 = vmax.f32 %v173, 0.0
      %v182 = vmax.f32 %v174, 0.0
      %v183 = vmax.f32 %v175, 0.0
      %v184 = vmax.f32 %v176, 0.0
      %v185 = vmax.f32 %v177, 0.0
      %v186 = vmax.f32 %v178, 0.0
      %v187 = vmax.f32 %v179, 0.0
      %188 = vst [vmem:[%s116] sm:$0xff] %v180
      %189 = vst [vmem:[%s116 + $0x8] sm:$0xff] %v181
      %190 = vst [vmem:[%s116 + $0x10] sm:$0xff] %v182
      %191 = vst [vmem:[%s116 + $0x18] sm:$0xff] %v183
      %192 = vst [vmem:[%s116 + $0x20] sm:$0xff] %v184
      %193 = vst [vmem:[%s116 + $0x28] sm:$0xff] %v185
      %194 = vst [vmem:[%s116 + $0x30] sm:$0xff] %v186
      %195 = vst [vmem:[%s116 + $0x38] sm:$0xff] %v187
      %p196 = scmp.lt.s32.totalorder %s12, 1
      %s197 = scalar_select %p196, %s12, 1
      %s198 = smul.addr %s197, 8
      %s199 = smul.addr %s198, 8
      %s200 = scalar_lea.vmem %s1, %s199
      // Predicated region
      $region25: #{edgenet.52} parent=23 // pred_check
        %p201 = pneg %p56
      $region26: #{edgenet.52} parent=23 // pred_check_branch
        %203 = sbr.rel (%p201) target = $region28
      $region27: #{edgenet.52} parent=23 // pred_region
        _
      $region28: #{edgenet.52} parent=23 // pred_fallthru
        _
    $region24: #{edgenet.52} parent=5 // pred_fallthru
      _
    %p204 = scmp.le.s32.totalorder 2, %s7
    // Predicated region
    $region29: #{edgenet.52} parent=5 // pred_check
      %p205 = pneg %p204
    $region30: #{edgenet.52} parent=5 // pred_check_branch
      %207 = sbr.rel (%p205) target = $region32
    $region31: #{edgenet.52} parent=5 // pred_region
      %s208 = ssub.s32 %s7, 2
      // Predicated region
      $region33: #{edgenet.52} parent=31 // pred_check
        %p209 = pneg %p62
      $region34: #{edgenet.52} parent=31 // pred_check_branch
        %211 = sbr.rel (%p209) target = $region36
      $region35: #{edgenet.52} parent=31 // pred_region
        %p212 = scmp.lt.s32.totalorder %s13, 1
        %s213 = scalar_select %p212, %s13, 1
        %s214 = smul.addr %s213, 8
        %s215 = smul.addr %s214, 8
        %s216 = scalar_lea.vmem %s1, %s215
      $region36: #{edgenet.52} parent=31 // pred_fallthru
        _
    $region32: #{edgenet.52} parent=5 // pred_fallthru
      _
  $region6: #{edgenet.52} parent=0 // loop_footer
    %s11 = sadd.s32 1, %s7
  $region7: #{edgenet.52} parent=0 // loop_footer_branch
    %6 = sbr.rel target = $region3
  $region8: #{edgenet.52} parent=0 // loop_exit
    _

// kernel: edgenet.53
$region0: #{edgenet.53}
  #allocation0 [shape = 'u32[]', space=smem, size = 0x4, offset = 0x4, fixed_abs, tag = 'smem constant byte address 0x4 - core index']
  #allocation1 [shape = 'u32[144,128]{1,0:T(1,128)}', space=vmem, size = 0x12000, scoped, tag = 'internal scratch']
  %s0 = inlined_call_operand.vmem [shape: bf16[32,2048], index: 0, kind: input, shape index: {}]
  %s1 = inlined_call_operand.vmem [shape: bf16[2048,256], index: 1, kind: input, shape index: {}]
  %s2 = inlined_call_operand.vmem [shape: f32[1,256], index: 2, kind: input, shape index: {}]
  %s3 = inlined_call_operand.vmem [shape: f32[32,256], index: 3, kind: output, shape index: {}]
  %s4 = sld [smem:[#allocation0]]
  $region76: #{edgenet.53} parent=0
    _
  %s6 = ssub.s32 1, %s4
  %s7 = scalar_select 0, %s6, %s4
  $region1: #{edgenet.53} parent=0
    #allocation2 [shape = 'u8[65536]{0}', space=vmem, size = 0x10000, scoped, tag = 'input window, operand 0']
    loop: start=0, step=1, limit=6
    $region2: #{edgenet.53} parent=1 // loop_pre_header
      _
    $region3: #{edgenet.53} parent=1 // loop_header
      %s9 = sphi 0, %s13
      %p10 = scmp.ge.s32.totalorder %s9, 6
      %s16 = sphi 0, %s35
      %s17 = sphi 0, %s31
      %s18 = sphi 0, %s27
      %s19 = sphi 0, %s16
      %s20 = sphi 0, %s17
      %s21 = sphi 0, %s18
      %s22 = sphi 0, %s19
      %s23 = sphi 0, %s20
      %s24 = sphi 0, %s21
      %s40 = sphi 0, %s42
      %s43 = sphi 0, %s40
      %s44 = sphi 0, %s43
      %s60 = sphi 0, %s44
      %s68 = sphi 0, %s70
      %s71 = sphi 0, %s68
      %s72 = sphi 0, %s71
      %s88 = sphi 0, %s72
      %s94 = sphi 0, %s96
      %s97 = sphi 0, %s94
      %s98 = sphi 0, %s97
      %s114 = sphi 0, %s98
      %s122 = sphi 0, %s124
      %s125 = sphi 0, %s122
      %s126 = sphi 0, %s125
      %s142 = sphi 0, %s126
    $region4: #{edgenet.53} parent=1 // loop_header_branch
      %12 = sbr.rel (%p10) target = $region8
    $region5: #{edgenet.53} parent=1 // loop_body
      %s14 = ssub.s32 %s9, 1
      %s15 = ssub.s32 %s9, 2
      %s25 = sadd.s32 1, %s18
      %p26 = scmp.ge.s32.totalorder %s25, 4
      %s27 = scalar_select %p26, 0, %s25
      %s28 = sadd.s32 1, %s17
      %s29 = scalar_select %p26, %s28, %s17
      %p30 = scmp.ge.s32.totalorder %s29, 1
      %s31 = scalar_select %p30, 0, %s29
      %s32 = sadd.s32 1, %s16
      %s33 = scalar_select %p30, %s32, %s16
      %p34 = scmp.ge.s32.totalorder %s33, 1
      %s35 = scalar_select %p34, 0, %s33
      %s36 = ssub.s32 %s16, %s35
      %s37 = ssub.s32 %s18, %s27
      %s38 = sor.u32 %s36, %s37
      %p39 = scmp.eq.s32.totalorder %s38, 0
      %s41 = sadd.s32 %s40, 1
      %s42 = scalar_select %p39, %s40, %s41
      %p45 = pneg %p39
      %p46 = scmp.eq.s32.totalorder %s9, 3
      %p47 = por %p45, %p46
      %p48 = scmp.ne.s32.totalorder %s40, %s43
      %p49 = scmp.eq.s32.totalorder %s9, 0
      %p50 = por %p48, %p49
      %p51 = scmp.ne.s32.totalorder %s40, %s43
      %p52 = scmp.eq.s32.totalorder %s14, 3
      %p53 = por %p51, %p52
      %p54 = scmp.ne.s32.totalorder %s43, %s44
      %p55 = scmp.eq.s32.totalorder %s14, 0
      %p56 = por %p54, %p55
      %p57 = scmp.ne.s32.totalorder %s43, %s44
      %p58 = scmp.eq.s32.totalorder %s15, 3
      %p59 = por %p57, %p58
      %p61 = scmp.ne.s32.totalorder %s44, %s60
      %p62 = scmp.eq.s32.totalorder %s15, 0
      %p63 = por %p61, %p62
      %s64 = ssub.s32 %s18, %s27
      %s65 = ssub.s32 %s17, %s31
      %s66 = sor.u32 %s64, %s65
      %p67 = scmp.eq.s32.totalorder %s66, 0
      %s69 = sadd.s32 %s68, 1
      %s70 = scalar_select %p67, %s68, %s69
      %p73 = pneg %p67
      %p74 = scmp.eq.s32.totalorder %s9, 3
      %p75 = por %p73, %p74
      %p76 = scmp.ne.s32.totalorder %s68, %s71
      %p77 = scmp.eq.s32.totalorder %s9, 0
      %p78 = por %p76, %p77
      %p79 = scmp.ne.s32.totalorder %s68, %s71
      %p80 = scmp.eq.s32.totalorder %s14, 3
      %p81 = por %p79, %p80
      %p82 = scmp.ne.s32.totalorder %s71, %s72
      %p83 = scmp.eq.s32.totalorder %s14, 0
      %p84 = por %p82, %p83
      %p85 = scmp.ne.s32.totalorder %s71, %s72
      %p86 = scmp.eq.s32.totalorder %s15, 3
      %p87 = por %p85, %p86
      %p89 = scmp.ne.s32.totalorder %s72, %s88
      %p90 = scmp.eq.s32.totalorder %s15, 0
      %p91 = por %p89, %p90
      %s92 = ssub.s32 %s17, %s31
      %p93 = scmp.eq.s32.totalorder %s92, 0
      %s95 = sadd.s32 %s94, 1
      %s96 = scalar_select %p93, %s94, %s95
      %p99 = pneg %p93
      %p100 = scmp.eq.s32.totalorder %s9, 3
      %p101 = por %p99, %p100
      %p102 = scmp.ne.s32.totalorder %s94, %s97
      %p103 = scmp.eq.s32.totalorder %s9, 0
      %p104 = por %p102, %p103
      %p105 = scmp.ne.s32.totalorder %s94, %s97
      %p106 = scmp.eq.s32.totalorder %s14, 3
      %p107 = por %p105, %p106
      %p108 = scmp.ne.s32.totalorder %s97, %s98
      %p109 = scmp.eq.s32.totalorder %s14, 0
      %p110 = por %p108, %p109
      %p111 = scmp.ne.s32.totalorder %s97, %s98
      %p112 = scmp.eq.s32.totalorder %s15, 3
      %p113 = por %p111, %p112
      %p115 = scmp.ne.s32.totalorder %s98, %s114
      %p116 = scmp.eq.s32.totalorder %s15, 0
      %p117 = por %p115, %p116
      %s118 = ssub.s32 %s16, %s35
      %s119 = ssub.s32 %s17, %s31
      %s120 = sor.u32 %s118, %s119
      %p121 = scmp.eq.s32.totalorder %s120, 0
      %s123 = sadd.s32 %s122, 1
      %s124 = scalar_select %p121, %s122, %s123
      %p127 = pneg %p121
      %p128 = scmp.eq.s32.totalorder %s9, 3
      %p129 = por %p127, %p128
      %p130 = scmp.ne.s32.totalorder %s122, %s125
      %p131 = scmp.eq.s32.totalorder %s9, 0
      %p132 = por %p130, %p131
      %p133 = scmp.ne.s32.totalorder %s122, %s125
      %p134 = scmp.eq.s32.totalorder %s14, 3
      %p135 = por %p133, %p134
      %p136 = scmp.ne.s32.totalorder %s125, %s126
      %p137 = scmp.eq.s32.totalorder %s14, 0
      %p138 = por %p136, %p137
      %p139 = scmp.ne.s32.totalorder %s125, %s126
      %p140 = scmp.eq.s32.totalorder %s15, 3
      %p141 = por %p139, %p140
      %p143 = scmp.ne.s32.totalorder %s126, %s142
      %p144 = scmp.eq.s32.totalorder %s15, 0
      %p145 = por %p143, %p144
      %p146 = scmp.le.s32.totalorder 1, %s9
      %p147 = scmp.lt.s32.totalorder %s9, 5
      %p148 = pnand %p146, %p147
      %p149 = pneg %p148
      // Predicated region
      $region9: #{edgenet.53} parent=5 // pred_check
        _
      $region10: #{edgenet.53} parent=5 // pred_check_branch
        %151 = sbr.rel (%p148) target = $region12
      $region11: #{edgenet.53} parent=5 // pred_region
        %s152 = ssub.s32 %s9, 1
        // Predicated region
        $region13: #{edgenet.53} parent=11 // pred_check
          %p153 = pneg %p110
        $region14: #{edgenet.53} parent=11 // pred_check_branch
          %155 = sbr.rel (%p153) target = $region16
        $region15: #{edgenet.53} parent=11 // pred_region
          %s156 = smul.u32 2, %s20
          %p157 = scmp.lt.s32.totalorder %s156, 1
          %s158 = scalar_select %p157, %s156, 1
          %s159 = scalar_lea.vmem %s2, %s158
          %s160 = smul.u32 2, %s20
        $region16: #{edgenet.53} parent=11 // pred_fallthru
          _
      $region12: #{edgenet.53} parent=5 // pred_fallthru
        _
      %p161 = scmp.lt.s32.totalorder %s9, 4
      // Predicated region
      $region17: #{edgenet.53} parent=5 // pred_check
        %p162 = pneg %p161
      $region18: #{edgenet.53} parent=5 // pred_check_branch
        %164 = sbr.rel (%p162) target = $region20
      $region19: #{edgenet.53} parent=5 // pred_region
        // Predicated region
        $region21: #{edgenet.53} parent=19 // pred_check
          %p165 = pneg %p50
        $region22: #{edgenet.53} parent=19 // pred_check_branch
          %167 = sbr.rel (%p165) target = $region24
        $region23: #{edgenet.53} parent=19 // pred_region
          %s168 = sand.u32 %s40, 1
          %s169 = sand.u32 %s40, 1
          %s170 = smul.addr %s169, 64
          %s171 = scalar_lea.vmem [#allocation2], %s170
          %s172 = smul.u32 4, %s16
          %s173 = smul.u32 4, %s18
          %s174 = smul.addr %s172, 16
          %s175 = sadd.s32 %s173, %s174
          %s176 = smul.addr %s175, 4
          %s177 = scalar_lea.vmem %s0, %s176
          // Predicated region
          $region25: #{edgenet.53} parent=23 // pred_check
            _
          $region26: #{edgenet.53} parent=23 // pred_check_branch
            %179 = sbr.rel (0) target = $region28
          $region27: #{edgenet.53} parent=23 // pred_region
            // Predicated region
            $region29: #{edgenet.53} parent=27 // pred_check
              _
            $region30: #{edgenet.53} parent=27 // pred_check_branch
              %181 = sbr.rel (0) target = $region32
            $region31: #{edgenet.53} parent=27 // pred_region
              loop: start=0, step=1, limit=1
              $region33: #{edgenet.53} parent=31 // loop_pre_header
                _
              $region34: #{edgenet.53} parent=31 // loop_header
                %s183 = sphi 0, %s187
                %p184 = scmp.ge.s32.totalorder %s183, 1
                %s188 = sphi %s177, %s177
                %s189 = sphi %s171, %s171
              $region35: #{edgenet.53} parent=31 // loop_header_branch
                %186 = sbr.rel (%p184) target = $region39
              $region36: #{edgenet.53} parent=31 // loop_body
                %v190 = vld [vmem:[%s188] sm:$0xff]
                %191 = vst [vmem:[%s189] sm:$0xff] %v190
                %v192 = vld [vmem:[%s188 + $0x8] sm:$0xff]
                %193 = vst [vmem:[%s189 + $0x8] sm:$0xff] %v192
                %v194 = vld [vmem:[%s188 + $0x40] sm:$0xff]
                %195 = vst [vmem:[%s189 + $0x10] sm:$0xff] %v194
                %v196 = vld [vmem:[%s188 + $0x48] sm:$0xff]
                %197 = vst [vmem:[%s189 + $0x18] sm:$0xff] %v196
                %v198 = vld [vmem:[%s188 + $0x80] sm:$0xff]
                %199 = vst [vmem:[%s189 + $0x20] sm:$0xff] %v198
                %v200 = vld [vmem:[%s188 + $0x88] sm:$0xff]
                %201 = vst [vmem:[%s189 + $0x28] sm:$0xff] %v200
                %v202 = vld [vmem:[%s188 + $0xc0] sm:$0xff]
                %203 = vst [vmem:[%s189 + $0x30] sm:$0xff] %v202
                %v204 = vld [vmem:[%s188 + $0xc8] sm:$0xff]
                %205 = vst [vmem:[%s189 + $0x38] sm:$0xff] %v204
              $region37: #{edgenet.53} parent=31 // loop_footer
                %s187 = sadd.s32 1, %s183
              $region38: #{edgenet.53} parent=31 // loop_footer_branch
                %182 = sbr.rel target = $region34
              $region39: #{edgenet.53} parent=31 // loop_exit
                _
            $region32: #{edgenet.53} parent=27 // pred_fallthru
              _
            // Predicated region
            $region40: #{edgenet.53} parent=27 // pred_check
              _
            $region41: #{edgenet.53} parent=27 // pred_check_branch
              %207 = sbr.rel target = $region43
            $region42: #{edgenet.53} parent=27 // pred_region
              _
            $region43: #{edgenet.53} parent=27 // pred_fallthru
              _
          $region28: #{edgenet.53} parent=23 // pred_fallthru
            _
          %208 = vnop
        $region24: #{edgenet.53} parent=19 // pred_fallthru
          _
        // Predicated region
        $region44: #{edgenet.53} parent=19 // pred_check
          %p209 = pneg %p78
        $region45: #{edgenet.53} parent=19 // pred_check_branch
          %211 = sbr.rel (%p209) target = $region47
        $region46: #{edgenet.53} parent=19 // pred_region
          %s212 = smul.u32 64, %s18
          %s213 = smul.u32 2, %s17
          %p214 = scmp.lt.s32.totalorder %s212, 255
          %s215 = scalar_select %p214, %s212, 255
          %p216 = scmp.lt.s32.totalorder %s213, 1
          %s217 = scalar_select %p216, %s213, 1
          %s218 = smul.addr %s215, 2
          %s219 = sadd.s32 %s217, %s218
          %s220 = smul.addr %s219, 4
          %s221 = scalar_lea.vmem %s1, %s220
          %s222 = smul.u32 64, %s18
          %s223 = smul.u32 2, %s17
        $region47: #{edgenet.53} parent=19 // pred_fallthru
          _
      $region20: #{edgenet.53} parent=5 // pred_fallthru
        _
      %p224 = scmp.le.s32.totalorder 1, %s9
      %p225 = scmp.lt.s32.totalorder %s9, 5
      %p226 = pnand %p224, %p225
      %p227 = pneg %p226
      // Predicated region
      $region48: #{edgenet.53} parent=5 // pred_check
        _
      $region49: #{edgenet.53} parent=5 // pred_check_branch
        %229 = sbr.rel (%p226) target = $region51
      $region50: #{edgenet.53} parent=5 // pred_region
        %s230 = ssub.s32 %s9, 1
        %s231 = sand.u32 %s43, 1
        %s232 = sand.u32 %s43, 1
        %s233 = smul.addr %s232, 64
        %s234 = scalar_lea.vmem [#allocation2], %s233
        // Predicated region
        $region52: #{edgenet.53} parent=50 // pred_check
          %p235 = pneg %p56
        $region53: #{edgenet.53} parent=50 // pred_check_branch
          %237 = sbr.rel (%p235) target = $region55
        $region54: #{edgenet.53} parent=50 // pred_region
          _
        $region55: #{edgenet.53} parent=50 // pred_fallthru
          _
        %s238 = sand.u32 %s43, 1
        %s239 = sand.u32 %s43, 1
        %s240 = smul.addr %s239, 64
        %s241 = scalar_lea.vmem [#allocation2], %s240
        %p242 = pneg %p56
        %p243 = pneg %p53
        %s244 = smul.u32 64, %s21
        %s245 = smul.u32 2, %s20
        %p246 = scmp.lt.s32.totalorder %s244, 255
        %s247 = scalar_select %p246, %s244, 255
        %p248 = scmp.lt.s32.totalorder %s245, 1
        %s249 = scalar_select %p248, %s245, 1
        %s250 = smul.addr %s247, 2
        %s251 = sadd.s32 %s249, %s250
        %s252 = smul.addr %s251, 4
        %s253 = scalar_lea.vmem %s1, %s252
        %p254 = pneg %p84
        %p255 = pneg %p81
        %s256 = smul.u32 2, %s20
        %p257 = scmp.lt.s32.totalorder %s256, 1
        %s258 = scalar_select %p257, %s256, 1
        %s259 = scalar_lea.vmem %s2, %s258
        %p260 = pneg %p110
        %p261 = pneg %p107
        %p262 = pneg %p138
        %p263 = pneg %p135
        %s264 = smul.u32 4, %s19
        %s265 = smul.u32 2, %s20
        %p266 = scmp.lt.s32.totalorder %s264, 3
        %s267 = scalar_select %p266, %s264, 3
        %p268 = scmp.lt.s32.totalorder %s265, 1
        %s269 = scalar_select %p268, %s265, 1
        %s270 = smul.addr %s267, 2
        %s271 = sadd.s32 %s269, %s270
        %s272 = smul.addr %s271, 8
        %s273 = scalar_lea.vmem %s3, %s272
        %s274 = smul.u32 4, %s19
        %s275 = smul.u32 4, %s21
        %s276 = smul.u32 64, %s21
        %s277 = smul.u32 2, %s20
        %p278 = scmp.lt.s32.totalorder %s276, 255
        %s279 = scalar_select %p278, %s276, 255
        %p280 = scmp.lt.s32.totalorder %s277, 1
        %s281 = scalar_select %p280, %s277, 1
        %s282 = smul.addr %s279, 2
        %s283 = sadd.s32 %s281, %s282
        %s284 = smul.addr %s283, 4
        %s285 = scalar_lea.vmem %s1, %s284
        %s286 = smul.u32 64, %s21
        %s287 = smul.u32 2, %s20
        %s288 = smul.u32 2, %s20
        %p289 = scmp.lt.s32.totalorder %s288, 1
        %s290 = scalar_select %p289, %s288, 1
        %s291 = scalar_lea.vmem %s2, %s290
        %s292 = smul.u32 2, %s20
        %s293 = smul.u32 4, %s19
        %s294 = smul.u32 2, %s20
        %p295 = scmp.lt.s32.totalorder %s293, 3
        %s296 = scalar_select %p295, %s293, 3
        %p297 = scmp.lt.s32.totalorder %s294, 1
        %s298 = scalar_select %p297, %s294, 1
        %s299 = smul.addr %s296, 2
        %s300 = sadd.s32 %s298, %s299
        %s301 = smul.addr %s300, 8
        %s302 = scalar_lea.vmem %s3, %s301
        %s303 = smul.u32 4, %s19
        %s304 = smul.u32 2, %s20
        %p305 = scmp.eq.s32.totalorder %s21, 0
        // Predicated region
        $region56: #{edgenet.53} parent=50 // pred_check
          %p306 = pneg %p305
        $region57: #{edgenet.53} parent=50 // pred_check_branch
          %308 = sbr.rel (%p306) target = $region59
        $region58: #{edgenet.53} parent=50 // pred_region
          %309 = vst [vmem:[%s302] sm:$0xff] 0.0
          %310 = vst [vmem:[%s302 + $0x8] sm:$0xff] 0.0
          %311 = vst [vmem:[%s302 + $0x10] sm:$0xff] 0.0
          %312 = vst [vmem:[%s302 + $0x18] sm:$0xff] 0.0
          %313 = vst [vmem:[%s302 + $0x20] sm:$0xff] 0.0
          %314 = vst [vmem:[%s302 + $0x28] sm:$0xff] 0.0
          %315 = vst [vmem:[%s302 + $0x30] sm:$0xff] 0.0
          %316 = vst [vmem:[%s302 + $0x38] sm:$0xff] 0.0
        $region59: #{edgenet.53} parent=50 // pred_fallthru
          _
        %v317 = vld [vmem:[%s302] sm:$0xff]
        %v318 = vld [vmem:[%s302 + $0x8] sm:$0xff]
        %v319 = vld [vmem:[%s302 + $0x10] sm:$0xff]
        %v320 = vld [vmem:[%s302 + $0x18] sm:$0xff]
        %v321 = vld [vmem:[%s302 + $0x20] sm:$0xff]
        %v322 = vld [vmem:[%s302 + $0x28] sm:$0xff]
        %v323 = vld [vmem:[%s302 + $0x30] sm:$0xff]
        %v324 = vld [vmem:[%s302 + $0x38] sm:$0xff]
        %v325 = vld [vmem:[%s234] sm:$0xff]
        %v326 = vld [vmem:[%s234 + $0x8] sm:$0xff]
        %v327 = vld [vmem:[%s234 + $0x10] sm:$0xff]
        %v328 = vld [vmem:[%s234 + $0x18] sm:$0xff]
        %v329 = vld [vmem:[%s234 + $0x20] sm:$0xff]
        %v330 = vld [vmem:[%s234 + $0x28] sm:$0xff]
        %v331 = vld [vmem:[%s234 + $0x30] sm:$0xff]
        %v332 = vld [vmem:[%s234 + $0x38] sm:$0xff]
        %v333 = vld [vmem:[%s285] sm:$0xff]
        %v334 = vld [vmem:[%s285 + $0x8] sm:$0xff]
        %v335 = vld [vmem:[%s285 + $0x10] sm:$0xff]
        %v336 = vld [vmem:[%s285 + $0x18] sm:$0xff]
        %v337 = vld [vmem:[%s285 + $0x20] sm:$0xff]
        %v338 = vld [vmem:[%s285 + $0x28] sm:$0xff]
        %v339 = vld [vmem:[%s285 + $0x30] sm:$0xff]
        %v340 = vld [vmem:[%s285 + $0x38] sm:$0xff]
        %v341 = vld [vmem:[%s285 + $0x40] sm:$0xff]
        %v342 = vld [vmem:[%s285 + $0x48] sm:$0xff]
        %v343 = vld [vmem:[%s285 + $0x50] sm:$0xff]
        %v344 = vld [vmem:[%s285 + $0x58] sm:$0xff]
        %v345 = vld [vmem:[%s285 + $0x60] sm:$0xff]
        %v346 = vld [vmem:[%s285 + $0x68] sm:$0xff]
        %v347 = vld [vmem:[%s285 + $0x70] sm:$0xff]
        %v348 = vld [vmem:[%s285 + $0x78] sm:$0xff]
        %v349 = vld [vmem:[%s285 + $0x80] sm:$0xff]
        %v350 = vld [vmem:[%s285 + $0x88] sm:$0xff]
        %v351 = vld [vmem:[%s285 + $0x90] sm:$0xff]
        %v352 = vld [vmem:[%s285 + $0x98] sm:$0xff]
        %v353 = vld [vmem:[%s285 + $0xa0] sm:$0xff]
        %v354 = vld [vmem:[%s285 + $0xa8] sm:$0xff]
        %v355 = vld [vmem:[%s285 + $0xb0] sm:$0xff]
        %v356 = vld [vmem:[%s285 + $0xb8] sm:$0xff]
        %v357 = vld [vmem:[%s285 + $0xc0] sm:$0xff]
        %v358 = vld [vmem:[%s285 + $0xc8] sm:$0xff]
        %v359 = vld [vmem:[%s285 + $0xd0] sm:$0xff]
        %v360 = vld [vmem:[%s285 + $0xd8] sm:$0xff]
        %v361 = vld [vmem:[%s285 + $0xe0] sm:$0xff]
        %v362 = vld [vmem:[%s285 + $0xe8] sm:$0xff]
        %v363 = vld [vmem:[%s285 + $0xf0] sm:$0xff]
        %v364 = vld [vmem:[%s285 + $0xf8] sm:$0xff]
        %v365 = vld [vmem:[%s285 + $0x100] sm:$0xff]
        %v366 = vld [vmem:[%s285 + $0x108] sm:$0xff]
        %v367 = vld [vmem:[%s285 + $0x110] sm:$0xff]
        %v368 = vld [vmem:[%s285 + $0x118] sm:$0xff]
        %v369 = vld [vmem:[%s285 + $0x120] sm:$0xff]
        %v370 = vld [vmem:[%s285 + $0x128] sm:$0xff]
        %v371 = vld [vmem:[%s285 + $0x130] sm:$0xff]
        %v372 = vld [vmem:[%s285 + $0x138] sm:$0xff]
        %v373 = vld [vmem:[%s285 + $0x140] sm:$0xff]
        %v374 = vld [vmem:[%s285 + $0x148] sm:$0xff]
        %v375 = vld [vmem:[%s285 + $0x150] sm:$0xff]
        %v376 = vld [vmem:[%s285 + $0x158] sm:$0xff]
        %v377 = vld [vmem:[%s285 + $0x160] sm:$0xff]
        %v378 = vld [vmem:[%s285 + $0x168] sm:$0xff]
        %v379 = vld [vmem:[%s285 + $0x170] sm:$0xff]
        %v380 = vld [vmem:[%s285 + $0x178] sm:$0xff]
        %v381 = vld [vmem:[%s285 + $0x180] sm:$0xff]
        %v382 = vld [vmem:[%s285 + $0x188] sm:$0xff]
        %v383 = vld [vmem:[%s285 + $0x190] sm:$0xff]
        %v384 = vld [vmem:[%s285 + $0x198] sm:$0xff]
        %v385 = vld [vmem:[%s285 + $0x1a0] sm:$0xff]
        %v386 = vld [vmem:[%s285 + $0x1a8] sm:$0xff]
        %v387 = vld [vmem:[%s285 + $0x1b0] sm:$0xff]
        %v388 = vld [vmem:[%s285 + $0x1b8] sm:$0xff]
        %v389 = vld [vmem:[%s285 + $0x1c0] sm:$0xff]
        %v390 = vld [vmem:[%s285 + $0x1c8] sm:$0xff]
        %v391 = vld [vmem:[%s285 + $0x1d0] sm:$0xff]
        %v392 = vld [vmem:[%s285 + $0x1d8] sm:$0xff]
        %v393 = vld [vmem:[%s285 + $0x1e0] sm:$0xff]
        %v394 = vld [vmem:[%s285 + $0x1e8] sm:$0xff]
        %v395 = vld [vmem:[%s285 + $0x1f0] sm:$0xff]
        %v396 = vld [vmem:[%s285 + $0x1f8] sm:$0xff]
        %v405 = vunpack.c.l.b16 %v325
        %v406 = vunpack.c.h.b16 %v325
        %v407 = vunpack.c.l.b16 %v326
        %v408 = vunpack.c.h.b16 %v326
        %v409 = vunpack.c.l.b16 %v327
        %v410 = vunpack.c.h.b16 %v327
        %v411 = vunpack.c.l.b16 %v328
        %v412 = vunpack.c.h.b16 %v328
        %v413 = vunpack.c.l.b16 %v329
        %v414 = vunpack.c.h.b16 %v329
        %v415 = vunpack.c.l.b16 %v330
        %v416 = vunpack.c.h.b16 %v330
        %v417 = vunpack.c.l.b16 %v331
        %v418 = vunpack.c.h.b16 %v331
        %v419 = vunpack.c.l.b16 %v332
        %v420 = vunpack.c.h.b16 %v332
        %v421 = vpack.c.b16 %v409, %v405
        %v422 = vpack.c.b16 %v410, %v406
        %v423 = vpack.c.b16 %v411, %v407
        %v424 = vpack.c.b16 %v412, %v408
        %v425 = vpack.c.b16 %v417, %v413
        %v426 = vpack.c.b16 %v418, %v414
        %v427 = vpack.c.b16 %v419, %v415
        %v428 = vpack.c.b16 %v420, %v416
        %v501 = vunpack.c.l.b16 %v333
        %v502 = vunpack.c.h.b16 %v333
        %v503 = vunpack.c.l.b16 %v334
        %v504 = vunpack.c.h.b16 %v334
        %v505 = vunpack.c.l.b16 %v335
        %v506 = vunpack.c.h.b16 %v335
        %v507 = vunpack.c.l.b16 %v336
        %v508 = vunpack.c.h.b16 %v336
        %v509 = vunpack.c.l.b16 %v337
        %v510 = vunpack.c.h.b16 %v337
        %v511 = vunpack.c.l.b16 %v338
        %v512 = vunpack.c.h.b16 %v338
        %v513 = vunpack.c.l.b16 %v339
        %v514 = vunpack.c.h.b16 %v339
        %v515 = vunpack.c.l.b16 %v340
        %v516 = vunpack.c.h.b16 %v340
        %v517 = vunpack.c.l.b16 %v341
        %v518 = vunpack.c.h.b16 %v341
        %v519 = vunpack.c.l.b16 %v342
        %v520 = vunpack.c.h.b16 %v342
        %v521 = vunpack.c.l.b16 %v343
        %v522 = vunpack.c.h.b16 %v343
        %v523 = vunpack.c.l.b16 %v344
        %v524 = vunpack.c.h.b16 %v344
        %v525 = vunpack.c.l.b16 %v345
        %v526 = vunpack.c.h.b16 %v345
        %v527 = vunpack.c.l.b16 %v346
        %v528 = vunpack.c.h.b16 %v346
        %v529 = vunpack.c.l.b16 %v347
        %v530 = vunpack.c.h.b16 %v347
        %v531 = vunpack.c.l.b16 %v348
        %v532 = vunpack.c.h.b16 %v348
        %v533 = vunpack.c.l.b16 %v349
        %v534 = vunpack.c.h.b16 %v349
        %v535 = vunpack.c.l.b16 %v350
        %v536 = vunpack.c.h.b16 %v350
        %v537 = vunpack.c.l.b16 %v351
        %v538 = vunpack.c.h.b16 %v351
        %v539 = vunpack.c.l.b16 %v352
        %v540 = vunpack.c.h.b16 %v352
        %v541 = vunpack.c.l.b16 %v353
        %v542 = vunpack.c.h.b16 %v353
        %v543 = vunpack.c.l.b16 %v354
        %v544 = vunpack.c.h.b16 %v354
        %v545 = vunpack.c.l.b16 %v355
        %v546 = vunpack.c.h.b16 %v355
        %v547 = vunpack.c.l.b16 %v356
        %v548 = vunpack.c.h.b16 %v356
        %v549 = vunpack.c.l.b16 %v357
        %v550 = vunpack.c.h.b16 %v357
        %v551 = vunpack.c.l.b16 %v358
        %v552 = vunpack.c.h.b16 %v358
        %v553 = vunpack.c.l.b16 %v359
        %v554 = vunpack.c.h.b16 %v359
        %v555 = vunpack.c.l.b16 %v360
        %v556 = vunpack.c.h.b16 %v360
        %v557 = vunpack.c.l.b16 %v361
        %v558 = vunpack.c.h.b16 %v361
        %v559 = vunpack.c.l.b16 %v362
        %v560 = vunpack.c.h.b16 %v362
        %v561 = vunpack.c.l.b16 %v363
        %v562 = vunpack.c.h.b16 %v363
        %v563 = vunpack.c.l.b16 %v364
        %v564 = vunpack.c.h.b16 %v364
        %v565 = vunpack.c.l.b16 %v365
        %v566 = vunpack.c.h.b16 %v365
        %v567 = vunpack.c.l.b16 %v366
        %v568 = vunpack.c.h.b16 %v366
        %v569 = vunpack.c.l.b16 %v367
        %v570 = vunpack.c.h.b16 %v367
        %v571 = vunpack.c.l.b16 %v368
        %v572 = vunpack.c.h.b16 %v368
        %v573 = vunpack.c.l.b16 %v369
        %v574 = vunpack.c.h.b16 %v369
        %v575 = vunpack.c.l.b16 %v370
        %v576 = vunpack.c.h.b16 %v370
        %v577 = vunpack.c.l.b16 %v371
        %v578 = vunpack.c.h.b16 %v371
        %v579 = vunpack.c.l.b16 %v372
        %v580 = vunpack.c.h.b16 %v372
        %v581 = vunpack.c.l.b16 %v373
        %v582 = vunpack.c.h.b16 %v373
        %v583 = vunpack.c.l.b16 %v374
        %v584 = vunpack.c.h.b16 %v374
        %v585 = vunpack.c.l.b16 %v375
        %v586 = vunpack.c.h.b16 %v375
        %v587 = vunpack.c.l.b16 %v376
        %v588 = vunpack.c.h.b16 %v376
        %v589 = vunpack.c.l.b16 %v377
        %v590 = vunpack.c.h.b16 %v377
        %v591 = vunpack.c.l.b16 %v378
        %v592 = vunpack.c.h.b16 %v378
        %v593 = vunpack.c.l.b16 %v379
        %v594 = vunpack.c.h.b16 %v379
        %v595 = vunpack.c.l.b16 %v380
        %v596 = vunpack.c.h.b16 %v380
        %v597 = vunpack.c.l.b16 %v381
        %v598 = vunpack.c.h.b16 %v381
        %v599 = vunpack.c.l.b16 %v382
        %v600 = vunpack.c.h.b16 %v382
        %v601 = vunpack.c.l.b16 %v383
        %v602 = vunpack.c.h.b16 %v383
        %v603 = vunpack.c.l.b16 %v384
        %v604 = vunpack.c.h.b16 %v384
        %v605 = vunpack.c.l.b16 %v385
        %v606 = vunpack.c.h.b16 %v385
        %v607 = vunpack.c.l.b16 %v386
        %v608 = vunpack.c.h.b16 %v386
        %v609 = vunpack.c.l.b16 %v387
        %v610 = vunpack.c.h.b16 %v387
        %v611 = vunpack.c.l.b16 %v388
        %v612 = vunpack.c.h.b16 %v388
        %v613 = vunpack.c.l.b16 %v389
        %v614 = vunpack.c.h.b16 %v389
        %v615 = vunpack.c.l.b16 %v390
        %v616 = vunpack.c.h.b16 %v390
        %v617 = vunpack.c.l.b16 %v391
        %v618 = vunpack.c.h.b16 %v391
        %v619 = vunpack.c.l.b16 %v392
        %v620 = vunpack.c.h.b16 %v392
        %v621 = vunpack.c.l.b16 %v393
        %v622 = vunpack.c.h.b16 %v393
        %v623 = vunpack.c.l.b16 %v394
        %v624 = vunpack.c.h.b16 %v394
        %v625 = vunpack.c.l.b16 %v395
        %v626 = vunpack.c.h.b16 %v395
        %v627 = vunpack.c.l.b16 %v396
        %v628 = vunpack.c.h.b16 %v396
        %v629 = vpack.c.b16 %v503, %v501
        %v630 = vpack.c.b16 %v504, %v502
        %v631 = vpack.c.b16 %v507, %v505
        %v632 = vpack.c.b16 %v508, %v506
        %v633 = vpack.c.b16 %v511, %v509
        %v634 = vpack.c.b16 %v512, %v510
        %v635 = vpack.c.b16 %v515, %v513
        %v636 = vpack.c.b16 %v516, %v514
        %v637 = vpack.c.b16 %v519, %v517
        %v638 = vpack.c.b16 %v520, %v518
        %v639 = vpack.c.b16 %v523, %v521
        %v640 = vpack.c.b16 %v524, %v522
        %v641 = vpack.c.b16 %v527, %v525
        %v642 = vpack.c.b16 %v528, %v526
        %v643 = vpack.c.b16 %v531, %v529
        %v644 = vpack.c.b16 %v532, %v530
        %v645 = vpack.c.b16 %v535, %v533
        %v646 = vpack.c.b16 %v536, %v534
        %v647 = vpack.c.b16 %v539, %v537
        %v648 = vpack.c.b16 %v540, %v538
        %v649 = vpack.c.b16 %v543, %v541
        %v650 = vpack.c.b16 %v544, %v542
        %v651 = vpack.c.b16 %v547, %v545
        %v652 = vpack.c.b16 %v548, %v546
        %v653 = vpack.c.b16 %v551, %v549
        %v654 = vpack.c.b16 %v552, %v550
        %v655 = vpack.c.b16 %v555, %v553
        %v656 = vpack.c.b16 %v556, %v554
        %v657 = vpack.c.b16 %v559, %v557
        %v658 = vpack.c.b16 %v560, %v558
        %v659 = vpack.c.b16 %v563, %v561
        %v660 = vpack.c.b16 %v564, %v562
        %v661 = vpack.c.b16 %v567, %v565
        %v662 = vpack.c.b16 %v568, %v566
        %v663 = vpack.c.b16 %v571, %v569
        %v664 = vpack.c.b16 %v572, %v570
        %v665 = vpack.c.b16 %v575, %v573
        %v666 = vpack.c.b16 %v576, %v574
        %v667 = vpack.c.b16 %v579, %v577
        %v668 = vpack.c.b16 %v580, %v578
        %v669 = vpack.c.b16 %v583, %v581
        %v670 = vpack.c.b16 %v584, %v582
        %v671 = vpack.c.b16 %v587, %v585
        %v672 = vpack.c.b16 %v588, %v586
        %v673 = vpack.c.b16 %v591, %v589
        %v674 = vpack.c.b16 %v592, %v590
        %v675 = vpack.c.b16 %v595, %v593
        %v676 = vpack.c.b16 %v596, %v594
        %v677 = vpack.c.b16 %v599, %v597
        %v678 = vpack.c.b16 %v600, %v598
        %v679 = vpack.c.b16 %v603, %v601
        %v680 = vpack.c.b16 %v604, %v602
        %v681 = vpack.c.b16 %v607, %v605
        %v682 = vpack.c.b16 %v608, %v606
        %v683 = vpack.c.b16 %v611, %v609
        %v684 = vpack.c.b16 %v612, %v610
        %v685 = vpack.c.b16 %v615, %v613
        %v686 = vpack.c.b16 %v616, %v614
        %v687 = vpack.c.b16 %v619, %v617
        %v688 = vpack.c.b16 %v620, %v618
        %v689 = vpack.c.b16 %v623, %v621
        %v690 = vpack.c.b16 %v624, %v622
        %v691 = vpack.c.b16 %v627, %v625
        %v692 = vpack.c.b16 %v628, %v626
        %757 = vmatprep.subr.bf16.mxu0 %v630
        %758 = vmatpush1.bf16.msra.mxu0 %v629
        %759 = vmatprep.subr.bf16.mxu0 %v632
        %760 = vmatpush1.bf16.msra.mxu0 %v631
        %761 = vmatprep.subr.bf16.mxu0 %v634
        %762 = vmatpush1.bf16.msra.mxu0 %v633
        %763 = vmatprep.subr.bf16.mxu0 %v636
        %764 = vmatpush1.bf16.msra.mxu0 %v635
        %765 = vmatprep.subr.bf16.mxu0 %v638
        %766 = vmatpush1.bf16.msra.mxu0 %v637
        %767 = vmatprep.subr.bf16.mxu0 %v640
        %768 = vmatpush1.bf16.msra.mxu0 %v639
        %769 = vmatprep.subr.bf16.mxu0 %v642
        %770 = vmatpush1.bf16.msra.mxu0 %v641
        %771 = vmatprep.subr.bf16.mxu0 %v644
        %772 = vmatpush1.bf16.msra.mxu0 %v643
        %773 = vmatprep.subr.bf16.mxu0 %v646
        %774 = vmatpush1.bf16.msra.mxu0 %v645
        %775 = vmatprep.subr.bf16.mxu0 %v648
        %776 = vmatpush1.bf16.msra.mxu0 %v647
        %777 = vmatprep.subr.bf16.mxu0 %v650
        %778 = vmatpush1.bf16.msra.mxu0 %v649
        %779 = vmatprep.subr.bf16.mxu0 %v652
        %780 = vmatpush1.bf16.msra.mxu0 %v651
        %781 = vmatprep.subr.bf16.mxu0 %v654
        %782 = vmatpush1.bf16.msra.mxu0 %v653
        %783 = vmatprep.subr.bf16.mxu0 %v656
        %784 = vmatpush1.bf16.msra.mxu0 %v655
        %785 = vmatprep.subr.bf16.mxu0 %v658
        %786 = vmatpush1.bf16.msra.mxu0 %v657
        %787 = vmatprep.subr.bf16.mxu0 %v660
        %788 = vmatpush1.bf16.msra.mxu0 %v659
        %789 = vmatprep.mubr.bf16.mxu0 %v422
        %790 = vmatmul.mubr.bf16.gmra.mrb[0].mxu0 %v421
        %v791 = vpop.f32.mrb[0].mxu0
        %v792 = vadd.f32 0.0, %v791
        %v793 = vpop.f32.mrb[0].mxu0
        %v794 = vadd.f32 0.0, %v793
        %v795 = vpop.f32.mrb[0].mxu0
        %v796 = vadd.f32 0.0, %v795
        %v797 = vpop.f32.mrb[0].mxu0
        %v798 = vadd.f32 0.0, %v797
        %799 = vmatprep.mubr.bf16.mxu0 %v426
        %800 = vmatmul.mubr.bf16.gmra.mrb[0].mxu0 %v425
        %v801 = vpop.f32.mrb[0].mxu0
        %v802 = vadd.f32 0.0, %v801
        %v803 = vpop.f32.mrb[0].mxu0
        %v804 = vadd.f32 0.0, %v803
        %v805 = vpop.f32.mrb[0].mxu0
        %v806 = vadd.f32 0.0, %v805
        %v807 = vpop.f32.mrb[0].mxu0
        %v808 = vadd.f32 0.0, %v807
        %809 = vdwg.mxu0
        %810 = vmatprep.subr.bf16.mxu0 %v662
        %811 = vmatpush1.bf16.msra.mxu0 %v661
        %812 = vmatprep.subr.bf16.mxu0 %v664
        %813 = vmatpush1.bf16.msra.mxu0 %v663
        %814 = vmatprep.subr.bf16.mxu0 %v666
        %815 = vmatpush1.bf16.msra.mxu0 %v665
        %816 = vmatprep.subr.bf16.mxu0 %v668
        %817 = vmatpush1.bf16.msra.mxu0 %v667
        %818 = vmatprep.subr.bf16.mxu0 %v670
        %819 = vmatpush1.bf16.msra.mxu0 %v669
        %820 = vmatprep.subr.bf16.mxu0 %v672
        %821 = vmatpush1.bf16.msra.mxu0 %v671
        %822 = vmatprep.subr.bf16.mxu0 %v674
        %823 = vmatpush1.bf16.msra.mxu0 %v673
        %824 = vmatprep.subr.bf16.mxu0 %v676
        %825 = vmatpush1.bf16.msra.mxu0 %v675
        %826 = vmatprep.subr.bf16.mxu0 %v678
        %827 = vmatpush1.bf16.msra.mxu0 %v677
        %828 = vmatprep.subr.bf16.mxu0 %v680
        %829 = vmatpush1.bf16.msra.mxu0 %v679
        %830 = vmatprep.subr.bf16.mxu0 %v682
        %831 = vmatpush1.bf16.msra.mxu0 %v681
        %832 = vmatprep.subr.bf16.mxu0 %v684
        %833 = vmatpush1.bf16.msra.mxu0 %v683
        %834 = vmatprep.subr.bf16.mxu0 %v686
        %835 = vmatpush1.bf16.msra.mxu0 %v685
        %836 = vmatprep.subr.bf16.mxu0 %v688
        %837 = vmatpush1.bf16.msra.mxu0 %v687
        %838 = vmatprep.subr.bf16.mxu0 %v690
        %839 = vmatpush1.bf16.msra.mxu0 %v689
        %840 = vmatprep.subr.bf16.mxu0 %v692
        %841 = vmatpush1.bf16.msra.mxu0 %v691
        %842 = vmatprep.mubr.bf16.mxu0 %v424
        %843 = vmatmul.mubr.bf16.gmra.mrb[0].mxu0 %v423
        %v844 = vpop.f32.mrb[0].mxu0
        %v845 = vadd.f32 %v792, %v844
        %v846 = vpop.f32.mrb[0].mxu0
        %v847 = vadd.f32 %v794, %v846
        %v848 = vpop.f32.mrb[0].mxu0
        %v849 = vadd.f32 %v796, %v848
        %v850 = vpop.f32.mrb[0].mxu0
        %v851 = vadd.f32 %v798, %v850
        %852 = vmatprep.mubr.bf16.mxu0 %v428
        %853 = vmatmul.mubr.bf16.gmra.mrb[0].mxu0 %v427
        %v854 = vpop.f32.mrb[0].mxu0
        %v855 = vadd.f32 %v802, %v854
        %v856 = vpop.f32.mrb[0].mxu0
        %v857 = vadd.f32 %v804, %v856
        %v858 = vpop.f32.mrb[0].mxu0
        %v859 = vadd.f32 %v806, %v858
        %v860 = vpop.f32.mrb[0].mxu0
        %v861 = vadd.f32 %v808, %v860
        %862 = vdwg.mxu0
        %v863 = vadd.f32 %v317, %v845
        %v864 = vadd.f32 %v318, %v847
        %v865 = vadd.f32 %v319, %v849
        %v866 = vadd.f32 %v320, %v851
        %v867 = vadd.f32 %v321, %v855
        %v868 = vadd.f32 %v322, %v857
        %v869 = vadd.f32 %v323, %v859
        %v870 = vadd.f32 %v324, %v861
        %871 = vst [vmem:[%s302] sm:$0xff] %v863
        %872 = vst [vmem:[%s302 + $0x8] sm:$0xff] %v864
        %873 = vst [vmem:[%s302 + $0x10] sm:$0xff] %v865
        %874 = vst [vmem:[%s302 + $0x18] sm:$0xff] %v866
        %875 = vst [vmem:[%s302 + $0x20] sm:$0xff] %v867
        %876 = vst [vmem:[%s302 + $0x28] sm:$0xff] %v868
        %877 = vst [vmem:[%s302 + $0x30] sm:$0xff] %v869
        %878 = vst [vmem:[%s302 + $0x38] sm:$0xff] %v870
        %p879 = scmp.eq.s32.totalorder %s21, 3
        // Predicated region
        $region60: #{edgenet.53} parent=50 // pred_check
          %p880 = pneg %p879
        $region61: #{edgenet.53} parent=50 // pred_check_branch
          %882 = sbr.rel (%p880) target = $region63
        $region62: #{edgenet.53} parent=50 // pred_region
          %v883 = vld [vmem:[%s302] sm:$0xff]
          %v884 = vld [vmem:[%s302 + $0x8] sm:$0xff]
          %v885 = vld [vmem:[%s302 + $0x10] sm:$0xff]
          %v886 = vld [vmem:[%s302 + $0x18] sm:$0xff]
          %v887 = vld [vmem:[%s302 + $0x20] sm:$0xff]
          %v888 = vld [vmem:[%s302 + $0x28] sm:$0xff]
          %v889 = vld [vmem:[%s302 + $0x30] sm:$0xff]
          %v890 = vld [vmem:[%s302 + $0x38] sm:$0xff]
          %v891 = vld [vmem:[%s291] sm:$0x3]
          %v893 = vlaneseq
          %v894 = vshrl.u32 %v893, 7
          %v895 = vsub.s32 0, %v894
          %v896 = vrot.slane %v891, %v895
          %v897 = vlaneseq
          %v898 = vshrl.u32 %v897, 7
          %v899 = vsub.s32 1, %v898
          %v900 = vrot.slane %v891, %v899
          %v903 = vadd.f32 %v883, %v896
          %v904 = vadd.f32 %v884, %v900
          %v905 = vadd.f32 %v885, %v896
          %v906 = vadd.f32 %v886, %v900
          %v907 = vadd.f32 %v887, %v896
          %v908 = vadd.f32 %v888, %v900
          %v909 = vadd.f32 %v889, %v896
          %v910 = vadd.f32 %v890, %v900
          %911 = vst [vmem:[%s302] sm:$0xff] %v903
          %912 = vst [vmem:[%s302 + $0x8] sm:$0xff] %v904
          %913 = vst [vmem:[%s302 + $0x10] sm:$0xff] %v905
          %914 = vst [vmem:[%s302 + $0x18] sm:$0xff] %v906
          %915 = vst [vmem:[%s302 + $0x20] sm:$0xff] %v907
          %916 = vst [vmem:[%s302 + $0x28] sm:$0xff] %v908
          %917 = vst [vmem:[%s302 + $0x30] sm:$0xff] %v909
          %918 = vst [vmem:[%s302 + $0x38] sm:$0xff] %v910
        $region63: #{edgenet.53} parent=50 // pred_fallthru
          _
        %s919 = smul.u32 4, %s19
        %s920 = smul.u32 2, %s20
        %p921 = scmp.lt.s32.totalorder %s919, 3
        %s922 = scalar_select %p921, %s919, 3
        %p923 = scmp.lt.s32.totalorder %s920, 1
        %s924 = scalar_select %p923, %s920, 1
        %s925 = smul.addr %s922, 2
        %s926 = sadd.s32 %s924, %s925
        %s927 = smul.addr %s926, 8
        %s928 = scalar_lea.vmem %s3, %s927
        // Predicated region
        $region64: #{edgenet.53} parent=50 // pred_check
          %p929 = pneg %p135
        $region65: #{edgenet.53} parent=50 // pred_check_branch
          %931 = sbr.rel (%p929) target = $region67
        $region66: #{edgenet.53} parent=50 // pred_region
          %s932 = smul.u32 4, %s19
          %s933 = smul.u32 2, %s20
        $region67: #{edgenet.53} parent=50 // pred_fallthru
          _
        // Predicated region
        $region68: #{edgenet.53} parent=50 // pred_check
          %p934 = pneg %p135
        $region69: #{edgenet.53} parent=50 // pred_check_branch
          %936 = sbr.rel (%p934) target = $region71
        $region70: #{edgenet.53} parent=50 // pred_region
          %s937 = smul.u32 4, %s19
          %s938 = smul.u32 2, %s20
          %p939 = scmp.lt.s32.totalorder %s937, 3
          %s940 = scalar_select %p939, %s937, 3
          %p941 = scmp.lt.s32.totalorder %s938, 1
          %s942 = scalar_select %p941, %s938, 1
          %s943 = smul.addr %s940, 2
          %s944 = sadd.s32 %s942, %s943
          %s945 = smul.addr %s944, 8
          %s946 = scalar_lea.vmem %s3, %s945
        $region71: #{edgenet.53} parent=50 // pred_fallthru
          _
      $region51: #{edgenet.53} parent=5 // pred_fallthru
        _
      %p947 = scmp.le.s32.totalorder 2, %s9
      // Predicated region
      $region72: #{edgenet.53} parent=5 // pred_check
        %p948 = pneg %p947
      $region73: #{edgenet.53} parent=5 // pred_check_branch
        %950 = sbr.rel (%p948) target = $region75
      $region74: #{edgenet.53} parent=5 // pred_region
        %s951 = ssub.s32 %s9, 2
      $region75: #{edgenet.53} parent=5 // pred_fallthru
        _
    $region6: #{edgenet.53} parent=1 // loop_footer
      %s13 = sadd.s32 1, %s9
    $region7: #{edgenet.53} parent=1 // loop_footer_branch
      %8 = sbr.rel target = $region3
    $region8: #{edgenet.53} parent=1 // loop_exit
      _

// kernel: edgenet.54
$region0: #{edgenet.54}
  #allocation0 [shape = 'u32[]', space=smem, size = 0x4, offset = 0x4, fixed_abs, tag = 'smem constant byte address 0x4 - core index']
  #allocation1 [shape = 'u32[144,128]{1,0:T(1,128)}', space=vmem, size = 0x12000, scoped, tag = 'internal scratch']
  %s0 = inlined_call_operand.vmem [shape: f32[2,16,256], index: 0, kind: input, shape index: {}]
  %s1 = inlined_call_operand.vmem [shape: f32[2,16,256], index: 1, kind: output, shape index: {}]
  %s2 = sld [smem:[#allocation0]]
  $region37: #{edgenet.54} parent=0
    _
  %s4 = ssub.s32 1, %s2
  %s5 = scalar_select 0, %s4, %s2
  loop: start=0, step=1, limit=4
  $region2: #{edgenet.54} parent=0 // loop_pre_header
    _
  $region3: #{edgenet.54} parent=0 // loop_header
    %s7 = sphi 0, %s11
    %p8 = scmp.ge.s32.totalorder %s7, 4
    %s17 = sphi 0, %s19
    %s20 = sphi 0, %s17
    %s21 = sphi 0, %s20
    %s37 = sphi 0, %s21
    %s43 = sphi 0, %s45
    %s46 = sphi 0, %s43
    %s47 = sphi 0, %s46
    %s63 = sphi 0, %s47
  $region4: #{edgenet.54} parent=0 // loop_header_branch
    %10 = sbr.rel (%p8) target = $region8
  $region5: #{edgenet.54} parent=0 // loop_body
    %s12 = ssub.s32 %s7, 1
    %s13 = ssub.s32 %s7, 2
    %s14 = sadd.s32 %s7, 1
    %s15 = ssub.s32 %s7, %s14
    %p16 = scmp.eq.s32.totalorder %s15, 0
    %s18 = sadd.s32 %s17, 1
    %s19 = scalar_select %p16, %s17, %s18
    %p22 = pneg %p16
    %p23 = scmp.eq.s32.totalorder %s7, 1
    %p24 = por %p22, %p23
    %p25 = scmp.ne.s32.totalorder %s17, %s20
    %p26 = scmp.eq.s32.totalorder %s7, 0
    %p27 = por %p25, %p26
    %p28 = scmp.ne.s32.totalorder %s17, %s20
    %p29 = scmp.eq.s32.totalorder %s12, 1
    %p30 = por %p28, %p29
    %p31 = scmp.ne.s32.totalorder %s20, %s21
    %p32 = scmp.eq.s32.totalorder %s12, 0
    %p33 = por %p31, %p32
    %p34 = scmp.ne.s32.totalorder %s20, %s21
    %p35 = scmp.eq.s32.totalorder %s13, 1
    %p36 = por %p34, %p35
    %p38 = scmp.ne.s32.totalorder %s21, %s37
    %p39 = scmp.eq.s32.totalorder %s13, 0
    %p40 = por %p38, %p39
    %s41 = ssub.s32 %s7, %s14
    %p42 = scmp.eq.s32.totalorder %s41, 0
    %s44 = sadd.s32 %s43, 1
    %s45 = scalar_select %p42, %s43, %s44
    %p48 = pneg %p42
    %p49 = scmp.eq.s32.totalorder %s7, 1
    %p50 = por %p48, %p49
    %p51 = scmp.ne.s32.totalorder %s43, %s46
    %p52 = scmp.eq.s32.totalorder %s7, 0
    %p53 = por %p51, %p52
    %p54 = scmp.ne.s32.totalorder %s43, %s46
    %p55 = scmp.eq.s32.totalorder %s12, 1
    %p56 = por %p54, %p55
    %p57 = scmp.ne.s32.totalorder %s46, %s47
    %p58 = scmp.eq.s32.totalorder %s12, 0
    %p59 = por %p57, %p58
    %p60 = scmp.ne.s32.totalorder %s46, %s47
    %p61 = scmp.eq.s32.totalorder %s13, 1
    %p62 = por %p60, %p61
    %p64 = scmp.ne.s32.totalorder %s47, %s63
    %p65 = scmp.eq.s32.totalorder %s13, 0
    %p66 = por %p64, %p65
    %p67 = scmp.le.s32.totalorder 1, %s7
    %p68 = scmp.lt.s32.totalorder %s7, 3
    %p69 = pnand %p67, %p68
    %p70 = pneg %p69
    // Predicated region
    $region9: #{edgenet.54} parent=5 // pred_check
      _
    $region10: #{edgenet.54} parent=5 // pred_check_branch
      %72 = sbr.rel (%p69) target = $region12
    $region11: #{edgenet.54} parent=5 // pred_region
      %s73 = ssub.s32 %s7, 1
    $region12: #{edgenet.54} parent=5 // pred_fallthru
      _
    %p74 = scmp.lt.s32.totalorder %s7, 2
    // Predicated region
    $region13: #{edgenet.54} parent=5 // pred_check
      %p75 = pneg %p74
    $region14: #{edgenet.54} parent=5 // pred_check_branch
      %77 = sbr.rel (%p75) target = $region16
    $region15: #{edgenet.54} parent=5 // pred_region
      // Predicated region
      $region17: #{edgenet.54} parent=15 // pred_check
        %p78 = pneg %p27
      $region18: #{edgenet.54} parent=15 // pred_check_branch
        %80 = sbr.rel (%p78) target = $region20
      $region19: #{edgenet.54} parent=15 // pred_region
        %p81 = scmp.lt.s32.totalorder %s7, 1
        %s82 = scalar_select %p81, %s7, 1
        %s83 = smul.addr %s82, 4
        %s84 = smul.addr %s83, 8
        %s85 = scalar_lea.vmem %s0, %s84
      $region20: #{edgenet.54} parent=15 // pred_fallthru
        _
    $region16: #{edgenet.54} parent=5 // pred_fallthru
      _
    %p86 = scmp.le.s32.totalorder 1, %s7
    %p87 = scmp.lt.s32.totalorder %s7, 3
    %p88 = pnand %p86, %p87
    %p89 = pneg %p88
    // Predicated region
    $region21: #{edgenet.54} parent=5 // pred_check
      _
    $region22: #{edgenet.54} parent=5 // pred_check_branch
      %91 = sbr.rel (%p88) target = $region24
    $region23: #{edgenet.54} parent=5 // pred_region
      %s92 = ssub.s32 %s7, 1
      %p93 = scmp.lt.s32.totalorder %s12, 1
      %s94 = scalar_select %p93, %s12, 1
      %s95 = smul.addr %s94, 4
      %s96 = smul.addr %s95, 8
      %s97 = scalar_lea.vmem %s0, %s96
      %p98 = pneg %p33
      %p99 = pneg %p30
      %p100 = pneg %p59
      %p101 = pneg %p56
      %p102 = scmp.lt.s32.totalorder %s12, 1
      %s103 = scalar_select %p102, %s12, 1
      %s104 = smul.addr %s103, 4
      %s105 = smul.addr %s104, 8
      %s106 = scalar_lea.vmem %s1, %s105
      %p107 = scmp.lt.s32.totalorder %s12, 1
      %s108 = scalar_select %p107, %s12, 1
      %s109 = smul.addr %s108, 4
      %s110 = smul.addr %s109, 8
      %s111 = scalar_lea.vmem %s0, %s110
      %p112 = scmp.lt.s32.totalorder %s12, 1
      %s113 = scalar_select %p112, %s12, 1
      %s114 = smul.addr %s113, 4
      %s115 = smul.addr %s114, 8
      %s116 = scalar_lea.vmem %s1, %s115
      %v117 = vld [vmem:[%s111] sm:$0xff]
      %v118 = vld [vmem:[%s111 + $0x8] sm:$0xff]
      %v119 = vld [vmem:[%s111 + $0x10] sm:$0xff]
      %v120 = vld [vmem:[%s111 + $0x18] sm:$0xff]
      %v121 = vadd.f32 %v117, %v119
      %v122 = vrot.slane %v121, 4
      %v123 = vadd.f32 %v121, %v122
      %v124 = vrot.slane %v123, 2
      %v125 = vadd.f32 %v123, %v124
      %v126 = vrot.slane %v125, 1
      %v127 = vadd.f32 %v125, %v126
      %v128 = vadd.f32 %v118, %v120
      %v129 = vrot.slane %v128, 4
      %v130 = vadd.f32 %v128, %v129
      %v131 = vrot.slane %v130, 2
      %v132 = vadd.f32 %v130, %v131
      %v133 = vrot.slane %v132, 1
      %v134 = vadd.f32 %v132, %v133
      %v135 = vrcp.pop 16.0
      %v136 = vmul.f32 %v127, %v135
      %v137 = vmul.f32 %v134, %v135
      %v138 = vsub.f32 %v117, %v136
      %v139 = vsub.f32 %v118, %v137
      %v140 = vsub.f32 %v119, %v136
      %v141 = vsub.f32 %v120, %v137
      %v142 = vmul.f32 %v138, %v138
      %v143 = vmul.f32 %v139, %v139
      %v144 = vmul.f32 %v140, %v140
      %v145 = vmul.f32 %v141, %v141
      %v146 = vadd.f32 %v142, %v144
      %v147 = vrot.slane %v146, 4
      %v148 = vadd.f32 %v146, %v147
      %v149 = vrot.slane %v148, 2
      %v150 = vadd.f32 %v148, %v149
      %v151 = vrot.slane %v150, 1
      %v152 = vadd.f32 %v150, %v151
      %v153 = vadd.f32 %v143, %v145
      %v154 = vrot.slane %v153, 4
      %v155 = vadd.f32 %v153, %v154
      %v156 = vrot.slane %v155, 2
      %v157 = vadd.f32 %v155, %v156
      %v158 = vrot.slane %v157, 1
      %v159 = vadd.f32 %v157, %v158
      %v160 = vmul.f32 %v152, %v135
      %v161 = vmul.f32 %v159, %v135
      %v162 = vadd.f32 %v160, 1e-05
      %v163 = vadd.f32 %v161, 1e-05
      %v164 = vrsqrt.pop %v162
      %v165 = vrsqrt.pop %v163
      %v166 = vmul.f32 %v138, %v164
      %v167 = vmul.f32 %v139, %v165
      %v168 = vmul.f32 %v140, %v164
      %v169 = vmul.f32 %v141, %v165
      %v170 = vmax.f32 %v166, 0.0
      %v171 = vmax.f32 %v167, 0.0
      %v172 = vmax.f32 %v168, 0.0
      %v173 = vmax.f32 %v169, 0.0
      %174 = vst [vmem:[%s116] sm:$0xff] %v170
      %175 = vst [vmem:[%s116 + $0x8] sm:$0xff] %v171
      %176 = vst [vmem:[%s116 + $0x10] sm:$0xff] %v172
      %177 = vst [vmem:[%s116 + $0x18] sm:$0xff] %v173
      %p178 = scmp.lt.s32.totalorder %s12, 1
      %s179 = scalar_select %p178, %s12, 1
      %s180 = smul.addr %s179, 4
      %s181 = smul.addr %s180, 8
      %s182 = scalar_lea.vmem %s1, %s181
      // Predicated region
      $region25: #{edgenet.54} parent=23 // pred_check
        %p183 = pneg %p56
      $region26: #{edgenet.54} parent=23 // pred_check_branch
        %185 = sbr.rel (%p183) target = $region28
      $region27: #{edgenet.54} parent=23 // pred_region
        _
      $region28: #{edgenet.54} parent=23 // pred_fallthru
        _
    $region24: #{edgenet.54} parent=5 // pred_fallthru
      _
    %p186 = scmp.le.s32.totalorder 2, %s7
    // Predicated region
    $region29: #{edgenet.54} parent=5 // pred_check
      %p187 = pneg %p186
    $region30: #{edgenet.54} parent=5 // pred_check_branch
      %189 = sbr.rel (%p187) target = $region32
    $region31: #{edgenet.54} parent=5 // pred_region
      %s190 = ssub.s32 %s7, 2
      // Predicated region
      $region33: #{edgenet.54} parent=31 // pred_check
        %p191 = pneg %p62
      $region34: #{edgenet.54} parent=31 // pred_check_branch
        %193 = sbr.rel (%p191) target = $region36
      $region35: #{edgenet.54} parent=31 // pred_region
        %p194 = scmp.lt.s32.totalorder %s13, 1
        %s195 = scalar_select %p194, %s13, 1
        %s196 = smul.addr %s195, 4
        %s197 = smul.addr %s196, 8
        %s198 = scalar_lea.vmem %s1, %s197
      $region36: #{edgenet.54} parent=31 // pred_fallthru
        _
    $region32: #{edgenet.54} parent=5 // pred_fallthru
      _
  $region6: #{edgenet.54} parent=0 // loop_footer
    %s11 = sadd.s32 1, %s7
  $region7: #{edgenet.54} parent=0 // loop_footer_branch
    %6 = sbr.rel target = $region3
  $region8: #{edgenet.54} parent=0 // loop_exit
    _

// kernel: edgenet.55
$region0: #{edgenet.55}
  #allocation0 [shape = 'u32[]', space=smem, size = 0x4, offset = 0x4, fixed_abs, tag = 'smem constant byte address 0x4 - core index']
  #allocation1 [shape = 'u32[144,128]{1,0:T(1,128)}', space=vmem, size = 0x12000, scoped, tag = 'internal scratch']
  %s0 = inlined_call_operand.vmem [shape: bf16[32,2560], index: 0, kind: input, shape index: {}]
  %s1 = inlined_call_operand.vmem [shape: bf16[2560,256], index: 1, kind: input, shape index: {}]
  %s2 = inlined_call_operand.vmem [shape: f32[1,256], index: 2, kind: input, shape index: {}]
  %s3 = inlined_call_operand.vmem [shape: f32[32,256], index: 3, kind: output, shape index: {}]
  %s4 = sld [smem:[#allocation0]]
  $region76: #{edgenet.55} parent=0
    _
  %s6 = ssub.s32 1, %s4
  %s7 = scalar_select 0, %s6, %s4
  $region1: #{edgenet.55} parent=0
    #allocation2 [shape = 'u8[65536]{0}', space=vmem, size = 0x10000, scoped, tag = 'input window, operand 0']
    loop: start=0, step=1, limit=7
    $region2: #{edgenet.55} parent=1 // loop_pre_header
      _
    $region3: #{edgenet.55} parent=1 // loop_header
      %s9 = sphi 0, %s13
      %p10 = scmp.ge.s32.totalorder %s9, 7
      %s16 = sphi 0, %s35
      %s17 = sphi 0, %s31
      %s18 = sphi 0, %s27
      %s19 = sphi 0, %s16
      %s20 = sphi 0, %s17
      %s21 = sphi 0, %s18
      %s22 = sphi 0, %s19
      %s23 = sphi 0, %s20
      %s24 = sphi 0, %s21
      %s40 = sphi 0, %s42
      %s43 = sphi 0, %s40
      %s44 = sphi 0, %s43
      %s60 = sphi 0, %s44
      %s68 = sphi 0, %s70
      %s71 = sphi 0, %s68
      %s72 = sphi 0, %s71
      %s88 = sphi 0, %s72
      %s94 = sphi 0, %s96
      %s97 = sphi 0, %s94
      %s98 = sphi 0, %s97
      %s114 = sphi 0, %s98
      %s122 = sphi 0, %s124
      %s125 = sphi 0, %s122
      %s126 = sphi 0, %s125
      %s142 = sphi 0, %s126
    $region4: #{edgenet.55} parent=1 // loop_header_branch
      %12 = sbr.rel (%p10) target = $region8
    $region5: #{edgenet.55} parent=1 // loop_body
      %s14 = ssub.s32 %s9, 1
      %s15 = ssub.s32 %s9, 2
      %s25 = sadd.s32 1, %s18
      %p26 = scmp.ge.s32.totalorder %s25, 5
      %s27 = scalar_select %p26, 0, %s25
      %s28 = sadd.s32 1, %s17
      %s29 = scalar_select %p26, %s28, %s17
      %p30 = scmp.ge.s32.totalorder %s29, 1
      %s31 = scalar_select %p30, 0, %s29
      %s32 = sadd.s32 1, %s16
      %s33 = scalar_select %p30, %s32, %s16
      %p34 = scmp.ge.s32.totalorder %s33, 1
      %s35 = scalar_select %p34, 0, %s33
      %s36 = ssub.s32 %s16, %s35
      %s37 = ssub.s32 %s18, %s27
      %s38 = sor.u32 %s36, %s37
      %p39 = scmp.eq.s32.totalorder %s38, 0
      %s41 = sadd.s32 %s40, 1
      %s42 = scalar_select %p39, %s40, %s41
      %p45 = pneg %p39
      %p46 = scmp.eq.s32.totalorder %s9, 4
      %p47 = por %p45, %p46
      %p48 = scmp.ne.s32.totalorder %s40, %s43
      %p49 = scmp.eq.s32.totalorder %s9, 0
      %p50 = por %p48, %p49
      %p51 = scmp.ne.s32.totalorder %s40, %s43
      %p52 = scmp.eq.s32.totalorder %s14, 4
      %p53 = por %p51, %p52
      %p54 = scmp.ne.s32.totalorder %s43, %s44
      %p55 = scmp.eq.s32.totalorder %s14, 0
      %p56 = por %p54, %p55
      %p57 = scmp.ne.s32.totalorder %s43, %s44
      %p58 = scmp.eq.s32.totalorder %s15, 4
      %p59 = por %p57, %p58
      %p61 = scmp.ne.s32.totalorder %s44, %s60
      %p62 = scmp.eq.s32.totalorder %s15, 0
      %p63 = por %p61, %p62
      %s64 = ssub.s32 %s18, %s27
      %s65 = ssub.s32 %s17, %s31
      %s66 = sor.u32 %s64, %s65
      %p67 = scmp.eq.s32.totalorder %s66, 0
      %s69 = sadd.s32 %s68, 1
      %s70 = scalar_select %p67, %s68, %s69
      %p73 = pneg %p67
      %p74 = scmp.eq.s32.totalorder %s9, 4
      %p75 = por %p73, %p74
      %p76 = scmp.ne.s32.totalorder %s68, %s71
      %p77 = scmp.eq.s32.totalorder %s9, 0
      %p78 = por %p76, %p77
      %p79 = scmp.ne.s32.totalorder %s68, %s71
      %p80 = scmp.eq.s32.totalorder %s14, 4
      %p81 = por %p79, %p80
      %p82 = scmp.ne.s32.totalorder %s71, %s72
      %p83 = scmp.eq.s32.totalorder %s14, 0
      %p84 = por %p82, %p83
      %p85 = scmp.ne.s32.totalorder %s71, %s72
      %p86 = scmp.eq.s32.totalorder %s15, 4
      %p87 = por %p85, %p86
      %p89 = scmp.ne.s32.totalorder %s72, %s88
      %p90 = scmp.eq.s32.totalorder %s15, 0
      %p91 = por %p89, %p90
      %s92 = ssub.s32 %s17, %s31
      %p93 = scmp.eq.s32.totalorder %s92, 0
      %s95 = sadd.s32 %s94, 1
      %s96 = scalar_select %p93, %s94, %s95
      %p99 = pneg %p93
      %p100 = scmp.eq.s32.totalorder %s9, 4
      %p101 = por %p99, %p100
      %p102 = scmp.ne.s32.totalorder %s94, %s97
      %p103 = scmp.eq.s32.totalorder %s9, 0
      %p104 = por %p102, %p103
      %p105 = scmp.ne.s32.totalorder %s94, %s97
      %p106 = scmp.eq.s32.totalorder %s14, 4
      %p107 = por %p105, %p106
      %p108 = scmp.ne.s32.totalorder %s97, %s98
      %p109 = scmp.eq.s32.totalorder %s14, 0
      %p110 = por %p108, %p109
      %p111 = scmp.ne.s32.totalorder %s97, %s98
      %p112 = scmp.eq.s32.totalorder %s15, 4
      %p113 = por %p111, %p112
      %p115 = scmp.ne.s32.totalorder %s98, %s114
      %p116 = scmp.eq.s32.totalorder %s15, 0
      %p117 = por %p115, %p116
      %s118 = ssub.s32 %s16, %s35
      %s119 = ssub.s32 %s17, %s31
      %s120 = sor.u32 %s118, %s119
      %p121 = scmp.eq.s32.totalorder %s120, 0
      %s123 = sadd.s32 %s122, 1
      %s124 = scalar_select %p121, %s122, %s123
      %p127 = pneg %p121
      %p128 = scmp.eq.s32.totalorder %s9, 4
      %p129 = por %p127, %p128
      %p130 = scmp.ne.s32.totalorder %s122, %s125
      %p131 = scmp.eq.s32.totalorder %s9, 0
      %p132 = por %p130, %p131
      %p133 = scmp.ne.s32.totalorder %s122, %s125
      %p134 = scmp.eq.s32.totalorder %s14, 4
      %p135 = por %p133, %p134
      %p136 = scmp.ne.s32.totalorder %s125, %s126
      %p137 = scmp.eq.s32.totalorder %s14, 0
      %p138 = por %p136, %p137
      %p139 = scmp.ne.s32.totalorder %s125, %s126
      %p140 = scmp.eq.s32.totalorder %s15, 4
      %p141 = por %p139, %p140
      %p143 = scmp.ne.s32.totalorder %s126, %s142
      %p144 = scmp.eq.s32.totalorder %s15, 0
      %p145 = por %p143, %p144
      %p146 = scmp.le.s32.totalorder 1, %s9
      %p147 = scmp.lt.s32.totalorder %s9, 6
      %p148 = pnand %p146, %p147
      %p149 = pneg %p148
      // Predicated region
      $region9: #{edgenet.55} parent=5 // pred_check
        _
      $region10: #{edgenet.55} parent=5 // pred_check_branch
        %151 = sbr.rel (%p148) target = $region12
      $region11: #{edgenet.55} parent=5 // pred_region
        %s152 = ssub.s32 %s9, 1
        // Predicated region
        $region13: #{edgenet.55} parent=11 // pred_check
          %p153 = pneg %p110
        $region14: #{edgenet.55} parent=11 // pred_check_branch
          %155 = sbr.rel (%p153) target = $region16
        $region15: #{edgenet.55} parent=11 // pred_region
          %s156 = smul.u32 2, %s20
          %p157 = scmp.lt.s32.totalorder %s156, 1
          %s158 = scalar_select %p157, %s156, 1
          %s159 = scalar_lea.vmem %s2, %s158
          %s160 = smul.u32 2, %s20
        $region16: #{edgenet.55} parent=11 // pred_fallthru
          _
      $region12: #{edgenet.55} parent=5 // pred_fallthru
        _
      %p161 = scmp.lt.s32.totalorder %s9, 5
      // Predicated region
      $region17: #{edgenet.55} parent=5 // pred_check
        %p162 = pneg %p161
      $region18: #{edgenet.55} parent=5 // pred_check_branch
        %164 = sbr.rel (%p162) target = $region20
      $region19: #{edgenet.55} parent=5 // pred_region
        // Predicated region
        $region21: #{edgenet.55} parent=19 // pred_check
          %p165 = pneg %p50
        $region22: #{edgenet.55} parent=19 // pred_check_branch
          %167 = sbr.rel (%p165) target = $region24
        $region23: #{edgenet.55} parent=19 // pred_region
          %s168 = sand.u32 %s40, 1
          %s169 = sand.u32 %s40, 1
          %s170 = smul.addr %s169, 64
          %s171 = scalar_lea.vmem [#allocation2], %s170
          %s172 = smul.u32 4, %s16
          %s173 = smul.u32 4, %s18
          %s174 = smul.addr %s172, 20
          %s175 = sadd.s32 %s173, %s174
          %s176 = smul.addr %s175, 4
          %s177 = scalar_lea.vmem %s0, %s176
          // Predicated region
          $region25: #{edgenet.55} parent=23 // pred_check
            _
          $region26: #{edgenet.55} parent=23 // pred_check_branch
            %179 = sbr.rel (0) target = $region28
          $region27: #{edgenet.55} parent=23 // pred_region
            // Predicated region
            $region29: #{edgenet.55} parent=27 // pred_check
              _
            $region30: #{edgenet.55} parent=27 // pred_check_branch
              %181 = sbr.rel (0) target = $region32
            $region31: #{edgenet.55} parent=27 // pred_region
              loop: start=0, step=1, limit=1
              $region33: #{edgenet.55} parent=31 // loop_pre_header
                _
              $region34: #{edgenet.55} parent=31 // loop_header
                %s183 = sphi 0, %s187
                %p184 = scmp.ge.s32.totalorder %s183, 1
                %s188 = sphi %s177, %s177
                %s189 = sphi %s171, %s171
              $region35: #{edgenet.55} parent=31 // loop_header_branch
                %186 = sbr.rel (%p184) target = $region39
              $region36: #{edgenet.55} parent=31 // loop_body
                %v190 = vld [vmem:[%s188] sm:$0xff]
                %191 = vst [vmem:[%s189] sm:$0xff] %v190
                %v192 = vld [vmem:[%s188 + $0x8] sm:$0xff]
                %193 = vst [vmem:[%s189 + $0x8] sm:$0xff] %v192
                %v194 = vld [vmem:[%s188 + $0x50] sm:$0xff]
                %195 = vst [vmem:[%s189 + $0x10] sm:$0xff] %v194
                %v196 = vld [vmem:[%s188 + $0x58] sm:$0xff]
                %197 = vst [vmem:[%s189 + $0x18] sm:$0xff] %v196
                %v198 = vld [vmem:[%s188 + $0xa0] sm:$0xff]
                %199 = vst [vmem:[%s189 + $0x20] sm:$0xff] %v198
                %v200 = vld [vmem:[%s188 + $0xa8] sm:$0xff]
                %201 = vst [vmem:[%s189 + $0x28] sm:$0xff] %v200
                %v202 = vld [vmem:[%s188 + $0xf0] sm:$0xff]
                %203 = vst [vmem:[%s189 + $0x30] sm:$0xff] %v202
                %v204 = vld [vmem:[%s188 + $0xf8] sm:$0xff]
                %205 = vst [vmem:[%s189 + $0x38] sm:$0xff] %v204
              $region37: #{edgenet.55} parent=31 // loop_footer
                %s187 = sadd.s32 1, %s183
              $region38: #{edgenet.55} parent=31 // loop_footer_branch
                %182 = sbr.rel target = $region34
              $region39: #{edgenet.55} parent=31 // loop_exit
                _
            $region32: #{edgenet.55} parent=27 // pred_fallthru
              _
            // Predicated region
            $region40: #{edgenet.55} parent=27 // pred_check
              _
            $region41: #{edgenet.55} parent=27 // pred_check_branch
              %207 = sbr.rel target = $region43
            $region42: #{edgenet.55} parent=27 // pred_region
              _
            $region43: #{edgenet.55} parent=27 // pred_fallthru
              _
          $region28: #{edgenet.55} parent=23 // pred_fallthru
            _
          %208 = vnop
        $region24: #{edgenet.55} parent=19 // pred_fallthru
          _
        // Predicated region
        $region44: #{edgenet.55} parent=19 // pred_check
          %p209 = pneg %p78
        $region45: #{edgenet.55} parent=19 // pred_check_branch
          %211 = sbr.rel (%p209) target = $region47
        $region46: #{edgenet.55} parent=19 // pred_region
          %s212 = smul.u32 64, %s18
          %s213 = smul.u32 2, %s17
          %p214 = scmp.lt.s32.totalorder %s212, 319
          %s215 = scalar_select %p214, %s212, 319
          %p216 = scmp.lt.s32.totalorder %s213, 1
          %s217 = scalar_select %p216, %s213, 1
          %s218 = smul.addr %s215, 2
          %s219 = sadd.s32 %s217, %s218
          %s220 = smul.addr %s219, 4
          %s221 = scalar_lea.vmem %s1, %s220
          %s222 = smul.u32 64, %s18
          %s223 = smul.u32 2, %s17
        $region47: #{edgenet.55} parent=19 // pred_fallthru
          _
      $region20: #{edgenet.55} parent=5 // pred_fallthru
        _
      %p224 = scmp.le.s32.totalorder 1, %s9
      %p225 = scmp.lt.s32.totalorder %s9, 6
      %p226 = pnand %p224, %p225
      %p227 = pneg %p226
      // Predicated region
      $region48: #{edgenet.55} parent=5 // pred_check
        _
      $region49: #{edgenet.55} parent=5 // pred_check_branch
        %229 = sbr.rel (%p226) target = $region51
      $region50: #{edgenet.55} parent=5 // pred_region
        %s230 = ssub.s32 %s9, 1
        %s231 = sand.u32 %s43, 1
        %s232 = sand.u32 %s43, 1
        %s233 = smul.addr %s232, 64
        %s234 = scalar_lea.vmem [#allocation2], %s233
        // Predicated region
        $region52: #{edgenet.55} parent=50 // pred_check
          %p235 = pneg %p56
        $region53: #{edgenet.55} parent=50 // pred_check_branch
          %237 = sbr.rel (%p235) target = $region55
        $region54: #{edgenet.55} parent=50 // pred_region
          _
        $region55: #{edgenet.55} parent=50 // pred_fallthru
          _
        %s238 = sand.u32 %s43, 1
        %s239 = sand.u32 %s43, 1
        %s240 = smul.addr %s239, 64
        %s241 = scalar_lea.vmem [#allocation2], %s240
        %p242 = pneg %p56
        %p243 = pneg %p53
        %s244 = smul.u32 64, %s21
        %s245 = smul.u32 2, %s20
        %p246 = scmp.lt.s32.totalorder %s244, 319
        %s247 = scalar_select %p246, %s244, 319
        %p248 = scmp.lt.s32.totalorder %s245, 1
        %s249 = scalar_select %p248, %s245, 1
        %s250 = smul.addr %s247, 2
        %s251 = sadd.s32 %s249, %s250
        %s252 = smul.addr %s251, 4
        %s253 = scalar_lea.vmem %s1, %s252
        %p254 = pneg %p84
        %p255 = pneg %p81
        %s256 = smul.u32 2, %s20
        %p257 = scmp.lt.s32.totalorder %s256, 1
        %s258 = scalar_select %p257, %s256, 1
        %s259 = scalar_lea.vmem %s2, %s258
        %p260 = pneg %p110
        %p261 = pneg %p107
        %p262 = pneg %p138
        %p263 = pneg %p135
        %s264 = smul.u32 4, %s19
        %s265 = smul.u32 2, %s20
        %p266 = scmp.lt.s32.totalorder %s264, 3
        %s267 = scalar_select %p266, %s264, 3
        %p268 = scmp.lt.s32.totalorder %s265, 1
        %s269 = scalar_select %p268, %s265, 1
        %s270 = smul.addr %s267, 2
        %s271 = sadd.s32 %s269, %s270
        %s272 = smul.addr %s271, 8
        %s273 = scalar_lea.vmem %s3, %s272
        %s274 = smul.u32 4, %s19
        %s275 = smul.u32 4, %s21
        %s276 = smul.u32 64, %s21
        %s277 = smul.u32 2, %s20
        %p278 = scmp.lt.s32.totalorder %s276, 319
        %s279 = scalar_select %p278, %s276, 319
        %p280 = scmp.lt.s32.totalorder %s277, 1
        %s281 = scalar_select %p280, %s277, 1
        %s282 = smul.addr %s279, 2
        %s283 = sadd.s32 %s281, %s282
        %s284 = smul.addr %s283, 4
        %s285 = scalar_lea.vmem %s1, %s284
        %s286 = smul.u32 64, %s21
        %s287 = smul.u32 2, %s20
        %s288 = smul.u32 2, %s20
        %p289 = scmp.lt.s32.totalorder %s288, 1
        %s290 = scalar_select %p289, %s288, 1
        %s291 = scalar_lea.vmem %s2, %s290
        %s292 = smul.u32 2, %s20
        %s293 = smul.u32 4, %s19
        %s294 = smul.u32 2, %s20
        %p295 = scmp.lt.s32.totalorder %s293, 3
        %s296 = scalar_select %p295, %s293, 3
        %p297 = scmp.lt.s32.totalorder %s294, 1
        %s298 = scalar_select %p297, %s294, 1
        %s299 = smul.addr %s296, 2
        %s300 = sadd.s32 %s298, %s299
        %s301 = smul.addr %s300, 8
        %s302 = scalar_lea.vmem %s3, %s301
        %s303 = smul.u32 4, %s19
        %s304 = smul.u32 2, %s20
        %p305 = scmp.eq.s32.totalorder %s21, 0
        // Predicated region
        $region56: #{edgenet.55} parent=50 // pred_check
          %p306 = pneg %p305
        $region57: #{edgenet.55} parent=50 // pred_check_branch
          %308 = sbr.rel (%p306) target = $region59
        $region58: #{edgenet.55} parent=50 // pred_region
          %309 = vst [vmem:[%s302] sm:$0xff] 0.0
          %310 = vst [vmem:[%s302 + $0x8] sm:$0xff] 0.0
          %311 = vst [vmem:[%s302 + $0x10] sm:$0xff] 0.0
          %312 = vst [vmem:[%s302 + $0x18] sm:$0xff] 0.0
          %313 = vst [vmem:[%s302 + $0x20] sm:$0xff] 0.0
          %314 = vst [vmem:[%s302 + $0x28] sm:$0xff] 0.0
          %315 = vst [vmem:[%s302 + $0x30] sm:$0xff] 0.0
          %316 = vst [vmem:[%s302 + $0x38] sm:$0xff] 0.0
        $region59: #{edgenet.55} parent=50 // pred_fallthru
          _
        %v317 = vld [vmem:[%s302] sm:$0xff]
        %v318 = vld [vmem:[%s302 + $0x8] sm:$0xff]
        %v319 = vld [vmem:[%s302 + $0x10] sm:$0xff]
        %v320 = vld [vmem:[%s302 + $0x18] sm:$0xff]
        %v321 = vld [vmem:[%s302 + $0x20] sm:$0xff]
        %v322 = vld [vmem:[%s302 + $0x28] sm:$0xff]
        %v323 = vld [vmem:[%s302 + $0x30] sm:$0xff]
        %v324 = vld [vmem:[%s302 + $0x38] sm:$0xff]
        %v325 = vld [vmem:[%s234] sm:$0xff]
        %v326 = vld [vmem:[%s234 + $0x8] sm:$0xff]
        %v327 = vld [vmem:[%s234 + $0x10] sm:$0xff]
        %v328 = vld [vmem:[%s234 + $0x18] sm:$0xff]
        %v329 = vld [vmem:[%s234 + $0x20] sm:$0xff]
        %v330 = vld [vmem:[%s234 + $0x28] sm:$0xff]
        %v331 = vld [vmem:[%s234 + $0x30] sm:$0xff]
        %v332 = vld [vmem:[%s234 + $0x38] sm:$0xff]
        %v333 = vld [vmem:[%s285] sm:$0xff]
        %v334 = vld [vmem:[%s285 + $0x8] sm:$0xff]
        %v335 = vld [vmem:[%s285 + $0x10] sm:$0xff]
        %v336 = vld [vmem:[%s285 + $0x18] sm:$0xff]
        %v337 = vld [vmem:[%s285 + $0x20] sm:$0xff]
        %v338 = vld [vmem:[%s285 + $0x28] sm:$0xff]
        %v339 = vld [vmem:[%s285 + $0x30] sm:$0xff]
        %v340 = vld [vmem:[%s285 + $0x38] sm:$0xff]
        %v341 = vld [vmem:[%s285 + $0x40] sm:$0xff]
        %v342 = vld [vmem:[%s285 + $0x48] sm:$0xff]
        %v343 = vld [vmem:[%s285 + $0x50] sm:$0xff]
        %v344 = vld [vmem:[%s285 + $0x58] sm:$0xff]
        %v345 = vld [vmem:[%s285 + $0x60] sm:$0xff]
        %v346 = vld [vmem:[%s285 + $0x68] sm:$0xff]
        %v347 = vld [vmem:[%s285 + $0x70] sm:$0xff]
        %v348 = vld [vmem:[%s285 + $0x78] sm:$0xff]
        %v349 = vld [vmem:[%s285 + $0x80] sm:$0xff]
        %v350 = vld [vmem:[%s285 + $0x88] sm:$0xff]
        %v351 = vld [vmem:[%s285 + $0x90] sm:$0xff]
        %v352 = vld [vmem:[%s285 + $0x98] sm:$0xff]
        %v353 = vld [vmem:[%s285 + $0xa0] sm:$0xff]
        %v354 = vld [vmem:[%s285 + $0xa8] sm:$0xff]
        %v355 = vld [vmem:[%s285 + $0xb0] sm:$0xff]
        %v356 = vld [vmem:[%s285 + $0xb8] sm:$0xff]
        %v357 = vld [vmem:[%s285 + $0xc0] sm:$0xff]
        %v358 = vld [vmem:[%s285 + $0xc8] sm:$0xff]
        %v359 = vld [vmem:[%s285 + $0xd0] sm:$0xff]
        %v360 = vld [vmem:[%s285 + $0xd8] sm:$0xff]
        %v361 = vld [vmem:[%s285 + $0xe0] sm:$0xff]
        %v362 = vld [vmem:[%s285 + $0xe8] sm:$0xff]
        %v363 = vld [vmem:[%s285 + $0xf0] sm:$0xff]
        %v364 = vld [vmem:[%s285 + $0xf8] sm:$0xff]
        %v365 = vld [vmem:[%s285 + $0x100] sm:$0xff]
        %v366 = vld [vmem:[%s285 + $0x108] sm:$0xff]
        %v367 = vld [vmem:[%s285 + $0x110] sm:$0xff]
        %v368 = vld [vmem:[%s285 + $0x118] sm:$0xff]
        %v369 = vld [vmem:[%s285 + $0x120] sm:$0xff]
        %v370 = vld [vmem:[%s285 + $0x128] sm:$0xff]
        %v371 = vld [vmem:[%s285 + $0x130] sm:$0xff]
        %v372 = vld [vmem:[%s285 + $0x138] sm:$0xff]
        %v373 = vld [vmem:[%s285 + $0x140] sm:$0xff]
        %v374 = vld [vmem:[%s285 + $0x148] sm:$0xff]
        %v375 = vld [vmem:[%s285 + $0x150] sm:$0xff]
        %v376 = vld [vmem:[%s285 + $0x158] sm:$0xff]
        %v377 = vld [vmem:[%s285 + $0x160] sm:$0xff]
        %v378 = vld [vmem:[%s285 + $0x168] sm:$0xff]
        %v379 = vld [vmem:[%s285 + $0x170] sm:$0xff]
        %v380 = vld [vmem:[%s285 + $0x178] sm:$0xff]
        %v381 = vld [vmem:[%s285 + $0x180] sm:$0xff]
        %v382 = vld [vmem:[%s285 + $0x188] sm:$0xff]
        %v383 = vld [vmem:[%s285 + $0x190] sm:$0xff]
        %v384 = vld [vmem:[%s285 + $0x198] sm:$0xff]
        %v385 = vld [vmem:[%s285 + $0x1a0] sm:$0xff]
        %v386 = vld [vmem:[%s285 + $0x1a8] sm:$0xff]
        %v387 = vld [vmem:[%s285 + $0x1b0] sm:$0xff]
        %v388 = vld [vmem:[%s285 + $0x1b8] sm:$0xff]
        %v389 = vld [vmem:[%s285 + $0x1c0] sm:$0xff]
        %v390 = vld [vmem:[%s285 + $0x1c8] sm:$0xff]
        %v391 = vld [vmem:[%s285 + $0x1d0] sm:$0xff]
        %v392 = vld [vmem:[%s285 + $0x1d8] sm:$0xff]
        %v393 = vld [vmem:[%s285 + $0x1e0] sm:$0xff]
        %v394 = vld [vmem:[%s285 + $0x1e8] sm:$0xff]
        %v395 = vld [vmem:[%s285 + $0x1f0] sm:$0xff]
        %v396 = vld [vmem:[%s285 + $0x1f8] sm:$0xff]
        %v405 = vunpack.c.l.b16 %v325
        %v406 = vunpack.c.h.b16 %v325
        %v407 = vunpack.c.l.b16 %v326
        %v408 = vunpack.c.h.b16 %v326
        %v409 = vunpack.c.l.b16 %v327
        %v410 = vunpack.c.h.b16 %v327
        %v411 = vunpack.c.l.b16 %v328
        %v412 = vunpack.c.h.b16 %v328
        %v413 = vunpack.c.l.b16 %v329
        %v414 = vunpack.c.h.b16 %v329
        %v415 = vunpack.c.l.b16 %v330
        %v416 = vunpack.c.h.b16 %v330
        %v417 = vunpack.c.l.b16 %v331
        %v418 = vunpack.c.h.b16 %v331
        %v419 = vunpack.c.l.b16 %v332
        %v420 = vunpack.c.h.b16 %v332
        %v421 = vpack.c.b16 %v409, %v405
        %v422 = vpack.c.b16 %v410, %v406
        %v423 = vpack.c.b16 %v411, %v407
        %v424 = vpack.c.b16 %v412, %v408
        %v425 = vpack.c.b16 %v417, %v413
        %v426 = vpack.c.b16 %v418, %v414
        %v427 = vpack.c.b16 %v419, %v415
        %v428 = vpack.c.b16 %v420, %v416
        %v501 = vunpack.c.l.b16 %v333
        %v502 = vunpack.c.h.b16 %v333
        %v503 = vunpack.c.l.b16 %v334
        %v504 = vunpack.c.h.b16 %v334
        %v505 = vunpack.c.l.b16 %v335
        %v506 = vunpack.c.h.b16 %v335
        %v507 = vunpack.c.l.b16 %v336
        %v508 = vunpack.c.h.b16 %v336
        %v509 = vunpack.c.l.b16 %v337
        %v510 = vunpack.c.h.b16 %v337
        %v511 = vunpack.c.l.b16 %v338
        %v512 = vunpack.c.h.b16 %v338
        %v513 = vunpack.c.l.b16 %v339
        %v514 = vunpack.c.h.b16 %v339
        %v515 = vunpack.c.l.b16 %v340
        %v516 = vunpack.c.h.b16 %v340
        %v517 = vunpack.c.l.b16 %v341
        %v518 = vunpack.c.h.b16 %v341
        %v519 = vunpack.c.l.b16 %v342
        %v520 = vunpack.c.h.b16 %v342
        %v521 = vunpack.c.l.b16 %v343
        %v522 = vunpack.c.h.b16 %v343
        %v523 = vunpack.c.l.b16 %v344
        %v524 = vunpack.c.h.b16 %v344
        %v525 = vunpack.c.l.b16 %v345
        %v526 = vunpack.c.h.b16 %v345
        %v527 = vunpack.c.l.b16 %v346
        %v528 = vunpack.c.h.b16 %v346
        %v529 = vunpack.c.l.b16 %v347
        %v530 = vunpack.c.h.b16 %v347
        %v531 = vunpack.c.l.b16 %v348
        %v532 = vunpack.c.h.b16 %v348
        %v533 = vunpack.c.l.b16 %v349
        %v534 = vunpack.c.h.b16 %v349
        %v535 = vunpack.c.l.b16 %v350
        %v536 = vunpack.c.h.b16 %v350
        %v537 = vunpack.c.l.b16 %v351
        %v538 = vunpack.c.h.b16 %v351
        %v539 = vunpack.c.l.b16 %v352
        %v540 = vunpack.c.h.b16 %v352
        %v541 = vunpack.c.l.b16 %v353
        %v542 = vunpack.c.h.b16 %v353
        %v543 = vunpack.c.l.b16 %v354
        %v544 = vunpack.c.h.b16 %v354
        %v545 = vunpack.c.l.b16 %v355
        %v546 = vunpack.c.h.b16 %v355
        %v547 = vunpack.c.l.b16 %v356
        %v548 = vunpack.c.h.b16 %v356
        %v549 = vunpack.c.l.b16 %v357
        %v550 = vunpack.c.h.b16 %v357
        %v551 = vunpack.c.l.b16 %v358
        %v552 = vunpack.c.h.b16 %v358
        %v553 = vunpack.c.l.b16 %v359
        %v554 = vunpack.c.h.b16 %v359
        %v555 = vunpack.c.l.b16 %v360
        %v556 = vunpack.c.h.b16 %v360
        %v557 = vunpack.c.l.b16 %v361
        %v558 = vunpack.c.h.b16 %v361
        %v559 = vunpack.c.l.b16 %v362
        %v560 = vunpack.c.h.b16 %v362
        %v561 = vunpack.c.l.b16 %v363
        %v562 = vunpack.c.h.b16 %v363
        %v563 = vunpack.c.l.b16 %v364
        %v564 = vunpack.c.h.b16 %v364
        %v565 = vunpack.c.l.b16 %v365
        %v566 = vunpack.c.h.b16 %v365
        %v567 = vunpack.c.l.b16 %v366
        %v568 = vunpack.c.h.b16 %v366
        %v569 = vunpack.c.l.b16 %v367
        %v570 = vunpack.c.h.b16 %v367
        %v571 = vunpack.c.l.b16 %v368
        %v572 = vunpack.c.h.b16 %v368
        %v573 = vunpack.c.l.b16 %v369
        %v574 = vunpack.c.h.b16 %v369
        %v575 = vunpack.c.l.b16 %v370
        %v576 = vunpack.c.h.b16 %v370
        %v577 = vunpack.c.l.b16 %v371
        %v578 = vunpack.c.h.b16 %v371
        %v579 = vunpack.c.l.b16 %v372
        %v580 = vunpack.c.h.b16 %v372
        %v581 = vunpack.c.l.b16 %v373
        %v582 = vunpack.c.h.b16 %v373
        %v583 = vunpack.c.l.b16 %v374
        %v584 = vunpack.c.h.b16 %v374
        %v585 = vunpack.c.l.b16 %v375
        %v586 = vunpack.c.h.b16 %v375
        %v587 = vunpack.c.l.b16 %v376
        %v588 = vunpack.c.h.b16 %v376
        %v589 = vunpack.c.l.b16 %v377
        %v590 = vunpack.c.h.b16 %v377
        %v591 = vunpack.c.l.b16 %v378
        %v592 = vunpack.c.h.b16 %v378
        %v593 = vunpack.c.l.b16 %v379
        %v594 = vunpack.c.h.b16 %v379
        %v595 = vunpack.c.l.b16 %v380
        %v596 = vunpack.c.h.b16 %v380
        %v597 = vunpack.c.l.b16 %v381
        %v598 = vunpack.c.h.b16 %v381
        %v599 = vunpack.c.l.b16 %v382
        %v600 = vunpack.c.h.b16 %v382
        %v601 = vunpack.c.l.b16 %v383
        %v602 = vunpack.c.h.b16 %v383
        %v603 = vunpack.c.l.b16 %v384
        %v604 = vunpack.c.h.b16 %v384
        %v605 = vunpack.c.l.b16 %v385
        %v606 = vunpack.c.h.b16 %v385
        %v607 = vunpack.c.l.b16 %v386
        %v608 = vunpack.c.h.b16 %v386
        %v609 = vunpack.c.l.b16 %v387
        %v610 = vunpack.c.h.b16 %v387
        %v611 = vunpack.c.l.b16 %v388
        %v612 = vunpack.c.h.b16 %v388
        %v613 = vunpack.c.l.b16 %v389
        %v614 = vunpack.c.h.b16 %v389
        %v615 = vunpack.c.l.b16 %v390
        %v616 = vunpack.c.h.b16 %v390
        %v617 = vunpack.c.l.b16 %v391
        %v618 = vunpack.c.h.b16 %v391
        %v619 = vunpack.c.l.b16 %v392
        %v620 = vunpack.c.h.b16 %v392
        %v621 = vunpack.c.l.b16 %v393
        %v622 = vunpack.c.h.b16 %v393
        %v623 = vunpack.c.l.b16 %v394
        %v624 = vunpack.c.h.b16 %v394
        %v625 = vunpack.c.l.b16 %v395
        %v626 = vunpack.c.h.b16 %v395
        %v627 = vunpack.c.l.b16 %v396
        %v628 = vunpack.c.h.b16 %v396
        %v629 = vpack.c.b16 %v503, %v501
        %v630 = vpack.c.b16 %v504, %v502
        %v631 = vpack.c.b16 %v507, %v505
        %v632 = vpack.c.b16 %v508, %v506
        %v633 = vpack.c.b16 %v511, %v509
        %v634 = vpack.c.b16 %v512, %v510
        %v635 = vpack.c.b16 %v515, %v513
        %v636 = vpack.c.b16 %v516, %v514
        %v637 = vpack.c.b16 %v519, %v517
        %v638 = vpack.c.b16 %v520, %v518
        %v639 = vpack.c.b16 %v523, %v521
        %v640 = vpack.c.b16 %v524, %v522
        %v641 = vpack.c.b16 %v527, %v525
        %v642 = vpack.c.b16 %v528, %v526
        %v643 = vpack.c.b16 %v531, %v529
        %v644 = vpack.c.b16 %v532, %v530
        %v645 = vpack.c.b16 %v535, %v533
        %v646 = vpack.c.b16 %v536, %v534
        %v647 = vpack.c.b16 %v539, %v537
        %v648 = vpack.c.b16 %v540, %v538
        %v649 = vpack.c.b16 %v543, %v541
        %v650 = vpack.c.b16 %v544, %v542
        %v651 = vpack.c.b16 %v547, %v545
        %v652 = vpack.c.b16 %v548, %v546
        %v653 = vpack.c.b16 %v551, %v549
        %v654 = vpack.c.b16 %v552, %v550
        %v655 = vpack.c.b16 %v555, %v553
        %v656 = vpack.c.b16 %v556, %v554
        %v657 = vpack.c.b16 %v559, %v557
        %v658 = vpack.c.b16 %v560, %v558
        %v659 = vpack.c.b16 %v563, %v561
        %v660 = vpack.c.b16 %v564, %v562
        %v661 = vpack.c.b16 %v567, %v565
        %v662 = vpack.c.b16 %v568, %v566
        %v663 = vpack.c.b16 %v571, %v569
        %v664 = vpack.c.b16 %v572, %v570
        %v665 = vpack.c.b16 %v575, %v573
        %v666 = vpack.c.b16 %v576, %v574
        %v667 = vpack.c.b16 %v579, %v577
        %v668 = vpack.c.b16 %v580, %v578
        %v669 = vpack.c.b16 %v583, %v581
        %v670 = vpack.c.b16 %v584, %v582
        %v671 = vpack.c.b16 %v587, %v585
        %v672 = vpack.c.b16 %v588, %v586
        %v673 = vpack.c.b16 %v591, %v589
        %v674 = vpack.c.b16 %v592, %v590
        %v675 = vpack.c.b16 %v595, %v593
        %v676 = vpack.c.b16 %v596, %v594
        %v677 = vpack.c.b16 %v599, %v597
        %v678 = vpack.c.b16 %v600, %v598
        %v679 = vpack.c.b16 %v603, %v601
        %v680 = vpack.c.b16 %v604, %v602
        %v681 = vpack.c.b16 %v607, %v605
        %v682 = vpack.c.b16 %v608, %v606
        %v683 = vpack.c.b16 %v611, %v609
        %v684 = vpack.c.b16 %v612, %v610
        %v685 = vpack.c.b16 %v615, %v613
        %v686 = vpack.c.b16 %v616, %v614
        %v687 = vpack.c.b16 %v619, %v617
        %v688 = vpack.c.b16 %v620, %v618
        %v689 = vpack.c.b16 %v623, %v621
        %v690 = vpack.c.b16 %v624, %v622
        %v691 = vpack.c.b16 %v627, %v625
        %v692 = vpack.c.b16 %v628, %v626
        %757 = vmatprep.subr.bf16.mxu0 %v630
        %758 = vmatpush1.bf16.msra.mxu0 %v629
        %759 = vmatprep.subr.bf16.mxu0 %v632
        %760 = vmatpush1.bf16.msra.mxu0 %v631
        %761 = vmatprep.subr.bf16.mxu0 %v634
        %762 = vmatpush1.bf16.msra.mxu0 %v633
        %763 = vmatprep.subr.bf16.mxu0 %v636
        %764 = vmatpush1.bf16.msra.mxu0 %v635
        %765 = vmatprep.subr.bf16.mxu0 %v638
        %766 = vmatpush1.bf16.msra.mxu0 %v637
        %767 = vmatprep.subr.bf16.mxu0 %v640
        %768 = vmatpush1.bf16.msra.mxu0 %v639
        %769 = vmatprep.subr.bf16.mxu0 %v642
        %770 = vmatpush1.bf16.msra.mxu0 %v641
        %771 = vmatprep.subr.bf16.mxu0 %v644
        %772 = vmatpush1.bf16.msra.mxu0 %v643
        %773 = vmatprep.subr.bf16.mxu0 %v646
        %774 = vmatpush1.bf16.msra.mxu0 %v645
        %775 = vmatprep.subr.bf16.mxu0 %v648
        %776 = vmatpush1.bf16.msra.mxu0 %v647
        %777 = vmatprep.subr.bf16.mxu0 %v650
        %778 = vmatpush1.bf16.msra.mxu0 %v649
        %779 = vmatprep.subr.bf16.mxu0 %v652
        %780 = vmatpush1.bf16.msra.mxu0 %v651
        %781 = vmatprep.subr.bf16.mxu0 %v654
        %782 = vmatpush1.bf16.msra.mxu0 %v653
        %783 = vmatprep.subr.bf16.mxu0 %v656
        %784 = vmatpush1.bf16.msra.mxu0 %v655
        %785 = vmatprep.subr.bf16.mxu0 %v658
        %786 = vmatpush1.bf16.msra.mxu0 %v657
        %787 = vmatprep.subr.bf16.mxu0 %v660
        %788 = vmatpush1.bf16.msra.mxu0 %v659
        %789 = vmatprep.mubr.bf16.mxu0 %v422
        %790 = vmatmul.mubr.bf16.gmra.mrb[0].mxu0 %v421
        %v791 = vpop.f32.mrb[0].mxu0
        %v792 = vadd.f32 0.0, %v791
        %v793 = vpop.f32.mrb[0].mxu0
        %v794 = vadd.f32 0.0, %v793
        %v795 = vpop.f32.mrb[0].mxu0
        %v796 = vadd.f32 0.0, %v795
        %v797 = vpop.f32.mrb[0].mxu0
        %v798 = vadd.f32 0.0, %v797
        %799 = vmatprep.mubr.bf16.mxu0 %v426
        %800 = vmatmul.mubr.bf16.gmra.mrb[0].mxu0 %v425
        %v801 = vpop.f32.mrb[0].mxu0
        %v802 = vadd.f32 0.0, %v801
        %v803 = vpop.f32.mrb[0].mxu0
        %v804 = vadd.f32 0.0, %v803
        %v805 = vpop.f32.mrb[0].mxu0
        %v806 = vadd.f32 0.0, %v805
        %v807 = vpop.f32.mrb[0].mxu0
        %v808 = vadd.f32 0.0, %v807
        %809 = vdwg.mxu0
        %810 = vmatprep.subr.bf16.mxu0 %v662
        %811 = vmatpush1.bf16.msra.mxu0 %v661
        %812 = vmatprep.subr.bf16.mxu0 %v664
        %813 = vmatpush1.bf16.msra.mxu0 %v663
        %814 = vmatprep.subr.bf16.mxu0 %v666
        %815 = vmatpush1.bf16.msra.mxu0 %v665
        %816 = vmatprep.subr.bf16.mxu0 %v668
        %817 = vmatpush1.bf16.msra.mxu0 %v667
        %818 = vmatprep.subr.bf16.mxu0 %v670
        %819 = vmatpush1.bf16.msra.mxu0 %v669
        %820 = vmatprep.subr.bf16.mxu0 %v672
        %821 = vmatpush1.bf16.msra.mxu0 %v671
        %822 = vmatprep.subr.bf16.mxu0 %v674
        %823 = vmatpush1.bf16.msra.mxu0 %v673
        %824 = vmatprep.subr.bf16.mxu0 %v676
        %825 = vmatpush1.bf16.msra.mxu0 %v675
        %826 = vmatprep.subr.bf16.mxu0 %v678
        %827 = vmatpush1.bf16.msra.mxu0 %v677
        %828 = vmatprep.subr.bf16.mxu0 %v680
        %829 = vmatpush1.bf16.msra.mxu0 %v679
        %830 = vmatprep.subr.bf16.mxu0 %v682
        %831 = vmatpush1.bf16.msra.mxu0 %v681
        %832 = vmatprep.subr.bf16.mxu0 %v684
        %833 = vmatpush1.bf16.msra.mxu0 %v683
        %834 = vmatprep.subr.bf16.mxu0 %v686
        %835 = vmatpush1.bf16.msra.mxu0 %v685
        %836 = vmatprep.subr.bf16.mxu0 %v688
        %837 = vmatpush1.bf16.msra.mxu0 %v687
        %838 = vmatprep.subr.bf16.mxu0 %v690
        %839 = vmatpush1.bf16.msra.mxu0 %v689
        %840 = vmatprep.subr.bf16.mxu0 %v692
        %841 = vmatpush1.bf16.msra.mxu0 %v691
        %842 = vmatprep.mubr.bf16.mxu0 %v424
        %843 = vmatmul.mubr.bf16.gmra.mrb[0].mxu0 %v423
        %v844 = vpop.f32.mrb[0].mxu0
        %v845 = vadd.f32 %v792, %v844
        %v846 = vpop.f32.mrb[0].mxu0
        %v847 = vadd.f32 %v794, %v846
        %v848 = vpop.f32.mrb[0].mxu0
        %v849 = vadd.f32 %v796, %v848
        %v850 = vpop.f32.mrb[0].mxu0
        %v851 = vadd.f32 %v798, %v850
        %852 = vmatprep.mubr.bf16.mxu0 %v428
        %853 = vmatmul.mubr.bf16.gmra.mrb[0].mxu0 %v427
        %v854 = vpop.f32.mrb[0].mxu0
        %v855 = vadd.f32 %v802, %v854
        %v856 = vpop.f32.mrb[0].mxu0
        %v857 = vadd.f32 %v804, %v856
        %v858 = vpop.f32.mrb[0].mxu0
        %v859 = vadd.f32 %v806, %v858
        %v860 = vpop.f32.mrb[0].mxu0
        %v861 = vadd.f32 %v808, %v860
        %862 = vdwg.mxu0
        %v863 = vadd.f32 %v317, %v845
        %v864 = vadd.f32 %v318, %v847
        %v865 = vadd.f32 %v319, %v849
        %v866 = vadd.f32 %v320, %v851
        %v867 = vadd.f32 %v321, %v855
        %v868 = vadd.f32 %v322, %v857
        %v869 = vadd.f32 %v323, %v859
        %v870 = vadd.f32 %v324, %v861
        %871 = vst [vmem:[%s302] sm:$0xff] %v863
        %872 = vst [vmem:[%s302 + $0x8] sm:$0xff] %v864
        %873 = vst [vmem:[%s302 + $0x10] sm:$0xff] %v865
        %874 = vst [vmem:[%s302 + $0x18] sm:$0xff] %v866
        %875 = vst [vmem:[%s302 + $0x20] sm:$0xff] %v867
        %876 = vst [vmem:[%s302 + $0x28] sm:$0xff] %v868
        %877 = vst [vmem:[%s302 + $0x30] sm:$0xff] %v869
        %878 = vst [vmem:[%s302 + $0x38] sm:$0xff] %v870
        %p879 = scmp.eq.s32.totalorder %s21, 4
        // Predicated region
        $region60: #{edgenet.55} parent=50 // pred_check
          %p880 = pneg %p879
        $region61: #{edgenet.55} parent=50 // pred_check_branch
          %882 = sbr.rel (%p880) target = $region63
        $region62: #{edgenet.55} parent=50 // pred_region
          %v883 = vld [vmem:[%s302] sm:$0xff]
          %v884 = vld [vmem:[%s302 + $0x8] sm:$0xff]
          %v885 = vld [vmem:[%s302 + $0x10] sm:$0xff]
          %v886 = vld [vmem:[%s302 + $0x18] sm:$0xff]
          %v887 = vld [vmem:[%s302 + $0x20] sm:$0xff]
          %v888 = vld [vmem:[%s302 + $0x28] sm:$0xff]
          %v889 = vld [vmem:[%s302 + $0x30] sm:$0xff]
          %v890 = vld [vmem:[%s302 + $0x38] sm:$0xff]
          %v891 = vld [vmem:[%s291] sm:$0x3]
          %v893 = vlaneseq
          %v894 = vshrl.u32 %v893, 7
          %v895 = vsub.s32 0, %v894
          %v896 = vrot.slane %v891, %v895
          %v897 = vlaneseq
          %v898 = vshrl.u32 %v897, 7
          %v899 = vsub.s32 1, %v898
          %v900 = vrot.slane %v891, %v899
          %v903 = vadd.f32 %v883, %v896
          %v904 = vadd.f32 %v884, %v900
          %v905 = vadd.f32 %v885, %v896
          %v906 = vadd.f32 %v886, %v900
          %v907 = vadd.f32 %v887, %v896
          %v908 = vadd.f32 %v888, %v900
          %v909 = vadd.f32 %v889, %v896
          %v910 = vadd.f32 %v890, %v900
          %911 = vst [vmem:[%s302] sm:$0xff] %v903
          %912 = vst [vmem:[%s302 + $0x8] sm:$0xff] %v904
          %913 = vst [vmem:[%s302 + $0x10] sm:$0xff] %v905
          %914 = vst [vmem:[%s302 + $0x18] sm:$0xff] %v906
          %915 = vst [vmem:[%s302 + $0x20] sm:$0xff] %v907
          %916 = vst [vmem:[%s302 + $0x28] sm:$0xff] %v908
          %917 = vst [vmem:[%s302 + $0x30] sm:$0xff] %v909
          %918 = vst [vmem:[%s302 + $0x38] sm:$0xff] %v910
        $region63: #{edgenet.55} parent=50 // pred_fallthru
          _
        %s919 = smul.u32 4, %s19
        %s920 = smul.u32 2, %s20
        %p921 = scmp.lt.s32.totalorder %s919, 3
        %s922 = scalar_select %p921, %s919, 3
        %p923 = scmp.lt.s32.totalorder %s920, 1
        %s924 = scalar_select %p923, %s920, 1
        %s925 = smul.addr %s922, 2
        %s926 = sadd.s32 %s924, %s925
        %s927 = smul.addr %s926, 8
        %s928 = scalar_lea.vmem %s3, %s927
        // Predicated region
        $region64: #{edgenet.55} parent=50 // pred_check
          %p929 = pneg %p135
        $region65: #{edgenet.55} parent=50 // pred_check_branch
          %931 = sbr.rel (%p929) target = $region67
        $region66: #{edgenet.55} parent=50 // pred_region
          %s932 = smul.u32 4, %s19
          %s933 = smul.u32 2, %s20
        $region67: #{edgenet.55} parent=50 // pred_fallthru
          _
        // Predicated region
        $region68: #{edgenet.55} parent=50 // pred_check
          %p934 = pneg %p135
        $region69: #{edgenet.55} parent=50 // pred_check_branch
          %936 = sbr.rel (%p934) target = $region71
        $region70: #{edgenet.55} parent=50 // pred_region
          %s937 = smul.u32 4, %s19
          %s938 = smul.u32 2, %s20
          %p939 = scmp.lt.s32.totalorder %s937, 3
          %s940 = scalar_select %p939, %s937, 3
          %p941 = scmp.lt.s32.totalorder %s938, 1
          %s942 = scalar_select %p941, %s938, 1
          %s943 = smul.addr %s940, 2
          %s944 = sadd.s32 %s942, %s943
          %s945 = smul.addr %s944, 8
          %s946 = scalar_lea.vmem %s3, %s945
        $region71: #{edgenet.55} parent=50 // pred_fallthru
          _
      $region51: #{edgenet.55} parent=5 // pred_fallthru
        _
      %p947 = scmp.le.s32.totalorder 2, %s9
      // Predicated region
      $region72: #{edgenet.55} parent=5 // pred_check
        %p948 = pneg %p947
      $region73: #{edgenet.55} parent=5 // pred_check_branch
        %950 = sbr.rel (%p948) target = $region75
      $region74: #{edgenet.55} parent=5 // pred_region
        %s951 = ssub.s32 %s9, 2
      $region75: #{edgenet.55} parent=5 // pred_fallthru
        _
    $region6: #{edgenet.55} parent=1 // loop_footer
      %s13 = sadd.s32 1, %s9
    $region7: #{edgenet.55} parent=1 // loop_footer_branch
      %8 = sbr.rel target = $region3
    $region8: #{edgenet.55} parent=1 // loop_exit
      _

// kernel: edgenet.58
$region0: #{edgenet.58}
  #allocation0 [shape = 'u32[]', space=smem, size = 0x4, offset = 0x4, fixed_abs, tag = 'smem constant byte address 0x4 - core index']
  #allocation1 [shape = 'u32[144,128]{1,0:T(1,128)}', space=vmem, size = 0x12000, scoped, tag = 'internal scratch']
  %s0 = inlined_call_operand.vmem [shape: f32[2,16,256], index: 0, kind: input, shape index: {}]
  %s1 = inlined_call_operand.vmem [shape: f32[2,16,256], index: 1, kind: input, shape index: {}]
  %s2 = inlined_call_operand.vmem [shape: f32[2,16,256], index: 2, kind: output, shape index: {}]
  %s3 = sld [smem:[#allocation0]]
  $region41: #{edgenet.58} parent=0
    _
  %s5 = ssub.s32 1, %s3
  %s6 = scalar_select 0, %s5, %s3
  loop: start=0, step=1, limit=4
  $region2: #{edgenet.58} parent=0 // loop_pre_header
    _
  $region3: #{edgenet.58} parent=0 // loop_header
    %s8 = sphi 0, %s12
    %p9 = scmp.ge.s32.totalorder %s8, 4
    %s18 = sphi 0, %s20
    %s21 = sphi 0, %s18
    %s22 = sphi 0, %s21
    %s38 = sphi 0, %s22
    %s44 = sphi 0, %s46
    %s47 = sphi 0, %s44
    %s48 = sphi 0, %s47
    %s64 = sphi 0, %s48
    %s70 = sphi 0, %s72
    %s73 = sphi 0, %s70
    %s74 = sphi 0, %s73
    %s90 = sphi 0, %s74
  $region4: #{edgenet.58} parent=0 // loop_header_branch
    %11 = sbr.rel (%p9) target = $region8
  $region5: #{edgenet.58} parent=0 // loop_body
    %s13 = ssub.s32 %s8, 1
    %s14 = ssub.s32 %s8, 2
    %s15 = sadd.s32 %s8, 1
    %s16 = ssub.s32 %s8, %s15
    %p17 = scmp.eq.s32.totalorder %s16, 0
    %s19 = sadd.s32 %s18, 1
    %s20 = scalar_select %p17, %s18, %s19
    %p23 = pneg %p17
    %p24 = scmp.eq.s32.totalorder %s8, 1
    %p25 = por %p23, %p24
    %p26 = scmp.ne.s32.totalorder %s18, %s21
    %p27 = scmp.eq.s32.totalorder %s8, 0
    %p28 = por %p26, %p27
    %p29 = scmp.ne.s32.totalorder %s18, %s21
    %p30 = scmp.eq.s32.totalorder %s13, 1
    %p31 = por %p29, %p30
    %p32 = scmp.ne.s32.totalorder %s21, %s22
    %p33 = scmp.eq.s32.totalorder %s13, 0
    %p34 = por %p32, %p33
    %p35 = scmp.ne.s32.totalorder %s21, %s22
    %p36 = scmp.eq.s32.totalorder %s14, 1
    %p37 = por %p35, %p36
    %p39 = scmp.ne.s32.totalorder %s22, %s38
    %p40 = scmp.eq.s32.totalorder %s14, 0
    %p41 = por %p39, %p40
    %s42 = ssub.s32 %s8, %s15
    %p43 = scmp.eq.s32.totalorder %s42, 0
    %s45 = sadd.s32 %s44, 1
    %s46 = scalar_select %p43, %s44, %s45
    %p49 = pneg %p43
    %p50 = scmp.eq.s32.totalorder %s8, 1
    %p51 = por %p49, %p50
    %p52 = scmp.ne.s32.totalorder %s44, %s47
    %p53 = scmp.eq.s32.totalorder %s8, 0
    %p54 = por %p52, %p53
    %p55 = scmp.ne.s32.totalorder %s44, %s47
    %p56 = scmp.eq.s32.totalorder %s13, 1
    %p57 = por %p55, %p56
    %p58 = scmp.ne.s32.totalorder %s47, %s48
    %p59 = scmp.eq.s32.totalorder %s13, 0
    %p60 = por %p58, %p59
    %p61 = scmp.ne.s32.totalorder %s47, %s48
    %p62 = scmp.eq.s32.totalorder %s14, 1
    %p63 = por %p61, %p62
    %p65 = scmp.ne.s32.totalorder %s48, %s64
    %p66 = scmp.eq.s32.totalorder %s14, 0
    %p67 = por %p65, %p66
    %s68 = ssub.s32 %s8, %s15
    %p69 = scmp.eq.s32.totalorder %s68, 0
    %s71 = sadd.s32 %s70, 1
    %s72 = scalar_select %p69, %s70, %s71
    %p75 = pneg %p69
    %p76 = scmp.eq.s32.totalorder %s8, 1
    %p77 = por %p75, %p76
    %p78 = scmp.ne.s32.totalorder %s70, %s73
    %p79 = scmp.eq.s32.totalorder %s8, 0
    %p80 = por %p78, %p79
    %p81 = scmp.ne.s32.totalorder %s70, %s73
    %p82 = scmp.eq.s32.totalorder %s13, 1
    %p83 = por %p81, %p82
    %p84 = scmp.ne.s32.totalorder %s73, %s74
    %p85 = scmp.eq.s32.totalorder %s13, 0
    %p86 = por %p84, %p85
    %p87 = scmp.ne.s32.totalorder %s73, %s74
    %p88 = scmp.eq.s32.totalorder %s14, 1
    %p89 = por %p87, %p88
    %p91 = scmp.ne.s32.totalorder %s74, %s90
    %p92 = scmp.eq.s32.totalorder %s14, 0
    %p93 = por %p91, %p92
    %p94 = scmp.le.s32.totalorder 1, %s8
    %p95 = scmp.lt.s32.totalorder %s8, 3
    %p96 = pnand %p94, %p95
    %p97 = pneg %p96
    // Predicated region
    $region9: #{edgenet.58} parent=5 // pred_check
      _
    $region10: #{edgenet.58} parent=5 // pred_check_branch
      %99 = sbr.rel (%p96) target = $region12
    $region11: #{edgenet.58} parent=5 // pred_region
      %s100 = ssub.s32 %s8, 1
    $region12: #{edgenet.58} parent=5 // pred_fallthru
      _
    %p101 = scmp.lt.s32.totalorder %s8, 2
    // Predicated region
    $region13: #{edgenet.58} parent=5 // pred_check
      %p102 = pneg %p101
    $region14: #{edgenet.58} parent=5 // pred_check_branch
      %104 = sbr.rel (%p102) target = $region16
    $region15: #{edgenet.58} parent=5 // pred_region
      // Predicated region
      $region17: #{edgenet.58} parent=15 // pred_check
        %p105 = pneg %p28
      $region18: #{edgenet.58} parent=15 // pred_check_branch
        %107 = sbr.rel (%p105) target = $region20
      $region19: #{edgenet.58} parent=15 // pred_region
        %p108 = scmp.lt.s32.totalorder %s8, 1
        %s109 = scalar_select %p108, %s8, 1
        %s110 = smul.addr %s109, 4
        %s111 = smul.addr %s110, 8
        %s112 = scalar_lea.vmem %s0, %s111
      $region20: #{edgenet.58} parent=15 // pred_fallthru
        _
      // Predicated region
      $region21: #{edgenet.58} parent=15 // pred_check
        %p113 = pneg %p54
      $region22: #{edgenet.58} parent=15 // pred_check_branch
        %115 = sbr.rel (%p113) target = $region24
      $region23: #{edgenet.58} parent=15 // pred_region
        %p116 = scmp.lt.s32.totalorder %s8, 1
        %s117 = scalar_select %p116, %s8, 1
        %s118 = smul.addr %s117, 4
        %s119 = smul.addr %s118, 8
        %s120 = scalar_lea.vmem %s1, %s119
      $region24: #{edgenet.58} parent=15 // pred_fallthru
        _
    $region16: #{edgenet.58} parent=5 // pred_fallthru
      _
    %p121 = scmp.le.s32.totalorder 1, %s8
    %p122 = scmp.lt.s32.totalorder %s8, 3
    %p123 = pnand %p121, %p122
    %p124 = pneg %p123
    // Predicated region
    $region25: #{edgenet.58} parent=5 // pred_check
      _
    $region26: #{edgenet.58} parent=5 // pred_check_branch
      %126 = sbr.rel (%p123) target = $region28
    $region27: #{edgenet.58} parent=5 // pred_region
      %s127 = ssub.s32 %s8, 1
      %p128 = scmp.lt.s32.totalorder %s13, 1
      %s129 = scalar_select %p128, %s13, 1
      %s130 = smul.addr %s129, 4
      %s131 = smul.addr %s130, 8
      %s132 = scalar_lea.vmem %s0, %s131
      %p133 = pneg %p34
      %p134 = pneg %p31
      %p135 = scmp.lt.s32.totalorder %s13, 1
      %s136 = scalar_select %p135, %s13, 1
      %s137 = smul.addr %s136, 4
      %s138 = smul.addr %s137, 8
      %s139 = scalar_lea.vmem %s1, %s138
      %p140 = pneg %p60
      %p141 = pneg %p57
      %p142 = pneg %p86
      %p143 = pneg %p83
      %p144 = scmp.lt.s32.totalorder %s13, 1
      %s145 = scalar_select %p144, %s13, 1
      %s146 = smul.addr %s145, 4
      %s147 = smul.addr %s146, 8
      %s148 = scalar_lea.vmem %s2, %s147
      %p149 = scmp.lt.s32.totalorder %s13, 1
      %s150 = scalar_select %p149, %s13, 1
      %s151 = smul.addr %s150, 4
      %s152 = smul.addr %s151, 8
      %s153 = scalar_lea.vmem %s0, %s152
      %p154 = scmp.lt.s32.totalorder %s13, 1
      %s155 = scalar_select %p154, %s13, 1
      %s156 = smul.addr %s155, 4
      %s157 = smul.addr %s156, 8
      %s158 = scalar_lea.vmem %s1, %s157
      %p159 = scmp.lt.s32.totalorder %s13, 1
      %s160 = scalar_select %p159, %s13, 1
      %s161 = smul.addr %s160, 4
      %s162 = smul.addr %s161, 8
      %s163 = scalar_lea.vmem %s2, %s162
      %v164 = vld [vmem:[%s153] sm:$0xff]
      %v165 = vld [vmem:[%s153 + $0x8] sm:$0xff]
      %v166 = vld [vmem:[%s153 + $0x10] sm:$0xff]
      %v167 = vld [vmem:[%s153 + $0x18] sm:$0xff]
      %v168 = vadd.f32 %v164, %v166
      %v169 = vrot.slane %v168, 4
      %v170 = vadd.f32 %v168, %v169
      %v171 = vrot.slane %v170, 2
      %v172 = vadd.f32 %v170, %v171
      %v173 = vrot.slane %v172, 1
      %v174 = vadd.f32 %v172, %v173
      %v175 = vadd.f32 %v165, %v167
      %v176 = vrot.slane %v175, 4
      %v177 = vadd.f32 %v175, %v176
      %v178 = vrot.slane %v177, 2
      %v179 = vadd.f32 %v177, %v178
      %v180 = vrot.slane %v179, 1
      %v181 = vadd.f32 %v179, %v180
      %v182 = vrcp.pop 16.0
      %v183 = vmul.f32 %v174, %v182
      %v184 = vmul.f32 %v181, %v182
      %v185 = vsub.f32 %v164, %v183
      %v186 = vsub.f32 %v165, %v184
      %v187 = vsub.f32 %v166, %v183
      %v188 = vsub.f32 %v167, %v184
      %v189 = vmul.f32 %v185, %v185
      %v190 = vmul.f32 %v186, %v186
      %v191 = vmul.f32 %v187, %v187
      %v192 = vmul.f32 %v188, %v188
      %v193 = vadd.f32 %v189, %v191
      %v194 = vrot.slane %v193, 4
      %v195 = vadd.f32 %v193, %v194
      %v196 = vrot.slane %v195, 2
      %v197 = vadd.f32 %v195, %v196
      %v198 = vrot.slane %v197, 1
      %v199 = vadd.f32 %v197, %v198
      %v200 = vadd.f32 %v190, %v192
      %v201 = vrot.slane %v200, 4
      %v202 = vadd.f32 %v200, %v201
      %v203 = vrot.slane %v202, 2
      %v204 = vadd.f32 %v202, %v203
      %v205 = vrot.slane %v204, 1
      %v206 = vadd.f32 %v204, %v205
      %v207 = vmul.f32 %v199, %v182
      %v208 = vmul.f32 %v206, %v182
      %v209 = vadd.f32 %v207, 1e-05
      %v210 = vadd.f32 %v208, 1e-05
      %v211 = vrsqrt.pop %v209
      %v212 = vrsqrt.pop %v210
      %v213 = vmul.f32 %v185, %v211
      %v214 = vmul.f32 %v186, %v212
      %v215 = vmul.f32 %v187, %v211
      %v216 = vmul.f32 %v188, %v212
      %v217 = vld [vmem:[%s158] sm:$0xff]
      %v218 = vld [vmem:[%s158 + $0x8] sm:$0xff]
      %v219 = vld [vmem:[%s158 + $0x10] sm:$0xff]
      %v220 = vld [vmem:[%s158 + $0x18] sm:$0xff]
      %v221 = vadd.f32 %v217, %v213
      %v222 = vadd.f32 %v218, %v214
      %v223 = vadd.f32 %v219, %v215
      %v224 = vadd.f32 %v220, %v216
      %225 = vst [vmem:[%s163] sm:$0xff] %v221
      %226 = vst [vmem:[%s163 + $0x8] sm:$0xff] %v222
      %227 = vst [vmem:[%s163 + $0x10] sm:$0xff] %v223
      %228 = vst [vmem:[%s163 + $0x18] sm:$0xff] %v224
      %p229 = scmp.lt.s32.totalorder %s13, 1
      %s230 = scalar_select %p229, %s13, 1
      %s231 = smul.addr %s230, 4
      %s232 = smul.addr %s231, 8
      %s233 = scalar_lea.vmem %s2, %s232
      // Predicated region
      $region29: #{edgenet.58} parent=27 // pred_check
        %p234 = pneg %p83
      $region30: #{edgenet.58} parent=27 // pred_check_branch
        %236 = sbr.rel (%p234) target = $region32
      $region31: #{edgenet.58} parent=27 // pred_region
        _
      $region32: #{edgenet.58} parent=27 // pred_fallthru
        _
    $region28: #{edgenet.58} parent=5 // pred_fallthru
      _
    %p237 = scmp.le.s32.totalorder 2, %s8
    // Predicated region
    $region33: #{edgenet.58} parent=5 // pred_check
      %p238 = pneg %p237
    $region34: #{edgenet.58} parent=5 // pred_check_branch
      %240 = sbr.rel (%p238) target = $region36
    $region35: #{edgenet.58} parent=5 // pred_region
      %s241 = ssub.s32 %s8, 2
      // Predicated region
      $region37: #{edgenet.58} parent=35 // pred_check
        %p242 = pneg %p89
      $region38: #{edgenet.58} parent=35 // pred_check_branch
        %244 = sbr.rel (%p242) target = $region40
      $region39: #{edgenet.58} parent=35 // pred_region
        %p245 = scmp.lt.s32.totalorder %s14, 1
        %s246 = scalar_select %p245, %s14, 1
        %s247 = smul.addr %s246, 4
        %s248 = smul.addr %s247, 8
        %s249 = scalar_lea.vmem %s2, %s248
      $region40: #{edgenet.58} parent=35 // pred_fallthru
        _
    $region36: #{edgenet.58} parent=5 // pred_fallthru
      _
  $region6: #{edgenet.58} parent=0 // loop_footer
    %s12 = sadd.s32 1, %s8
  $region7: #{edgenet.58} parent=0 // loop_footer_branch
    %7 = sbr.rel target = $region3
  $region8: #{edgenet.58} parent=0 // loop_exit
    _

// kernel: edgenet.87
$region0: #{edgenet.87}
  #allocation0 [shape = 'u32[]', space=smem, size = 0x4, offset = 0x4, fixed_abs, tag = 'smem constant byte address 0x4 - core index']
  #allocation1 [shape = 'u32[144,128]{1,0:T(1,128)}', space=vmem, size = 0x12000, scoped, tag = 'internal scratch']
  %s0 = inlined_call_operand.vmem [shape: bf16[32,1024], index: 0, kind: input, shape index: {}]
  %s1 = inlined_call_operand.vmem [shape: bf16[1024,128], index: 1, kind: input, shape index: {}]
  %s2 = inlined_call_operand.vmem [shape: f32[1,128], index: 2, kind: input, shape index: {}]
  %s3 = inlined_call_operand.vmem [shape: f32[32,128], index: 3, kind: output, shape index: {}]
  %s4 = sld [smem:[#allocation0]]
  $region76: #{edgenet.87} parent=0
    _
  %s6 = ssub.s32 1, %s4
  %s7 = scalar_select 0, %s6, %s4
  $region1: #{edgenet.87} parent=0
    #allocation2 [shape = 'u8[65536]{0}', space=vmem, size = 0x10000, scoped, tag = 'input window, operand 0']
    loop: start=0, step=1, limit=4
    $region2: #{edgenet.87} parent=1 // loop_pre_header
      _
    $region3: #{edgenet.87} parent=1 // loop_header
      %s9 = sphi 0, %s13
      %p10 = scmp.ge.s32.totalorder %s9, 4
      %s16 = sphi 0, %s35
      %s17 = sphi 0, %s31
      %s18 = sphi 0, %s27
      %s19 = sphi 0, %s16
      %s20 = sphi 0, %s17
      %s21 = sphi 0, %s18
      %s22 = sphi 0, %s19
      %s23 = sphi 0, %s20
      %s24 = sphi 0, %s21
      %s40 = sphi 0, %s42
      %s43 = sphi 0, %s40
      %s44 = sphi 0, %s43
      %s60 = sphi 0, %s44
      %s68 = sphi 0, %s70
      %s71 = sphi 0, %s68
      %s72 = sphi 0, %s71
      %s88 = sphi 0, %s72
      %s94 = sphi 0, %s96
      %s97 = sphi 0, %s94
      %s98 = sphi 0, %s97
      %s114 = sphi 0, %s98
      %s122 = sphi 0, %s124
      %s125 = sphi 0, %s122
      %s126 = sphi 0, %s125
      %s142 = sphi 0, %s126
    $region4: #{edgenet.87} parent=1 // loop_header_branch
      %12 = sbr.rel (%p10) target = $region8
    $region5: #{edgenet.87} parent=1 // loop_body
      %s14 = ssub.s32 %s9, 1
      %s15 = ssub.s32 %s9, 2
      %s25 = sadd.s32 1, %s18
      %p26 = scmp.ge.s32.totalorder %s25, 2
      %s27 = scalar_select %p26, 0, %s25
      %s28 = sadd.s32 1, %s17
      %s29 = scalar_select %p26, %s28, %s17
      %p30 = scmp.ge.s32.totalorder %s29, 1
      %s31 = scalar_select %p30, 0, %s29
      %s32 = sadd.s32 1, %s16
      %s33 = scalar_select %p30, %s32, %s16
      %p34 = scmp.ge.s32.totalorder %s33, 1
      %s35 = scalar_select %p34, 0, %s33
      %s36 = ssub.s32 %s16, %s35
      %s37 = ssub.s32 %s18, %s27
      %s38 = sor.u32 %s36, %s37
      %p39 = scmp.eq.s32.totalorder %s38, 0
      %s41 = sadd.s32 %s40, 1
      %s42 = scalar_select %p39, %s40, %s41
      %p45 = pneg %p39
      %p46 = scmp.eq.s32.totalorder %s9, 1
      %p47 = por %p45, %p46
      %p48 = scmp.ne.s32.totalorder %s40, %s43
      %p49 = scmp.eq.s32.totalorder %s9, 0
      %p50 = por %p48, %p49
      %p51 = scmp.ne.s32.totalorder %s40, %s43
      %p52 = scmp.eq.s32.totalorder %s14, 1
      %p53 = por %p51, %p52
      %p54 = scmp.ne.s32.totalorder %s43, %s44
      %p55 = scmp.eq.s32.totalorder %s14, 0
      %p56 = por %p54, %p55
      %p57 = scmp.ne.s32.totalorder %s43, %s44
      %p58 = scmp.eq.s32.totalorder %s15, 1
      %p59 = por %p57, %p58
      %p61 = scmp.ne.s32.totalorder %s44, %s60
      %p62 = scmp.eq.s32.totalorder %s15, 0
      %p63 = por %p61, %p62
      %s64 = ssub.s32 %s18, %s27
      %s65 = ssub.s32 %s17, %s31
      %s66 = sor.u32 %s64, %s65
      %p67 = scmp.eq.s32.totalorder %s66, 0
      %s69 = sadd.s32 %s68, 1
      %s70 = scalar_select %p67, %s68, %s69
      %p73 = pneg %p67
      %p74 = scmp.eq.s32.totalorder %s9, 1
      %p75 = por %p73, %p74
      %p76 = scmp.ne.s32.totalorder %s68, %s71
      %p77 = scmp.eq.s32.totalorder %s9, 0
      %p78 = por %p76, %p77
      %p79 = scmp.ne.s32.totalorder %s68, %s71
      %p80 = scmp.eq.s32.totalorder %s14, 1
      %p81 = por %p79, %p80
      %p82 = scmp.ne.s32.totalorder %s71, %s72
      %p83 = scmp.eq.s32.totalorder %s14, 0
      %p84 = por %p82, %p83
      %p85 = scmp.ne.s32.totalorder %s71, %s72
      %p86 = scmp.eq.s32.totalorder %s15, 1
      %p87 = por %p85, %p86
      %p89 = scmp.ne.s32.totalorder %s72, %s88
      %p90 = scmp.eq.s32.totalorder %s15, 0
      %p91 = por %p89, %p90
      %s92 = ssub.s32 %s17, %s31
      %p93 = scmp.eq.s32.totalorder %s92, 0
      %s95 = sadd.s32 %s94, 1
      %s96 = scalar_select %p93, %s94, %s95
      %p99 = pneg %p93
      %p100 = scmp.eq.s32.totalorder %s9, 1
      %p101 = por %p99, %p100
      %p102 = scmp.ne.s32.totalorder %s94, %s97
      %p103 = scmp.eq.s32.totalorder %s9, 0
      %p104 = por %p102, %p103
      %p105 = scmp.ne.s32.totalorder %s94, %s97
      %p106 = scmp.eq.s32.totalorder %s14, 1
      %p107 = por %p105, %p106
      %p108 = scmp.ne.s32.totalorder %s97, %s98
      %p109 = scmp.eq.s32.totalorder %s14, 0
      %p110 = por %p108, %p109
      %p111 = scmp.ne.s32.totalorder %s97, %s98
      %p112 = scmp.eq.s32.totalorder %s15, 1
      %p113 = por %p111, %p112
      %p115 = scmp.ne.s32.totalorder %s98, %s114
      %p116 = scmp.eq.s32.totalorder %s15, 0
      %p117 = por %p115, %p116
      %s118 = ssub.s32 %s16, %s35
      %s119 = ssub.s32 %s17, %s31
      %s120 = sor.u32 %s118, %s119
      %p121 = scmp.eq.s32.totalorder %s120, 0
      %s123 = sadd.s32 %s122, 1
      %s124 = scalar_select %p121, %s122, %s123
      %p127 = pneg %p121
      %p128 = scmp.eq.s32.totalorder %s9, 1
      %p129 = por %p127, %p128
      %p130 = scmp.ne.s32.totalorder %s122, %s125
      %p131 = scmp.eq.s32.totalorder %s9, 0
      %p132 = por %p130, %p131
      %p133 = scmp.ne.s32.totalorder %s122, %s125
      %p134 = scmp.eq.s32.totalorder %s14, 1
      %p135 = por %p133, %p134
      %p136 = scmp.ne.s32.totalorder %s125, %s126
      %p137 = scmp.eq.s32.totalorder %s14, 0
      %p138 = por %p136, %p137
      %p139 = scmp.ne.s32.totalorder %s125, %s126
      %p140 = scmp.eq.s32.totalorder %s15, 1
      %p141 = por %p139, %p140
      %p143 = scmp.ne.s32.totalorder %s126, %s142
      %p144 = scmp.eq.s32.totalorder %s15, 0
      %p145 = por %p143, %p144
      %p146 = scmp.le.s32.totalorder 1, %s9
      %p147 = scmp.lt.s32.totalorder %s9, 3
      %p148 = pnand %p146, %p147
      %p149 = pneg %p148
      // Predicated region
      $region9: #{edgenet.87} parent=5 // pred_check
        _
      $region10: #{edgenet.87} parent=5 // pred_check_branch
        %151 = sbr.rel (%p148) target = $region12
      $region11: #{edgenet.87} parent=5 // pred_region
        %s152 = ssub.s32 %s9, 1
        // Predicated region
        $region13: #{edgenet.87} parent=11 // pred_check
          %p153 = pneg %p110
        $region14: #{edgenet.87} parent=11 // pred_check_branch
          %155 = sbr.rel (%p153) target = $region16
        $region15: #{edgenet.87} parent=11 // pred_region
          %p156 = scmp.lt.s32.totalorder %s20, 0
          %s157 = scalar_select %p156, %s20, 0
          %s158 = scalar_lea.vmem %s2, %s157
        $region16: #{edgenet.87} parent=11 // pred_fallthru
          _
      $region12: #{edgenet.87} parent=5 // pred_fallthru
        _
      %p159 = scmp.lt.s32.totalorder %s9, 2
      // Predicated region
      $region17: #{edgenet.87} parent=5 // pred_check
        %p160 = pneg %p159
      $region18: #{edgenet.87} parent=5 // pred_check_branch
        %162 = sbr.rel (%p160) target = $region20
      $region19: #{edgenet.87} parent=5 // pred_region
        // Predicated region
        $region21: #{edgenet.87} parent=19 // pred_check
          %p163 = pneg %p50
        $region22: #{edgenet.87} parent=19 // pred_check_branch
          %165 = sbr.rel (%p163) target = $region24
        $region23: #{edgenet.87} parent=19 // pred_region
          %s166 = sand.u32 %s40, 1
          %s167 = sand.u32 %s40, 1
          %s168 = smul.addr %s167, 64
          %s169 = scalar_lea.vmem [#allocation2], %s168
          %s170 = smul.u32 4, %s16
          %s171 = smul.u32 4, %s18
          %s172 = smul.addr %s170, 8
          %s173 = sadd.s32 %s171, %s172
          %s174 = smul.addr %s173, 4
          %s175 = scalar_lea.vmem %s0, %s174
          // Predicated region
          $region25: #{edgenet.87} parent=23 // pred_check
            _
          $region26: #{edgenet.87} parent=23 // pred_check_branch
            %177 = sbr.rel (0) target = $region28
          $region27: #{edgenet.87} parent=23 // pred_region
            // Predicated region
            $region29: #{edgenet.87} parent=27 // pred_check
              _
            $region30: #{edgenet.87} parent=27 // pred_check_branch
              %179 = sbr.rel (0) target = $region32
            $region31: #{edgenet.87} parent=27 // pred_region
              loop: start=0, step=1, limit=1
              $region33: #{edgenet.87} parent=31 // loop_pre_header
                _
              $region34: #{edgenet.87} parent=31 // loop_header
                %s181 = sphi 0, %s185
                %p182 = scmp.ge.s32.totalorder %s181, 1
                %s186 = sphi %s175, %s175
                %s187 = sphi %s169, %s169
              $region35: #{edgenet.87} parent=31 // loop_header_branch
                %184 = sbr.rel (%p182) target = $region39
              $region36: #{edgenet.87} parent=31 // loop_body
                %v188 = vld [vmem:[%s186] sm:$0xff]
                %189 = vst [vmem:[%s187] sm:$0xff] %v188
                %v190 = vld [vmem:[%s186 + $0x8] sm:$0xff]
                %191 = vst [vmem:[%s187 + $0x8] sm:$0xff] %v190
                %v192 = vld [vmem:[%s186 + $0x20] sm:$0xff]
                %193 = vst [vmem:[%s187 + $0x10] sm:$0xff] %v192
                %v194 = vld [vmem:[%s186 + $0x28] sm:$0xff]
                %195 = vst [vmem:[%s187 + $0x18] sm:$0xff] %v194
                %v196 = vld [vmem:[%s186 + $0x40] sm:$0xff]
                %197 = vst [vmem:[%s187 + $0x20] sm:$0xff] %v196
                %v198 = vld [vmem:[%s186 + $0x48] sm:$0xff]
                %199 = vst [vmem:[%s187 + $0x28] sm:$0xff] %v198
                %v200 = vld [vmem:[%s186 + $0x60] sm:$0xff]
                %201 = vst [vmem:[%s187 + $0x30] sm:$0xff] %v200
                %v202 = vld [vmem:[%s186 + $0x68] sm:$0xff]
                %203 = vst [vmem:[%s187 + $0x38] sm:$0xff] %v202
              $region37: #{edgenet.87} parent=31 // loop_footer
                %s185 = sadd.s32 1, %s181
              $region38: #{edgenet.87} parent=31 // loop_footer_branch
                %180 = sbr.rel target = $region34
              $region39: #{edgenet.87} parent=31 // loop_exit
                _
            $region32: #{edgenet.87} parent=27 // pred_fallthru
              _
            // Predicated region
            $region40: #{edgenet.87} parent=27 // pred_check
              _
            $region41: #{edgenet.87} parent=27 // pred_check_branch
              %205 = sbr.rel target = $region43
            $region42: #{edgenet.87} parent=27 // pred_region
              _
            $region43: #{edgenet.87} parent=27 // pred_fallthru
              _
          $region28: #{edgenet.87} parent=23 // pred_fallthru
            _
          %206 = vnop
        $region24: #{edgenet.87} parent=19 // pred_fallthru
          _
        // Predicated region
        $region44: #{edgenet.87} parent=19 // pred_check
          %p207 = pneg %p78
        $region45: #{edgenet.87} parent=19 // pred_check_branch
          %209 = sbr.rel (%p207) target = $region47
        $region46: #{edgenet.87} parent=19 // pred_region
          %s210 = smul.u32 64, %s18
          %p211 = scmp.lt.s32.totalorder %s210, 127
          %s212 = scalar_select %p211, %s210, 127
          %p213 = scmp.lt.s32.totalorder %s17, 0
          %s214 = scalar_select %p213, %s17, 0
          %s215 = sadd.s32 %s214, %s212
          %s216 = smul.addr %s215, 4
          %s217 = scalar_lea.vmem %s1, %s216
          %s218 = smul.u32 64, %s18
        $region47: #{edgenet.87} parent=19 // pred_fallthru
          _
      $region20: #{edgenet.87} parent=5 // pred_fallthru
        _
      %p219 = scmp.le.s32.totalorder 1, %s9
      %p220 = scmp.lt.s32.totalorder %s9, 3
      %p221 = pnand %p219, %p220
      %p222 = pneg %p221
      // Predicated region
      $region48: #{edgenet.87} parent=5 // pred_check
        _
      $region49: #{edgenet.87} parent=5 // pred_check_branch
        %224 = sbr.rel (%p221) target = $region51
      $region50: #{edgenet.87} parent=5 // pred_region
        %s225 = ssub.s32 %s9, 1
        %s226 = sand.u32 %s43, 1
        %s227 = sand.u32 %s43, 1
        %s228 = smul.addr %s227, 64
        %s229 = scalar_lea.vmem [#allocation2], %s228
        // Predicated region
        $region52: #{edgenet.87} parent=50 // pred_check
          %p230 = pneg %p56
        $region53: #{edgenet.87} parent=50 // pred_check_branch
          %232 = sbr.rel (%p230) target = $region55
        $region54: #{edgenet.87} parent=50 // pred_region
          _
        $region55: #{edgenet.87} parent=50 // pred_fallthru
          _
        %s233 = sand.u32 %s43, 1
        %s234 = sand.u32 %s43, 1
        %s235 = smul.addr %s234, 64
        %s236 = scalar_lea.vmem [#allocation2], %s235
        %p237 = pneg %p56
        %p238 = pneg %p53
        %s239 = smul.u32 64, %s21
        %p240 = scmp.lt.s32.totalorder %s239, 127
        %s241 = scalar_select %p240, %s239, 127
        %p242 = scmp.lt.s32.totalorder %s20, 0
        %s243 = scalar_select %p242, %s20, 0
        %s244 = sadd.s32 %s243, %s241
        %s245 = smul.addr %s244, 4
        %s246 = scalar_lea.vmem %s1, %s245
        %p247 = pneg %p84
        %p248 = pneg %p81
        %p249 = scmp.lt.s32.totalorder %s20, 0
        %s250 = scalar_select %p249, %s20, 0
        %s251 = scalar_lea.vmem %s2, %s250
        %p252 = pneg %p110
        %p253 = pneg %p107
        %p254 = pneg %p138
        %p255 = pneg %p135
        %s256 = smul.u32 4, %s19
        %p257 = scmp.lt.s32.totalorder %s256, 3
        %s258 = scalar_select %p257, %s256, 3
        %p259 = scmp.lt.s32.totalorder %s20, 0
        %s260 = scalar_select %p259, %s20, 0
        %s261 = sadd.s32 %s260, %s258
        %s262 = smul.addr %s261, 8
        %s263 = scalar_lea.vmem %s3, %s262
        %s264 = smul.u32 4, %s19
        %s265 = smul.u32 4, %s21
        %s266 = smul.u32 64, %s21
        %p267 = scmp.lt.s32.totalorder %s266, 127
        %s268 = scalar_select %p267, %s266, 127
        %p269 = scmp.lt.s32.totalorder %s20, 0
        %s270 = scalar_select %p269, %s20, 0
        %s271 = sadd.s32 %s270, %s268
        %s272 = smul.addr %s271, 4
        %s273 = scalar_lea.vmem %s1, %s272
        %s274 = smul.u32 64, %s21
        %p275 = scmp.lt.s32.totalorder %s20, 0
        %s276 = scalar_select %p275, %s20, 0
        %s277 = scalar_lea.vmem %s2, %s276
        %s278 = smul.u32 4, %s19
        %p279 = scmp.lt.s32.totalorder %s278, 3
        %s280 = scalar_select %p279, %s278, 3
        %p281 = scmp.lt.s32.totalorder %s20, 0
        %s282 = scalar_select %p281, %s20, 0
        %s283 = sadd.s32 %s282, %s280
        %s284 = smul.addr %s283, 8
        %s285 = scalar_lea.vmem %s3, %s284
        %s286 = smul.u32 4, %s19
        %p288 = scmp.eq.s32.totalorder %s21, 0
        // Predicated region
        $region56: #{edgenet.87} parent=50 // pred_check
          %p289 = pneg %p288
        $region57: #{edgenet.87} parent=50 // pred_check_branch
          %291 = sbr.rel (%p289) target = $region59
        $region58: #{edgenet.87} parent=50 // pred_region
          %292 = vst [vmem:[%s285] sm:$0xff] 0.0
          %293 = vst [vmem:[%s285 + $0x8] sm:$0xff] 0.0
          %294 = vst [vmem:[%s285 + $0x10] sm:$0xff] 0.0
          %295 = vst [vmem:[%s285 + $0x18] sm:$0xff] 0.0
        $region59: #{edgenet.87} parent=50 // pred_fallthru
          _
        %v296 = vld [vmem:[%s285] sm:$0xff]
        %v297 = vld [vmem:[%s285 + $0x8] sm:$0xff]
        %v298 = vld [vmem:[%s285 + $0x10] sm:$0xff]
        %v299 = vld [vmem:[%s285 + $0x18] sm:$0xff]
        %v300 = vld [vmem:[%s229] sm:$0xff]
        %v301 = vld [vmem:[%s229 + $0x8] sm:$0xff]
        %v302 = vld [vmem:[%s229 + $0x10] sm:$0xff]
        %v303 = vld [vmem:[%s229 + $0x18] sm:$0xff]
        %v304 = vld [vmem:[%s229 + $0x20] sm:$0xff]
        %v305 = vld [vmem:[%s229 + $0x28] sm:$0xff]
        %v306 = vld [vmem:[%s229 + $0x30] sm:$0xff]
        %v307 = vld [vmem:[%s229 + $0x38] sm:$0xff]
        %v308 = vld [vmem:[%s273] sm:$0xf]
        %v309 = vld [vmem:[%s273 + $0x4] sm:$0xf]
        %v310 = vld [vmem:[%s273 + $0x8] sm:$0xf]
        %v311 = vld [vmem:[%s273 + $0xc] sm:$0xf]
        %v312 = vld [vmem:[%s273 + $0x10] sm:$0xf]
        %v313 = vld [vmem:[%s273 + $0x14] sm:$0xf]
        %v314 = vld [vmem:[%s273 + $0x18] sm:$0xf]
        %v315 = vld [vmem:[%s273 + $0x1c] sm:$0xf]
        %v316 = vld [vmem:[%s273 + $0x20] sm:$0xf]
        %v317 = vld [vmem:[%s273 + $0x24] sm:$0xf]
        %v318 = vld [vmem:[%s273 + $0x28] sm:$0xf]
        %v319 = vld [vmem:[%s273 + $0x2c] sm:$0xf]
        %v320 = vld [vmem:[%s273 + $0x30] sm:$0xf]
        %v321 = vld [vmem:[%s273 + $0x34] sm:$0xf]
        %v322 = vld [vmem:[%s273 + $0x38] sm:$0xf]
        %v323 = vld [vmem:[%s273 + $0x3c] sm:$0xf]
        %v324 = vld [vmem:[%s273 + $0x40] sm:$0xf]
        %v325 = vld [vmem:[%s273 + $0x44] sm:$0xf]
        %v326 = vld [vmem:[%s273 + $0x48] sm:$0xf]
        %v327 = vld [vmem:[%s273 + $0x4c] sm:$0xf]
        %v328 = vld [vmem:[%s273 + $0x50] sm:$0xf]
        %v329 = vld [vmem:[%s273 + $0x54] sm:$0xf]
        %v330 = vld [vmem:[%s273 + $0x58] sm:$0xf]
        %v331 = vld [vmem:[%s273 + $0x5c] sm:$0xf]
        %v332 = vld [vmem:[%s273 + $0x60] sm:$0xf]
        %v333 = vld [vmem:[%s273 + $0x64] sm:$0xf]
        %v334 = vld [vmem:[%s273 + $0x68] sm:$0xf]
        %v335 = vld [vmem:[%s273 + $0x6c] sm:$0xf]
        %v336 = vld [vmem:[%s273 + $0x70] sm:$0xf]
        %v337 = vld [vmem:[%s273 + $0x74] sm:$0xf]
        %v338 = vld [vmem:[%s273 + $0x78] sm:$0xf]
        %v339 = vld [vmem:[%s273 + $0x7c] sm:$0xf]
        %v340 = vld [vmem:[%s273 + $0x80] sm:$0xf]
        %v341 = vld [vmem:[%s273 + $0x84] sm:$0xf]
        %v342 = vld [vmem:[%s273 + $0x88] sm:$0xf]
        %v343 = vld [vmem:[%s273 + $0x8c] sm:$0xf]
        %v344 = vld [vmem:[%s273 + $0x90] sm:$0xf]
        %v345 = vld [vmem:[%s273 + $0x94] sm:$0xf]
        %v346 = vld [vmem:[%s273 + $0x98] sm:$0xf]
        %v347 = vld [vmem:[%s273 + $0x9c] sm:$0xf]
        %v348 = vld [vmem:[%s273 + $0xa0] sm:$0xf]
        %v349 = vld [vmem:[%s273 + $0xa4] sm:$0xf]
        %v350 = vld [vmem:[%s273 + $0xa8] sm:$0xf]
        %v351 = vld [vmem:[%s273 + $0xac] sm:$0xf]
        %v352 = vld [vmem:[%s273 + $0xb0] sm:$0xf]
        %v353 = vld [vmem:[%s273 + $0xb4] sm:$0xf]
        %v354 = vld [vmem:[%s273 + $0xb8] sm:$0xf]
        %v355 = vld [vmem:[%s273 + $0xbc] sm:$0xf]
        %v356 = vld [vmem:[%s273 + $0xc0] sm:$0xf]
        %v357 = vld [vmem:[%s273 + $0xc4] sm:$0xf]
        %v358 = vld [vmem:[%s273 + $0xc8] sm:$0xf]
        %v359 = vld [vmem:[%s273 + $0xcc] sm:$0xf]
        %v360 = vld [vmem:[%s273 + $0xd0] sm:$0xf]
        %v361 = vld [vmem:[%s273 + $0xd4] sm:$0xf]
        %v362 = vld [vmem:[%s273 + $0xd8] sm:$0xf]
        %v363 = vld [vmem:[%s273 + $0xdc] sm:$0xf]
        %v364 = vld [vmem:[%s273 + $0xe0] sm:$0xf]
        %v365 = vld [vmem:[%s273 + $0xe4] sm:$0xf]
        %v366 = vld [vmem:[%s273 + $0xe8] sm:$0xf]
        %v367 = vld [vmem:[%s273 + $0xec] sm:$0xf]
        %v368 = vld [vmem:[%s273 + $0xf0] sm:$0xf]
        %v369 = vld [vmem:[%s273 + $0xf4] sm:$0xf]
        %v370 = vld [vmem:[%s273 + $0xf8] sm:$0xf]
        %v371 = vld [vmem:[%s273 + $0xfc] sm:$0xf]
        %v380 = vunpack.c.l.b16 %v300
        %v381 = vunpack.c.h.b16 %v300
        %v382 = vunpack.c.l.b16 %v301
        %v383 = vunpack.c.h.b16 %v301
        %v384 = vunpack.c.l.b16 %v302
        %v385 = vunpack.c.h.b16 %v302
        %v386 = vunpack.c.l.b16 %v303
        %v387 = vunpack.c.h.b16 %v303
        %v388 = vunpack.c.l.b16 %v304
        %v389 = vunpack.c.h.b16 %v304
        %v390 = vunpack.c.l.b16 %v305
        %v391 = vunpack.c.h.b16 %v305
        %v392 = vunpack.c.l.b16 %v306
        %v393 = vunpack.c.h.b16 %v306
        %v394 = vunpack.c.l.b16 %v307
        %v395 = vunpack.c.h.b16 %v307
        %v396 = vpack.c.b16 %v384, %v380
        %v397 = vpack.c.b16 %v385, %v381
        %v398 = vpack.c.b16 %v386, %v382
        %v399 = vpack.c.b16 %v387, %v383
        %v400 = vpack.c.b16 %v392, %v388
        %v401 = vpack.c.b16 %v393, %v389
        %v402 = vpack.c.b16 %v394, %v390
        %v403 = vpack.c.b16 %v395, %v391
        %v476 = vunpack.c.l.b16 %v308
        %v477 = vunpack.c.l.b16 %v309
        %v478 = vunpack.c.l.b16 %v310
        %v479 = vunpack.c.l.b16 %v311
        %v480 = vunpack.c.l.b16 %v312
        %v481 = vunpack.c.l.b16 %v313
        %v482 = vunpack.c.l.b16 %v314
        %v483 = vunpack.c.l.b16 %v315
        %v484 = vunpack.c.l.b16 %v316
        %v485 = vunpack.c.l.b16 %v317
        %v486 = vunpack.c.l.b16 %v318
        %v487 = vunpack.c.l.b16 %v319
        %v488 = vunpack.c.l.b16 %v320
        %v489 = vunpack.c.l.b16 %v321
        %v490 = vunpack.c.l.b16 %v322
        %v491 = vunpack.c.l.b16 %v323
        %v492 = vunpack.c.l.b16 %v324
        %v493 = vunpack.c.l.b16 %v325
        %v494 = vunpack.c.l.b16 %v326
        %v495 = vunpack.c.l.b16 %v327
        %v496 = vunpack.c.l.b16 %v328
        %v497 = vunpack.c.l.b16 %v329
        %v498 = vunpack.c.l.b16 %v330
        %v499 = vunpack.c.l.b16 %v331
        %v500 = vunpack.c.l.b16 %v332
        %v501 = vunpack.c.l.b16 %v333
        %v502 = vunpack.c.l.b16 %v334
        %v503 = vunpack.c.l.b16 %v335
        %v504 = vunpack.c.l.b16 %v336
        %v505 = vunpack.c.l.b16 %v337
        %v506 = vunpack.c.l.b16 %v338
        %v507 = vunpack.c.l.b16 %v339
        %v508 = vunpack.c.l.b16 %v340
        %v509 = vunpack.c.l.b16 %v341
        %v510 = vunpack.c.l.b16 %v342
        %v511 = vunpack.c.l.b16 %v343
        %v512 = vunpack.c.l.b16 %v344
        %v513 = vunpack.c.l.b16 %v345
        %v514 = vunpack.c.l.b16 %v346
        %v515 = vunpack.c.l.b16 %v347
        %v516 = vunpack.c.l.b16 %v348
        %v517 = vunpack.c.l.b16 %v349
        %v518 = vunpack.c.l.b16 %v350
        %v519 = vunpack.c.l.b16 %v351
        %v520 = vunpack.c.l.b16 %v352
        %v521 = vunpack.c.l.b16 %v353
        %v522 = vunpack.c.l.b16 %v354
        %v523 = vunpack.c.l.b16 %v355
        %v524 = vunpack.c.l.b16 %v356
        %v525 = vunpack.c.l.b16 %v357
        %v526 = vunpack.c.l.b16 %v358
        %v527 = vunpack.c.l.b16 %v359
        %v528 = vunpack.c.l.b16 %v360
        %v529 = vunpack.c.l.b16 %v361
        %v530 = vunpack.c.l.b16 %v362
        %v531 = vunpack.c.l.b16 %v363
        %v532 = vunpack.c.l.b16 %v364
        %v533 = vunpack.c.l.b16 %v365
        %v534 = vunpack.c.l.b16 %v366
        %v535 = vunpack.c.l.b16 %v367
        %v536 = vunpack.c.l.b16 %v368
        %v537 = vunpack.c.l.b16 %v369
        %v538 = vunpack.c.l.b16 %v370
        %v539 = vunpack.c.l.b16 %v371
        %v540 = vpack.c.b16 %v477, %v476
        %v541 = vpack.c.b16 %v479, %v478
        %v542 = vpack.c.b16 %v481, %v480
        %v543 = vpack.c.b16 %v483, %v482
        %v544 = vpack.c.b16 %v485, %v484
        %v545 = vpack.c.b16 %v487, %v486
        %v546 = vpack.c.b16 %v489, %v488
        %v547 = vpack.c.b16 %v491, %v490
        %v548 = vpack.c.b16 %v493, %v492
        %v549 = vpack.c.b16 %v495, %v494
        %v550 = vpack.c.b16 %v497, %v496
        %v551 = vpack.c.b16 %v499, %v498
        %v552 = vpack.c.b16 %v501, %v500
        %v553 = vpack.c.b16 %v503, %v502
        %v554 = vpack.c.b16 %v505, %v504
        %v555 = vpack.c.b16 %v507, %v506
        %v556 = vpack.c.b16 %v509, %v508
        %v557 = vpack.c.b16 %v511, %v510
        %v558 = vpack.c.b16 %v513, %v512
        %v559 = vpack.c.b16 %v515, %v514
        %v560 = vpack.c.b16 %v517, %v516
        %v561 = vpack.c.b16 %v519, %v518
        %v562 = vpack.c.b16 %v521, %v520
        %v563 = vpack.c.b16 %v523, %v522
        %v564 = vpack.c.b16 %v525, %v524
        %v565 = vpack.c.b16 %v527, %v526
        %v566 = vpack.c.b16 %v529, %v528
        %v567 = vpack.c.b16 %v531, %v530
        %v568 = vpack.c.b16 %v533, %v532
        %v569 = vpack.c.b16 %v535, %v534
        %v570 = vpack.c.b16 %v537, %v536
        %v571 = vpack.c.b16 %v539, %v538
        %604 = vmatprep.subr.bf16.mxu0 0
        %605 = vmatpush1.bf16.msra.mxu0 %v540
        %606 = vmatprep.subr.bf16.mxu0 0
        %607 = vmatpush1.bf16.msra.mxu0 %v541
        %608 = vmatprep.subr.bf16.mxu0 0
        %609 = vmatpush1.bf16.msra.mxu0 %v542
        %610 = vmatprep.subr.bf16.mxu0 0
        %611 = vmatpush1.bf16.msra.mxu0 %v543
        %612 = vmatprep.subr.bf16.mxu0 0
        %613 = vmatpush1.bf16.msra.mxu0 %v544
        %614 = vmatprep.subr.bf16.mxu0 0
        %615 = vmatpush1.bf16.msra.mxu0 %v545
        %616 = vmatprep.subr.bf16.mxu0 0
        %617 = vmatpush1.bf16.msra.mxu0 %v546
        %618 = vmatprep.subr.bf16.mxu0 0
        %619 = vmatpush1.bf16.msra.mxu0 %v547
        %620 = vmatprep.subr.bf16.mxu0 0
        %621 = vmatpush1.bf16.msra.mxu0 %v548
        %622 = vmatprep.subr.bf16.mxu0 0
        %623 = vmatpush1.bf16.msra.mxu0 %v549
        %624 = vmatprep.subr.bf16.mxu0 0
        %625 = vmatpush1.bf16.msra.mxu0 %v550
        %626 = vmatprep.subr.bf16.mxu0 0
        %627 = vmatpush1.bf16.msra.mxu0 %v551
        %628 = vmatprep.subr.bf16.mxu0 0
        %629 = vmatpush1.bf16.msra.mxu0 %v552
        %630 = vmatprep.subr.bf16.mxu0 0
        %631 = vmatpush1.bf16.msra.mxu0 %v553
        %632 = vmatprep.subr.bf16.mxu0 0
        %633 = vmatpush1.bf16.msra.mxu0 %v554
        %634 = vmatprep.subr.bf16.mxu0 0
        %635 = vmatpush1.bf16.msra.mxu0 %v555
        %636 = vmatprep.mubr.bf16.mxu0 %v397
        %637 = vmatmul.mubr.bf16.gmra.mrb[0].mxu0 %v396
        %v638 = vpop.f32.mrb[0].mxu0
        %v639 = vadd.f32 0.0, %v638
        %v640 = vpop.f32.mrb[0].mxu0
        %v641 = vpop.f32.mrb[0].mxu0
        %v642 = vadd.f32 0.0, %v641
        %v643 = vpop.f32.mrb[0].mxu0
        %644 = vmatprep.mubr.bf16.mxu0 %v401
        %645 = vmatmul.mubr.bf16.gmra.mrb[0].mxu0 %v400
        %v646 = vpop.f32.mrb[0].mxu0
        %v647 = vadd.f32 0.0, %v646
        %v648 = vpop.f32.mrb[0].mxu0
        %v649 = vpop.f32.mrb[0].mxu0
        %v650 = vadd.f32 0.0, %v649
        %v651 = vpop.f32.mrb[0].mxu0
        %652 = vdwg.mxu0
        %653 = vmatprep.subr.bf16.mxu0 0
        %654 = vmatpush1.bf16.msra.mxu0 %v556
        %655 = vmatprep.subr.bf16.mxu0 0
        %656 = vmatpush1.bf16.msra.mxu0 %v557
        %657 = vmatprep.subr.bf16.mxu0 0
        %658 = vmatpush1.bf16.msra.mxu0 %v558
        %659 = vmatprep.subr.bf16.mxu0 0
        %660 = vmatpush1.bf16.msra.mxu0 %v559
        %661 = vmatprep.subr.bf16.mxu0 0
        %662 = vmatpush1.bf16.msra.mxu0 %v560
        %663 = vmatprep.subr.bf16.mxu0 0
        %664 = vmatpush1.bf16.msra.mxu0 %v561
        %665 = vmatprep.subr.bf16.mxu0 0
        %666 = vmatpush1.bf16.msra.mxu0 %v562
        %667 = vmatprep.subr.bf16.mxu0 0
        %668 = vmatpush1.bf16.msra.mxu0 %v563
        %669 = vmatprep.subr.bf16.mxu0 0
        %670 = vmatpush1.bf16.msra.mxu0 %v564
        %671 = vmatprep.subr.bf16.mxu0 0
        %672 = vmatpush1.bf16.msra.mxu0 %v565
        %673 = vmatprep.subr.bf16.mxu0 0
        %674 = vmatpush1.bf16.msra.mxu0 %v566
        %675 = vmatprep.subr.bf16.mxu0 0
        %676 = vmatpush1.bf16.msra.mxu0 %v567
        %677 = vmatprep.subr.bf16.mxu0 0
        %678 = vmatpush1.bf16.msra.mxu0 %v568
        %679 = vmatprep.subr.bf16.mxu0 0
        %680 = vmatpush1.bf16.msra.mxu0 %v569
        %681 = vmatprep.subr.bf16.mxu0 0
        %682 = vmatpush1.bf16.msra.mxu0 %v570
        %683 = vmatprep.subr.bf16.mxu0 0
        %684 = vmatpush1.bf16.msra.mxu0 %v571
        %685 = vmatprep.mubr.bf16.mxu0 %v399
        %686 = vmatmul.mubr.bf16.gmra.mrb[0].mxu0 %v398
        %v687 = vpop.f32.mrb[0].mxu0
        %v688 = vadd.f32 %v639, %v687
        %v689 = vpop.f32.mrb[0].mxu0
        %v690 = vpop.f32.mrb[0].mxu0
        %v691 = vadd.f32 %v642, %v690
        %v692 = vpop.f32.mrb[0].mxu0
        %693 = vmatprep.mubr.bf16.mxu0 %v403
        %694 = vmatmul.mubr.bf16.gmra.mrb[0].mxu0 %v402
        %v695 = vpop.f32.mrb[0].mxu0
        %v696 = vadd.f32 %v647, %v695
        %v697 = vpop.f32.mrb[0].mxu0
        %v698 = vpop.f32.mrb[0].mxu0
        %v699 = vadd.f32 %v650, %v698
        %v700 = vpop.f32.mrb[0].mxu0
        %701 = vdwg.mxu0
        %v702 = vadd.f32 %v296, %v688
        %v703 = vadd.f32 %v297, %v691
        %v704 = vadd.f32 %v298, %v696
        %v705 = vadd.f32 %v299, %v699
        %706 = vst [vmem:[%s285] sm:$0xff] %v702
        %707 = vst [vmem:[%s285 + $0x8] sm:$0xff] %v703
        %708 = vst [vmem:[%s285 + $0x10] sm:$0xff] %v704
        %709 = vst [vmem:[%s285 + $0x18] sm:$0xff] %v705
        %p710 = scmp.eq.s32.totalorder %s21, 1
        // Predicated region
        $region60: #{edgenet.87} parent=50 // pred_check
          %p711 = pneg %p710
        $region61: #{edgenet.87} parent=50 // pred_check_branch
          %713 = sbr.rel (%p711) target = $region63
        $region62: #{edgenet.87} parent=50 // pred_region
          %v714 = vld [vmem:[%s285] sm:$0xff]
          %v715 = vld [vmem:[%s285 + $0x8] sm:$0xff]
          %v716 = vld [vmem:[%s285 + $0x10] sm:$0xff]
          %v717 = vld [vmem:[%s285 + $0x18] sm:$0xff]
          %v718 = vld [vmem:[%s277] sm:$0x1]
          %v720 = vlaneseq
          %v721 = vshrl.u32 %v720, 7
          %v722 = vsub.s32 0, %v721
          %v723 = vrot.slane %v718, %v722
          %v725 = vadd.f32 %v714, %v723
          %v726 = vadd.f32 %v715, %v723
          %v727 = vadd.f32 %v716, %v723
          %v728 = vadd.f32 %v717, %v723
          %729 = vst [vmem:[%s285] sm:$0xff] %v725
          %730 = vst [vmem:[%s285 + $0x8] sm:$0xff] %v726
          %731 = vst [vmem:[%s285 + $0x10] sm:$0xff] %v727
          %732 = vst [vmem:[%s285 + $0x18] sm:$0xff] %v728
        $region63: #{edgenet.87} parent=50 // pred_fallthru
          _
        %s733 = smul.u32 4, %s19
        %p734 = scmp.lt.s32.totalorder %s733, 3
        %s735 = scalar_select %p734, %s733, 3
        %p736 = scmp.lt.s32.totalorder %s20, 0
        %s737 = scalar_select %p736, %s20, 0
        %s738 = sadd.s32 %s737, %s735
        %s739 = smul.addr %s738, 8
        %s740 = scalar_lea.vmem %s3, %s739
        // Predicated region
        $region64: #{edgenet.87} parent=50 // pred_check
          %p741 = pneg %p135
        $region65: #{edgenet.87} parent=50 // pred_check_branch
          %743 = sbr.rel (%p741) target = $region67
        $region66: #{edgenet.87} parent=50 // pred_region
          %s744 = smul.u32 4, %s19
        $region67: #{edgenet.87} parent=50 // pred_fallthru
          _
        // Predicated region
        $region68: #{edgenet.87} parent=50 // pred_check
          %p745 = pneg %p135
        $region69: #{edgenet.87} parent=50 // pred_check_branch
          %747 = sbr.rel (%p745) target = $region71
        $region70: #{edgenet.87} parent=50 // pred_region
          %s748 = smul.u32 4, %s19
          %p749 = scmp.lt.s32.totalorder %s748, 3
          %s750 = scalar_select %p749, %s748, 3
          %p751 = scmp.lt.s32.totalorder %s20, 0
          %s752 = scalar_select %p751, %s20, 0
          %s753 = sadd.s32 %s752, %s750
          %s754 = smul.addr %s753, 8
          %s755 = scalar_lea.vmem %s3, %s754
        $region71: #{edgenet.87} parent=50 // pred_fallthru
          _
      $region51: #{edgenet.87} parent=5 // pred_fallthru
        _
      %p756 = scmp.le.s32.totalorder 2, %s9
      // Predicated region
      $region72: #{edgenet.87} parent=5 // pred_check
        %p757 = pneg %p756
      $region73: #{edgenet.87} parent=5 // pred_check_branch
        %759 = sbr.rel (%p757) target = $region75
      $region74: #{edgenet.87} parent=5 // pred_region
        %s760 = ssub.s32 %s9, 2
      $region75: #{edgenet.87} parent=5 // pred_fallthru
        _
    $region6: #{edgenet.87} parent=1 // loop_footer
      %s13 = sadd.s32 1, %s9
    $region7: #{edgenet.87} parent=1 // loop_footer_branch
      %8 = sbr.rel target = $region3
    $region8: #{edgenet.87} parent=1 // loop_exit
      _

// kernel: edgenet.92
$region0: #{edgenet.92}
  #allocation0 [shape = 'u32[]', space=smem, size = 0x4, offset = 0x4, fixed_abs, tag = 'smem constant byte address 0x4 - core index']
  #allocation1 [shape = 'u32[144,128]{1,0:T(1,128)}', space=vmem, size = 0x12000, scoped, tag = 'internal scratch']
  %s0 = inlined_call_operand.vmem [shape: bf16[128,512], index: 0, kind: input, shape index: {}]
  %s1 = inlined_call_operand.vmem [shape: bf16[512,128], index: 1, kind: input, shape index: {}]
  %s2 = inlined_call_operand.vmem [shape: f32[1,128], index: 2, kind: input, shape index: {}]
  %s3 = inlined_call_operand.vmem [shape: f32[128,128], index: 3, kind: output, shape index: {}]
  %s4 = sld [smem:[#allocation0]]
  $region30: #{edgenet.92} parent=0
    _
  %s6 = ssub.s32 1, %s4
  %s7 = scalar_select 0, %s6, %s4
  // Predicated region
  $region2: #{edgenet.92} parent=0 // pred_check
    _
  $region3: #{edgenet.92} parent=0 // pred_check_branch
    %9 = sbr.rel (0) target = $region5
  $region4: #{edgenet.92} parent=0 // pred_region
    _
  $region5: #{edgenet.92} parent=0 // pred_fallthru
    _
  // Predicated region
  $region6: #{edgenet.92} parent=0 // pred_check
    _
  $region7: #{edgenet.92} parent=0 // pred_check_branch
    %11 = sbr.rel (0) target = $region9
  $region8: #{edgenet.92} parent=0 // pred_region
    _
  $region9: #{edgenet.92} parent=0 // pred_fallthru
    _
  // Predicated region
  $region10: #{edgenet.92} parent=0 // pred_check
    _
  $region11: #{edgenet.92} parent=0 // pred_check_branch
    %13 = sbr.rel (0) target = $region13
  $region12: #{edgenet.92} parent=0 // pred_region
    _
  $region13: #{edgenet.92} parent=0 // pred_fallthru
    _
  %p15 = scmp.eq.s32.totalorder 0, 0
  // Predicated region
  $region14: #{edgenet.92} parent=0 // pred_check
    %p16 = pneg %p15
  $region15: #{edgenet.92} parent=0 // pred_check_branch
    %18 = sbr.rel (%p16) target = $region17
  $region16: #{edgenet.92} parent=0 // pred_region
    %19 = vst [vmem:[%s3] sm:$0xff] 0.0
    %20 = vst [vmem:[%s3 + $0x8] sm:$0xff] 0.0
    %21 = vst [vmem:[%s3 + $0x10] sm:$0xff] 0.0
    %22 = vst [vmem:[%s3 + $0x18] sm:$0xff] 0.0
    %23 = vst [vmem:[%s3 + $0x20] sm:$0xff] 0.0
    %24 = vst [vmem:[%s3 + $0x28] sm:$0xff] 0.0
    %25 = vst [vmem:[%s3 + $0x30] sm:$0xff] 0.0
    %26 = vst [vmem:[%s3 + $0x38] sm:$0xff] 0.0
    %27 = vst [vmem:[%s3 + $0x40] sm:$0xff] 0.0
    %28 = vst [vmem:[%s3 + $0x48] sm:$0xff] 0.0
    %29 = vst [vmem:[%s3 + $0x50] sm:$0xff] 0.0
    %30 = vst [vmem:[%s3 + $0x58] sm:$0xff] 0.0
    %31 = vst [vmem:[%s3 + $0x60] sm:$0xff] 0.0
    %32 = vst [vmem:[%s3 + $0x68] sm:$0xff] 0.0
    %33 = vst [vmem:[%s3 + $0x70] sm:$0xff] 0.0
    %34 = vst [vmem:[%s3 + $0x78] sm:$0xff] 0.0
  $region17: #{edgenet.92} parent=0 // pred_fallthru
    _
  %v35 = vld [vmem:[%s3] sm:$0xff]
  %v36 = vld [vmem:[%s3 + $0x8] sm:$0xff]
  %v37 = vld [vmem:[%s3 + $0x10] sm:$0xff]
  %v38 = vld [vmem:[%s3 + $0x18] sm:$0xff]
  %v39 = vld [vmem:[%s3 + $0x20] sm:$0xff]
  %v40 = vld [vmem:[%s3 + $0x28] sm:$0xff]
  %v41 = vld [vmem:[%s3 + $0x30] sm:$0xff]
  %v42 = vld [vmem:[%s3 + $0x38] sm:$0xff]
  %v43 = vld [vmem:[%s3 + $0x40] sm:$0xff]
  %v44 = vld [vmem:[%s3 + $0x48] sm:$0xff]
  %v45 = vld [vmem:[%s3 + $0x50] sm:$0xff]
  %v46 = vld [vmem:[%s3 + $0x58] sm:$0xff]
  %v47 = vld [vmem:[%s3 + $0x60] sm:$0xff]
  %v48 = vld [vmem:[%s3 + $0x68] sm:$0xff]
  %v49 = vld [vmem:[%s3 + $0x70] sm:$0xff]
  %v50 = vld [vmem:[%s3 + $0x78] sm:$0xff]
  %v51 = vld [vmem:[%s0] sm:$0xff]
  %v52 = vld [vmem:[%s0 + $0x8] sm:$0xff]
  %v53 = vld [vmem:[%s0 + $0x10] sm:$0xff]
  %v54 = vld [vmem:[%s0 + $0x18] sm:$0xff]
  %v55 = vld [vmem:[%s0 + $0x20] sm:$0xff]
  %v56 = vld [vmem:[%s0 + $0x28] sm:$0xff]
  %v57 = vld [vmem:[%s0 + $0x30] sm:$0xff]
  %v58 = vld [vmem:[%s0 + $0x38] sm:$0xff]
  %v59 = vld [vmem:[%s0 + $0x40] sm:$0xff]
  %v60 = vld [vmem:[%s0 + $0x48] sm:$0xff]
  %v61 = vld [vmem:[%s0 + $0x50] sm:$0xff]
  %v62 = vld [vmem:[%s0 + $0x58] sm:$0xff]
  %v63 = vld [vmem:[%s0 + $0x60] sm:$0xff]
  %v64 = vld [vmem:[%s0 + $0x68] sm:$0xff]
  %v65 = vld [vmem:[%s0 + $0x70] sm:$0xff]
  %v66 = vld [vmem:[%s0 + $0x78] sm:$0xff]
  %v67 = vld [vmem:[%s0 + $0x80] sm:$0xff]
  %v68 = vld [vmem:[%s0 + $0x88] sm:$0xff]
  %v69 = vld [vmem:[%s0 + $0x90] sm:$0xff]
  %v70 = vld [vmem:[%s0 + $0x98] sm:$0xff]
  %v71 = vld [vmem:[%s0 + $0xa0] sm:$0xff]
  %v72 = vld [vmem:[%s0 + $0xa8] sm:$0xff]
  %v73 = vld [vmem:[%s0 + $0xb0] sm:$0xff]
  %v74 = vld [vmem:[%s0 + $0xb8] sm:$0xff]
  %v75 = vld [vmem:[%s0 + $0xc0] sm:$0xff]
  %v76 = vld [vmem:[%s0 + $0xc8] sm:$0xff]
  %v77 = vld [vmem:[%s0 + $0xd0] sm:$0xff]
  %v78 = vld [vmem:[%s0 + $0xd8] sm:$0xff]
  %v79 = vld [vmem:[%s0 + $0xe0] sm:$0xff]
  %v80 = vld [vmem:[%s0 + $0xe8] sm:$0xff]
  %v81 = vld [vmem:[%s0 + $0xf0] sm:$0xff]
  %v82 = vld [vmem:[%s0 + $0xf8] sm:$0xff]
  %v83 = vld [vmem:[%s1] sm:$0xf]
  %v84 = vld [vmem:[%s1 + $0x4] sm:$0xf]
  %v85 = vld [vmem:[%s1 + $0x8] sm:$0xf]
  %v86 = vld [vmem:[%s1 + $0xc] sm:$0xf]
  %v87 = vld [vmem:[%s1 + $0x10] sm:$0xf]
  %v88 = vld [vmem:[%s1 + $0x14] sm:$0xf]
  %v89 = vld [vmem:[%s1 + $0x18] sm:$0xf]
  %v90 = vld [vmem:[%s1 + $0x1c] sm:$0xf]
  %v91 = vld [vmem:[%s1 + $0x20] sm:$0xf]
  %v92 = vld [vmem:[%s1 + $0x24] sm:$0xf]
  %v93 = vld [vmem:[%s1 + $0x28] sm:$0xf]
  %v94 = vld [vmem:[%s1 + $0x2c] sm:$0xf]
  %v95 = vld [vmem:[%s1 + $0x30] sm:$0xf]
  %v96 = vld [vmem:[%s1 + $0x34] sm:$0xf]
  %v97 = vld [vmem:[%s1 + $0x38] sm:$0xf]
  %v98 = vld [vmem:[%s1 + $0x3c] sm:$0xf]
  %v99 = vld [vmem:[%s1 + $0x40] sm:$0xf]
  %v100 = vld [vmem:[%s1 + $0x44] sm:$0xf]
  %v101 = vld [vmem:[%s1 + $0x48] sm:$0xf]
  %v102 = vld [vmem:[%s1 + $0x4c] sm:$0xf]
  %v103 = vld [vmem:[%s1 + $0x50] sm:$0xf]
  %v104 = vld [vmem:[%s1 + $0x54] sm:$0xf]
  %v105 = vld [vmem:[%s1 + $0x58] sm:$0xf]
  %v106 = vld [vmem:[%s1 + $0x5c] sm:$0xf]
  %v107 = vld [vmem:[%s1 + $0x60] sm:$0xf]
  %v108 = vld [vmem:[%s1 + $0x64] sm:$0xf]
  %v109 = vld [vmem:[%s1 + $0x68] sm:$0xf]
  %v110 = vld [vmem:[%s1 + $0x6c] sm:$0xf]
  %v111 = vld [vmem:[%s1 + $0x70] sm:$0xf]
  %v112 = vld [vmem:[%s1 + $0x74] sm:$0xf]
  %v113 = vld [vmem:[%s1 + $0x78] sm:$0xf]
  %v114 = vld [vmem:[%s1 + $0x7c] sm:$0xf]
  %v115 = vld [vmem:[%s1 + $0x80] sm:$0xf]
  %v116 = vld [vmem:[%s1 + $0x84] sm:$0xf]
  %v117 = vld [vmem:[%s1 + $0x88] sm:$0xf]
  %v118 = vld [vmem:[%s1 + $0x8c] sm:$0xf]
  %v119 = vld [vmem:[%s1 + $0x90] sm:$0xf]
  %v120 = vld [vmem:[%s1 + $0x94] sm:$0xf]
  %v121 = vld [vmem:[%s1 + $0x98] sm:$0xf]
  %v122 = vld [vmem:[%s1 + $0x9c] sm:$0xf]
  %v123 = vld [vmem:[%s1 + $0xa0] sm:$0xf]
  %v124 = vld [vmem:[%s1 + $0xa4] sm:$0xf]
  %v125 = vld [vmem:[%s1 + $0xa8] sm:$0xf]
  %v126 = vld [vmem:[%s1 + $0xac] sm:$0xf]
  %v127 = vld [vmem:[%s1 + $0xb0] sm:$0xf]
  %v128 = vld [vmem:[%s1 + $0xb4] sm:$0xf]
  %v129 = vld [vmem:[%s1 + $0xb8] sm:$0xf]
  %v130 = vld [vmem:[%s1 + $0xbc] sm:$0xf]
  %v131 = vld [vmem:[%s1 + $0xc0] sm:$0xf]
  %v132 = vld [vmem:[%s1 + $0xc4] sm:$0xf]
  %v133 = vld [vmem:[%s1 + $0xc8] sm:$0xf]
  %v134 = vld [vmem:[%s1 + $0xcc] sm:$0xf]
  %v135 = vld [vmem:[%s1 + $0xd0] sm:$0xf]
  %v136 = vld [vmem:[%s1 + $0xd4] sm:$0xf]
  %v137 = vld [vmem:[%s1 + $0xd8] sm:$0xf]
  %v138 = vld [vmem:[%s1 + $0xdc] sm:$0xf]
  %v139 = vld [vmem:[%s1 + $0xe0] sm:$0xf]
  %v140 = vld [vmem:[%s1 + $0xe4] sm:$0xf]
  %v141 = vld [vmem:[%s1 + $0xe8] sm:$0xf]
  %v142 = vld [vmem:[%s1 + $0xec] sm:$0xf]
  %v143 = vld [vmem:[%s1 + $0xf0] sm:$0xf]
  %v144 = vld [vmem:[%s1 + $0xf4] sm:$0xf]
  %v145 = vld [vmem:[%s1 + $0xf8] sm:$0xf]
  %v146 = vld [vmem:[%s1 + $0xfc] sm:$0xf]
  %v179 = vunpack.c.l.b16 %v51
  %v180 = vunpack.c.h.b16 %v51
  %v181 = vunpack.c.l.b16 %v52
  %v182 = vunpack.c.h.b16 %v52
  %v183 = vunpack.c.l.b16 %v53
  %v184 = vunpack.c.h.b16 %v53
  %v185 = vunpack.c.l.b16 %v54
  %v186 = vunpack.c.h.b16 %v54
  %v187 = vunpack.c.l.b16 %v55
  %v188 = vunpack.c.h.b16 %v55
  %v189 = vunpack.c.l.b16 %v56
  %v190 = vunpack.c.h.b16 %v56
  %v191 = vunpack.c.l.b16 %v57
  %v192 = vunpack.c.h.b16 %v57
  %v193 = vunpack.c.l.b16 %v58
  %v194 = vunpack.c.h.b16 %v58
  %v195 = vunpack.c.l.b16 %v59
  %v196 = vunpack.c.h.b16 %v59
  %v197 = vunpack.c.l.b16 %v60
  %v198 = vunpack.c.h.b16 %v60
  %v199 = vunpack.c.l.b16 %v61
  %v200 = vunpack.c.h.b16 %v61
  %v201 = vunpack.c.l.b16 %v62
  %v202 = vunpack.c.h.b16 %v62
  %v203 = vunpack.c.l.b16 %v63
  %v204 = vunpack.c.h.b16 %v63
  %v205 = vunpack.c.l.b16 %v64
  %v206 = vunpack.c.h.b16 %v64
  %v207 = vunpack.c.l.b16 %v65
  %v208 = vunpack.c.h.b16 %v65
  %v209 = vunpack.c.l.b16 %v66
  %v210 = vunpack.c.h.b16 %v66
  %v211 = vunpack.c.l.b16 %v67
  %v212 = vunpack.c.h.b16 %v67
  %v213 = vunpack.c.l.b16 %v68
  %v214 = vunpack.c.h.b16 %v68
  %v215 = vunpack.c.l.b16 %v69
  %v216 = vunpack.c.h.b16 %v69
  %v217 = vunpack.c.l.b16 %v70
  %v218 = vunpack.c.h.b16 %v70
  %v219 = vunpack.c.l.b16 %v71
  %v220 = vunpack.c.h.b16 %v71
  %v221 = vunpack.c.l.b16 %v72
  %v222 = vunpack.c.h.b16 %v72
  %v223 = vunpack.c.l.b16 %v73
  %v224 = vunpack.c.h.b16 %v73
  %v225 = vunpack.c.l.b16 %v74
  %v226 = vunpack.c.h.b16 %v74
  %v227 = vunpack.c.l.b16 %v75
  %v228 = vunpack.c.h.b16 %v75
  %v229 = vunpack.c.l.b16 %v76
  %v230 = vunpack.c.h.b16 %v76
  %v231 = vunpack.c.l.b16 %v77
  %v232 = vunpack.c.h.b16 %v77
  %v233 = vunpack.c.l.b16 %v78
  %v234 = vunpack.c.h.b16 %v78
  %v235 = vunpack.c.l.b16 %v79
  %v236 = vunpack.c.h.b16 %v79
  %v237 = vunpack.c.l.b16 %v80
  %v238 = vunpack.c.h.b16 %v80
  %v239 = vunpack.c.l.b16 %v81
  %v240 = vunpack.c.h.b16 %v81
  %v241 = vunpack.c.l.b16 %v82
  %v242 = vunpack.c.h.b16 %v82
  %v243 = vpack.c.b16 %v183, %v179
  %v244 = vpack.c.b16 %v184, %v180
  %v245 = vpack.c.b16 %v185, %v181
  %v246 = vpack.c.b16 %v186, %v182
  %v247 = vpack.c.b16 %v191, %v187
  %v248 = vpack.c.b16 %v192, %v188
  %v249 = vpack.c.b16 %v193, %v189
  %v250 = vpack.c.b16 %v194, %v190
  %v251 = vpack.c.b16 %v199, %v195
  %v252 = vpack.c.b16 %v200, %v196
  %v253 = vpack.c.b16 %v201, %v197
  %v254 = vpack.c.b16 %v202, %v198
  %v255 = vpack.c.b16 %v207, %v203
  %v256 = vpack.c.b16 %v208, %v204
  %v257 = vpack.c.b16 %v209, %v205
  %v258 = vpack.c.b16 %v210, %v206
  %v259 = vpack.c.b16 %v215, %v211
  %v260 = vpack.c.b16 %v216, %v212
  %v261 = vpack.c.b16 %v217, %v213
  %v262 = vpack.c.b16 %v218, %v214
  %v263 = vpack.c.b16 %v223, %v219
  %v264 = vpack.c.b16 %v224, %v220
  %v265 = vpack.c.b16 %v225, %v221
  %v266 = vpack.c.b16 %v226, %v222
  %v267 = vpack.c.b16 %v231, %v227
  %v268 = vpack.c.b16 %v232, %v228
  %v269 = vpack.c.b16 %v233, %v229
  %v270 = vpack.c.b16 %v234, %v230
  %v271 = vpack.c.b16 %v239, %v235
  %v272 = vpack.c.b16 %v240, %v236
  %v273 = vpack.c.b16 %v241, %v237
  %v274 = vpack.c.b16 %v242, %v238
  %v371 = vunpack.c.l.b16 %v83
  %v372 = vunpack.c.l.b16 %v84
  %v373 = vunpack.c.l.b16 %v85
  %v374 = vunpack.c.l.b16 %v86
  %v375 = vunpack.c.l.b16 %v87
  %v376 = vunpack.c.l.b16 %v88
  %v377 = vunpack.c.l.b16 %v89
  %v378 = vunpack.c.l.b16 %v90
  %v379 = vunpack.c.l.b16 %v91
  %v380 = vunpack.c.l.b16 %v92
  %v381 = vunpack.c.l.b16 %v93
  %v382 = vunpack.c.l.b16 %v94
  %v383 = vunpack.c.l.b16 %v95
  %v384 = vunpack.c.l.b16 %v96
  %v385 = vunpack.c.l.b16 %v97
  %v386 = vunpack.c.l.b16 %v98
  %v387 = vunpack.c.l.b16 %v99
  %v388 = vunpack.c.l.b16 %v100
  %v389 = vunpack.c.l.b16 %v101
  %v390 = vunpack.c.l.b16 %v102
  %v391 = vunpack.c.l.b16 %v103
  %v392 = vunpack.c.l.b16 %v104
  %v393 = vunpack.c.l.b16 %v105
  %v394 = vunpack.c.l.b16 %v106
  %v395 = vunpack.c.l.b16 %v107
  %v396 = vunpack.c.l.b16 %v108
  %v397 = vunpack.c.l.b16 %v109
  %v398 = vunpack.c.l.b16 %v110
  %v399 = vunpack.c.l.b16 %v111
  %v400 = vunpack.c.l.b16 %v112
  %v401 = vunpack.c.l.b16 %v113
  %v402 = vunpack.c.l.b16 %v114
  %v403 = vunpack.c.l.b16 %v115
  %v404 = vunpack.c.l.b16 %v116
  %v405 = vunpack.c.l.b16 %v117
  %v406 = vunpack.c.l.b16 %v118
  %v407 = vunpack.c.l.b16 %v119
  %v408 = vunpack.c.l.b16 %v120
  %v409 = vunpack.c.l.b16 %v121
  %v410 = vunpack.c.l.b16 %v122
  %v411 = vunpack.c.l.b16 %v123
  %v412 = vunpack.c.l.b16 %v124
  %v413 = vunpack.c.l.b16 %v125
  %v414 = vunpack.c.l.b16 %v126
  %v415 = vunpack.c.l.b16 %v127
  %v416 = vunpack.c.l.b16 %v128
  %v417 = vunpack.c.l.b16 %v129
  %v418 = vunpack.c.l.b16 %v130
  %v419 = vunpack.c.l.b16 %v131
  %v420 = vunpack.c.l.b16 %v132
  %v421 = vunpack.c.l.b16 %v133
  %v422 = vunpack.c.l.b16 %v134
  %v423 = vunpack.c.l.b16 %v135
  %v424 = vunpack.c.l.b16 %v136
  %v425 = vunpack.c.l.b16 %v137
  %v426 = vunpack.c.l.b16 %v138
  %v427 = vunpack.c.l.b16 %v139
  %v428 = vunpack.c.l.b16 %v140
  %v429 = vunpack.c.l.b16 %v141
  %v430 = vunpack.c.l.b16 %v142
  %v431 = vunpack.c.l.b16 %v143
  %v432 = vunpack.c.l.b16 %v144
  %v433 = vunpack.c.l.b16 %v145
  %v434 = vunpack.c.l.b16 %v146
  %v435 = vpack.c.b16 %v372, %v371
  %v436 = vpack.c.b16 %v374, %v373
  %v437 = vpack.c.b16 %v376, %v375
  %v438 = vpack.c.b16 %v378, %v377
  %v439 = vpack.c.b16 %v380, %v379
  %v440 = vpack.c.b16 %v382, %v381
  %v441 = vpack.c.b16 %v384, %v383
  %v442 = vpack.c.b16 %v386, %v385
  %v443 = vpack.c.b16 %v388, %v387
  %v444 = vpack.c.b16 %v390, %v389
  %v445 = vpack.c.b16 %v392, %v391
  %v446 = vpack.c.b16 %v394, %v393
  %v447 = vpack.c.b16 %v396, %v395
  %v448 = vpack.c.b16 %v398, %v397
  %v449 = vpack.c.b16 %v400, %v399
  %v450 = vpack.c.b16 %v402, %v401
  %v451 = vpack.c.b16 %v404, %v403
  %v452 = vpack.c.b16 %v406, %v405
  %v453 = vpack.c.b16 %v408, %v407
  %v454 = vpack.c.b16 %v410, %v409
  %v455 = vpack.c.b16 %v412, %v411
  %v456 = vpack.c.b16 %v414, %v413
  %v457 = vpack.c.b16 %v416, %v415
  %v458 = vpack.c.b16 %v418, %v417
  %v459 = vpack.c.b16 %v420, %v419
  %v460 = vpack.c.b16 %v422, %v421
  %v461 = vpack.c.b16 %v424, %v423
  %v462 = vpack.c.b16 %v426, %v425
  %v463 = vpack.c.b16 %v428, %v427
  %v464 = vpack.c.b16 %v430, %v429
  %v465 = vpack.c.b16 %v432, %v431
  %v466 = vpack.c.b16 %v434, %v433
  %499 = vmatprep.subr.bf16.mxu0 0
  %500 = vmatpush1.bf16.msra.mxu0 %v435
  %501 = vmatprep.subr.bf16.mxu0 0
  %502 = vmatpush1.bf16.msra.mxu0 %v436
  %503 = vmatprep.subr.bf16.mxu0 0
  %504 = vmatpush1.bf16.msra.mxu0 %v437
  %505 = vmatprep.subr.bf16.mxu0 0
  %506 = vmatpush1.bf16.msra.mxu0 %v438
  %507 = vmatprep.subr.bf16.mxu0 0
  %508 = vmatpush1.bf16.msra.mxu0 %v439
  %509 = vmatprep.subr.bf16.mxu0 0
  %510 = vmatpush1.bf16.msra.mxu0 %v440
  %511 = vmatprep.subr.bf16.mxu0 0
  %512 = vmatpush1.bf16.msra.mxu0 %v441
  %513 = vmatprep.subr.bf16.mxu0 0
  %514 = vmatpush1.bf16.msra.mxu0 %v442
  %515 = vmatprep.subr.bf16.mxu0 0
  %516 = vmatpush1.bf16.msra.mxu0 %v443
  %517 = vmatprep.subr.bf16.mxu0 0
  %518 = vmatpush1.bf16.msra.mxu0 %v444
  %519 = vmatprep.subr.bf16.mxu0 0
  %520 = vmatpush1.bf16.msra.mxu0 %v445
  %521 = vmatprep.subr.bf16.mxu0 0
  %522 = vmatpush1.bf16.msra.mxu0 %v446
  %523 = vmatprep.subr.bf16.mxu0 0
  %524 = vmatpush1.bf16.msra.mxu0 %v447
  %525 = vmatprep.subr.bf16.mxu0 0
  %526 = vmatpush1.bf16.msra.mxu0 %v448
  %527 = vmatprep.subr.bf16.mxu0 0
  %528 = vmatpush1.bf16.msra.mxu0 %v449
  %529 = vmatprep.subr.bf16.mxu0 0
  %530 = vmatpush1.bf16.msra.mxu0 %v450
  %531 = vmatprep.mubr.bf16.mxu0 %v244
  %532 = vmatmul.mubr.bf16.gmra.mrb[0].mxu0 %v243
  %v533 = vpop.f32.mrb[0].mxu0
  %v534 = vadd.f32 0.0, %v533
  %v535 = vpop.f32.mrb[0].mxu0
  %v536 = vpop.f32.mrb[0].mxu0
  %v537 = vadd.f32 0.0, %v536
  %v538 = vpop.f32.mrb[0].mxu0
  %539 = vmatprep.mubr.bf16.mxu0 %v248
  %540 = vmatmul.mubr.bf16.gmra.mrb[0].mxu0 %v247
  %v541 = vpop.f32.mrb[0].mxu0
  %v542 = vadd.f32 0.0, %v541
  %v543 = vpop.f32.mrb[0].mxu0
  %v544 = vpop.f32.mrb[0].mxu0
  %v545 = vadd.f32 0.0, %v544
  %v546 = vpop.f32.mrb[0].mxu0
  %547 = vmatprep.mubr.bf16.mxu0 %v252
  %548 = vmatmul.mubr.bf16.gmra.mrb[0].mxu0 %v251
  %v549 = vpop.f32.mrb[0].mxu0
  %v550 = vadd.f32 0.0, %v549
  %v551 = vpop.f32.mrb[0].mxu0
  %v552 = vpop.f32.mrb[0].mxu0
  %v553 = vadd.f32 0.0, %v552
  %v554 = vpop.f32.mrb[0].mxu0
  %555 = vmatprep.mubr.bf16.mxu0 %v256
  %556 = vmatmul.mubr.bf16.gmra.mrb[0].mxu0 %v255
  %v557 = vpop.f32.mrb[0].mxu0
  %v558 = vadd.f32 0.0, %v557
  %v559 = vpop.f32.mrb[0].mxu0
  %v560 = vpop.f32.mrb[0].mxu0
  %v561 = vadd.f32 0.0, %v560
  %v562 = vpop.f32.mrb[0].mxu0
  %563 = vmatprep.mubr.bf16.mxu0 %v260
  %564 = vmatmul.mubr.bf16.gmra.mrb[0].mxu0 %v259
  %v565 = vpop.f32.mrb[0].mxu0
  %v566 = vadd.f32 0.0, %v565
  %v567 = vpop.f32.mrb[0].mxu0
  %v568 = vpop.f32.mrb[0].mxu0
  %v569 = vadd.f32 0.0, %v568
  %v570 = vpop.f32.mrb[0].mxu0
  %571 = vmatprep.mubr.bf16.mxu0 %v264
  %572 = vmatmul.mubr.bf16.gmra.mrb[0].mxu0 %v263
  %v573 = vpop.f32.mrb[0].mxu0
  %v574 = vadd.f32 0.0, %v573
  %v575 = vpop.f32.mrb[0].mxu0
  %v576 = vpop.f32.mrb[0].mxu0
  %v577 = vadd.f32 0.0, %v576
  %v578 = vpop.f32.mrb[0].mxu0
  %579 = vmatprep.mubr.bf16.mxu0 %v268
  %580 = vmatmul.mubr.bf16.gmra.mrb[0].mxu0 %v267
  %v581 = vpop.f32.mrb[0].mxu0
  %v582 = vadd.f32 0.0, %v581
  %v583 = vpop.f32.mrb[0].mxu0
  %v584 = vpop.f32.mrb[0].mxu0
  %v585 = vadd.f32 0.0, %v584
  %v586 = vpop.f32.mrb[0].mxu0
  %587 = vmatprep.mubr.bf16.mxu0 %v272
  %588 = vmatmul.mubr.bf16.gmra.mrb[0].mxu0 %v271
  %v589 = vpop.f32.mrb[0].mxu0
  %v590 = vadd.f32 0.0, %v589
  %v591 = vpop.f32.mrb[0].mxu0
  %v592 = vpop.f32.mrb[0].mxu0
  %v593 = vadd.f32 0.0, %v592
  %v594 = vpop.f32.mrb[0].mxu0
  %595 = vdwg.mxu0
  %596 = vmatprep.subr.bf16.mxu0 0
  %597 = vmatpush1.bf16.msra.mxu0 %v451
  %598 = vmatprep.subr.bf16.mxu0 0
  %599 = vmatpush1.bf16.msra.mxu0 %v452
  %600 = vmatprep.subr.bf16.mxu0 0
  %601 = vmatpush1.bf16.msra.mxu0 %v453
  %602 = vmatprep.subr.bf16.mxu0 0
  %603 = vmatpush1.bf16.msra.mxu0 %v454
  %604 = vmatprep.subr.bf16.mxu0 0
  %605 = vmatpush1.bf16.msra.mxu0 %v455
  %606 = vmatprep.subr.bf16.mxu0 0
  %607 = vmatpush1.bf16.msra.mxu0 %v456
  %608 = vmatprep.subr.bf16.mxu0 0
  %609 = vmatpush1.bf16.msra.mxu0 %v457
  %610 = vmatprep.subr.bf16.mxu0 0
  %611 = vmatpush1.bf16.msra.mxu0 %v458
  %612 = vmatprep.subr.bf16.mxu0 0
  %613 = vmatpush1.bf16.msra.mxu0 %v459
  %614 = vmatprep.subr.bf16.mxu0 0
  %615 = vmatpush1.bf16.msra.mxu0 %v460
  %616 = vmatprep.subr.bf16.mxu0 0
  %617 = vmatpush1.bf16.msra.mxu0 %v461
  %618 = vmatprep.subr.bf16.mxu0 0
  %619 = vmatpush1.bf16.msra.mxu0 %v462
  %620 = vmatprep.subr.bf16.mxu0 0
  %621 = vmatpush1.bf16.msra.mxu0 %v463
  %622 = vmatprep.subr.bf16.mxu0 0
  %623 = vmatpush1.bf16.msra.mxu0 %v464
  %624 = vmatprep.subr.bf16.mxu0 0
  %625 = vmatpush1.bf16.msra.mxu0 %v465
  %626 = vmatprep.subr.bf16.mxu0 0
  %627 = vmatpush1.bf16.msra.mxu0 %v466
  %628 = vmatprep.mubr.bf16.mxu0 %v246
  %629 = vmatmul.mubr.bf16.gmra.mrb[0].mxu0 %v245
  %v630 = vpop.f32.mrb[0].mxu0
  %v631 = vadd.f32 %v534, %v630
  %v632 = vpop.f32.mrb[0].mxu0
  %v633 = vpop.f32.mrb[0].mxu0
  %v634 = vadd.f32 %v537, %v633
  %v635 = vpop.f32.mrb[0].mxu0
  %636 = vmatprep.mubr.bf16.mxu0 %v250
  %637 = vmatmul.mubr.bf16.gmra.mrb[0].mxu0 %v249
  %v638 = vpop.f32.mrb[0].mxu0
  %v639 = vadd.f32 %v542, %v638
  %v640 = vpop.f32.mrb[0].mxu0
  %v641 = vpop.f32.mrb[0].mxu0
  %v642 = vadd.f32 %v545, %v641
  %v643 = vpop.f32.mrb[0].mxu0
  %644 = vmatprep.mubr.bf16.mxu0 %v254
  %645 = vmatmul.mubr.bf16.gmra.mrb[0].mxu0 %v253
  %v646 = vpop.f32.mrb[0].mxu0
  %v647 = vadd.f32 %v550, %v646
  %v648 = vpop.f32.mrb[0].mxu0
  %v649 = vpop.f32.mrb[0].mxu0
  %v650 = vadd.f32 %v553, %v649
  %v651 = vpop.f32.mrb[0].mxu0
  %652 = vmatprep.mubr.bf16.mxu0 %v258
  %653 = vmatmul.mubr.bf16.gmra.mrb[0].mxu0 %v257
  %v654 = vpop.f32.mrb[0].mxu0
  %v655 = vadd.f32 %v558, %v654
  %v656 = vpop.f32.mrb[0].mxu0
  %v657 = vpop.f32.mrb[0].mxu0
  %v658 = vadd.f32 %v561, %v657
  %v659 = vpop.f32.mrb[0].mxu0
  %660 = vmatprep.mubr.bf16.mxu0 %v262
  %661 = vmatmul.mubr.bf16.gmra.mrb[0].mxu0 %v261
  %v662 = vpop.f32.mrb[0].mxu0
  %v663 = vadd.f32 %v566, %v662
  %v664 = vpop.f32.mrb[0].mxu0
  %v665 = vpop.f32.mrb[0].mxu0
  %v666 = vadd.f32 %v569, %v665
  %v667 = vpop.f32.mrb[0].mxu0
  %668 = vmatprep.mubr.bf16.mxu0 %v266
  %669 = vmatmul.mubr.bf16.gmra.mrb[0].mxu0 %v265
  %v670 = vpop.f32.mrb[0].mxu0
  %v671 = vadd.f32 %v574, %v670
  %v672 = vpop.f32.mrb[0].mxu0
  %v673 = vpop.f32.mrb[0].mxu0
  %v674 = vadd.f32 %v577, %v673
  %v675 = vpop.f32.mrb[0].mxu0
  %676 = vmatprep.mubr.bf16.mxu0 %v270
  %677 = vmatmul.mubr.bf16.gmra.mrb[0].mxu0 %v269
  %v678 = vpop.f32.mrb[0].mxu0
  %v679 = vadd.f32 %v582, %v678
  %v680 = vpop.f32.mrb[0].mxu0
  %v681 = vpop.f32.mrb[0].mxu0
  %v682 = vadd.f32 %v585, %v681
  %v683 = vpop.f32.mrb[0].mxu0
  %684 = vmatprep.mubr.bf16.mxu0 %v274
  %685 = vmatmul.mubr.bf16.gmra.mrb[0].mxu0 %v273
  %v686 = vpop.f32.mrb[0].mxu0
  %v687 = vadd.f32 %v590, %v686
  %v688 = vpop.f32.mrb[0].mxu0
  %v689 = vpop.f32.mrb[0].mxu0
  %v690 = vadd.f32 %v593, %v689
  %v691 = vpop.f32.mrb[0].mxu0
  %692 = vdwg.mxu0
  %v693 = vadd.f32 %v35, %v631
  %v694 = vadd.f32 %v36, %v634
  %v695 = vadd.f32 %v37, %v639
  %v696 = vadd.f32 %v38, %v642
  %v697 = vadd.f32 %v39, %v647
  %v698 = vadd.f32 %v40, %v650
  %v699 = vadd.f32 %v41, %v655
  %v700 = vadd.f32 %v42, %v658
  %v701 = vadd.f32 %v43, %v663
  %v702 = vadd.f32 %v44, %v666
  %v703 = vadd.f32 %v45, %v671
  %v704 = vadd.f32 %v46, %v674
  %v705 = vadd.f32 %v47, %v679
  %v706 = vadd.f32 %v48, %v682
  %v707 = vadd.f32 %v49, %v687
  %v708 = vadd.f32 %v50, %v690
  %709 = vst [vmem:[%s3] sm:$0xff] %v693
  %710 = vst [vmem:[%s3 + $0x8] sm:$0xff] %v694
  %711 = vst [vmem:[%s3 + $0x10] sm:$0xff] %v695
  %712 = vst [vmem:[%s3 + $0x18] sm:$0xff] %v696
  %713 = vst [vmem:[%s3 + $0x20] sm:$0xff] %v697
  %714 = vst [vmem:[%s3 + $0x28] sm:$0xff] %v698
  %715 = vst [vmem:[%s3 + $0x30] sm:$0xff] %v699
  %716 = vst [vmem:[%s3 + $0x38] sm:$0xff] %v700
  %717 = vst [vmem:[%s3 + $0x40] sm:$0xff] %v701
  %718 = vst [vmem:[%s3 + $0x48] sm:$0xff] %v702
  %719 = vst [vmem:[%s3 + $0x50] sm:$0xff] %v703
  %720 = vst [vmem:[%s3 + $0x58] sm:$0xff] %v704
  %721 = vst [vmem:[%s3 + $0x60] sm:$0xff] %v705
  %722 = vst [vmem:[%s3 + $0x68] sm:$0xff] %v706
  %723 = vst [vmem:[%s3 + $0x70] sm:$0xff] %v707
  %724 = vst [vmem:[%s3 + $0x78] sm:$0xff] %v708
  // Predicated region
  $region18: #{edgenet.92} parent=0 // pred_check
    %p725 = pneg %p15
  $region19: #{edgenet.92} parent=0 // pred_check_branch
    %727 = sbr.rel (%p725) target = $region21
  $region20: #{edgenet.92} parent=0 // pred_region
    %v728 = vld [vmem:[%s3] sm:$0xff]
    %v729 = vld [vmem:[%s3 + $0x8] sm:$0xff]
    %v730 = vld [vmem:[%s3 + $0x10] sm:$0xff]
    %v731 = vld [vmem:[%s3 + $0x18] sm:$0xff]
    %v732 = vld [vmem:[%s3 + $0x20] sm:$0xff]
    %v733 = vld [vmem:[%s3 + $0x28] sm:$0xff]
    %v734 = vld [vmem:[%s3 + $0x30] sm:$0xff]
    %v735 = vld [vmem:[%s3 + $0x38] sm:$0xff]
    %v736 = vld [vmem:[%s3 + $0x40] sm:$0xff]
    %v737 = vld [vmem:[%s3 + $0x48] sm:$0xff]
    %v738 = vld [vmem:[%s3 + $0x50] sm:$0xff]
    %v739 = vld [vmem:[%s3 + $0x58] sm:$0xff]
    %v740 = vld [vmem:[%s3 + $0x60] sm:$0xff]
    %v741 = vld [vmem:[%s3 + $0x68] sm:$0xff]
    %v742 = vld [vmem:[%s3 + $0x70] sm:$0xff]
    %v743 = vld [vmem:[%s3 + $0x78] sm:$0xff]
    %v744 = vld [vmem:[%s2] sm:$0x1]
    %v746 = vlaneseq
    %v747 = vshrl.u32 %v746, 7
    %v748 = vsub.s32 0, %v747
    %v749 = vrot.slane %v744, %v748
    %v751 = vadd.f32 %v728, %v749
    %v752 = vadd.f32 %v729, %v749
    %v753 = vadd.f32 %v730, %v749
    %v754 = vadd.f32 %v731, %v749
    %v755 = vadd.f32 %v732, %v749
    %v756 = vadd.f32 %v733, %v749
    %v757 = vadd.f32 %v734, %v749
    %v758 = vadd.f32 %v735, %v749
    %v759 = vadd.f32 %v736, %v749
    %v760 = vadd.f32 %v737, %v749
    %v761 = vadd.f32 %v738, %v749
    %v762 = vadd.f32 %v739, %v749
    %v763 = vadd.f32 %v740, %v749
    %v764 = vadd.f32 %v741, %v749
    %v765 = vadd.f32 %v742, %v749
    %v766 = vadd.f32 %v743, %v749
    %767 = vst [vmem:[%s3] sm:$0xff] %v751
    %768 = vst [vmem:[%s3 + $0x8] sm:$0xff] %v752
    %769 = vst [vmem:[%s3 + $0x10] sm:$0xff] %v753
    %770 = vst [vmem:[%s3 + $0x18] sm:$0xff] %v754
    %771 = vst [vmem:[%s3 + $0x20] sm:$0xff] %v755
    %772 = vst [vmem:[%s3 + $0x28] sm:$0xff] %v756
    %773 = vst [vmem:[%s3 + $0x30] sm:$0xff] %v757
    %774 = vst [vmem:[%s3 + $0x38] sm:$0xff] %v758
    %775 = vst [vmem:[%s3 + $0x40] sm:$0xff] %v759
    %776 = vst [vmem:[%s3 + $0x48] sm:$0xff] %v760
    %777 = vst [vmem:[%s3 + $0x50] sm:$0xff] %v761
    %778 = vst [vmem:[%s3 + $0x58] sm:$0xff] %v762
    %779 = vst [vmem:[%s3 + $0x60] sm:$0xff] %v763
    %780 = vst [vmem:[%s3 + $0x68] sm:$0xff] %v764
    %781 = vst [vmem:[%s3 + $0x70] sm:$0xff] %v765
    %782 = vst [vmem:[%s3 + $0x78] sm:$0xff] %v766
  $region21: #{edgenet.92} parent=0 // pred_fallthru
    _
  // Predicated region
  $region22: #{edgenet.92} parent=0 // pred_check
    _
  $region23: #{edgenet.92} parent=0 // pred_check_branch
    %784 = sbr.rel (0) target = $region25
  $region24: #{edgenet.92} parent=0 // pred_region
    _
  $region25: #{edgenet.92} parent=0 // pred_fallthru
    _
  // Predicated region
  $region26: #{edgenet.92} parent=0 // pred_check
    _
  $region27: #{edgenet.92} parent=0 // pred_check_branch
    %786 = sbr.rel (0) target = $region29
  $region28: #{edgenet.92} parent=0 // pred_region
    _
  $region29: #{edgenet.92} parent=0 // pred_fallthru
    _

// kernel: edgenet.97
$region0: #{edgenet.97}
  #allocation0 [shape = 'u32[]', space=smem, size = 0x4, offset = 0x4, fixed_abs, tag = 'smem constant byte address 0x4 - core index']
  #allocation1 [shape = 'u32[144,128]{1,0:T(1,128)}', space=vmem, size = 0x12000, scoped, tag = 'internal scratch']
  %s0 = inlined_call_operand.vmem [shape: bf16[512,3584], index: 0, kind: input, shape index: {}]
  %s1 = inlined_call_operand.vmem [shape: bf16[3584,128], index: 1, kind: input, shape index: {}]
  %s2 = inlined_call_operand.vmem [shape: f32[1,128], index: 2, kind: input, shape index: {}]
  %s3 = inlined_call_operand.vmem [shape: f32[512,128], index: 3, kind: output, shape index: {}]
  %s4 = sld [smem:[#allocation0]]
  $region76: #{edgenet.97} parent=0
    _
  %s6 = ssub.s32 1, %s4
  %s7 = scalar_select 0, %s6, %s4
  $region1: #{edgenet.97} parent=0
    #allocation2 [shape = 'u8[1048576]{0}', space=vmem, size = 0x100000, scoped, tag = 'input window, operand 0']
    loop: start=0, step=1, limit=9
    $region2: #{edgenet.97} parent=1 // loop_pre_header
      _
    $region3: #{edgenet.97} parent=1 // loop_header
      %s9 = sphi 0, %s13
      %p10 = scmp.ge.s32.totalorder %s9, 9
      %s16 = sphi 0, %s35
      %s17 = sphi 0, %s31
      %s18 = sphi 0, %s27
      %s19 = sphi 0, %s16
      %s20 = sphi 0, %s17
      %s21 = sphi 0, %s18
      %s22 = sphi 0, %s19
      %s23 = sphi 0, %s20
      %s24 = sphi 0, %s21
      %s40 = sphi 0, %s42
      %s43 = sphi 0, %s40
      %s44 = sphi 0, %s43
      %s60 = sphi 0, %s44
      %s68 = sphi 0, %s70
      %s71 = sphi 0, %s68
      %s72 = sphi 0, %s71
      %s88 = sphi 0, %s72
      %s94 = sphi 0, %s96
      %s97 = sphi 0, %s94
      %s98 = sphi 0, %s97
      %s114 = sphi 0, %s98
      %s122 = sphi 0, %s124
      %s125 = sphi 0, %s122
      %s126 = sphi 0, %s125
      %s142 = sphi 0, %s126
    $region4: #{edgenet.97} parent=1 // loop_header_branch
      %12 = sbr.rel (%p10) target = $region8
    $region5: #{edgenet.97} parent=1 // loop_body
      %s14 = ssub.s32 %s9, 1
      %s15 = ssub.s32 %s9, 2
      %s25 = sadd.s32 1, %s18
      %p26 = scmp.ge.s32.totalorder %s25, 7
      %s27 = scalar_select %p26, 0, %s25
      %s28 = sadd.s32 1, %s17
      %s29 = scalar_select %p26, %s28, %s17
      %p30 = scmp.ge.s32.totalorder %s29, 1
      %s31 = scalar_select %p30, 0, %s29
      %s32 = sadd.s32 1, %s16
      %s33 = scalar_select %p30, %s32, %s16
      %p34 = scmp.ge.s32.totalorder %s33, 1
      %s35 = scalar_select %p34, 0, %s33
      %s36 = ssub.s32 %s16, %s35
      %s37 = ssub.s32 %s18, %s27
      %s38 = sor.u32 %s36, %s37
      %p39 = scmp.eq.s32.totalorder %s38, 0
      %s41 = sadd.s32 %s40, 1
      %s42 = scalar_select %p39, %s40, %s41
      %p45 = pneg %p39
      %p46 = scmp.eq.s32.totalorder %s9, 6
      %p47 = por %p45, %p46
      %p48 = scmp.ne.s32.totalorder %s40, %s43
      %p49 = scmp.eq.s32.totalorder %s9, 0
      %p50 = por %p48, %p49
      %p51 = scmp.ne.s32.totalorder %s40, %s43
      %p52 = scmp.eq.s32.totalorder %s14, 6
      %p53 = por %p51, %p52
      %p54 = scmp.ne.s32.totalorder %s43, %s44
      %p55 = scmp.eq.s32.totalorder %s14, 0
      %p56 = por %p54, %p55
      %p57 = scmp.ne.s32.totalorder %s43, %s44
      %p58 = scmp.eq.s32.totalorder %s15, 6
      %p59 = por %p57, %p58
      %p61 = scmp.ne.s32.totalorder %s44, %s60
      %p62 = scmp.eq.s32.totalorder %s15, 0
      %p63 = por %p61, %p62
      %s64 = ssub.s32 %s18, %s27
      %s65 = ssub.s32 %s17, %s31
      %s66 = sor.u32 %s64, %s65
      %p67 = scmp.eq.s32.totalorder %s66, 0
      %s69 = sadd.s32 %s68, 1
      %s70 = scalar_select %p67, %s68, %s69
      %p73 = pneg %p67
      %p74 = scmp.eq.s32.totalorder %s9, 6
      %p75 = por %p73, %p74
      %p76 = scmp.ne.s32.totalorder %s68, %s71
      %p77 = scmp.eq.s32.totalorder %s9, 0
      %p78 = por %p76, %p77
      %p79 = scmp.ne.s32.totalorder %s68, %s71
      %p80 = scmp.eq.s32.totalorder %s14, 6
      %p81 = por %p79, %p80
      %p82 = scmp.ne.s32.totalorder %s71, %s72
      %p83 = scmp.eq.s32.totalorder %s14, 0
      %p84 = por %p82, %p83
      %p85 = scmp.ne.s32.totalorder %s71, %s72
      %p86 = scmp.eq.s32.totalorder %s15, 6
      %p87 = por %p85, %p86
      %p89 = scmp.ne.s32.totalorder %s72, %s88
      %p90 = scmp.eq.s32.totalorder %s15, 0
      %p91 = por %p89, %p90
      %s92 = ssub.s32 %s17, %s31
      %p93 = scmp.eq.s32.totalorder %s92, 0
      %s95 = sadd.s32 %s94, 1
      %s96 = scalar_select %p93, %s94, %s95
      %p99 = pneg %p93
      %p100 = scmp.eq.s32.totalorder %s9, 6
      %p101 = por %p99, %p100
      %p102 = scmp.ne.s32.totalorder %s94, %s97
      %p103 = scmp.eq.s32.totalorder %s9, 0
      %p104 = por %p102, %p103
      %p105 = scmp.ne.s32.totalorder %s94, %s97
      %p106 = scmp.eq.s32.totalorder %s14, 6
      %p107 = por %p105, %p106
      %p108 = scmp.ne.s32.totalorder %s97, %s98
      %p109 = scmp.eq.s32.totalorder %s14, 0
      %p110 = por %p108, %p109
      %p111 = scmp.ne.s32.totalorder %s97, %s98
      %p112 = scmp.eq.s32.totalorder %s15, 6
      %p113 = por %p111, %p112
      %p115 = scmp.ne.s32.totalorder %s98, %s114
      %p116 = scmp.eq.s32.totalorder %s15, 0
      %p117 = por %p115, %p116
      %s118 = ssub.s32 %s16, %s35
      %s119 = ssub.s32 %s17, %s31
      %s120 = sor.u32 %s118, %s119
      %p121 = scmp.eq.s32.totalorder %s120, 0
      %s123 = sadd.s32 %s122, 1
      %s124 = scalar_select %p121, %s122, %s123
      %p127 = pneg %p121
      %p128 = scmp.eq.s32.totalorder %s9, 6
      %p129 = por %p127, %p128
      %p130 = scmp.ne.s32.totalorder %s122, %s125
      %p131 = scmp.eq.s32.totalorder %s9, 0
      %p132 = por %p130, %p131
      %p133 = scmp.ne.s32.totalorder %s122, %s125
      %p134 = scmp.eq.s32.totalorder %s14, 6
      %p135 = por %p133, %p134
      %p136 = scmp.ne.s32.totalorder %s125, %s126
      %p137 = scmp.eq.s32.totalorder %s14, 0
      %p138 = por %p136, %p137
      %p139 = scmp.ne.s32.totalorder %s125, %s126
      %p140 = scmp.eq.s32.totalorder %s15, 6
      %p141 = por %p139, %p140
      %p143 = scmp.ne.s32.totalorder %s126, %s142
      %p144 = scmp.eq.s32.totalorder %s15, 0
      %p145 = por %p143, %p144
      %p146 = scmp.le.s32.totalorder 1, %s9
      %p147 = scmp.lt.s32.totalorder %s9, 8
      %p148 = pnand %p146, %p147
      %p149 = pneg %p148
      // Predicated region
      $region9: #{edgenet.97} parent=5 // pred_check
        _
      $region10: #{edgenet.97} parent=5 // pred_check_branch
        %151 = sbr.rel (%p148) target = $region12
      $region11: #{edgenet.97} parent=5 // pred_region
        %s152 = ssub.s32 %s9, 1
        // Predicated region
        $region13: #{edgenet.97} parent=11 // pred_check
          %p153 = pneg %p110
        $region14: #{edgenet.97} parent=11 // pred_check_branch
          %155 = sbr.rel (%p153) target = $region16
        $region15: #{edgenet.97} parent=11 // pred_region
          %p156 = scmp.lt.s32.totalorder %s20, 0
          %s157 = scalar_select %p156, %s20, 0
          %s158 = scalar_lea.vmem %s2, %s157
        $region16: #{edgenet.97} parent=11 // pred_fallthru
          _
      $region12: #{edgenet.97} parent=5 // pred_fallthru
        _
      %p159 = scmp.lt.s32.totalorder %s9, 7
      // Predicated region
      $region17: #{edgenet.97} parent=5 // pred_check
        %p160 = pneg %p159
      $region18: #{edgenet.97} parent=5 // pred_check_branch
        %162 = sbr.rel (%p160) target = $region20
      $region19: #{edgenet.97} parent=5 // pred_region
        // Predicated region
        $region21: #{edgenet.97} parent=19 // pred_check
          %p163 = pneg %p50
        $region22: #{edgenet.97} parent=19 // pred_check_branch
          %165 = sbr.rel (%p163) target = $region24
        $region23: #{edgenet.97} parent=19 // pred_region
          %s166 = sand.u32 %s40, 1
          %s167 = sand.u32 %s40, 1
          %s168 = smul.addr %s167, 1024
          %s169 = scalar_lea.vmem [#allocation2], %s168
          %s170 = smul.u32 64, %s16
          %s171 = smul.u32 4, %s18
          %s172 = smul.addr %s170, 28
          %s173 = sadd.s32 %s171, %s172
          %s174 = smul.addr %s173, 4
          %s175 = scalar_lea.vmem %s0, %s174
          // Predicated region
          $region25: #{edgenet.97} parent=23 // pred_check
            _
          $region26: #{edgenet.97} parent=23 // pred_check_branch
            %177 = sbr.rel (0) target = $region28
          $region27: #{edgenet.97} parent=23 // pred_region
            // Predicated region
            $region29: #{edgenet.97} parent=27 // pred_check
              _
            $region30: #{edgenet.97} parent=27 // pred_check_branch
              %179 = sbr.rel (0) target = $region32
            $region31: #{edgenet.97} parent=27 // pred_region
              loop: start=0, step=1, limit=1
              $region33: #{edgenet.97} parent=31 // loop_pre_header
                _
              $region34: #{edgenet.97} parent=31 // loop_header
                %s181 = sphi 0, %s185
                %p182 = scmp.ge.s32.totalorder %s181, 1
                %s186 = sphi %s175, %s175
                %s187 = sphi %s169, %s169
              $region35: #{edgenet.97} parent=31 // loop_header_branch
                %184 = sbr.rel (%p182) target = $region39
              $region36: #{edgenet.97} parent=31 // loop_body
                %v188 = vld [vmem:[%s186] sm:$0xff]
                %189 = vst [vmem:[%s187] sm:$0xff] %v188
                %v190 = vld [vmem:[%s186 + $0x8] sm:$0xff]
                %191 = vst [vmem:[%s187 + $0x8] sm:$0xff] %v190
                %v192 = vld [vmem:[%s186 + $0x70] sm:$0xff]
                %193 = vst [vmem:[%s187 + $0x10] sm:$0xff] %v192
                %v194 = vld [vmem:[%s186 + $0x78] sm:$0xff]
                %195 = vst [vmem:[%s187 + $0x18] sm:$0xff] %v194
                %v196 = vld [vmem:[%s186 + $0xe0] sm:$0xff]
                %197 = vst [vmem:[%s187 + $0x20] sm:$0xff] %v196
                %v198 = vld [vmem:[%s186 + $0xe8] sm:$0xff]
                %199 = vst [vmem:[%s187 + $0x28] sm:$0xff] %v198
                %v200 = vld [vmem:[%s186 + $0x150] sm:$0xff]
                %201 = vst [vmem:[%s187 + $0x30] sm:$0xff] %v200
                %v202 = vld [vmem:[%s186 + $0x158] sm:$0xff]
                %203 = vst [vmem:[%s187 + $0x38] sm:$0xff] %v202
                %v204 = vld [vmem:[%s186 + $0x1c0] sm:$0xff]
                %205 = vst [vmem:[%s187 + $0x40] sm:$0xff] %v204
                %v206 = vld [vmem:[%s186 + $0x1c8] sm:$0xff]
                %207 = vst [vmem:[%s187 + $0x48] sm:$0xff] %v206
                %v208 = vld [vmem:[%s186 + $0x230] sm:$0xff]
                %209 = vst [vmem:[%s187 + $0x50] sm:$0xff] %v208
                %v210 = vld [vmem:[%s186 + $0x238] sm:$0xff]
                %211 = vst [vmem:[%s187 + $0x58] sm:$0xff] %v210
                %v212 = vld [vmem:[%s186 + $0x2a0] sm:$0xff]
                %213 = vst [vmem:[%s187 + $0x60] sm:$0xff] %v212
                %v214 = vld [vmem:[%s186 + $0x2a8] sm:$0xff]
                %215 = vst [vmem:[%s187 + $0x68] sm:$0xff] %v214
                %v216 = vld [vmem:[%s186 + $0x310] sm:$0xff]
                %217 = vst [vmem:[%s187 + $0x70] sm:$0xff] %v216
                %v218 = vld [vmem:[%s186 + $0x318] sm:$0xff]
                %219 = vst [vmem:[%s187 + $0x78] sm:$0xff] %v218
                %v220 = vld [vmem:[%s186 + $0x380] sm:$0xff]
                %221 = vst [vmem:[%s187 + $0x80] sm:$0xff] %v220
                %v222 = vld [vmem:[%s186 + $0x388] sm:$0xff]
                %223 = vst [vmem:[%s187 + $0x88] sm:$0xff] %v222
                %v224 = vld [vmem:[%s186 + $0x3f0] sm:$0xff]
                %225 = vst [vmem:[%s187 + $0x90] sm:$0xff] %v224
                %v226 = vld [vmem:[%s186 + $0x3f8] sm:$0xff]
                %227 = vst [vmem:[%s187 + $0x98] sm:$0xff] %v226
                %v228 = vld [vmem:[%s186 + $0x460] sm:$0xff]
                %229 = vst [vmem:[%s187 + $0xa0] sm:$0xff] %v228
                %v230 = vld [vmem:[%s186 + $0x468] sm:$0xff]
                %231 = vst [vmem:[%s187 + $0xa8] sm:$0xff] %v230
                %v232 = vld [vmem:[%s186 + $0x4d0] sm:$0xff]
                %233 = vst [vmem:[%s187 + $0xb0] sm:$0xff] %v232
                %v234 = vld [vmem:[%s186 + $0x4d8] sm:$0xff]
                %235 = vst [vmem:[%s187 + $0xb8] sm:$0xff] %v234
                %v236 = vld [vmem:[%s186 + $0x540] sm:$0xff]
                %237 = vst [vmem:[%s187 + $0xc0] sm:$0xff] %v236
                %v238 = vld [vmem:[%s186 + $0x548] sm:$0xff]
                %239 = vst [vmem:[%s187 + $0xc8] sm:$0xff] %v238
                %v240 = vld [vmem:[%s186 + $0x5b0] sm:$0xff]
                %241 = vst [vmem:[%s187 + $0xd0] sm:$0xff] %v240
                %v242 = vld [vmem:[%s186 + $0x5b8] sm:$0xff]
                %243 = vst [vmem:[%s187 + $0xd8] sm:$0xff] %v242
                %v244 = vld [vmem:[%s186 + $0x620] sm:$0xff]
                %245 = vst [vmem:[%s187 + $0xe0] sm:$0xff] %v244
                %v246 = vld [vmem:[%s186 + $0x628] sm:$0xff]
                %247 = vst [vmem:[%s187 + $0xe8] sm:$0xff] %v246
                %v248 = vld [vmem:[%s186 + $0x690] sm:$0xff]
                %249 = vst [vmem:[%s187 + $0xf0] sm:$0xff] %v248
                %v250 = vld [vmem:[%s186 + $0x698] sm:$0xff]
                %251 = vst [vmem:[%s187 + $0xf8] sm:$0xff] %v250
                %v252 = vld [vmem:[%s186 + $0x700] sm:$0xff]
                %253 = vst [vmem:[%s187 + $0x100] sm:$0xff] %v252
                %v254 = vld [vmem:[%s186 + $0x708] sm:$0xff]
                %255 = vst [vmem:[%s187 + $0x108] sm:$0xff] %v254
                %v256 = vld [vmem:[%s186 + $0x770] sm:$0xff]
                %257 = vst [vmem:[%s187 + $0x110] sm:$0xff] %v256
                %v258 = vld [vmem:[%s186 + $0x778] sm:$0xff]
                %259 = vst [vmem:[%s187 + $0x118] sm:$0xff] %v258
                %v260 = vld [vmem:[%s186 + $0x7e0] sm:$0xff]
                %261 = vst [vmem:[%s187 + $0x120] sm:$0xff] %v260
                %v262 = vld [vmem:[%s186 + $0x7e8] sm:$0xff]
                %263 = vst [vmem:[%s187 + $0x128] sm:$0xff] %v262
                %v264 = vld [vmem:[%s186 + $0x850] sm:$0xff]
                %265 = vst [vmem:[%s187 + $0x130] sm:$0xff] %v264
                %v266 = vld [vmem:[%s186 + $0x858] sm:$0xff]
                %267 = vst [vmem:[%s187 + $0x138] sm:$0xff] %v266
                %v268 = vld [vmem:[%s186 + $0x8c0] sm:$0xff]
                %269 = vst [vmem:[%s187 + $0x140] sm:$0xff] %v268
                %v270 = vld [vmem:[%s186 + $0x8c8] sm:$0xff]
                %271 = vst [vmem:[%s187 + $0x148] sm:$0xff] %v270
                %v272 = vld [vmem:[%s186 + $0x930] sm:$0xff]
                %273 = vst [vmem:[%s187 + $0x150] sm:$0xff] %v272
                %v274 = vld [vmem:[%s186 + $0x938] sm:$0xff]
                %275 = vst [vmem:[%s187 + $0x158] sm:$0xff] %v274
                %v276 = vld [vmem:[%s186 + $0x9a0] sm:$0xff]
                %277 = vst [vmem:[%s187 + $0x160] sm:$0xff] %v276
                %v278 = vld [vmem:[%s186 + $0x9a8] sm:$0xff]
                %279 = vst [vmem:[%s187 + $0x168] sm:$0xff] %v278
                %v280 = vld [vmem:[%s186 + $0xa10] sm:$0xff]
                %281 = vst [vmem:[%s187 + $0x170] sm:$0xff] %v280
                %v282 = vld [vmem:[%s186 + $0xa18] sm:$0xff]
                %283 = vst [vmem:[%s187 + $0x178] sm:$0xff] %v282
                %v284 = vld [vmem:[%s186 + $0xa80] sm:$0xff]
                %285 = vst [vmem:[%s187 + $0x180] sm:$0xff] %v284
                %v286 = vld [vmem:[%s186 + $0xa88] sm:$0xff]
                %287 = vst [vmem:[%s187 + $0x188] sm:$0xff] %v286
                %v288 = vld [vmem:[%s186 + $0xaf0] sm:$0xff]
                %289 = vst [vmem:[%s187 + $0x190] sm:$0xff] %v288
                %v290 = vld [vmem:[%s186 + $0xaf8] sm:$0xff]
                %291 = vst [vmem:[%s187 + $0x198] sm:$0xff] %v290
                %v292 = vld [vmem:[%s186 + $0xb60] sm:$0xff]
                %293 = vst [vmem:[%s187 + $0x1a0] sm:$0xff] %v292
                %v294 = vld [vmem:[%s186 + $0xb68] sm:$0xff]
                %295 = vst [vmem:[%s187 + $0x1a8] sm:$0xff] %v294
                %v296 = vld [vmem:[%s186 + $0xbd0] sm:$0xff]
                %297 = vst [vmem:[%s187 + $0x1b0] sm:$0xff] %v296
                %v298 = vld [vmem:[%s186 + $0xbd8] sm:$0xff]
                %299 = vst [vmem:[%s187 + $0x1b8] sm:$0xff] %v298
                %v300 = vld [vmem:[%s186 + $0xc40] sm:$0xff]
                %301 = vst [vmem:[%s187 + $0x1c0] sm:$0xff] %v300
                %v302 = vld [vmem:[%s186 + $0xc48] sm:$0xff]
                %303 = vst [vmem:[%s187 + $0x1c8] sm:$0xff] %v302
                %v304 = vld [vmem:[%s186 + $0xcb0] sm:$0xff]
                %305 = vst [vmem:[%s187 + $0x1d0] sm:$0xff] %v304
                %v306 = vld [vmem:[%s186 + $0xcb8] sm:$0xff]
                %307 = vst [vmem:[%s187 + $0x1d8] sm:$0xff] %v306
                %v308 = vld [vmem:[%s186 + $0xd20] sm:$0xff]
                %309 = vst [vmem:[%s187 + $0x1e0] sm:$0xff] %v308
                %v310 = vld [vmem:[%s186 + $0xd28] sm:$0xff]
                %311 = vst [vmem:[%s187 + $0x1e8] sm:$0xff] %v310
                %v312 = vld [vmem:[%s186 + $0xd90] sm:$0xff]
                %313 = vst [vmem:[%s187 + $0x1f0] sm:$0xff] %v312
                %v314 = vld [vmem:[%s186 + $0xd98] sm:$0xff]
                %315 = vst [vmem:[%s187 + $0x1f8] sm:$0xff] %v314
                %v316 = vld [vmem:[%s186 + $0xe00] sm:$0xff]
                %317 = vst [vmem:[%s187 + $0x200] sm:$0xff] %v316
                %v318 = vld [vmem:[%s186 + $0xe08] sm:$0xff]
                %319 = vst [vmem:[%s187 + $0x208] sm:$0xff] %v318
                %v320 = vld [vmem:[%s186 + $0xe70] sm:$0xff]
                %321 = vst [vmem:[%s187 + $0x210] sm:$0xff] %v320
                %v322 = vld [vmem:[%s186 + $0xe78] sm:$0xff]
                %323 = vst [vmem:[%s187 + $0x218] sm:$0xff] %v322
                %v324 = vld [vmem:[%s186 + $0xee0] sm:$0xff]
                %325 = vst [vmem:[%s187 + $0x220] sm:$0xff] %v324
                %v326 = vld [vmem:[%s186 + $0xee8] sm:$0xff]
                %327 = vst [vmem:[%s187 + $0x228] sm:$0xff] %v326
                %v328 = vld [vmem:[%s186 + $0xf50] sm:$0xff]
                %329 = vst [vmem:[%s187 + $0x230] sm:$0xff] %v328
                %v330 = vld [vmem:[%s186 + $0xf58] sm:$0xff]
                %331 = vst [vmem:[%s187 + $0x238] sm:$0xff] %v330
                %v332 = vld [vmem:[%s186 + $0xfc0] sm:$0xff]
                %333 = vst [vmem:[%s187 + $0x240] sm:$0xff] %v332
                %v334 = vld [vmem:[%s186 + $0xfc8] sm:$0xff]
                %335 = vst [vmem:[%s187 + $0x248] sm:$0xff] %v334
                %v336 = vld [vmem:[%s186 + $0x1030] sm:$0xff]
                %337 = vst [vmem:[%s187 + $0x250] sm:$0xff] %v336
                %v338 = vld [vmem:[%s186 + $0x1038] sm:$0xff]
                %339 = vst [vmem:[%s187 + $0x258] sm:$0xff] %v338
                %v340 = vld [vmem:[%s186 + $0x10a0] sm:$0xff]
                %341 = vst [vmem:[%s187 + $0x260] sm:$0xff] %v340
                %v342 = vld [vmem:[%s186 + $0x10a8] sm:$0xff]
                %343 = vst [vmem:[%s187 + $0x268] sm:$0xff] %v342
                %v344 = vld [vmem:[%s186 + $0x1110] sm:$0xff]
                %345 = vst [vmem:[%s187 + $0x270] sm:$0xff] %v344
                %v346 = vld [vmem:[%s186 + $0x1118] sm:$0xff]
                %347 = vst [vmem:[%s187 + $0x278] sm:$0xff] %v346
                %v348 = vld [vmem:[%s186 + $0x1180] sm:$0xff]
                %349 = vst [vmem:[%s187 + $0x280] sm:$0xff] %v348
                %v350 = vld [vmem:[%s186 + $0x1188] sm:$0xff]
                %351 = vst [vmem:[%s187 + $0x288] sm:$0xff] %v350
                %v352 = vld [vmem:[%s186 + $0x11f0] sm:$0xff]
                %353 = vst [vmem:[%s187 + $0x290] sm:$0xff] %v352
                %v354 = vld [vmem:[%s186 + $0x11f8] sm:$0xff]
                %355 = vst [vmem:[%s187 + $0x298] sm:$0xff] %v354
                %v356 = vld [vmem:[%s186 + $0x1260] sm:$0xff]
                %357 = vst [vmem:[%s187 + $0x2a0] sm:$0xff] %v356
                %v358 = vld [vmem:[%s186 + $0x1268] sm:$0xff]
                %359 = vst [vmem:[%s187 + $0x2a8] sm:$0xff] %v358
                %v360 = vld [vmem:[%s186 + $0x12d0] sm:$0xff]
                %361 = vst [vmem:[%s187 + $0x2b0] sm:$0xff] %v360
                %v362 = vld [vmem:[%s186 + $0x12d8] sm:$0xff]
                %363 = vst [vmem:[%s187 + $0x2b8] sm:$0xff] %v362
                %v364 = vld [vmem:[%s186 + $0x1340] sm:$0xff]
                %365 = vst [vmem:[%s187 + $0x2c0] sm:$0xff] %v364
                %v366 = vld [vmem:[%s186 + $0x1348] sm:$0xff]
                %367 = vst [vmem:[%s187 + $0x2c8] sm:$0xff] %v366
                %v368 = vld [vmem:[%s186 + $0x13b0] sm:$0xff]
                %369 = vst [vmem:[%s187 + $0x2d0] sm:$0xff] %v368
                %v370 = vld [vmem:[%s186 + $0x13b8] sm:$0xff]
                %371 = vst [vmem:[%s187 + $0x2d8] sm:$0xff] %v370
                %v372 = vld [vmem:[%s186 + $0x1420] sm:$0xff]
                %373 = vst [vmem:[%s187 + $0x2e0] sm:$0xff] %v372
                %v374 = vld [vmem:[%s186 + $0x1428] sm:$0xff]
                %375 = vst [vmem:[%s187 + $0x2e8] sm:$0xff] %v374
                %v376 = vld [vmem:[%s186 + $0x1490] sm:$0xff]
                %377 = vst [vmem:[%s187 + $0x2f0] sm:$0xff] %v376
                %v378 = vld [vmem:[%s186 + $0x1498] sm:$0xff]
                %379 = vst [vmem:[%s187 + $0x2f8] sm:$0xff] %v378
                %v380 = vld [vmem:[%s186 + $0x1500] sm:$0xff]
                %381 = vst [vmem:[%s187 + $0x300] sm:$0xff] %v380
                %v382 = vld [vmem:[%s186 + $0x1508] sm:$0xff]
                %383 = vst [vmem:[%s187 + $0x308] sm:$0xff] %v382
                %v384 = vld [vmem:[%s186 + $0x1570] sm:$0xff]
                %385 = vst [vmem:[%s187 + $0x310] sm:$0xff] %v384
                %v386 = vld [vmem:[%s186 + $0x1578] sm:$0xff]
                %387 = vst [vmem:[%s187 + $0x318] sm:$0xff] %v386
                %v388 = vld [vmem:[%s186 + $0x15e0] sm:$0xff]
                %389 = vst [vmem:[%s187 + $0x320] sm:$0xff] %v388
                %v390 = vld [vmem:[%s186 + $0x15e8] sm:$0xff]
                %391 = vst [vmem:[%s187 + $0x328] sm:$0xff] %v390
                %v392 = vld [vmem:[%s186 + $0x1650] sm:$0xff]
                %393 = vst [vmem:[%s187 + $0x330] sm:$0xff] %v392
                %v394 = vld [vmem:[%s186 + $0x1658] sm:$0xff]
                %395 = vst [vmem:[%s187 + $0x338] sm:$0xff] %v394
                %v396 = vld [vmem:[%s186 + $0x16c0] sm:$0xff]
                %397 = vst [vmem:[%s187 + $0x340] sm:$0xff] %v396
                %v398 = vld [vmem:[%s186 + $0x16c8] sm:$0xff]
                %399 = vst [vmem:[%s187 + $0x348] sm:$0xff] %v398
                %v400 = vld [vmem:[%s186 + $0x1730] sm:$0xff]
                %401 = vst [vmem:[%s187 + $0x350] sm:$0xff] %v400
                %v402 = vld [vmem:[%s186 + $0x1738] sm:$0xff]
                %403 = vst [vmem:[%s187 + $0x358] sm:$0xff] %v402
                %v404 = vld [vmem:[%s186 + $0x17a0] sm:$0xff]
                %405 = vst [vmem:[%s187 + $0x360] sm:$0xff] %v404
                %v406 = vld [vmem:[%s186 + $0x17a8] sm:$0xff]
                %407 = vst [vmem:[%s187 + $0x368] sm:$0xff] %v406
                %v408 = vld [vmem:[%s186 + $0x1810] sm:$0xff]
                %409 = vst [vmem:[%s187 + $0x370] sm:$0xff] %v408
                %v410 = vld [vmem:[%s186 + $0x1818] sm:$0xff]
                %411 = vst [vmem:[%s187 + $0x378] sm:$0xff] %v410
                %v412 = vld [vmem:[%s186 + $0x1880] sm:$0xff]
                %413 = vst [vmem:[%s187 + $0x380] sm:$0xff] %v412
                %v414 = vld [vmem:[%s186 + $0x1888] sm:$0xff]
                %415 = vst [vmem:[%s187 + $0x388] sm:$0xff] %v414
                %v416 = vld [vmem:[%s186 + $0x18f0] sm:$0xff]
                %417 = vst [vmem:[%s187 + $0x390] sm:$0xff] %v416
                %v418 = vld [vmem:[%s186 + $0x18f8] sm:$0xff]
                %419 = vst [vmem:[%s187 + $0x398] sm:$0xff] %v418
                %v420 = vld [vmem:[%s186 + $0x1960] sm:$0xff]
                %421 = vst [vmem:[%s187 + $0x3a0] sm:$0xff] %v420
                %v422 = vld [vmem:[%s186 + $0x1968] sm:$0xff]
                %423 = vst [vmem:[%s187 + $0x3a8] sm:$0xff] %v422
                %v424 = vld [vmem:[%s186 + $0x19d0] sm:$0xff]
                %425 = vst [vmem:[%s187 + $0x3b0] sm:$0xff] %v424
                %v426 = vld [vmem:[%s186 + $0x19d8] sm:$0xff]
                %427 = vst [vmem:[%s187 + $0x3b8] sm:$0xff] %v426
                %v428 = vld [vmem:[%s186 + $0x1a40] sm:$0xff]
                %429 = vst [vmem:[%s187 + $0x3c0] sm:$0xff] %v428
                %v430 = vld [vmem:[%s186 + $0x1a48] sm:$0xff]
                %431 = vst [vmem:[%s187 + $0x3c8] sm:$0xff] %v430
                %v432 = vld [vmem:[%s186 + $0x1ab0] sm:$0xff]
                %433 = vst [vmem:[%s187 + $0x3d0] sm:$0xff] %v432
                %v434 = vld [vmem:[%s186 + $0x1ab8] sm:$0xff]
                %435 = vst [vmem:[%s187 + $0x3d8] sm:$0xff] %v434
                %v436 = vld [vmem:[%s186 + $0x1b20] sm:$0xff]
                %437 = vst [vmem:[%s187 + $0x3e0] sm:$0xff] %v436
                %v438 = vld [vmem:[%s186 + $0x1b28] sm:$0xff]
                %439 = vst [vmem:[%s187 + $0x3e8] sm:$0xff] %v438
                %v440 = vld [vmem:[%s186 + $0x1b90] sm:$0xff]
                %441 = vst [vmem:[%s187 + $0x3f0] sm:$0xff] %v440
                %v442 = vld [vmem:[%s186 + $0x1b98] sm:$0xff]
                %443 = vst [vmem:[%s187 + $0x3f8] sm:$0xff] %v442
              $region37: #{edgenet.97} parent=31 // loop_footer
                %s185 = sadd.s32 1, %s181
              $region38: #{edgenet.97} parent=31 // loop_footer_branch
                %180 = sbr.rel target = $region34
              $region39: #{edgenet.97} parent=31 // loop_exit
                _
            $region32: #{edgenet.97} parent=27 // pred_fallthru
              _
            // Predicated region
            $region40: #{edgenet.97} parent=27 // pred_check
              _
            $region41: #{edgenet.97} parent=27 // pred_check_branch
              %445 = sbr.rel target = $region43
            $region42: #{edgenet.97} parent=27 // pred_region
              _
            $region43: #{edgenet.97} parent=27 // pred_fallthru
              _
          $region28: #{edgenet.97} parent=23 // pred_fallthru
            _
          %446 = vnop
        $region24: #{edgenet.97} parent=19 // pred_fallthru
          _
        // Predicated region
        $region44: #{edgenet.97} parent=19 // pred_check
          %p447 = pneg %p78
        $region45: #{edgenet.97} parent=19 // pred_check_branch
          %449 = sbr.rel (%p447) target = $region47
        $region46: #{edgenet.97} parent=19 // pred_region
          %s450 = smul.u32 64, %s18
          %p451 = scmp.lt.s32.totalorder %s450, 447
          %s452 = scalar_select %p451, %s450, 447
          %p453 = scmp.lt.s32.totalorder %s17, 0
          %s454 = scalar_select %p453, %s17, 0
          %s455 = sadd.s32 %s454, %s452
          %s456 = smul.addr %s455, 4
          %s457 = scalar_lea.vmem %s1, %s456
          %s458 = smul.u32 64, %s18
        $region47: #{edgenet.97} parent=19 // pred_fallthru
          _
      $region20: #{edgenet.97} parent=5 // pred_fallthru
        _
      %p459 = scmp.le.s32.totalorder 1, %s9
      %p460 = scmp.lt.s32.totalorder %s9, 8
      %p461 = pnand %p459, %p460
      %p462 = pneg %p461
      // Predicated region
      $region48: #{edgenet.97} parent=5 // pred_check
        _
      $region49: #{edgenet.97} parent=5 // pred_check_branch
        %464 = sbr.rel (%p461) target = $region51
      $region50: #{edgenet.97} parent=5 // pred_region
        %s465 = ssub.s32 %s9, 1
        %s466 = sand.u32 %s43, 1
        %s467 = sand.u32 %s43, 1
        %s468 = smul.addr %s467, 1024
        %s469 = scalar_lea.vmem [#allocation2], %s468
        // Predicated region
        $region52: #{edgenet.97} parent=50 // pred_check
          %p470 = pneg %p56
        $region53: #{edgenet.97} parent=50 // pred_check_branch
          %472 = sbr.rel (%p470) target = $region55
        $region54: #{edgenet.97} parent=50 // pred_region
          _
        $region55: #{edgenet.97} parent=50 // pred_fallthru
          _
        %s473 = sand.u32 %s43, 1
        %s474 = sand.u32 %s43, 1
        %s475 = smul.addr %s474, 1024
        %s476 = scalar_lea.vmem [#allocation2], %s475
        %p477 = pneg %p56
        %p478 = pneg %p53
        %s479 = smul.u32 64, %s21
        %p480 = scmp.lt.s32.totalorder %s479, 447
        %s481 = scalar_select %p480, %s479, 447
        %p482 = scmp.lt.s32.totalorder %s20, 0
        %s483 = scalar_select %p482, %s20, 0
        %s484 = sadd.s32 %s483, %s481
        %s485 = smul.addr %s484, 4
        %s486 = scalar_lea.vmem %s1, %s485
        %p487 = pneg %p84
        %p488 = pneg %p81
        %p489 = scmp.lt.s32.totalorder %s20, 0
        %s490 = scalar_select %p489, %s20, 0
        %s491 = scalar_lea.vmem %s2, %s490
        %p492 = pneg %p110
        %p493 = pneg %p107
        %p494 = pneg %p138
        %p495 = pneg %p135
        %s496 = smul.u32 64, %s19
        %p497 = scmp.lt.s32.totalorder %s496, 63
        %s498 = scalar_select %p497, %s496, 63
        %p499 = scmp.lt.s32.totalorder %s20, 0
        %s500 = scalar_select %p499, %s20, 0
        %s501 = sadd.s32 %s500, %s498
        %s502 = smul.addr %s501, 8
        %s503 = scalar_lea.vmem %s3, %s502
        %s504 = smul.u32 64, %s19
        %s505 = smul.u32 4, %s21
        %s506 = smul.u32 64, %s21
        %p507 = scmp.lt.s32.totalorder %s506, 447
        %s508 = scalar_select %p507, %s506, 447
        %p509 = scmp.lt.s32.totalorder %s20, 0
        %s510 = scalar_select %p509, %s20, 0
        %s511 = sadd.s32 %s510, %s508
        %s512 = smul.addr %s511, 4
        %s513 = scalar_lea.vmem %s1, %s512
        %s514 = smul.u32 64, %s21
        %p515 = scmp.lt.s32.totalorder %s20, 0
        %s516 = scalar_select %p515, %s20, 0
        %s517 = scalar_lea.vmem %s2, %s516
        %s518 = smul.u32 64, %s19
        %p519 = scmp.lt.s32.totalorder %s518, 63
        %s520 = scalar_select %p519, %s518, 63
        %p521 = scmp.lt.s32.totalorder %s20, 0
        %s522 = scalar_select %p521, %s20, 0
        %s523 = sadd.s32 %s522, %s520
        %s524 = smul.addr %s523, 8
        %s525 = scalar_lea.vmem %s3, %s524
        %s526 = smul.u32 64, %s19
        %p528 = scmp.eq.s32.totalorder %s21, 0
        // Predicated region
        $region56: #{edgenet.97} parent=50 // pred_check
          %p529 = pneg %p528
        $region57: #{edgenet.97} parent=50 // pred_check_branch
          %531 = sbr.rel (%p529) target = $region59
        $region58: #{edgenet.97} parent=50 // pred_region
          %532 = vst [vmem:[%s525] sm:$0xff] 0.0
          %533 = vst [vmem:[%s525 + $0x8] sm:$0xff] 0.0
          %534 = vst [vmem:[%s525 + $0x10] sm:$0xff] 0.0
          %535 = vst [vmem:[%s525 + $0x18] sm:$0xff] 0.0
          %536 = vst [vmem:[%s525 + $0x20] sm:$0xff] 0.0
          %537 = vst [vmem:[%s525 + $0x28] sm:$0xff] 0.0
          %538 = vst [vmem:[%s525 + $0x30] sm:$0xff] 0.0
          %539 = vst [vmem:[%s525 + $0x38] sm:$0xff] 0.0
          %540 = vst [vmem:[%s525 + $0x40] sm:$0xff] 0.0
          %541 = vst [vmem:[%s525 + $0x48] sm:$0xff] 0.0
          %542 = vst [vmem:[%s525 + $0x50] sm:$0xff] 0.0
          %543 = vst [vmem:[%s525 + $0x58] sm:$0xff] 0.0
          %544 = vst [vmem:[%s525 + $0x60] sm:$0xff] 0.0
          %545 = vst [vmem:[%s525 + $0x68] sm:$0xff] 0.0
          %546 = vst [vmem:[%s525 + $0x70] sm:$0xff] 0.0
          %547 = vst [vmem:[%s525 + $0x78] sm:$0xff] 0.0
          %548 = vst [vmem:[%s525 + $0x80] sm:$0xff] 0.0
          %549 = vst [vmem:[%s525 + $0x88] sm:$0xff] 0.0
          %550 = vst [vmem:[%s525 + $0x90] sm:$0xff] 0.0
          %551 = vst [vmem:[%s525 + $0x98] sm:$0xff] 0.0
          %552 = vst [vmem:[%s525 + $0xa0] sm:$0xff] 0.0
          %553 = vst [vmem:[%s525 + $0xa8] sm:$0xff] 0.0
          %554 = vst [vmem:[%s525 + $0xb0] sm:$0xff] 0.0
          %555 = vst [vmem:[%s525 + $0xb8] sm:$0xff] 0.0
          %556 = vst [vmem:[%s525 + $0xc0] sm:$0xff] 0.0
          %557 = vst [vmem:[%s525 + $0xc8] sm:$0xff] 0.0
          %558 = vst [vmem:[%s525 + $0xd0] sm:$0xff] 0.0
          %559 = vst [vmem:[%s525 + $0xd8] sm:$0xff] 0.0
          %560 = vst [vmem:[%s525 + $0xe0] sm:$0xff] 0.0
          %561 = vst [vmem:[%s525 + $0xe8] sm:$0xff] 0.0
          %562 = vst [vmem:[%s525 + $0xf0] sm:$0xff] 0.0
          %563 = vst [vmem:[%s525 + $0xf8] sm:$0xff] 0.0
          %564 = vst [vmem:[%s525 + $0x100] sm:$0xff] 0.0
          %565 = vst [vmem:[%s525 + $0x108] sm:$0xff] 0.0
          %566 = vst [vmem:[%s525 + $0x110] sm:$0xff] 0.0
          %567 = vst [vmem:[%s525 + $0x118] sm:$0xff] 0.0
          %568 = vst [vmem:[%s525 + $0x120] sm:$0xff] 0.0
          %569 = vst [vmem:[%s525 + $0x128] sm:$0xff] 0.0
          %570 = vst [vmem:[%s525 + $0x130] sm:$0xff] 0.0
          %571 = vst [vmem:[%s525 + $0x138] sm:$0xff] 0.0
          %572 = vst [vmem:[%s525 + $0x140] sm:$0xff] 0.0
          %573 = vst [vmem:[%s525 + $0x148] sm:$0xff] 0.0
          %574 = vst [vmem:[%s525 + $0x150] sm:$0xff] 0.0
          %575 = vst [vmem:[%s525 + $0x158] sm:$0xff] 0.0
          %576 = vst [vmem:[%s525 + $0x160] sm:$0xff] 0.0
          %577 = vst [vmem:[%s525 + $0x168] sm:$0xff] 0.0
          %578 = vst [vmem:[%s525 + $0x170] sm:$0xff] 0.0
          %579 = vst [vmem:[%s525 + $0x178] sm:$0xff] 0.0
          %580 = vst [vmem:[%s525 + $0x180] sm:$0xff] 0.0
          %581 = vst [vmem:[%s525 + $0x188] sm:$0xff] 0.0
          %582 = vst [vmem:[%s525 + $0x190] sm:$0xff] 0.0
          %583 = vst [vmem:[%s525 + $0x198] sm:$0xff] 0.0
          %584 = vst [vmem:[%s525 + $0x1a0] sm:$0xff] 0.0
          %585 = vst [vmem:[%s525 + $0x1a8] sm:$0xff] 0.0
          %586 = vst [vmem:[%s525 + $0x1b0] sm:$0xff] 0.0
          %587 = vst [vmem:[%s525 + $0x1b8] sm:$0xff] 0.0
          %588 = vst [vmem:[%s525 + $0x1c0] sm:$0xff] 0.0
          %589 = vst [vmem:[%s525 + $0x1c8] sm:$0xff] 0.0
          %590 = vst [vmem:[%s525 + $0x1d0] sm:$0xff] 0.0
          %591 = vst [vmem:[%s525 + $0x1d8] sm:$0xff] 0.0
          %592 = vst [vmem:[%s525 + $0x1e0] sm:$0xff] 0.0
          %593 = vst [vmem:[%s525 + $0x1e8] sm:$0xff] 0.0
          %594 = vst [vmem:[%s525 + $0x1f0] sm:$0xff] 0.0
          %595 = vst [vmem:[%s525 + $0x1f8] sm:$0xff] 0.0
        $region59: #{edgenet.97} parent=50 // pred_fallthru
          _
        %v596 = vld [vmem:[%s525] sm:$0xff]
        %v597 = vld [vmem:[%s525 + $0x8] sm:$0xff]
        %v598 = vld [vmem:[%s525 + $0x10] sm:$0xff]
        %v599 = vld [vmem:[%s525 + $0x18] sm:$0xff]
        %v600 = vld [vmem:[%s525 + $0x20] sm:$0xff]
        %v601 = vld [vmem:[%s525 + $0x28] sm:$0xff]
        %v602 = vld [vmem:[%s525 + $0x30] sm:$0xff]
        %v603 = vld [vmem:[%s525 + $0x38] sm:$0xff]
        %v604 = vld [vmem:[%s525 + $0x40] sm:$0xff]
        %v605 = vld [vmem:[%s525 + $0x48] sm:$0xff]
        %v606 = vld [vmem:[%s525 + $0x50] sm:$0xff]
        %v607 = vld [vmem:[%s525 + $0x58] sm:$0xff]
        %v608 = vld [vmem:[%s525 + $0x60] sm:$0xff]
        %v609 = vld [vmem:[%s525 + $0x68] sm:$0xff]
        %v610 = vld [vmem:[%s525 + $0x70] sm:$0xff]
        %v611 = vld [vmem:[%s525 + $0x78] sm:$0xff]
        %v612 = vld [vmem:[%s525 + $0x80] sm:$0xff]
        %v613 = vld [vmem:[%s525 + $0x88] sm:$0xff]
        %v614 = vld [vmem:[%s525 + $0x90] sm:$0xff]
        %v615 = vld [vmem:[%s525 + $0x98] sm:$0xff]
        %v616 = vld [vmem:[%s525 + $0xa0] sm:$0xff]
        %v617 = vld [vmem:[%s525 + $0xa8] sm:$0xff]
        %v618 = vld [vmem:[%s525 + $0xb0] sm:$0xff]
        %v619 = vld [vmem:[%s525 + $0xb8] sm:$0xff]
        %v620 = vld [vmem:[%s525 + $0xc0] sm:$0xff]
        %v621 = vld [vmem:[%s525 + $0xc8] sm:$0xff]
        %v622 = vld [vmem:[%s525 + $0xd0] sm:$0xff]
        %v623 = vld [vmem:[%s525 + $0xd8] sm:$0xff]
        %v624 = vld [vmem:[%s525 + $0xe0] sm:$0xff]
        %v625 = vld [vmem:[%s525 + $0xe8] sm:$0xff]
        %v626 = vld [vmem:[%s525 + $0xf0] sm:$0xff]
        %v627 = vld [vmem:[%s525 + $0xf8] sm:$0xff]
        %v628 = vld [vmem:[%s525 + $0x100] sm:$0xff]
        %v629 = vld [vmem:[%s525 + $0x108] sm:$0xff]
        %v630 = vld [vmem:[%s525 + $0x110] sm:$0xff]
        %v631 = vld [vmem:[%s525 + $0x118] sm:$0xff]
        %v632 = vld [vmem:[%s525 + $0x120] sm:$0xff]
        %v633 = vld [vmem:[%s525 + $0x128] sm:$0xff]
        %v634 = vld [vmem:[%s525 + $0x130] sm:$0xff]
        %v635 = vld [vmem:[%s525 + $0x138] sm:$0xff]
        %v636 = vld [vmem:[%s525 + $0x140] sm:$0xff]
        %v637 = vld [vmem:[%s525 + $0x148] sm:$0xff]
        %v638 = vld [vmem:[%s525 + $0x150] sm:$0xff]
        %v639 = vld [vmem:[%s525 + $0x158] sm:$0xff]
        %v640 = vld [vmem:[%s525 + $0x160] sm:$0xff]
        %v641 = vld [vmem:[%s525 + $0x168] sm:$0xff]
        %v642 = vld [vmem:[%s525 + $0x170] sm:$0xff]
        %v643 = vld [vmem:[%s525 + $0x178] sm:$0xff]
        %v644 = vld [vmem:[%s525 + $0x180] sm:$0xff]
        %v645 = vld [vmem:[%s525 + $0x188] sm:$0xff]
        %v646 = vld [vmem:[%s525 + $0x190] sm:$0xff]
        %v647 = vld [vmem:[%s525 + $0x198] sm:$0xff]
        %v648 = vld [vmem:[%s525 + $0x1a0] sm:$0xff]
        %v649 = vld [vmem:[%s525 + $0x1a8] sm:$0xff]
        %v650 = vld [vmem:[%s525 + $0x1b0] sm:$0xff]
        %v651 = vld [vmem:[%s525 + $0x1b8] sm:$0xff]
        %v652 = vld [vmem:[%s525 + $0x1c0] sm:$0xff]
        %v653 = vld [vmem:[%s525 + $0x1c8] sm:$0xff]
        %v654 = vld [vmem:[%s525 + $0x1d0] sm:$0xff]
        %v655 = vld [vmem:[%s525 + $0x1d8] sm:$0xff]
        %v656 = vld [vmem:[%s525 + $0x1e0] sm:$0xff]
        %v657 = vld [vmem:[%s525 + $0x1e8] sm:$0xff]
        %v658 = vld [vmem:[%s525 + $0x1f0] sm:$0xff]
        %v659 = vld [vmem:[%s525 + $0x1f8] sm:$0xff]
        %v660 = vld [vmem:[%s469] sm:$0xff]
        %v661 = vld [vmem:[%s469 + $0x8] sm:$0xff]
        %v662 = vld [vmem:[%s469 + $0x10] sm:$0xff]
        %v663 = vld [vmem:[%s469 + $0x18] sm:$0xff]
        %v664 = vld [vmem:[%s469 + $0x20] sm:$0xff]
        %v665 = vld [vmem:[%s469 + $0x28] sm:$0xff]
        %v666 = vld [vmem:[%s469 + $0x30] sm:$0xff]
        %v667 = vld [vmem:[%s469 + $0x38] sm:$0xff]
        %v668 = vld [vmem:[%s469 + $0x40] sm:$0xff]
        %v669 = vld [vmem:[%s469 + $0x48] sm:$0xff]
        %v670 = vld [vmem:[%s469 + $0x50] sm:$0xff]
        %v671 = vld [vmem:[%s469 + $0x58] sm:$0xff]
        %v672 = vld [vmem:[%s469 + $0x60] sm:$0xff]
        %v673 = vld [vmem:[%s469 + $0x68] sm:$0xff]
        %v674 = vld [vmem:[%s469 + $0x70] sm:$0xff]
        %v675 = vld [vmem:[%s469 + $0x78] sm:$0xff]
        %v676 = vld [vmem:[%s469 + $0x80] sm:$0xff]
        %v677 = vld [vmem:[%s469 + $0x88] sm:$0xff]
        %v678 = vld [vmem:[%s469 + $0x90] sm:$0xff]
        %v679 = vld [vmem:[%s469 + $0x98] sm:$0xff]
        %v680 = vld [vmem:[%s469 + $0xa0] sm:$0xff]
        %v681 = vld [vmem:[%s469 + $0xa8] sm:$0xff]
        %v682 = vld [vmem:[%s469 + $0xb0] sm:$0xff]
        %v683 = vld [vmem:[%s469 + $0xb8] sm:$0xff]
        %v684 = vld [vmem:[%s469 + $0xc0] sm:$0xff]
        %v685 = vld [vmem:[%s469 + $0xc8] sm:$0xff]
        %v686 = vld [vmem:[%s469 + $0xd0] sm:$0xff]
        %v687 = vld [vmem:[%s469 + $0xd8] sm:$0xff]
        %v688 = vld [vmem:[%s469 + $0xe0] sm:$0xff]
        %v689 = vld [vmem:[%s469 + $0xe8] sm:$0xff]
        %v690 = vld [vmem:[%s469 + $0xf0] sm:$0xff]
        %v691 = vld [vmem:[%s469 + $0xf8] sm:$0xff]
        %v692 = vld [vmem:[%s469 + $0x100] sm:$0xff]
        %v693 = vld [vmem:[%s469 + $0x108] sm:$0xff]
        %v694 = vld [vmem:[%s469 + $0x110] sm:$0xff]
        %v695 = vld [vmem:[%s469 + $0x118] sm:$0xff]
        %v696 = vld [vmem:[%s469 + $0x120] sm:$0xff]
        %v697 = vld [vmem:[%s469 + $0x128] sm:$0xff]
        %v698 = vld [vmem:[%s469 + $0x130] sm:$0xff]
        %v699 = vld [vmem:[%s469 + $0x138] sm:$0xff]
        %v700 = vld [vmem:[%s469 + $0x140] sm:$0xff]
        %v701 = vld [vmem:[%s469 + $0x148] sm:$0xff]
        %v702 = vld [vmem:[%s469 + $0x150] sm:$0xff]
        %v703 = vld [vmem:[%s469 + $0x158] sm:$0xff]
        %v704 = vld [vmem:[%s469 + $0x160] sm:$0xff]
        %v705 = vld [vmem:[%s469 + $0x168] sm:$0xff]
        %v706 = vld [vmem:[%s469 + $0x170] sm:$0xff]
        %v707 = vld [vmem:[%s469 + $0x178] sm:$0xff]
        %v708 = vld [vmem:[%s469 + $0x180] sm:$0xff]
        %v709 = vld [vmem:[%s469 + $0x188] sm:$0xff]
        %v710 = vld [vmem:[%s469 + $0x190] sm:$0xff]
        %v711 = vld [vmem:[%s469 + $0x198] sm:$0xff]
        %v712 = vld [vmem:[%s469 + $0x1a0] sm:$0xff]
        %v713 = vld [vmem:[%s469 + $0x1a8] sm:$0xff]
        %v714 = vld [vmem:[%s469 + $0x1b0] sm:$0xff]
        %v715 = vld [vmem:[%s469 + $0x1b8] sm:$0xff]
        %v716 = vld [vmem:[%s469 + $0x1c0] sm:$0xff]
        %v717 = vld [vmem:[%s469 + $0x1c8] sm:$0xff]
        %v718 = vld [vmem:[%s469 + $0x1d0] sm:$0xff]
        %v719 = vld [vmem:[%s469 + $0x1d8] sm:$0xff]
        %v720 = vld [vmem:[%s469 + $0x1e0] sm:$0xff]
        %v721 = vld [vmem:[%s469 + $0x1e8] sm:$0xff]
        %v722 = vld [vmem:[%s469 + $0x1f0] sm:$0xff]
        %v723 = vld [vmem:[%s469 + $0x1f8] sm:$0xff]
        %v724 = vld [vmem:[%s469 + $0x200] sm:$0xff]
        %v725 = vld [vmem:[%s469 + $0x208] sm:$0xff]
        %v726 = vld [vmem:[%s469 + $0x210] sm:$0xff]
        %v727 = vld [vmem:[%s469 + $0x218] sm:$0xff]
        %v728 = vld [vmem:[%s469 + $0x220] sm:$0xff]
        %v729 = vld [vmem:[%s469 + $0x228] sm:$0xff]
        %v730 = vld [vmem:[%s469 + $0x230] sm:$0xff]
        %v731 = vld [vmem:[%s469 + $0x238] sm:$0xff]
        %v732 = vld [vmem:[%s469 + $0x240] sm:$0xff]
        %v733 = vld [vmem:[%s469 + $0x248] sm:$0xff]
        %v734 = vld [vmem:[%s469 + $0x250] sm:$0xff]
        %v735 = vld [vmem:[%s469 + $0x258] sm:$0xff]
        %v736 = vld [vmem:[%s469 + $0x260] sm:$0xff]
        %v737 = vld [vmem:[%s469 + $0x268] sm:$0xff]
        %v738 = vld [vmem:[%s469 + $0x270] sm:$0xff]
        %v739 = vld [vmem:[%s469 + $0x278] sm:$0xff]
        %v740 = vld [vmem:[%s469 + $0x280] sm:$0xff]
        %v741 = vld [vmem:[%s469 + $0x288] sm:$0xff]
        %v742 = vld [vmem:[%s469 + $0x290] sm:$0xff]
        %v743 = vld [vmem:[%s469 + $0x298] sm:$0xff]
        %v744 = vld [vmem:[%s469 + $0x2a0] sm:$0xff]
        %v745 = vld [vmem:[%s469 + $0x2a8] sm:$0xff]
        %v746 = vld [vmem:[%s469 + $0x2b0] sm:$0xff]
        %v747 = vld [vmem:[%s469 + $0x2b8] sm:$0xff]
        %v748 = vld [vmem:[%s469 + $0x2c0] sm:$0xff]
        %v749 = vld [vmem:[%s469 + $0x2c8] sm:$0xff]
        %v750 = vld [vmem:[%s469 + $0x2d0] sm:$0xff]
        %v751 = vld [vmem:[%s469 + $0x2d8] sm:$0xff]
        %v752 = vld [vmem:[%s469 + $0x2e0] sm:$0xff]
        %v753 = vld [vmem:[%s469 + $0x2e8] sm:$0xff]
        %v754 = vld [vmem:[%s469 + $0x2f0] sm:$0xff]
        %v755 = vld [vmem:[%s469 + $0x2f8] sm:$0xff]
        %v756 = vld [vmem:[%s469 + $0x300] sm:$0xff]
        %v757 = vld [vmem:[%s469 + $0x308] sm:$0xff]
        %v758 = vld [vmem:[%s469 + $0x310] sm:$0xff]
        %v759 = vld [vmem:[%s469 + $0x318] sm:$0xff]
        %v760 = vld [vmem:[%s469 + $0x320] sm:$0xff]
        %v761 = vld [vmem:[%s469 + $0x328] sm:$0xff]
        %v762 = vld [vmem:[%s469 + $0x330] sm:$0xff]
        %v763 = vld [vmem:[%s469 + $0x338] sm:$0xff]
        %v764 = vld [vmem:[%s469 + $0x340] sm:$0xff]
        %v765 = vld [vmem:[%s469 + $0x348] sm:$0xff]
        %v766 = vld [vmem:[%s469 + $0x350] sm:$0xff]
        %v767 = vld [vmem:[%s469 + $0x358] sm:$0xff]
        %v768 = vld [vmem:[%s469 + $0x360] sm:$0xff]
        %v769 = vld [vmem:[%s469 + $0x368] sm:$0xff]
        %v770 = vld [vmem:[%s469 + $0x370] sm:$0xff]
        %v771 = vld [vmem:[%s469 + $0x378] sm:$0xff]
        %v772 = vld [vmem:[%s469 + $0x380] sm:$0xff]
        %v773 = vld [vmem:[%s469 + $0x388] sm:$0xff]
        %v774 = vld [vmem:[%s469 + $0x390] sm:$0xff]
        %v775 = vld [vmem:[%s469 + $0x398] sm:$0xff]
        %v776 = vld [vmem:[%s469 + $0x3a0] sm:$0xff]
        %v777 = vld [vmem:[%s469 + $0x3a8] sm:$0xff]
        %v778 = vld [vmem:[%s469 + $0x3b0] sm:$0xff]
        %v779 = vld [vmem:[%s469 + $0x3b8] sm:$0xff]
        %v780 = vld [vmem:[%s469 + $0x3c0] sm:$0xff]
        %v781 = vld [vmem:[%s469 + $0x3c8] sm:$0xff]
        %v782 = vld [vmem:[%s469 + $0x3d0] sm:$0xff]
        %v783 = vld [vmem:[%s469 + $0x3d8] sm:$0xff]
        %v784 = vld [vmem:[%s469 + $0x3e0] sm:$0xff]
        %v785 = vld [vmem:[%s469 + $0x3e8] sm:$0xff]
        %v786 = vld [vmem:[%s469 + $0x3f0] sm:$0xff]
        %v787 = vld [vmem:[%s469 + $0x3f8] sm:$0xff]
        %v788 = vld [vmem:[%s513] sm:$0xf]
        %v789 = vld [vmem:[%s513 + $0x4] sm:$0xf]
        %v790 = vld [vmem:[%s513 + $0x8] sm:$0xf]
        %v791 = vld [vmem:[%s513 + $0xc] sm:$0xf]
        %v792 = vld [vmem:[%s513 + $0x10] sm:$0xf]
        %v793 = vld [vmem:[%s513 + $0x14] sm:$0xf]
        %v794 = vld [vmem:[%s513 + $0x18] sm:$0xf]
        %v795 = vld [vmem:[%s513 + $0x1c] sm:$0xf]
        %v796 = vld [vmem:[%s513 + $0x20] sm:$0xf]
        %v797 = vld [vmem:[%s513 + $0x24] sm:$0xf]
        %v798 = vld [vmem:[%s513 + $0x28] sm:$0xf]
        %v799 = vld [vmem:[%s513 + $0x2c] sm:$0xf]
        %v800 = vld [vmem:[%s513 + $0x30] sm:$0xf]
        %v801 = vld [vmem:[%s513 + $0x34] sm:$0xf]
        %v802 = vld [vmem:[%s513 + $0x38] sm:$0xf]
        %v803 = vld [vmem:[%s513 + $0x3c] sm:$0xf]
        %v804 = vld [vmem:[%s513 + $0x40] sm:$0xf]
        %v805 = vld [vmem:[%s513 + $0x44] sm:$0xf]
        %v806 = vld [vmem:[%s513 + $0x48] sm:$0xf]
        %v807 = vld [vmem:[%s513 + $0x4c] sm:$0xf]
        %v808 = vld [vmem:[%s513 + $0x50] sm:$0xf]
        %v809 = vld [vmem:[%s513 + $0x54] sm:$0xf]
        %v810 = vld [vmem:[%s513 + $0x58] sm:$0xf]
        %v811 = vld [vmem:[%s513 + $0x5c] sm:$0xf]
        %v812 = vld [vmem:[%s513 + $0x60] sm:$0xf]
        %v813 = vld [vmem:[%s513 + $0x64] sm:$0xf]
        %v814 = vld [vmem:[%s513 + $0x68] sm:$0xf]
        %v815 = vld [vmem:[%s513 + $0x6c] sm:$0xf]
        %v816 = vld [vmem:[%s513 + $0x70] sm:$0xf]
        %v817 = vld [vmem:[%s513 + $0x74] sm:$0xf]
        %v818 = vld [vmem:[%s513 + $0x78] sm:$0xf]
        %v819 = vld [vmem:[%s513 + $0x7c] sm:$0xf]
        %v820 = vld [vmem:[%s513 + $0x80] sm:$0xf]
        %v821 = vld [vmem:[%s513 + $0x84] sm:$0xf]
        %v822 = vld [vmem:[%s513 + $0x88] sm:$0xf]
        %v823 = vld [vmem:[%s513 + $0x8c] sm:$0xf]
        %v824 = vld [vmem:[%s513 + $0x90] sm:$0xf]
        %v825 = vld [vmem:[%s513 + $0x94] sm:$0xf]
        %v826 = vld [vmem:[%s513 + $0x98] sm:$0xf]
        %v827 = vld [vmem:[%s513 + $0x9c] sm:$0xf]
        %v828 = vld [vmem:[%s513 + $0xa0] sm:$0xf]
        %v829 = vld [vmem:[%s513 + $0xa4] sm:$0xf]
        %v830 = vld [vmem:[%s513 + $0xa8] sm:$0xf]
        %v831 = vld [vmem:[%s513 + $0xac] sm:$0xf]
        %v832 = vld [vmem:[%s513 + $0xb0] sm:$0xf]
        %v833 = vld [vmem:[%s513 + $0xb4] sm:$0xf]
        %v834 = vld [vmem:[%s513 + $0xb8] sm:$0xf]
        %v835 = vld [vmem:[%s513 + $0xbc] sm:$0xf]
        %v836 = vld [vmem:[%s513 + $0xc0] sm:$0xf]
        %v837 = vld [vmem:[%s513 + $0xc4] sm:$0xf]
        %v838 = vld [vmem:[%s513 + $0xc8] sm:$0xf]
        %v839 = vld [vmem:[%s513 + $0xcc] sm:$0xf]
        %v840 = vld [vmem:[%s513 + $0xd0] sm:$0xf]
        %v841 = vld [vmem:[%s513 + $0xd4] sm:$0xf]
        %v842 = vld [vmem:[%s513 + $0xd8] sm:$0xf]
        %v843 = vld [vmem:[%s513 + $0xdc] sm:$0xf]
        %v844 = vld [vmem:[%s513 + $0xe0] sm:$0xf]
        %v845 = vld [vmem:[%s513 + $0xe4] sm:$0xf]
        %v846 = vld [vmem:[%s513 + $0xe8] sm:$0xf]
        %v847 = vld [vmem:[%s513 + $0xec] sm:$0xf]
        %v848 = vld [vmem:[%s513 + $0xf0] sm:$0xf]
        %v849 = vld [vmem:[%s513 + $0xf4] sm:$0xf]
        %v850 = vld [vmem:[%s513 + $0xf8] sm:$0xf]
        %v851 = vld [vmem:[%s513 + $0xfc] sm:$0xf]
        %v980 = vunpack.c.l.b16 %v660
        %v981 = vunpack.c.h.b16 %v660
        %v982 = vunpack.c.l.b16 %v661
        %v983 = vunpack.c.h.b16 %v661
        %v984 = vunpack.c.l.b16 %v662
        %v985 = vunpack.c.h.b16 %v662
        %v986 = vunpack.c.l.b16 %v663
        %v987 = vunpack.c.h.b16 %v663
        %v988 = vunpack.c.l.b16 %v664
        %v989 = vunpack.c.h.b16 %v664
        %v990 = vunpack.c.l.b16 %v665
        %v991 = vunpack.c.h.b16 %v665
        %v992 = vunpack.c.l.b16 %v666
        %v993 = vunpack.c.h.b16 %v666
        %v994 = vunpack.c.l.b16 %v667
        %v995 = vunpack.c.h.b16 %v667
        %v996 = vunpack.c.l.b16 %v668
        %v997 = vunpack.c.h.b16 %v668
        %v998 = vunpack.c.l.b16 %v669
        %v999 = vunpack.c.h.b16 %v669
        %v1000 = vunpack.c.l.b16 %v670
        %v1001 = vunpack.c.h.b16 %v670
        %v1002 = vunpack.c.l.b16 %v671
        %v1003 = vunpack.c.h.b16 %v671
        %v1004 = vunpack.c.l.b16 %v672
        %v1005 = vunpack.c.h.b16 %v672
        %v1006 = vunpack.c.l.b16 %v673
        %v1007 = vunpack.c.h.b16 %v673
        %v1008 = vunpack.c.l.b16 %v674
        %v1009 = vunpack.c.h.b16 %v674
        %v1010 = vunpack.c.l.b16 %v675
        %v1011 = vunpack.c.h.b16 %v675
        %v1012 = vunpack.c.l.b16 %v676
        %v1013 = vunpack.c.h.b16 %v676
        %v1014 = vunpack.c.l.b16 %v677
        %v1015 = vunpack.c.h.b16 %v677
        %v1016 = vunpack.c.l.b16 %v678
        %v1017 = vunpack.c.h.b16 %v678
        %v1018 = vunpack.c.l.b16 %v679
        %v1019 = vunpack.c.h.b16 %v679
        %v1020 = vunpack.c.l.b16 %v680
        %v1021 = vunpack.c.h.b16 %v680
        %v1022 = vunpack.c.l.b16 %v681
        %v1023 = vunpack.c.h.b16 %v681
        %v1024 = vunpack.c.l.b16 %v682
        %v1025 = vunpack.c.h.b16 %v682
        %v1026 = vunpack.c.l.b16 %v683
        %v1027 = vunpack.c.h.b16 %v683
        %v1028 = vunpack.c.l.b16 %v684
        %v1029 = vunpack.c.h.b16 %v684
        %v1030 = vunpack.c.l.b16 %v685
        %v1031 = vunpack.c.h.b16 %v685
        %v1032 = vunpack.c.l.b16 %v686
        %v1033 = vunpack.c.h.b16 %v686
        %v1034 = vunpack.c.l.b16 %v687
        %v1035 = vunpack.c.h.b16 %v687
        %v1036 = vunpack.c.l.b16 %v688
        %v1037 = vunpack.c.h.b16 %v688
        %v1038 = vunpack.c.l.b16 %v689
        %v1039 = vunpack.c.h.b16 %v689
        %v1040 = vunpack.c.l.b16 %v690
        %v1041 = vunpack.c.h.b16 %v690
        %v1042 = vunpack.c.l.b16 %v691
        %v1043 = vunpack.c.h.b16 %v691
        %v1044 = vunpack.c.l.b16 %v692
        %v1045 = vunpack.c.h.b16 %v692
        %v1046 = vunpack.c.l.b16 %v693
        %v1047 = vunpack.c.h.b16 %v693
        %v1048 = vunpack.c.l.b16 %v694
        %v1049 = vunpack.c.h.b16 %v694
        %v1050 = vunpack.c.l.b16 %v695
        %v1051 = vunpack.c.h.b16 %v695
        %v1052 = vunpack.c.l.b16 %v696
        %v1053 = vunpack.c.h.b16 %v696
        %v1054 = vunpack.c.l.b16 %v697
        %v1055 = vunpack.c.h.b16 %v697
        %v1056 = vunpack.c.l.b16 %v698
        %v1057 = vunpack.c.h.b16 %v698
        %v1058 = vunpack.c.l.b16 %v699
        %v1059 = vunpack.c.h.b16 %v699
        %v1060 = vunpack.c.l.b16 %v700
        %v1061 = vunpack.c.h.b16 %v700
        %v1062 = vunpack.c.l.b16 %v701
        %v1063 = vunpack.c.h.b16 %v701
        %v1064 = vunpack.c.l.b16 %v702
        %v1065 = vunpack.c.h.b16 %v702
        %v1066 = vunpack.c.l.b16 %v703
        %v1067 = vunpack.c.h.b16 %v703
        %v1068 = vunpack.c.l.b16 %v704
        %v1069 = vunpack.c.h.b16 %v704
        %v1070 = vunpack.c.l.b16 %v705
        %v1071 = vunpack.c.h.b16 %v705
        %v1072 = vunpack.c.l.b16 %v706
        %v1073 = vunpack.c.h.b16 %v706
        %v1074 = vunpack.c.l.b16 %v707
        %v1075 = vunpack.c.h.b16 %v707
        %v1076 = vunpack.c.l.b16 %v708
        %v1077 = vunpack.c.h.b16 %v708
        %v1078 = vunpack.c.l.b16 %v709
        %v1079 = vunpack.c.h.b16 %v709
        %v1080 = vunpack.c.l.b16 %v710
        %v1081 = vunpack.c.h.b16 %v710
        %v1082 = vunpack.c.l.b16 %v711
        %v1083 = vunpack.c.h.b16 %v711
        %v1084 = vunpack.c.l.b16 %v712
        %v1085 = vunpack.c.h.b16 %v712
        %v1086 = vunpack.c.l.b16 %v713
        %v1087 = vunpack.c.h.b16 %v713
        %v1088 = vunpack.c.l.b16 %v714
        %v1089 = vunpack.c.h.b16 %v714
        %v1090 = vunpack.c.l.b16 %v715
        %v1091 = vunpack.c.h.b16 %v715
        %v1092 = vunpack.c.l.b16 %v716
        %v1093 = vunpack.c.h.b16 %v716
        %v1094 = vunpack.c.l.b16 %v717
        %v1095 = vunpack.c.h.b16 %v717
        %v1096 = vunpack.c.l.b16 %v718
        %v1097 = vunpack.c.h.b16 %v718
        %v1098 = vunpack.c.l.b16 %v719
        %v1099 = vunpack.c.h.b16 %v719
        %v1100 = vunpack.c.l.b16 %v720
        %v1101 = vunpack.c.h.b16 %v720
        %v1102 = vunpack.c.l.b16 %v721
        %v1103 = vunpack.c.h.b16 %v721
        %v1104 = vunpack.c.l.b16 %v722
        %v1105 = vunpack.c.h.b16 %v722
        %v1106 = vunpack.c.l.b16 %v723
        %v1107 = vunpack.c.h.b16 %v723
        %v1108 = vunpack.c.l.b16 %v724
        %v1109 = vunpack.c.h.b16 %v724
        %v1110 = vunpack.c.l.b16 %v725
        %v1111 = vunpack.c.h.b16 %v725
        %v1112 = vunpack.c.l.b16 %v726
        %v1113 = vunpack.c.h.b16 %v726
        %v1114 = vunpack.c.l.b16 %v727
        %v1115 = vunpack.c.h.b16 %v727
        %v1116 = vunpack.c.l.b16 %v728
        %v1117 = vunpack.c.h.b16 %v728
        %v1118 = vunpack.c.l.b16 %v729
        %v1119 = vunpack.c.h.b16 %v729
        %v1120 = vunpack.c.l.b16 %v730
        %v1121 = vunpack.c.h.b16 %v730
        %v1122 = vunpack.c.l.b16 %v731
        %v1123 = vunpack.c.h.b16 %v731
        %v1124 = vunpack.c.l.b16 %v732
        %v1125 = vunpack.c.h.b16 %v732
        %v1126 = vunpack.c.l.b16 %v733
        %v1127 = vunpack.c.h.b16 %v733
        %v1128 = vunpack.c.l.b16 %v734
        %v1129 = vunpack.c.h.b16 %v734
        %v1130 = vunpack.c.l.b16 %v735
        %v1131 = vunpack.c.h.b16 %v735
        %v1132 = vunpack.c.l.b16 %v736
        %v1133 = vunpack.c.h.b16 %v736
        %v1134 = vunpack.c.l.b16 %v737
        %v1135 = vunpack.c.h.b16 %v737
        %v1136 = vunpack.c.l.b16 %v738
        %v1137 = vunpack.c.h.b16 %v738
        %v1138 = vunpack.c.l.b16 %v739
        %v1139 = vunpack.c.h.b16 %v739
        %v1140 = vunpack.c.l.b16 %v740
        %v1141 = vunpack.c.h.b16 %v740
        %v1142 = vunpack.c.l.b16 %v741
        %v1143 = vunpack.c.h.b16 %v741
        %v1144 = vunpack.c.l.b16 %v742
        %v1145 = vunpack.c.h.b16 %v742
        %v1146 = vunpack.c.l.b16 %v743
        %v1147 = vunpack.c.h.b16 %v743
        %v1148 = vunpack.c.l.b16 %v744
        %v1149 = vunpack.c.h.b16 %v744
        %v1150 = vunpack.c.l.b16 %v745
        %v1151 = vunpack.c.h.b16 %v745
        %v1152 = vunpack.c.l.b16 %v746
        %v1153 = vunpack.c.h.b16 %v746
        %v1154 = vunpack.c.l.b16 %v747
        %v1155 = vunpack.c.h.b16 %v747
        %v1156 = vunpack.c.l.b16 %v748
        %v1157 = vunpack.c.h.b16 %v748
        %v1158 = vunpack.c.l.b16 %v749
        %v1159 = vunpack.c.h.b16 %v749
        %v1160 = vunpack.c.l.b16 %v750
        %v1161 = vunpack.c.h.b16 %v750
        %v1162 = vunpack.c.l.b16 %v751
        %v1163 = vunpack.c.h.b16 %v751
        %v1164 = vunpack.c.l.b16 %v752
        %v1165 = vunpack.c.h.b16 %v752
        %v1166 = vunpack.c.l.b16 %v753
        %v1167 = vunpack.c.h.b16 %v753
        %v1168 = vunpack.c.l.b16 %v754
        %v1169 = vunpack.c.h.b16 %v754
        %v1170 = vunpack.c.l.b16 %v755
        %v1171 = vunpack.c.h.b16 %v755
        %v1172 = vunpack.c.l.b16 %v756
        %v1173 = vunpack.c.h.b16 %v756
        %v1174 = vunpack.c.l.b16 %v757
        %v1175 = vunpack.c.h.b16 %v757
        %v1176 = vunpack.c.l.b16 %v758
        %v1177 = vunpack.c.h.b16 %v758
        %v1178 = vunpack.c.l.b16 %v759
        %v1179 = vunpack.c.h.b16 %v759
        %v1180 = vunpack.c.l.b16 %v760
        %v1181 = vunpack.c.h.b16 %v760
        %v1182 = vunpack.c.l.b16 %v761
        %v1183 = vunpack.c.h.b16 %v761
        %v1184 = vunpack.c.l.b16 %v762
        %v1185 = vunpack.c.h.b16 %v762
        %v1186 = vunpack.c.l.b16 %v763
        %v1187 = vunpack.c.h.b16 %v763
        %v1188 = vunpack.c.l.b16 %v764
        %v1189 = vunpack.c.h.b16 %v764
        %v1190 = vunpack.c.l.b16 %v765
        %v1191 = vunpack.c.h.b16 %v765
        %v1192 = vunpack.c.l.b16 %v766
        %v1193 = vunpack.c.h.b16 %v766
        %v1194 = vunpack.c.l.b16 %v767
        %v1195 = vunpack.c.h.b16 %v767
        %v1196 = vunpack.c.l.b16 %v768
        %v1197 = vunpack.c.h.b16 %v768
        %v1198 = vunpack.c.l.b16 %v769
        %v1199 = vunpack.c.h.b16 %v769
        %v1200 = vunpack.c.l.b16 %v770
        %v1201 = vunpack.c.h.b16 %v770
        %v1202 = vunpack.c.l.b16 %v771
        %v1203 = vunpack.c.h.b16 %v771
        %v1204 = vunpack.c.l.b16 %v772
        %v1205 = vunpack.c.h.b16 %v772
        %v1206 = vunpack.c.l.b16 %v773
        %v1207 = vunpack.c.h.b16 %v773
        %v1208 = vunpack.c.l.b16 %v774
        %v1209 = vunpack.c.h.b16 %v774
        %v1210 = vunpack.c.l.b16 %v775
        %v1211 = vunpack.c.h.b16 %v775
        %v1212 = vunpack.c.l.b16 %v776
        %v1213 = vunpack.c.h.b16 %v776
        %v1214 = vunpack.c.l.b16 %v777
        %v1215 = vunpack.c.h.b16 %v777
        %v1216 = vunpack.c.l.b16 %v778
        %v1217 = vunpack.c.h.b16 %v778
        %v1218 = vunpack.c.l.b16 %v779
        %v1219 = vunpack.c.h.b16 %v779
        %v1220 = vunpack.c.l.b16 %v780
        %v1221 = vunpack.c.h.b16 %v780
        %v1222 = vunpack.c.l.b16 %v781
        %v1223 = vunpack.c.h.b16 %v781
        %v1224 = vunpack.c.l.b16 %v782
        %v1225 = vunpack.c.h.b16 %v782
        %v1226 = vunpack.c.l.b16 %v783
        %v1227 = vunpack.c.h.b16 %v783
        %v1228 = vunpack.c.l.b16 %v784
        %v1229 = vunpack.c.h.b16 %v784
        %v1230 = vunpack.c.l.b16 %v785
        %v1231 = vunpack.c.h.b16 %v785
        %v1232 = vunpack.c.l.b16 %v786
        %v1233 = vunpack.c.h.b16 %v786
        %v1234 = vunpack.c.l.b16 %v787
        %v1235 = vunpack.c.h.b16 %v787
        %v1236 = vpack.c.b16 %v984, %v980
        %v1237 = vpack.c.b16 %v985, %v981
        %v1238 = vpack.c.b16 %v986, %v982
        %v1239 = vpack.c.b16 %v987, %v983
        %v1240 = vpack.c.b16 %v992, %v988
        %v1241 = vpack.c.b16 %v993, %v989
        %v1242 = vpack.c.b16 %v994, %v990
        %v1243 = vpack.c.b16 %v995, %v991
        %v1244 = vpack.c.b16 %v1000, %v996
        %v1245 = vpack.c.b16 %v1001, %v997
        %v1246 = vpack.c.b16 %v1002, %v998
        %v1247 = vpack.c.b16 %v1003, %v999
        %v1248 = vpack.c.b16 %v1008, %v1004
        %v1249 = vpack.c.b16 %v1009, %v1005
        %v1250 = vpack.c.b16 %v1010, %v1006
        %v1251 = vpack.c.b16 %v1011, %v1007
        %v1252 = vpack.c.b16 %v1016, %v1012
        %v1253 = vpack.c.b16 %v1017, %v1013
        %v1254 = vpack.c.b16 %v1018, %v1014
        %v1255 = vpack.c.b16 %v1019, %v1015
        %v1256 = vpack.c.b16 %v1024, %v1020
        %v1257 = vpack.c.b16 %v1025, %v1021
        %v1258 = vpack.c.b16 %v1026, %v1022
        %v1259 = vpack.c.b16 %v1027, %v1023
        %v1260 = vpack.c.b16 %v1032, %v1028
        %v1261 = vpack.c.b16 %v1033, %v1029
        %v1262 = vpack.c.b16 %v1034, %v1030
        %v1263 = vpack.c.b16 %v1035, %v1031
        %v1264 = vpack.c.b16 %v1040, %v1036
        %v1265 = vpack.c.b16 %v1041, %v1037
        %v1266 = vpack.c.b16 %v1042, %v1038
        %v1267 = vpack.c.b16 %v1043, %v1039
        %v1268 = vpack.c.b16 %v1048, %v1044
        %v1269 = vpack.c.b16 %v1049, %v1045
        %v1270 = vpack.c.b16 %v1050, %v1046
        %v1271 = vpack.c.b16 %v1051, %v1047
        %v1272 = vpack.c.b16 %v1056, %v1052
        %v1273 = vpack.c.b16 %v1057, %v1053
        %v1274 = vpack.c.b16 %v1058, %v1054
        %v1275 = vpack.c.b16 %v1059, %v1055
        %v1276 = vpack.c.b16 %v1064, %v1060
        %v1277 = vpack.c.b16 %v1065, %v1061
        %v1278 = vpack.c.b16 %v1066, %v1062
        %v1279 = vpack.c.b16 %v1067, %v1063
        %v1280 = vpack.c.b16 %v1072, %v1068
        %v1281 = vpack.c.b16 %v1073, %v1069
        %v1282 = vpack.c.b16 %v1074, %v1070
        %v1283 = vpack.c.b16 %v1075, %v1071
        %v1284 = vpack.c.b16 %v1080, %v1076
        %v1285 = vpack.c.b16 %v1081, %v1077
        %v1286 = vpack.c.b16 %v1082, %v1078
        %v1287 = vpack.c.b16 %v1083, %v1079
        %v1288 = vpack.c.b16 %v1088, %v1084
        %v1289 = vpack.c.b16 %v1089, %v1085
        %v1290 = vpack.c.b16 %v1090, %v1086
        %v1291 = vpack.c.b16 %v1091, %v1087
        %v1292 = vpack.c.b16 %v1096, %v1092
        %v1293 = vpack.c.b16 %v1097, %v1093
        %v1294 = vpack.c.b16 %v1098, %v1094
        %v1295 = vpack.c.b16 %v1099, %v1095
        %v1296 = vpack.c.b16 %v1104, %v1100
        %v1297 = vpack.c.b16 %v1105, %v1101
        %v1298 = vpack.c.b16 %v1106, %v1102
        %v1299 = vpack.c.b16 %v1107, %v1103
        %v1300 = vpack.c.b16 %v1112, %v1108
        %v1301 = vpack.c.b16 %v1113, %v1109
        %v1302 = vpack.c.b16 %v1114, %v1110
        %v1303 = vpack.c.b16 %v1115, %v1111
        %v1304 = vpack.c.b16 %v1120, %v1116
        %v1305 = vpack.c.b16 %v1121, %v1117
        %v1306 = vpack.c.b16 %v1122, %v1118
        %v1307 = vpack.c.b16 %v1123, %v1119
        %v1308 = vpack.c.b16 %v1128, %v1124
        %v1309 = vpack.c.b16 %v1129, %v1125
        %v1310 = vpack.c.b16 %v1130, %v1126
        %v1311 = vpack.c.b16 %v1131, %v1127
        %v1312 = vpack.c.b16 %v1136, %v1132
        %v1313 = vpack.c.b16 %v1137, %v1133
        %v1314 = vpack.c.b16 %v1138, %v1134
        %v1315 = vpack.c.b16 %v1139, %v1135
        %v1316 = vpack.c.b16 %v1144, %v1140
        %v1317 = vpack.c.b16 %v1145, %v1141
        %v1318 = vpack.c.b16 %v1146, %v1142
        %v1319 = vpack.c.b16 %v1147, %v1143
        %v1320 = vpack.c.b16 %v1152, %v1148
        %v1321 = vpack.c.b16 %v1153, %v1149
        %v1322 = vpack.c.b16 %v1154, %v1150
        %v1323 = vpack.c.b16 %v1155, %v1151
        %v1324 = vpack.c.b16 %v1160, %v1156
        %v1325 = vpack.c.b16 %v1161, %v1157
        %v1326 = vpack.c.b16 %v1162, %v1158
        %v1327 = vpack.c.b16 %v1163, %v1159
        %v1328 = vpack.c.b16 %v1168, %v1164
        %v1329 = vpack.c.b16 %v1169, %v1165
        %v1330 = vpack.c.b16 %v1170, %v1166
        %v1331 = vpack.c.b16 %v1171, %v1167
        %v1332 = vpack.c.b16 %v1176, %v1172
        %v1333 = vpack.c.b16 %v1177, %v1173
        %v1334 = vpack.c.b16 %v1178, %v1174
        %v1335 = vpack.c.b16 %v1179, %v1175
        %v1336 = vpack.c.b16 %v1184, %v1180
        %v1337 = vpack.c.b16 %v1185, %v1181
        %v1338 = vpack.c.b16 %v1186, %v1182
        %v1339 = vpack.c.b16 %v1187, %v1183
        %v1340 = vpack.c.b16 %v1192, %v1188
        %v1341 = vpack.c.b16 %v1193, %v1189
        %v1342 = vpack.c.b16 %v1194, %v1190
        %v1343 = vpack.c.b16 %v1195, %v1191
        %v1344 = vpack.c.b16 %v1200, %v1196
        %v1345 = vpack.c.b16 %v1201, %v1197
        %v1346 = vpack.c.b16 %v1202, %v1198
        %v1347 = vpack.c.b16 %v1203, %v1199
        %v1348 = vpack.c.b16 %v1208, %v1204
        %v1349 = vpack.c.b16 %v1209, %v1205
        %v1350 = vpack.c.b16 %v1210, %v1206
        %v1351 = vpack.c.b16 %v1211, %v1207
        %v1352 = vpack.c.b16 %v1216, %v1212
        %v1353 = vpack.c.b16 %v1217, %v1213
        %v1354 = vpack.c.b16 %v1218, %v1214
        %v1355 = vpack.c.b16 %v1219, %v1215
        %v1356 = vpack.c.b16 %v1224, %v1220
        %v1357 = vpack.c.b16 %v1225, %v1221
        %v1358 = vpack.c.b16 %v1226, %v1222
        %v1359 = vpack.c.b16 %v1227, %v1223
        %v1360 = vpack.c.b16 %v1232, %v1228
        %v1361 = vpack.c.b16 %v1233, %v1229
        %v1362 = vpack.c.b16 %v1234, %v1230
        %v1363 = vpack.c.b16 %v1235, %v1231
        %v1556 = vunpack.c.l.b16 %v788
        %v1557 = vunpack.c.l.b16 %v789
        %v1558 = vunpack.c.l.b16 %v790
        %v1559 = vunpack.c.l.b16 %v791
        %v1560 = vunpack.c.l.b16 %v792
        %v1561 = vunpack.c.l.b16 %v793
        %v1562 = vunpack.c.l.b16 %v794
        %v1563 = vunpack.c.l.b16 %v795
        %v1564 = vunpack.c.l.b16 %v796
        %v1565 = vunpack.c.l.b16 %v797
        %v1566 = vunpack.c.l.b16 %v798
        %v1567 = vunpack.c.l.b16 %v799
        %v1568 = vunpack.c.l.b16 %v800
        %v1569 = vunpack.c.l.b16 %v801
        %v1570 = vunpack.c.l.b16 %v802
        %v1571 = vunpack.c.l.b16 %v803
        %v1572 = vunpack.c.l.b16 %v804
        %v1573 = vunpack.c.l.b16 %v805
        %v1574 = vunpack.c.l.b16 %v806
        %v1575 = vunpack.c.l.b16 %v807
        %v1576 = vunpack.c.l.b16 %v808
        %v1577 = vunpack.c.l.b16 %v809
        %v1578 = vunpack.c.l.b16 %v810
        %v1579 = vunpack.c.l.b16 %v811
        %v1580 = vunpack.c.l.b16 %v812
        %v1581 = vunpack.c.l.b16 %v813
        %v1582 = vunpack.c.l.b16 %v814
        %v1583 = vunpack.c.l.b16 %v815
        %v1584 = vunpack.c.l.b16 %v816
        %v1585 = vunpack.c.l.b16 %v817
        %v1586 = vunpack.c.l.b16 %v818
        %v1587 = vunpack.c.l.b16 %v819
        %v1588 = vunpack.c.l.b16 %v820
        %v1589 = vunpack.c.l.b16 %v821
        %v1590 = vunpack.c.l.b16 %v822
        %v1591 = vunpack.c.l.b16 %v823
        %v1592 = vunpack.c.l.b16 %v824
        %v1593 = vunpack.c.l.b16 %v825
        %v1594 = vunpack.c.l.b16 %v826
        %v1595 = vunpack.c.l.b16 %v827
        %v1596 = vunpack.c.l.b16 %v828
        %v1597 = vunpack.c.l.b16 %v829
        %v1598 = vunpack.c.l.b16 %v830
        %v1599 = vunpack.c.l.b16 %v831
        %v1600 = vunpack.c.l.b16 %v832
        %v1601 = vunpack.c.l.b16 %v833
        %v1602 = vunpack.c.l.b16 %v834
        %v1603 = vunpack.c.l.b16 %v835
        %v1604 = vunpack.c.l.b16 %v836
        %v1605 = vunpack.c.l.b16 %v837
        %v1606 = vunpack.c.l.b16 %v838
        %v1607 = vunpack.c.l.b16 %v839
        %v1608 = vunpack.c.l.b16 %v840
        %v1609 = vunpack.c.l.b16 %v841
        %v1610 = vunpack.c.l.b16 %v842
        %v1611 = vunpack.c.l.b16 %v843
        %v1612 = vunpack.c.l.b16 %v844
        %v1613 = vunpack.c.l.b16 %v845
        %v1614 = vunpack.c.l.b16 %v846
        %v1615 = vunpack.c.l.b16 %v847
        %v1616 = vunpack.c.l.b16 %v848
        %v1617 = vunpack.c.l.b16 %v849
        %v1618 = vunpack.c.l.b16 %v850
        %v1619 = vunpack.c.l.b16 %v851
        %v1620 = vpack.c.b16 %v1557, %v1556
        %v1621 = vpack.c.b16 %v1559, %v1558
        %v1622 = vpack.c.b16 %v1561, %v1560
        %v1623 = vpack.c.b16 %v1563, %v1562
        %v1624 = vpack.c.b16 %v1565, %v1564
        %v1625 = vpack.c.b16 %v1567, %v1566
        %v1626 = vpack.c.b16 %v1569, %v1568
        %v1627 = vpack.c.b16 %v1571, %v1570
        %v1628 = vpack.c.b16 %v1573, %v1572
        %v1629 = vpack.c.b16 %v1575, %v1574
        %v1630 = vpack.c.b16 %v1577, %v1576
        %v1631 = vpack.c.b16 %v1579, %v1578
        %v1632 = vpack.c.b16 %v1581, %v1580
        %v1633 = vpack.c.b16 %v1583, %v1582
        %v1634 = vpack.c.b16 %v1585, %v1584
        %v1635 = vpack.c.b16 %v1587, %v1586
        %v1636 = vpack.c.b16 %v1589, %v1588
        %v1637 = vpack.c.b16 %v1591, %v1590
        %v1638 = vpack.c.b16 %v1593, %v1592
        %v1639 = vpack.c.b16 %v1595, %v1594
        %v1640 = vpack.c.b16 %v1597, %v1596
        %v1641 = vpack.c.b16 %v1599, %v1598
        %v1642 = vpack.c.b16 %v1601, %v1600
        %v1643 = vpack.c.b16 %v1603, %v1602
        %v1644 = vpack.c.b16 %v1605, %v1604
        %v1645 = vpack.c.b16 %v1607, %v1606
        %v1646 = vpack.c.b16 %v1609, %v1608
        %v1647 = vpack.c.b16 %v1611, %v1610
        %v1648 = vpack.c.b16 %v1613, %v1612
        %v1649 = vpack.c.b16 %v1615, %v1614
        %v1650 = vpack.c.b16 %v1617, %v1616
        %v1651 = vpack.c.b16 %v1619, %v1618
        %1684 = vmatprep.subr.bf16.mxu0 0
        %1685 = vmatpush1.bf16.msra.mxu0 %v1620
        %1686 = vmatprep.subr.bf16.mxu0 0
        %1687 = vmatpush1.bf16.msra.mxu0 %v1621
        %1688 = vmatprep.subr.bf16.mxu0 0
        %1689 = vmatpush1.bf16.msra.mxu0 %v1622
        %1690 = vmatprep.subr.bf16.mxu0 0
        %1691 = vmatpush1.bf16.msra.mxu0 %v1623
        %1692 = vmatprep.subr.bf16.mxu0 0
        %1693 = vmatpush1.bf16.msra.mxu0 %v1624
        %1694 = vmatprep.subr.bf16.mxu0 0
        %1695 = vmatpush1.bf16.msra.mxu0 %v1625
        %1696 = vmatprep.subr.bf16.mxu0 0
        %1697 = vmatpush1.bf16.msra.mxu0 %v1626
        %1698 = vmatprep.subr.bf16.mxu0 0
        %1699 = vmatpush1.bf16.msra.mxu0 %v1627
        %1700 = vmatprep.subr.bf16.mxu0 0
        %1701 = vmatpush1.bf16.msra.mxu0 %v1628
        %1702 = vmatprep.subr.bf16.mxu0 0
        %1703 = vmatpush1.bf16.msra.mxu0 %v1629
        %1704 = vmatprep.subr.bf16.mxu0 0
        %1705 = vmatpush1.bf16.msra.mxu0 %v1630
        %1706 = vmatprep.subr.bf16.mxu0 0
        %1707 = vmatpush1.bf16.msra.mxu0 %v1631
        %1708 = vmatprep.subr.bf16.mxu0 0
        %1709 = vmatpush1.bf16.msra.mxu0 %v1632
        %1710 = vmatprep.subr.bf16.mxu0 0
        %1711 = vmatpush1.bf16.msra.mxu0 %v1633
        %1712 = vmatprep.subr.bf16.mxu0 0
        %1713 = vmatpush1.bf16.msra.mxu0 %v1634
        %1714 = vmatprep.subr.bf16.mxu0 0
        %1715 = vmatpush1.bf16.msra.mxu0 %v1635
        %1716 = vmatprep.mubr.bf16.mxu0 %v1237
        %1717 = vmatmul.mubr.bf16.gmra.mrb[0].mxu0 %v1236
        %v1718 = vpop.f32.mrb[0].mxu0
        %v1719 = vadd.f32 0.0, %v1718
        %v1720 = vpop.f32.mrb[0].mxu0
        %v1721 = vpop.f32.mrb[0].mxu0
        %v1722 = vadd.f32 0.0, %v1721
        %v1723 = vpop.f32.mrb[0].mxu0
        %1724 = vmatprep.mubr.bf16.mxu0 %v1241
        %1725 = vmatmul.mubr.bf16.gmra.mrb[0].mxu0 %v1240
        %v1726 = vpop.f32.mrb[0].mxu0
        %v1727 = vadd.f32 0.0, %v1726
        %v1728 = vpop.f32.mrb[0].mxu0
        %v1729 = vpop.f32.mrb[0].mxu0
        %v1730 = vadd.f32 0.0, %v1729
        %v1731 = vpop.f32.mrb[0].mxu0
        %1732 = vmatprep.mubr.bf16.mxu0 %v1245
        %1733 = vmatmul.mubr.bf16.gmra.mrb[0].mxu0 %v1244
        %v1734 = vpop.f32.mrb[0].mxu0
        %v1735 = vadd.f32 0.0, %v1734
        %v1736 = vpop.f32.mrb[0].mxu0
        %v1737 = vpop.f32.mrb[0].mxu0
        %v1738 = vadd.f32 0.0, %v1737
        %v1739 = vpop.f32.mrb[0].mxu0
        %1740 = vmatprep.mubr.bf16.mxu0 %v1249
        %1741 = vmatmul.mubr.bf16.gmra.mrb[0].mxu0 %v1248
        %v1742 = vpop.f32.mrb[0].mxu0
        %v1743 = vadd.f32 0.0, %v1742
        %v1744 = vpop.f32.mrb[0].mxu0
        %v1745 = vpop.f32.mrb[0].mxu0
        %v1746 = vadd.f32 0.0, %v1745
        %v1747 = vpop.f32.mrb[0].mxu0
        %1748 = vmatprep.mubr.bf16.mxu0 %v1253
        %1749 = vmatmul.mubr.bf16.gmra.mrb[0].mxu0 %v1252
        %v1750 = vpop.f32.mrb[0].mxu0
        %v1751 = vadd.f32 0.0, %v1750
        %v1752 = vpop.f32.mrb[0].mxu0
        %v1753 = vpop.f32.mrb[0].mxu0
        %v1754 = vadd.f32 0.0, %v1753
        %v1755 = vpop.f32.mrb[0].mxu0
        %1756 = vmatprep.mubr.bf16.mxu0 %v1257
        %1757 = vmatmul.mubr.bf16.gmra.mrb[0].mxu0 %v1256
        %v1758 = vpop.f32.mrb[0].mxu0
        %v1759 = vadd.f32 0.0, %v1758
        %v1760 = vpop.f32.mrb[0].mxu0
        %v1761 = vpop.f32.mrb[0].mxu0
        %v1762 = vadd.f32 0.0, %v1761
        %v1763 = vpop.f32.mrb[0].mxu0
        %1764 = vmatprep.mubr.bf16.mxu0 %v1261
        %1765 = vmatmul.mubr.bf16.gmra.mrb[0].mxu0 %v1260
        %v1766 = vpop.f32.mrb[0].mxu0
        %v1767 = vadd.f32 0.0, %v1766
        %v1768 = vpop.f32.mrb[0].mxu0
        %v1769 = vpop.f32.mrb[0].mxu0
        %v1770 = vadd.f32 0.0, %v1769
        %v1771 = vpop.f32.mrb[0].mxu0
        %1772 = vmatprep.mubr.bf16.mxu0 %v1265
        %1773 = vmatmul.mubr.bf16.gmra.mrb[0].mxu0 %v1264
        %v1774 = vpop.f32.mrb[0].mxu0
        %v1775 = vadd.f32 0.0, %v1774
        %v1776 = vpop.f32.mrb[0].mxu0
        %v1777 = vpop.f32.mrb[0].mxu0
        %v1778 = vadd.f32 0.0, %v1777
        %v1779 = vpop.f32.mrb[0].mxu0
        %1780 = vmatprep.mubr.bf16.mxu0 %v1269
        %1781 = vmatmul.mubr.bf16.gmra.mrb[0].mxu0 %v1268
        %v1782 = vpop.f32.mrb[0].mxu0
        %v1783 = vadd.f32 0.0, %v1782
        %v1784 = vpop.f32.mrb[0].mxu0
        %v1785 = vpop.f32.mrb[0].mxu0
        %v1786 = vadd.f32 0.0, %v1785
        %v1787 = vpop.f32.mrb[0].mxu0
        %1788 = vmatprep.mubr.bf16.mxu0 %v1273
        %1789 = vmatmul.mubr.bf16.gmra.mrb[0].mxu0 %v1272
        %v1790 = vpop.f32.mrb[0].mxu0
        %v1791 = vadd.f32 0.0, %v1790
        %v1792 = vpop.f32.mrb[0].mxu0
        %v1793 = vpop.f32.mrb[0].mxu0
        %v1794 = vadd.f32 0.0, %v1793
        %v1795 = vpop.f32.mrb[0].mxu0
        %1796 = vmatprep.mubr.bf16.mxu0 %v1277
        %1797 = vmatmul.mubr.bf16.gmra.mrb[0].mxu0 %v1276
        %v1798 = vpop.f32.mrb[0].mxu0
        %v1799 = vadd.f32 0.0, %v1798
        %v1800 = vpop.f32.mrb[0].mxu0
        %v1801 = vpop.f32.mrb[0].mxu0
        %v1802 = vadd.f32 0.0, %v1801
        %v1803 = vpop.f32.mrb[0].mxu0
        %1804 = vmatprep.mubr.bf16.mxu0 %v1281
        %1805 = vmatmul.mubr.bf16.gmra.mrb[0].mxu0 %v1280
        %v1806 = vpop.f32.mrb[0].mxu0
        %v1807 = vadd.f32 0.0, %v1806
        %v1808 = vpop.f32.mrb[0].mxu0
        %v1809 = vpop.f32.mrb[0].mxu0
        %v1810 = vadd.f32 0.0, %v1809
        %v1811 = vpop.f32.mrb[0].mxu0
        %1812 = vmatprep.mubr.bf16.mxu0 %v1285
        %1813 = vmatmul.mubr.bf16.gmra.mrb[0].mxu0 %v1284
        %v1814 = vpop.f32.mrb[0].mxu0
        %v1815 = vadd.f32 0.0, %v1814
        %v1816 = vpop.f32.mrb[0].mxu0
        %v1817 = vpop.f32.mrb[0].mxu0
        %v1818 = vadd.f32 0.0, %v1817
        %v1819 = vpop.f32.mrb[0].mxu0
        %1820 = vmatprep.mubr.bf16.mxu0 %v1289
        %1821 = vmatmul.mubr.bf16.gmra.mrb[0].mxu0 %v1288
        %v1822 = vpop.f32.mrb[0].mxu0
        %v1823 = vadd.f32 0.0, %v1822
        %v1824 = vpop.f32.mrb[0].mxu0
        %v1825 = vpop.f32.mrb[0].mxu0
        %v1826 = vadd.f32 0.0, %v1825
        %v1827 = vpop.f32.mrb[0].mxu0
        %1828 = vmatprep.mubr.bf16.mxu0 %v1293
        %1829 = vmatmul.mubr.bf16.gmra.mrb[0].mxu0 %v1292
        %v1830 = vpop.f32.mrb[0].mxu0
        %v1831 = vadd.f32 0.0, %v1830
        %v1832 = vpop.f32.mrb[0].mxu0
        %v1833 = vpop.f32.mrb[0].mxu0
        %v1834 = vadd.f32 0.0, %v1833
        %v1835 = vpop.f32.mrb[0].mxu0
        %1836 = vmatprep.mubr.bf16.mxu0 %v1297
        %1837 = vmatmul.mubr.bf16.gmra.mrb[0].mxu0 %v1296
        %v1838 = vpop.f32.mrb[0].mxu0
        %v1839 = vadd.f32 0.0, %v1838
        %v1840 = vpop.f32.mrb[0].mxu0
        %v1841 = vpop.f32.mrb[0].mxu0
        %v1842 = vadd.f32 0.0, %v1841
        %v1843 = vpop.f32.mrb[0].mxu0
        %1844 = vmatprep.mubr.bf16.mxu0 %v1301
        %1845 = vmatmul.mubr.bf16.gmra.mrb[0].mxu0 %v1300
        %v1846 = vpop.f32.mrb[0].mxu0
        %v1847 = vadd.f32 0.0, %v1846
        %v1848 = vpop.f32.mrb[0].mxu0
        %v1849 = vpop.f32.mrb[0].mxu0
        %v1850 = vadd.f32 0.0, %v1849
        %v1851 = vpop.f32.mrb[0].mxu0
        %1852 = vmatprep.mubr.bf16.mxu0 %v1305
        %1853 = vmatmul.mubr.bf16.gmra.mrb[0].mxu0 %v1304
        %v1854 = vpop.f32.mrb[0].mxu0
        %v1855 = vadd.f32 0.0, %v1854
        %v1856 = vpop.f32.mrb[0].mxu0
        %v1857 = vpop.f32.mrb[0].mxu0
        %v1858 = vadd.f32 0.0, %v1857
        %v1859 = vpop.f32.mrb[0].mxu0
        %1860 = vmatprep.mubr.bf16.mxu0 %v1309
        %1861 = vmatmul.mubr.bf16.gmra.mrb[0].mxu0 %v1308
        %v1862 = vpop.f32.mrb[0].mxu0
        %v1863 = vadd.f32 0.0, %v1862
        %v1864 = vpop.f32.mrb[0].mxu0
        %v1865 = vpop.f32.mrb[0].mxu0
        %v1866 = vadd.f32 0.0, %v1865
        %v1867 = vpop.f32.mrb[0].mxu0
        %1868 = vmatprep.mubr.bf16.mxu0 %v1313
        %1869 = vmatmul.mubr.bf16.gmra.mrb[0].mxu0 %v1312
        %v1870 = vpop.f32.mrb[0].mxu0
        %v1871 = vadd.f32 0.0, %v1870
        %v1872 = vpop.f32.mrb[0].mxu0
        %v1873 = vpop.f32.mrb[0].mxu0
        %v1874 = vadd.f32 0.0, %v1873
        %v1875 = vpop.f32.mrb[0].mxu0
        %1876 = vmatprep.mubr.bf16.mxu0 %v1317
        %1877 = vmatmul.mubr.bf16.gmra.mrb[0].mxu0 %v1316
        %v1878 = vpop.f32.mrb[0].mxu0
        %v1879 = vadd.f32 0.0, %v1878
        %v1880 = vpop.f32.mrb[0].mxu0
        %v1881 = vpop.f32.mrb[0].mxu0
        %v1882 = vadd.f32 0.0, %v1881
        %v1883 = vpop.f32.mrb[0].mxu0
        %1884 = vmatprep.mubr.bf16.mxu0 %v1321
        %1885 = vmatmul.mubr.bf16.gmra.mrb[0].mxu0 %v1320
        %v1886 = vpop.f32.mrb[0].mxu0
        %v1887 = vadd.f32 0.0, %v1886
        %v1888 = vpop.f32.mrb[0].mxu0
        %v1889 = vpop.f32.mrb[0].mxu0
        %v1890 = vadd.f32 0.0, %v1889
        %v1891 = vpop.f32.mrb[0].mxu0
        %1892 = vmatprep.mubr.bf16.mxu0 %v1325
        %1893 = vmatmul.mubr.bf16.gmra.mrb[0].mxu0 %v1324
        %v1894 = vpop.f32.mrb[0].mxu0
        %v1895 = vadd.f32 0.0, %v1894
        %v1896 = vpop.f32.mrb[0].mxu0
        %v1897 = vpop.f32.mrb[0].mxu0
        %v1898 = vadd.f32 0.0, %v1897
        %v1899 = vpop.f32.mrb[0].mxu0
        %1900 = vmatprep.mubr.bf16.mxu0 %v1329
        %1901 = vmatmul.mubr.bf16.gmra.mrb[0].mxu0 %v1328
        %v1902 = vpop.f32.mrb[0].mxu0
        %v1903 = vadd.f32 0.0, %v1902
        %v1904 = vpop.f32.mrb[0].mxu0
        %v1905 = vpop.f32.mrb[0].mxu0
        %v1906 = vadd.f32 0.0, %v1905
        %v1907 = vpop.f32.mrb[0].mxu0
        %1908 = vmatprep.mubr.bf16.mxu0 %v1333
        %1909 = vmatmul.mubr.bf16.gmra.mrb[0].mxu0 %v1332
        %v1910 = vpop.f32.mrb[0].mxu0
        %v1911 = vadd.f32 0.0, %v1910
        %v1912 = vpop.f32.mrb[0].mxu0
        %v1913 = vpop.f32.mrb[0].mxu0
        %v1914 = vadd.f32 0.0, %v1913
        %v1915 = vpop.f32.mrb[0].mxu0
        %1916 = vmatprep.mubr.bf16.mxu0 %v1337
        %1917 = vmatmul.mubr.bf16.gmra.mrb[0].mxu0 %v1336
        %v1918 = vpop.f32.mrb[0].mxu0
        %v1919 = vadd.f32 0.0, %v1918
        %v1920 = vpop.f32.mrb[0].mxu0
        %v1921 = vpop.f32.mrb[0].mxu0
        %v1922 = vadd.f32 0.0, %v1921
        %v1923 = vpop.f32.mrb[0].mxu0
        %1924 = vmatprep.mubr.bf16.mxu0 %v1341
        %1925 = vmatmul.mubr.bf16.gmra.mrb[0].mxu0 %v1340
        %v1926 = vpop.f32.mrb[0].mxu0
        %v1927 = vadd.f32 0.0, %v1926
        %v1928 = vpop.f32.mrb[0].mxu0
        %v1929 = vpop.f32.mrb[0].mxu0
        %v1930 = vadd.f32 0.0, %v1929
        %v1931 = vpop.f32.mrb[0].mxu0
        %1932 = vmatprep.mubr.bf16.mxu0 %v1345
        %1933 = vmatmul.mubr.bf16.gmra.mrb[0].mxu0 %v1344
        %v1934 = vpop.f32.mrb[0].mxu0
        %v1935 = vadd.f32 0.0, %v1934
        %v1936 = vpop.f32.mrb[0].mxu0
        %v1937 = vpop.f32.mrb[0].mxu0
        %v1938 = vadd.f32 0.0, %v1937
        %v1939 = vpop.f32.mrb[0].mxu0
        %1940 = vmatprep.mubr.bf16.mxu0 %v1349
        %1941 = vmatmul.mubr.bf16.gmra.mrb[0].mxu0 %v1348
        %v1942 = vpop.f32.mrb[0].mxu0
        %v1943 = vadd.f32 0.0, %v1942
        %v1944 = vpop.f32.mrb[0].mxu0
        %v1945 = vpop.f32.mrb[0].mxu0
        %v1946 = vadd.f32 0.0, %v1945
        %v1947 = vpop.f32.mrb[0].mxu0
        %1948 = vmatprep.mubr.bf16.mxu0 %v1353
        %1949 = vmatmul.mubr.bf16.gmra.mrb[0].mxu0 %v1352
        %v1950 = vpop.f32.mrb[0].mxu0
        %v1951 = vadd.f32 0.0, %v1950
        %v1952 = vpop.f32.mrb[0].mxu0
        %v1953 = vpop.f32.mrb[0].mxu0
        %v1954 = vadd.f32 0.0, %v1953
        %v1955 = vpop.f32.mrb[0].mxu0
        %1956 = vmatprep.mubr.bf16.mxu0 %v1357
        %1957 = vmatmul.mubr.bf16.gmra.mrb[0].mxu0 %v1356
        %v1958 = vpop.f32.mrb[0].mxu0
        %v1959 = vadd.f32 0.0, %v1958
        %v1960 = vpop.f32.mrb[0].mxu0
        %v1961 = vpop.f32.mrb[0].mxu0
        %v1962 = vadd.f32 0.0, %v1961
        %v1963 = vpop.f32.mrb[0].mxu0
        %1964 = vmatprep.mubr.bf16.mxu0 %v1361
        %1965 = vmatmul.mubr.bf16.gmra.mrb[0].mxu0 %v1360
        %v1966 = vpop.f32.mrb[0].mxu0
        %v1967 = vadd.f32 0.0, %v1966
        %v1968 = vpop.f32.mrb[0].mxu0
        %v1969 = vpop.f32.mrb[0].mxu0
        %v1970 = vadd.f32 0.0, %v1969
        %v1971 = vpop.f32.mrb[0].mxu0
        %1972 = vdwg.mxu0
        %1973 = vmatprep.subr.bf16.mxu0 0
        %1974 = vmatpush1.bf16.msra.mxu0 %v1636
        %1975 = vmatprep.subr.bf16.mxu0 0
        %1976 = vmatpush1.bf16.msra.mxu0 %v1637
        %1977 = vmatprep.subr.bf16.mxu0 0
        %1978 = vmatpush1.bf16.msra.mxu0 %v1638
        %1979 = vmatprep.subr.bf16.mxu0 0
        %1980 = vmatpush1.bf16.msra.mxu0 %v1639
        %1981 = vmatprep.subr.bf16.mxu0 0
        %1982 = vmatpush1.bf16.msra.mxu0 %v1640
        %1983 = vmatprep.subr.bf16.mxu0 0
        %1984 = vmatpush1.bf16.msra.mxu0 %v1641
        %1985 = vmatprep.subr.bf16.mxu0 0
        %1986 = vmatpush1.bf16.msra.mxu0 %v1642
        %1987 = vmatprep.subr.bf16.mxu0 0
        %1988 = vmatpush1.bf16.msra.mxu0 %v1643
        %1989 = vmatprep.subr.bf16.mxu0 0
        %1990 = vmatpush1.bf16.msra.mxu0 %v1644
        %1991 = vmatprep.subr.bf16.mxu0 0
        %1992 = vmatpush1.bf16.msra.mxu0 %v1645
        %1993 = vmatprep.subr.bf16.mxu0 0
        %1994 = vmatpush1.bf16.msra.mxu0 %v1646
        %1995 = vmatprep.subr.bf16.mxu0 0
        %1996 = vmatpush1.bf16.msra.mxu0 %v1647
        %1997 = vmatprep.subr.bf16.mxu0 0
        %1998 = vmatpush1.bf16.msra.mxu0 %v1648
        %1999 = vmatprep.subr.bf16.mxu0 0
        %2000 = vmatpush1.bf16.msra.mxu0 %v1649
        %2001 = vmatprep.subr.bf16.mxu0 0
        %2002 = vmatpush1.bf16.msra.mxu0 %v1650
        %2003 = vmatprep.subr.bf16.mxu0 0
        %2004 = vmatpush1.bf16.msra.mxu0 %v1651
        %2005 = vmatprep.mubr.bf16.mxu0 %v1239
        %2006 = vmatmul.mubr.bf16.gmra.mrb[0].mxu0 %v1238
        %v2007 = vpop.f32.mrb[0].mxu0
        %v2008 = vadd.f32 %v1719, %v2007
        %v2009 = vpop.f32.mrb[0].mxu0
        %v2010 = vpop.f32.mrb[0].mxu0
        %v2011 = vadd.f32 %v1722, %v2010
        %v2012 = vpop.f32.mrb[0].mxu0
        %2013 = vmatprep.mubr.bf16.mxu0 %v1243
        %2014 = vmatmul.mubr.bf16.gmra.mrb[0].mxu0 %v1242
        %v2015 = vpop.f32.mrb[0].mxu0
        %v2016 = vadd.f32 %v1727, %v2015
        %v2017 = vpop.f32.mrb[0].mxu0
        %v2018 = vpop.f32.mrb[0].mxu0
        %v2019 = vadd.f32 %v1730, %v2018
        %v2020 = vpop.f32.mrb[0].mxu0
        %2021 = vmatprep.mubr.bf16.mxu0 %v1247
        %2022 = vmatmul.mubr.bf16.gmra.mrb[0].mxu0 %v1246
        %v2023 = vpop.f32.mrb[0].mxu0
        %v2024 = vadd.f32 %v1735, %v2023
        %v2025 = vpop.f32.mrb[0].mxu0
        %v2026 = vpop.f32.mrb[0].mxu0
        %v2027 = vadd.f32 %v1738, %v2026
        %v2028 = vpop.f32.mrb[0].mxu0
        %2029 = vmatprep.mubr.bf16.mxu0 %v1251
        %2030 = vmatmul.mubr.bf16.gmra.mrb[0].mxu0 %v1250
        %v2031 = vpop.f32.mrb[0].mxu0
        %v2032 = vadd.f32 %v1743, %v2031
        %v2033 = vpop.f32.mrb[0].mxu0
        %v2034 = vpop.f32.mrb[0].mxu0
        %v2035 = vadd.f32 %v1746, %v2034
        %v2036 = vpop.f32.mrb[0].mxu0
        %2037 = vmatprep.mubr.bf16.mxu0 %v1255
        %2038 = vmatmul.mubr.bf16.gmra.mrb[0].mxu0 %v1254
        %v2039 = vpop.f32.mrb[0].mxu0
        %v2040 = vadd.f32 %v1751, %v2039
        %v2041 = vpop.f32.mrb[0].mxu0
        %v2042 = vpop.f32.mrb[0].mxu0
        %v2043 = vadd.f32 %v1754, %v2042
        %v2044 = vpop.f32.mrb[0].mxu0
        %2045 = vmatprep.mubr.bf16.mxu0 %v1259
        %2046 = vmatmul.mubr.bf16.gmra.mrb[0].mxu0 %v1258
        %v2047 = vpop.f32.mrb[0].mxu0
        %v2048 = vadd.f32 %v1759, %v2047
        %v2049 = vpop.f32.mrb[0].mxu0
        %v2050 = vpop.f32.mrb[0].mxu0
        %v2051 = vadd.f32 %v1762, %v2050
        %v2052 = vpop.f32.mrb[0].mxu0
        %2053 = vmatprep.mubr.bf16.mxu0 %v1263
        %2054 = vmatmul.mubr.bf16.gmra.mrb[0].mxu0 %v1262
        %v2055 = vpop.f32.mrb[0].mxu0
        %v2056 = vadd.f32 %v1767, %v2055
        %v2057 = vpop.f32.mrb[0].mxu0
        %v2058 = vpop.f32.mrb[0].mxu0
        %v2059 = vadd.f32 %v1770, %v2058
        %v2060 = vpop.f32.mrb[0].mxu0
        %2061 = vmatprep.mubr.bf16.mxu0 %v1267
        %2062 = vmatmul.mubr.bf16.gmra.mrb[0].mxu0 %v1266
        %v2063 = vpop.f32.mrb[0].mxu0
        %v2064 = vadd.f32 %v1775, %v2063
        %v2065 = vpop.f32.mrb[0].mxu0
        %v2066 = vpop.f32.mrb[0].mxu0
        %v2067 = vadd.f32 %v1778, %v2066
        %v2068 = vpop.f32.mrb[0].mxu0
        %2069 = vmatprep.mubr.bf16.mxu0 %v1271
        %2070 = vmatmul.mubr.bf16.gmra.mrb[0].mxu0 %v1270
        %v2071 = vpop.f32.mrb[0].mxu0
        %v2072 = vadd.f32 %v1783, %v2071
        %v2073 = vpop.f32.mrb[0].mxu0
        %v2074 = vpop.f32.mrb[0].mxu0
        %v2075 = vadd.f32 %v1786, %v2074
        %v2076 = vpop.f32.mrb[0].mxu0
        %2077 = vmatprep.mubr.bf16.mxu0 %v1275
        %2078 = vmatmul.mubr.bf16.gmra.mrb[0].mxu0 %v1274
        %v2079 = vpop.f32.mrb[0].mxu0
        %v2080 = vadd.f32 %v1791, %v2079
        %v2081 = vpop.f32.mrb[0].mxu0
        %v2082 = vpop.f32.mrb[0].mxu0
        %v2083 = vadd.f32 %v1794, %v2082
        %v2084 = vpop.f32.mrb[0].mxu0
        %2085 = vmatprep.mubr.bf16.mxu0 %v1279
        %2086 = vmatmul.mubr.bf16.gmra.mrb[0].mxu0 %v1278
        %v2087 = vpop.f32.mrb[0].mxu0
        %v2088 = vadd.f32 %v1799, %v2087
        %v2089 = vpop.f32.mrb[0].mxu0
        %v2090 = vpop.f32.mrb[0].mxu0
        %v2091 = vadd.f32 %v1802, %v2090
        %v2092 = vpop.f32.mrb[0].mxu0
        %2093 = vmatprep.mubr.bf16.mxu0 %v1283
        %2094 = vmatmul.mubr.bf16.gmra.mrb[0].mxu0 %v1282
        %v2095 = vpop.f32.mrb[0].mxu0
        %v2096 = vadd.f32 %v1807, %v2095
        %v2097 = vpop.f32.mrb[0].mxu0
        %v2098 = vpop.f32.mrb[0].mxu0
        %v2099 = vadd.f32 %v1810, %v2098
        %v2100 = vpop.f32.mrb[0].mxu0
        %2101 = vmatprep.mubr.bf16.mxu0 %v1287
        %2102 = vmatmul.mubr.bf16.gmra.mrb[0].mxu0 %v1286
        %v2103 = vpop.f32.mrb[0].mxu0
        %v2104 = vadd.f32 %v1815, %v2103
        %v2105 = vpop.f32.mrb[0].mxu0
        %v2106 = vpop.f32.mrb[0].mxu0
        %v2107 = vadd.f32 %v1818, %v2106
        %v2108 = vpop.f32.mrb[0].mxu0
        %2109 = vmatprep.mubr.bf16.mxu0 %v1291
        %2110 = vmatmul.mubr.bf16.gmra.mrb[0].mxu0 %v1290
        %v2111 = vpop.f32.mrb[0].mxu0
        %v2112 = vadd.f32 %v1823, %v2111
        %v2113 = vpop.f32.mrb[0].mxu0
        %v2114 = vpop.f32.mrb[0].mxu0
        %v2115 = vadd.f32 %v1826, %v2114
        %v2116 = vpop.f32.mrb[0].mxu0
        %2117 = vmatprep.mubr.bf16.mxu0 %v1295
        %2118 = vmatmul.mubr.bf16.gmra.mrb[0].mxu0 %v1294
        %v2119 = vpop.f32.mrb[0].mxu0
        %v2120 = vadd.f32 %v1831, %v2119
        %v2121 = vpop.f32.mrb[0].mxu0
        %v2122 = vpop.f32.mrb[0].mxu0
        %v2123 = vadd.f32 %v1834, %v2122
        %v2124 = vpop.f32.mrb[0].mxu0
        %2125 = vmatprep.mubr.bf16.mxu0 %v1299
        %2126 = vmatmul.mubr.bf16.gmra.mrb[0].mxu0 %v1298
        %v2127 = vpop.f32.mrb[0].mxu0
        %v2128 = vadd.f32 %v1839, %v2127
        %v2129 = vpop.f32.mrb[0].mxu0
        %v2130 = vpop.f32.mrb[0].mxu0
        %v2131 = vadd.f32 %v1842, %v2130
        %v2132 = vpop.f32.mrb[0].mxu0
        %2133 = vmatprep.mubr.bf16.mxu0 %v1303
        %2134 = vmatmul.mubr.bf16.gmra.mrb[0].mxu0 %v1302
        %v2135 = vpop.f32.mrb[0].mxu0
        %v2136 = vadd.f32 %v1847, %v2135
        %v2137 = vpop.f32.mrb[0].mxu0
        %v2138 = vpop.f32.mrb[0].mxu0
        %v2139 = vadd.f32 %v1850, %v2138
        %v2140 = vpop.f32.mrb[0].mxu0
        %2141 = vmatprep.mubr.bf16.mxu0 %v1307
        %2142 = vmatmul.mubr.bf16.gmra.mrb[0].mxu0 %v1306
        %v2143 = vpop.f32.mrb[0].mxu0
        %v2144 = vadd.f32 %v1855, %v2143
        %v2145 = vpop.f32.mrb[0].mxu0
        %v2146 = vpop.f32.mrb[0].mxu0
        %v2147 = vadd.f32 %v1858, %v2146
        %v2148 = vpop.f32.mrb[0].mxu0
        %2149 = vmatprep.mubr.bf16.mxu0 %v1311
        %2150 = vmatmul.mubr.bf16.gmra.mrb[0].mxu0 %v1310
        %v2151 = vpop.f32.mrb[0].mxu0
        %v2152 = vadd.f32 %v1863, %v2151
        %v2153 = vpop.f32.mrb[0].mxu0
        %v2154 = vpop.f32.mrb[0].mxu0
        %v2155 = vadd.f32 %v1866, %v2154
        %v2156 = vpop.f32.mrb[0].mxu0
        %2157 = vmatprep.mubr.bf16.mxu0 %v1315
        %2158 = vmatmul.mubr.bf16.gmra.mrb[0].mxu0 %v1314
        %v2159 = vpop.f32.mrb[0].mxu0
        %v2160 = vadd.f32 %v1871, %v2159
        %v2161 = vpop.f32.mrb[0].mxu0
        %v2162 = vpop.f32.mrb[0].mxu0
        %v2163 = vadd.f32 %v1874, %v2162
        %v2164 = vpop.f32.mrb[0].mxu0
        %2165 = vmatprep.mubr.bf16.mxu0 %v1319
        %2166 = vmatmul.mubr.bf16.gmra.mrb[0].mxu0 %v1318
        %v2167 = vpop.f32.mrb[0].mxu0
        %v2168 = vadd.f32 %v1879, %v2167
        %v2169 = vpop.f32.mrb[0].mxu0
        %v2170 = vpop.f32.mrb[0].mxu0
        %v2171 = vadd.f32 %v1882, %v2170
        %v2172 = vpop.f32.mrb[0].mxu0
        %2173 = vmatprep.mubr.bf16.mxu0 %v1323
        %2174 = vmatmul.mubr.bf16.gmra.mrb[0].mxu0 %v1322
        %v2175 = vpop.f32.mrb[0].mxu0
        %v2176 = vadd.f32 %v1887, %v2175
        %v2177 = vpop.f32.mrb[0].mxu0
        %v2178 = vpop.f32.mrb[0].mxu0
        %v2179 = vadd.f32 %v1890, %v2178
        %v2180 = vpop.f32.mrb[0].mxu0
        %2181 = vmatprep.mubr.bf16.mxu0 %v1327
        %2182 = vmatmul.mubr.bf16.gmra.mrb[0].mxu0 %v1326
        %v2183 = vpop.f32.mrb[0].mxu0
        %v2184 = vadd.f32 %v1895, %v2183
        %v2185 = vpop.f32.mrb[0].mxu0
        %v2186 = vpop.f32.mrb[0].mxu0
        %v2187 = vadd.f32 %v1898, %v2186
        %v2188 = vpop.f32.mrb[0].mxu0
        %2189 = vmatprep.mubr.bf16.mxu0 %v1331
        %2190 = vmatmul.mubr.bf16.gmra.mrb[0].mxu0 %v1330
        %v2191 = vpop.f32.mrb[0].mxu0
        %v2192 = vadd.f32 %v1903, %v2191
        %v2193 = vpop.f32.mrb[0].mxu0
        %v2194 = vpop.f32.mrb[0].mxu0
        %v2195 = vadd.f32 %v1906, %v2194
        %v2196 = vpop.f32.mrb[0].mxu0
        %2197 = vmatprep.mubr.bf16.mxu0 %v1335
        %2198 = vmatmul.mubr.bf16.gmra.mrb[0].mxu0 %v1334
        %v2199 = vpop.f32.mrb[0].mxu0
        %v2200 = vadd.f32 %v1911, %v2199
        %v2201 = vpop.f32.mrb[0].mxu0
        %v2202 = vpop.f32.mrb[0].mxu0
        %v2203 = vadd.f32 %v1914, %v2202
        %v2204 = vpop.f32.mrb[0].mxu0
        %2205 = vmatprep.mubr.bf16.mxu0 %v1339
        %2206 = vmatmul.mubr.bf16.gmra.mrb[0].mxu0 %v1338
        %v2207 = vpop.f32.mrb[0].mxu0
        %v2208 = vadd.f32 %v1919, %v2207
        %v2209 = vpop.f32.mrb[0].mxu0
        %v2210 = vpop.f32.mrb[0].mxu0
        %v2211 = vadd.f32 %v1922, %v2210
        %v2212 = vpop.f32.mrb[0].mxu0
        %2213 = vmatprep.mubr.bf16.mxu0 %v1343
        %2214 = vmatmul.mubr.bf16.gmra.mrb[0].mxu0 %v1342
        %v2215 = vpop.f32.mrb[0].mxu0
        %v2216 = vadd.f32 %v1927, %v2215
        %v2217 = vpop.f32.mrb[0].mxu0
        %v2218 = vpop.f32.mrb[0].mxu0
        %v2219 = vadd.f32 %v1930, %v2218
        %v2220 = vpop.f32.mrb[0].mxu0
        %2221 = vmatprep.mubr.bf16.mxu0 %v1347
        %2222 = vmatmul.mubr.bf16.gmra.mrb[0].mxu0 %v1346
        %v2223 = vpop.f32.mrb[0].mxu0
        %v2224 = vadd.f32 %v1935, %v2223
        %v2225 = vpop.f32.mrb[0].mxu0
        %v2226 = vpop.f32.mrb[0].mxu0
        %v2227 = vadd.f32 %v1938, %v2226
        %v2228 = vpop.f32.mrb[0].mxu0
        %2229 = vmatprep.mubr.bf16.mxu0 %v1351
        %2230 = vmatmul.mubr.bf16.gmra.mrb[0].mxu0 %v1350
        %v2231 = vpop.f32.mrb[0].mxu0
        %v2232 = vadd.f32 %v1943, %v2231
        %v2233 = vpop.f32.mrb[0].mxu0
        %v2234 = vpop.f32.mrb[0].mxu0
        %v2235 = vadd.f32 %v1946, %v2234
        %v2236 = vpop.f32.mrb[0].mxu0
        %2237 = vmatprep.mubr.bf16.mxu0 %v1355
        %2238 = vmatmul.mubr.bf16.gmra.mrb[0].mxu0 %v1354
        %v2239 = vpop.f32.mrb[0].mxu0
        %v2240 = vadd.f32 %v1951, %v2239
        %v2241 = vpop.f32.mrb[0].mxu0
        %v2242 = vpop.f32.mrb[0].mxu0
        %v2243 = vadd.f32 %v1954, %v2242
        %v2244 = vpop.f32.mrb[0].mxu0
        %2245 = vmatprep.mubr.bf16.mxu0 %v1359
        %2246 = vmatmul.mubr.bf16.gmra.mrb[0].mxu0 %v1358
        %v2247 = vpop.f32.mrb[0].mxu0
        %v2248 = vadd.f32 %v1959, %v2247
        %v2249 = vpop.f32.mrb[0].mxu0
        %v2250 = vpop.f32.mrb[0].mxu0
        %v2251 = vadd.f32 %v1962, %v2250
        %v2252 = vpop.f32.mrb[0].mxu0
        %2253 = vmatprep.mubr.bf16.mxu0 %v1363
        %2254 = vmatmul.mubr.bf16.gmra.mrb[0].mxu0 %v1362
        %v2255 = vpop.f32.mrb[0].mxu0
        %v2256 = vadd.f32 %v1967, %v2255
        %v2257 = vpop.f32.mrb[0].mxu0
        %v2258 = vpop.f32.mrb[0].mxu0
        %v2259 = vadd.f32 %v1970, %v2258
        %v2260 = vpop.f32.mrb[0].mxu0
        %2261 = vdwg.mxu0
        %v2262 = vadd.f32 %v596, %v2008
        %v2263 = vadd.f32 %v597, %v2011
        %v2264 = vadd.f32 %v598, %v2016
        %v2265 = vadd.f32 %v599, %v2019
        %v2266 = vadd.f32 %v600, %v2024
        %v2267 = vadd.f32 %v601, %v2027
        %v2268 = vadd.f32 %v602, %v2032
        %v2269 = vadd.f32 %v603, %v2035
        %v2270 = vadd.f32 %v604, %v2040
        %v2271 = vadd.f32 %v605, %v2043
        %v2272 = vadd.f32 %v606, %v2048
        %v2273 = vadd.f32 %v607, %v2051
        %v2274 = vadd.f32 %v608, %v2056
        %v2275 = vadd.f32 %v609, %v2059
        %v2276 = vadd.f32 %v610, %v2064
        %v2277 = vadd.f32 %v611, %v2067
        %v2278 = vadd.f32 %v612, %v2072
        %v2279 = vadd.f32 %v613, %v2075
        %v2280 = vadd.f32 %v614, %v2080
        %v2281 = vadd.f32 %v615, %v2083
        %v2282 = vadd.f32 %v616, %v2088
        %v2283 = vadd.f32 %v617, %v2091
        %v2284 = vadd.f32 %v618, %v2096
        %v2285 = vadd.f32 %v619, %v2099
        %v2286 = vadd.f32 %v620, %v2104
        %v2287 = vadd.f32 %v621, %v2107
        %v2288 = vadd.f32 %v622, %v2112
        %v2289 = vadd.f32 %v623, %v2115
        %v2290 = vadd.f32 %v624, %v2120
        %v2291 = vadd.f32 %v625, %v2123
        %v2292 = vadd.f32 %v626, %v2128
        %v2293 = vadd.f32 %v627, %v2131
        %v2294 = vadd.f32 %v628, %v2136
        %v2295 = vadd.f32 %v629, %v2139
        %v2296 = vadd.f32 %v630, %v2144
        %v2297 = vadd.f32 %v631, %v2147
        %v2298 = vadd.f32 %v632, %v2152
        %v2299 = vadd.f32 %v633, %v2155
        %v2300 = vadd.f32 %v634, %v2160
        %v2301 = vadd.f32 %v635, %v2163
        %v2302 = vadd.f32 %v636, %v2168
        %v2303 = vadd.f32 %v637, %v2171
        %v2304 = vadd.f32 %v638, %v2176
        %v2305 = vadd.f32 %v639, %v2179
        %v2306 = vadd.f32 %v640, %v2184
        %v2307 = vadd.f32 %v641, %v2187
        %v2308 = vadd.f32 %v642, %v2192
        %v2309 = vadd.f32 %v643, %v2195
        %v2310 = vadd.f32 %v644, %v2200
        %v2311 = vadd.f32 %v645, %v2203
        %v2312 = vadd.f32 %v646, %v2208
        %v2313 = vadd.f32 %v647, %v2211
        %v2314 = vadd.f32 %v648, %v2216
        %v2315 = vadd.f32 %v649, %v2219
        %v2316 = vadd.f32 %v650, %v2224
        %v2317 = vadd.f32 %v651, %v2227
        %v2318 = vadd.f32 %v652, %v2232
        %v2319 = vadd.f32 %v653, %v2235
        %v2320 = vadd.f32 %v654, %v2240
        %v2321 = vadd.f32 %v655, %v2243
        %v2322 = vadd.f32 %v656, %v2248
        %v2323 = vadd.f32 %v657, %v2251
        %v2324 = vadd.f32 %v658, %v2256
        %v2325 = vadd.f32 %v659, %v2259
        %2326 = vst [vmem:[%s525] sm:$0xff] %v2262
        %2327 = vst [vmem:[%s525 + $0x8] sm:$0xff] %v2263
        %2328 = vst [vmem:[%s525 + $0x10] sm:$0xff] %v2264
        %2329 = vst [vmem:[%s525 + $0x18] sm:$0xff] %v2265
        %2330 = vst [vmem:[%s525 + $0x20] sm:$0xff] %v2266
        %2331 = vst [vmem:[%s525 + $0x28] sm:$0xff] %v2267
        %2332 = vst [vmem:[%s525 + $0x30] sm:$0xff] %v2268
        %2333 = vst [vmem:[%s525 + $0x38] sm:$0xff] %v2269
        %2334 = vst [vmem:[%s525 + $0x40] sm:$0xff] %v2270
        %2335 = vst [vmem:[%s525 + $0x48] sm:$0xff] %v2271
        %2336 = vst [vmem:[%s525 + $0x50] sm:$0xff] %v2272
        %2337 = vst [vmem:[%s525 + $0x58] sm:$0xff] %v2273
        %2338 = vst [vmem:[%s525 + $0x60] sm:$0xff] %v2274
        %2339 = vst [vmem:[%s525 + $0x68] sm:$0xff] %v2275
        %2340 = vst [vmem:[%s525 + $0x70] sm:$0xff] %v2276
        %2341 = vst [vmem:[%s525 + $0x78] sm:$0xff] %v2277
        %2342 = vst [vmem:[%s525 + $0x80] sm:$0xff] %v2278
        %2343 = vst [vmem:[%s525 + $0x88] sm:$0xff] %v2279
        %2344 = vst [vmem:[%s525 + $0x90] sm:$0xff] %v2280
        %2345 = vst [vmem:[%s525 + $0x98] sm:$0xff] %v2281
        %2346 = vst [vmem:[%s525 + $0xa0] sm:$0xff] %v2282
        %2347 = vst [vmem:[%s525 + $0xa8] sm:$0xff] %v2283
        %2348 = vst [vmem:[%s525 + $0xb0] sm:$0xff] %v2284
        %2349 = vst [vmem:[%s525 + $0xb8] sm:$0xff] %v2285
        %2350 = vst [vmem:[%s525 + $0xc0] sm:$0xff] %v2286
        %2351 = vst [vmem:[%s525 + $0xc8] sm:$0xff] %v2287
        %2352 = vst [vmem:[%s525 + $0xd0] sm:$0xff] %v2288
        %2353 = vst [vmem:[%s525 + $0xd8] sm:$0xff] %v2289
        %2354 = vst [vmem:[%s525 + $0xe0] sm:$0xff] %v2290
        %2355 = vst [vmem:[%s525 + $0xe8] sm:$0xff] %v2291
        %2356 = vst [vmem:[%s525 + $0xf0] sm:$0xff] %v2292
        %2357 = vst [vmem:[%s525 + $0xf8] sm:$0xff] %v2293
        %2358 = vst [vmem:[%s525 + $0x100] sm:$0xff] %v2294
        %2359 = vst [vmem:[%s525 + $0x108] sm:$0xff] %v2295
        %2360 = vst [vmem:[%s525 + $0x110] sm:$0xff] %v2296
        %2361 = vst [vmem:[%s525 + $0x118] sm:$0xff] %v2297
        %2362 = vst [vmem:[%s525 + $0x120] sm:$0xff] %v2298
        %2363 = vst [vmem:[%s525 + $0x128] sm:$0xff] %v2299
        %2364 = vst [vmem:[%s525 + $0x130] sm:$0xff] %v2300
        %2365 = vst [vmem:[%s525 + $0x138] sm:$0xff] %v2301
        %2366 = vst [vmem:[%s525 + $0x140] sm:$0xff] %v2302
        %2367 = vst [vmem:[%s525 + $0x148] sm:$0xff] %v2303
        %2368 = vst [vmem:[%s525 + $0x150] sm:$0xff] %v2304
        %2369 = vst [vmem:[%s525 + $0x158] sm:$0xff] %v2305
        %2370 = vst [vmem:[%s525 + $0x160] sm:$0xff] %v2306
        %2371 = vst [vmem:[%s525 + $0x168] sm:$0xff] %v2307
        %2372 = vst [vmem:[%s525 + $0x170] sm:$0xff] %v2308
        %2373 = vst [vmem:[%s525 + $0x178] sm:$0xff] %v2309
        %2374 = vst [vmem:[%s525 + $0x180] sm:$0xff] %v2310
        %2375 = vst [vmem:[%s525 + $0x188] sm:$0xff] %v2311
        %2376 = vst [vmem:[%s525 + $0x190] sm:$0xff] %v2312
        %2377 = vst [vmem:[%s525 + $0x198] sm:$0xff] %v2313
        %2378 = vst [vmem:[%s525 + $0x1a0] sm:$0xff] %v2314
        %2379 = vst [vmem:[%s525 + $0x1a8] sm:$0xff] %v2315
        %2380 = vst [vmem:[%s525 + $0x1b0] sm:$0xff] %v2316
        %2381 = vst [vmem:[%s525 + $0x1b8] sm:$0xff] %v2317
        %2382 = vst [vmem:[%s525 + $0x1c0] sm:$0xff] %v2318
        %2383 = vst [vmem:[%s525 + $0x1c8] sm:$0xff] %v2319
        %2384 = vst [vmem:[%s525 + $0x1d0] sm:$0xff] %v2320
        %2385 = vst [vmem:[%s525 + $0x1d8] sm:$0xff] %v2321
        %2386 = vst [vmem:[%s525 + $0x1e0] sm:$0xff] %v2322
        %2387 = vst [vmem:[%s525 + $0x1e8] sm:$0xff] %v2323
        %2388 = vst [vmem:[%s525 + $0x1f0] sm:$0xff] %v2324
        %2389 = vst [vmem:[%s525 + $0x1f8] sm:$0xff] %v2325
        %p2390 = scmp.eq.s32.totalorder %s21, 6
        // Predicated region
        $region60: #{edgenet.97} parent=50 // pred_check
          %p2391 = pneg %p2390
        $region61: #{edgenet.97} parent=50 // pred_check_branch
          %2393 = sbr.rel (%p2391) target = $region63
        $region62: #{edgenet.97} parent=50 // pred_region
          %v2394 = vld [vmem:[%s525] sm:$0xff]
          %v2395 = vld [vmem:[%s525 + $0x8] sm:$0xff]
          %v2396 = vld [vmem:[%s525 + $0x10] sm:$0xff]
          %v2397 = vld [vmem:[%s525 + $0x18] sm:$0xff]
          %v2398 = vld [vmem:[%s525 + $0x20] sm:$0xff]
          %v2399 = vld [vmem:[%s525 + $0x28] sm:$0xff]
          %v2400 = vld [vmem:[%s525 + $0x30] sm:$0xff]
          %v2401 = vld [vmem:[%s525 + $0x38] sm:$0xff]
          %v2402 = vld [vmem:[%s525 + $0x40] sm:$0xff]
          %v2403 = vld [vmem:[%s525 + $0x48] sm:$0xff]
          %v2404 = vld [vmem:[%s525 + $0x50] sm:$0xff]
          %v2405 = vld [vmem:[%s525 + $0x58] sm:$0xff]
          %v2406 = vld [vmem:[%s525 + $0x60] sm:$0xff]
          %v2407 = vld [vmem:[%s525 + $0x68] sm:$0xff]
          %v2408 = vld [vmem:[%s525 + $0x70] sm:$0xff]
          %v2409 = vld [vmem:[%s525 + $0x78] sm:$0xff]
          %v2410 = vld [vmem:[%s525 + $0x80] sm:$0xff]
          %v2411 = vld [vmem:[%s525 + $0x88] sm:$0xff]
          %v2412 = vld [vmem:[%s525 + $0x90] sm:$0xff]
          %v2413 = vld [vmem:[%s525 + $0x98] sm:$0xff]
          %v2414 = vld [vmem:[%s525 + $0xa0] sm:$0xff]
          %v2415 = vld [vmem:[%s525 + $0xa8] sm:$0xff]
          %v2416 = vld [vmem:[%s525 + $0xb0] sm:$0xff]
          %v2417 = vld [vmem:[%s525 + $0xb8] sm:$0xff]
          %v2418 = vld [vmem:[%s525 + $0xc0] sm:$0xff]
          %v2419 = vld [vmem:[%s525 + $0xc8] sm:$0xff]
          %v2420 = vld [vmem:[%s525 + $0xd0] sm:$0xff]
          %v2421 = vld [vmem:[%s525 + $0xd8] sm:$0xff]
          %v2422 = vld [vmem:[%s525 + $0xe0] sm:$0xff]
          %v2423 = vld [vmem:[%s525 + $0xe8] sm:$0xff]
          %v2424 = vld [vmem:[%s525 + $0xf0] sm:$0xff]
          %v2425 = vld [vmem:[%s525 + $0xf8] sm:$0xff]
          %v2426 = vld [vmem:[%s525 + $0x100] sm:$0xff]
          %v2427 = vld [vmem:[%s525 + $0x108] sm:$0xff]
          %v2428 = vld [vmem:[%s525 + $0x110] sm:$0xff]
          %v2429 = vld [vmem:[%s525 + $0x118] sm:$0xff]
          %v2430 = vld [vmem:[%s525 + $0x120] sm:$0xff]
          %v2431 = vld [vmem:[%s525 + $0x128] sm:$0xff]
          %v2432 = vld [vmem:[%s525 + $0x130] sm:$0xff]
          %v2433 = vld [vmem:[%s525 + $0x138] sm:$0xff]
          %v2434 = vld [vmem:[%s525 + $0x140] sm:$0xff]
          %v2435 = vld [vmem:[%s525 + $0x148] sm:$0xff]
          %v2436 = vld [vmem:[%s525 + $0x150] sm:$0xff]
          %v2437 = vld [vmem:[%s525 + $0x158] sm:$0xff]
          %v2438 = vld [vmem:[%s525 + $0x160] sm:$0xff]
          %v2439 = vld [vmem:[%s525 + $0x168] sm:$0xff]
          %v2440 = vld [vmem:[%s525 + $0x170] sm:$0xff]
          %v2441 = vld [vmem:[%s525 + $0x178] sm:$0xff]
          %v2442 = vld [vmem:[%s525 + $0x180] sm:$0xff]
          %v2443 = vld [vmem:[%s525 + $0x188] sm:$0xff]
          %v2444 = vld [vmem:[%s525 + $0x190] sm:$0xff]
          %v2445 = vld [vmem:[%s525 + $0x198] sm:$0xff]
          %v2446 = vld [vmem:[%s525 + $0x1a0] sm:$0xff]
          %v2447 = vld [vmem:[%s525 + $0x1a8] sm:$0xff]
          %v2448 = vld [vmem:[%s525 + $0x1b0] sm:$0xff]
          %v2449 = vld [vmem:[%s525 + $0x1b8] sm:$0xff]
          %v2450 = vld [vmem:[%s525 + $0x1c0] sm:$0xff]
          %v2451 = vld [vmem:[%s525 + $0x1c8] sm:$0xff]
          %v2452 = vld [vmem:[%s525 + $0x1d0] sm:$0xff]
          %v2453 = vld [vmem:[%s525 + $0x1d8] sm:$0xff]
          %v2454 = vld [vmem:[%s525 + $0x1e0] sm:$0xff]
          %v2455 = vld [vmem:[%s525 + $0x1e8] sm:$0xff]
          %v2456 = vld [vmem:[%s525 + $0x1f0] sm:$0xff]
          %v2457 = vld [vmem:[%s525 + $0x1f8] sm:$0xff]
          %v2458 = vld [vmem:[%s517] sm:$0x1]
          %v2460 = vlaneseq
          %v2461 = vshrl.u32 %v2460, 7
          %v2462 = vsub.s32 0, %v2461
          %v2463 = vrot.slane %v2458, %v2462
          %v2465 = vadd.f32 %v2394, %v2463
          %v2466 = vadd.f32 %v2395, %v2463
          %v2467 = vadd.f32 %v2396, %v2463
          %v2468 = vadd.f32 %v2397, %v2463
          %v2469 = vadd.f32 %v2398, %v2463
          %v2470 = vadd.f32 %v2399, %v2463
          %v2471 = vadd.f32 %v2400, %v2463
          %v2472 = vadd.f32 %v2401, %v2463
          %v2473 = vadd.f32 %v2402, %v2463
          %v2474 = vadd.f32 %v2403, %v2463
          %v2475 = vadd.f32 %v2404, %v2463
          %v2476 = vadd.f32 %v2405, %v2463
          %v2477 = vadd.f32 %v2406, %v2463
          %v2478 = vadd.f32 %v2407, %v2463
          %v2479 = vadd.f32 %v2408, %v2463
          %v2480 = vadd.f32 %v2409, %v2463
          %v2481 = vadd.f32 %v2410, %v2463
          %v2482 = vadd.f32 %v2411, %v2463
          %v2483 = vadd.f32 %v2412, %v2463
          %v2484 = vadd.f32 %v2413, %v2463
          %v2485 = vadd.f32 %v2414, %v2463
          %v2486 = vadd.f32 %v2415, %v2463
          %v2487 = vadd.f32 %v2416, %v2463
          %v2488 = vadd.f32 %v2417, %v2463
          %v2489 = vadd.f32 %v2418, %v2463
          %v2490 = vadd.f32 %v2419, %v2463
          %v2491 = vadd.f32 %v2420, %v2463
          %v2492 = vadd.f32 %v2421, %v2463
          %v2493 = vadd.f32 %v2422, %v2463
          %v2494 = vadd.f32 %v2423, %v2463
          %v2495 = vadd.f32 %v2424, %v2463
          %v2496 = vadd.f32 %v2425, %v2463
          %v2497 = vadd.f32 %v2426, %v2463
          %v2498 = vadd.f32 %v2427, %v2463
          %v2499 = vadd.f32 %v2428, %v2463
          %v2500 = vadd.f32 %v2429, %v2463
          %v2501 = vadd.f32 %v2430, %v2463
          %v2502 = vadd.f32 %v2431, %v2463
          %v2503 = vadd.f32 %v2432, %v2463
          %v2504 = vadd.f32 %v2433, %v2463
          %v2505 = vadd.f32 %v2434, %v2463
          %v2506 = vadd.f32 %v2435, %v2463
          %v2507 = vadd.f32 %v2436, %v2463
          %v2508 = vadd.f32 %v2437, %v2463
          %v2509 = vadd.f32 %v2438, %v2463
          %v2510 = vadd.f32 %v2439, %v2463
          %v2511 = vadd.f32 %v2440, %v2463
          %v2512 = vadd.f32 %v2441, %v2463
          %v2513 = vadd.f32 %v2442, %v2463
          %v2514 = vadd.f32 %v2443, %v2463
          %v2515 = vadd.f32 %v2444, %v2463
          %v2516 = vadd.f32 %v2445, %v2463
          %v2517 = vadd.f32 %v2446, %v2463
          %v2518 = vadd.f32 %v2447, %v2463
          %v2519 = vadd.f32 %v2448, %v2463
          %v2520 = vadd.f32 %v2449, %v2463
          %v2521 = vadd.f32 %v2450, %v2463
          %v2522 = vadd.f32 %v2451, %v2463
          %v2523 = vadd.f32 %v2452, %v2463
          %v2524 = vadd.f32 %v2453, %v2463
          %v2525 = vadd.f32 %v2454, %v2463
          %v2526 = vadd.f32 %v2455, %v2463
          %v2527 = vadd.f32 %v2456, %v2463
          %v2528 = vadd.f32 %v2457, %v2463
          %v2529 = vsub.f32 0.0, %v2465
          %v2530 = vsub.f32 0.0, %v2466
          %v2531 = vsub.f32 0.0, %v2467
          %v2532 = vsub.f32 0.0, %v2468
          %v2533 = vsub.f32 0.0, %v2469
          %v2534 = vsub.f32 0.0, %v2470
          %v2535 = vsub.f32 0.0, %v2471
          %v2536 = vsub.f32 0.0, %v2472
          %v2537 = vsub.f32 0.0, %v2473
          %v2538 = vsub.f32 0.0, %v2474
          %v2539 = vsub.f32 0.0, %v2475
          %v2540 = vsub.f32 0.0, %v2476
          %v2541 = vsub.f32 0.0, %v2477
          %v2542 = vsub.f32 0.0, %v2478
          %v2543 = vsub.f32 0.0, %v2479
          %v2544 = vsub.f32 0.0, %v2480
          %v2545 = vsub.f32 0.0, %v2481
          %v2546 = vsub.f32 0.0, %v2482
          %v2547 = vsub.f32 0.0, %v2483
          %v2548 = vsub.f32 0.0, %v2484
          %v2549 = vsub.f32 0.0, %v2485
          %v2550 = vsub.f32 0.0, %v2486
          %v2551 = vsub.f32 0.0, %v2487
          %v2552 = vsub.f32 0.0, %v2488
          %v2553 = vsub.f32 0.0, %v2489
          %v2554 = vsub.f32 0.0, %v2490
          %v2555 = vsub.f32 0.0, %v2491
          %v2556 = vsub.f32 0.0, %v2492
          %v2557 = vsub.f32 0.0, %v2493
          %v2558 = vsub.f32 0.0, %v2494
          %v2559 = vsub.f32 0.0, %v2495
          %v2560 = vsub.f32 0.0, %v2496
          %v2561 = vsub.f32 0.0, %v2497
          %v2562 = vsub.f32 0.0, %v2498
          %v2563 = vsub.f32 0.0, %v2499
          %v2564 = vsub.f32 0.0, %v2500
          %v2565 = vsub.f32 0.0, %v2501
          %v2566 = vsub.f32 0.0, %v2502
          %v2567 = vsub.f32 0.0, %v2503
          %v2568 = vsub.f32 0.0, %v2504
          %v2569 = vsub.f32 0.0, %v2505
          %v2570 = vsub.f32 0.0, %v2506
          %v2571 = vsub.f32 0.0, %v2507
          %v2572 = vsub.f32 0.0, %v2508
          %v2573 = vsub.f32 0.0, %v2509
          %v2574 = vsub.f32 0.0, %v2510
          %v2575 = vsub.f32 0.0, %v2511
          %v2576 = vsub.f32 0.0, %v2512
          %v2577 = vsub.f32 0.0, %v2513
          %v2578 = vsub.f32 0.0, %v2514
          %v2579 = vsub.f32 0.0, %v2515
          %v2580 = vsub.f32 0.0, %v2516
          %v2581 = vsub.f32 0.0, %v2517
          %v2582 = vsub.f32 0.0, %v2518
          %v2583 = vsub.f32 0.0, %v2519
          %v2584 = vsub.f32 0.0, %v2520
          %v2585 = vsub.f32 0.0, %v2521
          %v2586 = vsub.f32 0.0, %v2522
          %v2587 = vsub.f32 0.0, %v2523
          %v2588 = vsub.f32 0.0, %v2524
          %v2589 = vsub.f32 0.0, %v2525
          %v2590 = vsub.f32 0.0, %v2526
          %v2591 = vsub.f32 0.0, %v2527
          %v2592 = vsub.f32 0.0, %v2528
          %v2593 = vmul.f32 %v2529, 1.442695
          %v2594 = vpow.pop %v2593
          %v2595 = vmul.f32 %v2530, 1.442695
          %v2596 = vpow.pop %v2595
          %v2597 = vmul.f32 %v2531, 1.442695
          %v2598 = vpow.pop %v2597
          %v2599 = vmul.f32 %v2532, 1.442695
          %v2600 = vpow.pop %v2599
          %v2601 = vmul.f32 %v2533, 1.442695
          %v2602 = vpow.pop %v2601
          %v2603 = vmul.f32 %v2534, 1.442695
          %v2604 = vpow.pop %v2603
          %v2605 = vmul.f32 %v2535, 1.442695
          %v2606 = vpow.pop %v2605
          %v2607 = vmul.f32 %v2536, 1.442695
          %v2608 = vpow.pop %v2607
          %v2609 = vmul.f32 %v2537, 1.442695
          %v2610 = vpow.pop %v2609
          %v2611 = vmul.f32 %v2538, 1.442695
          %v2612 = vpow.pop %v2611
          %v2613 = vmul.f32 %v2539, 1.442695
          %v2614 = vpow.pop %v2613
          %v2615 = vmul.f32 %v2540, 1.442695
          %v2616 = vpow.pop %v2615
          %v2617 = vmul.f32 %v2541, 1.442695
          %v2618 = vpow.pop %v2617
          %v2619 = vmul.f32 %v2542, 1.442695
          %v2620 = vpow.pop %v2619
          %v2621 = vmul.f32 %v2543, 1.442695
          %v2622 = vpow.pop %v2621
          %v2623 = vmul.f32 %v2544, 1.442695
          %v2624 = vpow.pop %v2623
          %v2625 = vmul.f32 %v2545, 1.442695
          %v2626 = vpow.pop %v2625
          %v2627 = vmul.f32 %v2546, 1.442695
          %v2628 = vpow.pop %v2627
          %v2629 = vmul.f32 %v2547, 1.442695
          %v2630 = vpow.pop %v2629
          %v2631 = vmul.f32 %v2548, 1.442695
          %v2632 = vpow.pop %v2631
          %v2633 = vmul.f32 %v2549, 1.442695
          %v2634 = vpow.pop %v2633
          %v2635 = vmul.f32 %v2550, 1.442695
          %v2636 = vpow.pop %v2635
          %v2637 = vmul.f32 %v2551, 1.442695
          %v2638 = vpow.pop %v2637
          %v2639 = vmul.f32 %v2552, 1.442695
          %v2640 = vpow.pop %v2639
          %v2641 = vmul.f32 %v2553, 1.442695
          %v2642 = vpow.pop %v2641
          %v2643 = vmul.f32 %v2554, 1.442695
          %v2644 = vpow.pop %v2643
          %v2645 = vmul.f32 %v2555, 1.442695
          %v2646 = vpow.pop %v2645
          %v2647 = vmul.f32 %v2556, 1.442695
          %v2648 = vpow.pop %v2647
          %v2649 = vmul.f32 %v2557, 1.442695
          %v2650 = vpow.pop %v2649
          %v2651 = vmul.f32 %v2558, 1.442695
          %v2652 = vpow.pop %v2651
          %v2653 = vmul.f32 %v2559, 1.442695
          %v2654 = vpow.pop %v2653
          %v2655 = vmul.f32 %v2560, 1.442695
          %v2656 = vpow.pop %v2655
          %v2657 = vmul.f32 %v2561, 1.442695
          %v2658 = vpow.pop %v2657
          %v2659 = vmul.f32 %v2562, 1.442695
          %v2660 = vpow.pop %v2659
          %v2661 = vmul.f32 %v2563, 1.442695
          %v2662 = vpow.pop %v2661
          %v2663 = vmul.f32 %v2564, 1.442695
          %v2664 = vpow.pop %v2663
          %v2665 = vmul.f32 %v2565, 1.442695
          %v2666 = vpow.pop %v2665
          %v2667 = vmul.f32 %v2566, 1.442695
          %v2668 = vpow.pop %v2667
          %v2669 = vmul.f32 %v2567, 1.442695
          %v2670 = vpow.pop %v2669
          %v2671 = vmul.f32 %v2568, 1.442695
          %v2672 = vpow.pop %v2671
          %v2673 = vmul.f32 %v2569, 1.442695
          %v2674 = vpow.pop %v2673
          %v2675 = vmul.f32 %v2570, 1.442695
          %v2676 = vpow.pop %v2675
          %v2677 = vmul.f32 %v2571, 1.442695
          %v2678 = vpow.pop %v2677
          %v2679 = vmul.f32 %v2572, 1.442695
          %v2680 = vpow.pop %v2679
          %v2681 = vmul.f32 %v2573, 1.442695
          %v2682 = vpow.pop %v2681
          %v2683 = vmul.f32 %v2574, 1.442695
          %v2684 = vpow.pop %v2683
          %v2685 = vmul.f32 %v2575, 1.442695
          %v2686 = vpow.pop %v2685
          %v2687 = vmul.f32 %v2576, 1.442695
          %v2688 = vpow.pop %v2687
          %v2689 = vmul.f32 %v2577, 1.442695
          %v2690 = vpow.pop %v2689
          %v2691 = vmul.f32 %v2578, 1.442695
          %v2692 = vpow.pop %v2691
          %v2693 = vmul.f32 %v2579, 1.442695
          %v2694 = vpow.pop %v2693
          %v2695 = vmul.f32 %v2580, 1.442695
          %v2696 = vpow.pop %v2695
          %v2697 = vmul.f32 %v2581, 1.442695
          %v2698 = vpow.pop %v2697
          %v2699 = vmul.f32 %v2582, 1.442695
          %v2700 = vpow.pop %v2699
          %v2701 = vmul.f32 %v2583, 1.442695
          %v2702 = vpow.pop %v2701
          %v2703 = vmul.f32 %v2584, 1.442695
          %v2704 = vpow.pop %v2703
          %v2705 = vmul.f32 %v2585, 1.442695
          %v2706 = vpow.pop %v2705
          %v2707 = vmul.f32 %v2586, 1.442695
          %v2708 = vpow.pop %v2707
          %v2709 = vmul.f32 %v2587, 1.442695
          %v2710 = vpow.pop %v2709
          %v2711 = vmul.f32 %v2588, 1.442695
          %v2712 = vpow.pop %v2711
          %v2713 = vmul.f32 %v2589, 1.442695
          %v2714 = vpow.pop %v2713
          %v2715 = vmul.f32 %v2590, 1.442695
          %v2716 = vpow.pop %v2715
          %v2717 = vmul.f32 %v2591, 1.442695
          %v2718 = vpow.pop %v2717
          %v2719 = vmul.f32 %v2592, 1.442695
          %v2720 = vpow.pop %v2719
          %v2721 = vadd.f32 %v2594, 1.0
          %v2722 = vadd.f32 %v2596, 1.0
          %v2723 = vadd.f32 %v2598, 1.0
          %v2724 = vadd.f32 %v2600, 1.0
          %v2725 = vadd.f32 %v2602, 1.0
          %v2726 = vadd.f32 %v2604, 1.0
          %v2727 = vadd.f32 %v2606, 1.0
          %v2728 = vadd.f32 %v2608, 1.0
          %v2729 = vadd.f32 %v2610, 1.0
          %v2730 = vadd.f32 %v2612, 1.0
          %v2731 = vadd.f32 %v2614, 1.0
          %v2732 = vadd.f32 %v2616, 1.0
          %v2733 = vadd.f32 %v2618, 1.0
          %v2734 = vadd.f32 %v2620, 1.0
          %v2735 = vadd.f32 %v2622, 1.0
          %v2736 = vadd.f32 %v2624, 1.0
          %v2737 = vadd.f32 %v2626, 1.0
          %v2738 = vadd.f32 %v2628, 1.0
          %v2739 = vadd.f32 %v2630, 1.0
          %v2740 = vadd.f32 %v2632, 1.0
          %v2741 = vadd.f32 %v2634, 1.0
          %v2742 = vadd.f32 %v2636, 1.0
          %v2743 = vadd.f32 %v2638, 1.0
          %v2744 = vadd.f32 %v2640, 1.0
          %v2745 = vadd.f32 %v2642, 1.0
          %v2746 = vadd.f32 %v2644, 1.0
          %v2747 = vadd.f32 %v2646, 1.0
          %v2748 = vadd.f32 %v2648, 1.0
          %v2749 = vadd.f32 %v2650, 1.0
          %v2750 = vadd.f32 %v2652, 1.0
          %v2751 = vadd.f32 %v2654, 1.0
          %v2752 = vadd.f32 %v2656, 1.0
          %v2753 = vadd.f32 %v2658, 1.0
          %v2754 = vadd.f32 %v2660, 1.0
          %v2755 = vadd.f32 %v2662, 1.0
          %v2756 = vadd.f32 %v2664, 1.0
          %v2757 = vadd.f32 %v2666, 1.0
          %v2758 = vadd.f32 %v2668, 1.0
          %v2759 = vadd.f32 %v2670, 1.0
          %v2760 = vadd.f32 %v2672, 1.0
          %v2761 = vadd.f32 %v2674, 1.0
          %v2762 = vadd.f32 %v2676, 1.0
          %v2763 = vadd.f32 %v2678, 1.0
          %v2764 = vadd.f32 %v2680, 1.0
          %v2765 = vadd.f32 %v2682, 1.0
          %v2766 = vadd.f32 %v2684, 1.0
          %v2767 = vadd.f32 %v2686, 1.0
          %v2768 = vadd.f32 %v2688, 1.0
          %v2769 = vadd.f32 %v2690, 1.0
          %v2770 = vadd.f32 %v2692, 1.0
          %v2771 = vadd.f32 %v2694, 1.0
          %v2772 = vadd.f32 %v2696, 1.0
          %v2773 = vadd.f32 %v2698, 1.0
          %v2774 = vadd.f32 %v2700, 1.0
          %v2775 = vadd.f32 %v2702, 1.0
          %v2776 = vadd.f32 %v2704, 1.0
          %v2777 = vadd.f32 %v2706, 1.0
          %v2778 = vadd.f32 %v2708, 1.0
          %v2779 = vadd.f32 %v2710, 1.0
          %v2780 = vadd.f32 %v2712, 1.0
          %v2781 = vadd.f32 %v2714, 1.0
          %v2782 = vadd.f32 %v2716, 1.0
          %v2783 = vadd.f32 %v2718, 1.0
          %v2784 = vadd.f32 %v2720, 1.0
          %v2785 = vrcp.pop %v2721
          %v2786 = vmul.f32 1.0, %v2785
          %v2787 = vrcp.pop %v2722
          %v2788 = vmul.f32 1.0, %v2787
          %v2789 = vrcp.pop %v2723
          %v2790 = vmul.f32 1.0, %v2789
          %v2791 = vrcp.pop %v2724
          %v2792 = vmul.f32 1.0, %v2791
          %v2793 = vrcp.pop %v2725
          %v2794 = vmul.f32 1.0, %v2793
          %v2795 = vrcp.pop %v2726
          %v2796 = vmul.f32 1.0, %v2795
          %v2797 = vrcp.pop %v2727
          %v2798 = vmul.f32 1.0, %v2797
          %v2799 = vrcp.pop %v2728
          %v2800 = vmul.f32 1.0, %v2799
          %v2801 = vrcp.pop %v2729
          %v2802 = vmul.f32 1.0, %v2801
          %v2803 = vrcp.pop %v2730
          %v2804 = vmul.f32 1.0, %v2803
          %v2805 = vrcp.pop %v2731
          %v2806 = vmul.f32 1.0, %v2805
          %v2807 = vrcp.pop %v2732
          %v2808 = vmul.f32 1.0, %v2807
          %v2809 = vrcp.pop %v2733
          %v2810 = vmul.f32 1.0, %v2809
          %v2811 = vrcp.pop %v2734
          %v2812 = vmul.f32 1.0, %v2811
          %v2813 = vrcp.pop %v2735
          %v2814 = vmul.f32 1.0, %v2813
          %v2815 = vrcp.pop %v2736
          %v2816 = vmul.f32 1.0, %v2815
          %v2817 = vrcp.pop %v2737
          %v2818 = vmul.f32 1.0, %v2817
          %v2819 = vrcp.pop %v2738
          %v2820 = vmul.f32 1.0, %v2819
          %v2821 = vrcp.pop %v2739
          %v2822 = vmul.f32 1.0, %v2821
          %v2823 = vrcp.pop %v2740
          %v2824 = vmul.f32 1.0, %v2823
          %v2825 = vrcp.pop %v2741
          %v2826 = vmul.f32 1.0, %v2825
          %v2827 = vrcp.pop %v2742
          %v2828 = vmul.f32 1.0, %v2827
          %v2829 = vrcp.pop %v2743
          %v2830 = vmul.f32 1.0, %v2829
          %v2831 = vrcp.pop %v2744
          %v2832 = vmul.f32 1.0, %v2831
          %v2833 = vrcp.pop %v2745
          %v2834 = vmul.f32 1.0, %v2833
          %v2835 = vrcp.pop %v2746
          %v2836 = vmul.f32 1.0, %v2835
          %v2837 = vrcp.pop %v2747
          %v2838 = vmul.f32 1.0, %v2837
          %v2839 = vrcp.pop %v2748
          %v2840 = vmul.f32 1.0, %v2839
          %v2841 = vrcp.pop %v2749
          %v2842 = vmul.f32 1.0, %v2841
          %v2843 = vrcp.pop %v2750
          %v2844 = vmul.f32 1.0, %v2843
          %v2845 = vrcp.pop %v2751
          %v2846 = vmul.f32 1.0, %v2845
          %v2847 = vrcp.pop %v2752
          %v2848 = vmul.f32 1.0, %v2847
          %v2849 = vrcp.pop %v2753
          %v2850 = vmul.f32 1.0, %v2849
          %v2851 = vrcp.pop %v2754
          %v2852 = vmul.f32 1.0, %v2851
          %v2853 = vrcp.pop %v2755
          %v2854 = vmul.f32 1.0, %v2853
          %v2855 = vrcp.pop %v2756
          %v2856 = vmul.f32 1.0, %v2855
          %v2857 = vrcp.pop %v2757
          %v2858 = vmul.f32 1.0, %v2857
          %v2859 = vrcp.pop %v2758
          %v2860 = vmul.f32 1.0, %v2859
          %v2861 = vrcp.pop %v2759
          %v2862 = vmul.f32 1.0, %v2861
          %v2863 = vrcp.pop %v2760
          %v2864 = vmul.f32 1.0, %v2863
          %v2865 = vrcp.pop %v2761
          %v2866 = vmul.f32 1.0, %v2865
          %v2867 = vrcp.pop %v2762
          %v2868 = vmul.f32 1.0, %v2867
          %v2869 = vrcp.pop %v2763
          %v2870 = vmul.f32 1.0, %v2869
          %v2871 = vrcp.pop %v2764
          %v2872 = vmul.f32 1.0, %v2871
          %v2873 = vrcp.pop %v2765
          %v2874 = vmul.f32 1.0, %v2873
          %v2875 = vrcp.pop %v2766
          %v2876 = vmul.f32 1.0, %v2875
          %v2877 = vrcp.pop %v2767
          %v2878 = vmul.f32 1.0, %v2877
          %v2879 = vrcp.pop %v2768
          %v2880 = vmul.f32 1.0, %v2879
          %v2881 = vrcp.pop %v2769
          %v2882 = vmul.f32 1.0, %v2881
          %v2883 = vrcp.pop %v2770
          %v2884 = vmul.f32 1.0, %v2883
          %v2885 = vrcp.pop %v2771
          %v2886 = vmul.f32 1.0, %v2885
          %v2887 = vrcp.pop %v2772
          %v2888 = vmul.f32 1.0, %v2887
          %v2889 = vrcp.pop %v2773
          %v2890 = vmul.f32 1.0, %v2889
          %v2891 = vrcp.pop %v2774
          %v2892 = vmul.f32 1.0, %v2891
          %v2893 = vrcp.pop %v2775
          %v2894 = vmul.f32 1.0, %v2893
          %v2895 = vrcp.pop %v2776
          %v2896 = vmul.f32 1.0, %v2895
          %v2897 = vrcp.pop %v2777
          %v2898 = vmul.f32 1.0, %v2897
          %v2899 = vrcp.pop %v2778
          %v2900 = vmul.f32 1.0, %v2899
          %v2901 = vrcp.pop %v2779
          %v2902 = vmul.f32 1.0, %v2901
          %v2903 = vrcp.pop %v2780
          %v2904 = vmul.f32 1.0, %v2903
          %v2905 = vrcp.pop %v2781
          %v2906 = vmul.f32 1.0, %v2905
          %v2907 = vrcp.pop %v2782
          %v2908 = vmul.f32 1.0, %v2907
          %v2909 = vrcp.pop %v2783
          %v2910 = vmul.f32 1.0, %v2909
          %v2911 = vrcp.pop %v2784
          %v2912 = vmul.f32 1.0, %v2911
          %2913 = vst [vmem:[%s525] sm:$0xff] %v2786
          %2914 = vst [vmem:[%s525 + $0x8] sm:$0xff] %v2788
          %2915 = vst [vmem:[%s525 + $0x10] sm:$0xff] %v2790
          %2916 = vst [vmem:[%s525 + $0x18] sm:$0xff] %v2792
          %2917 = vst [vmem:[%s525 + $0x20] sm:$0xff] %v2794
          %2918 = vst [vmem:[%s525 + $0x28] sm:$0xff] %v2796
          %2919 = vst [vmem:[%s525 + $0x30] sm:$0xff] %v2798
          %2920 = vst [vmem:[%s525 + $0x38] sm:$0xff] %v2800
          %2921 = vst [vmem:[%s525 + $0x40] sm:$0xff] %v2802
          %2922 = vst [vmem:[%s525 + $0x48] sm:$0xff] %v2804
          %2923 = vst [vmem:[%s525 + $0x50] sm:$0xff] %v2806
          %2924 = vst [vmem:[%s525 + $0x58] sm:$0xff] %v2808
          %2925 = vst [vmem:[%s525 + $0x60] sm:$0xff] %v2810
          %2926 = vst [vmem:[%s525 + $0x68] sm:$0xff] %v2812
          %2927 = vst [vmem:[%s525 + $0x70] sm:$0xff] %v2814
          %2928 = vst [vmem:[%s525 + $0x78] sm:$0xff] %v2816
          %2929 = vst [vmem:[%s525 + $0x80] sm:$0xff] %v2818
          %2930 = vst [vmem:[%s525 + $0x88] sm:$0xff] %v2820
          %2931 = vst [vmem:[%s525 + $0x90] sm:$0xff] %v2822
          %2932 = vst [vmem:[%s525 + $0x98] sm:$0xff] %v2824
          %2933 = vst [vmem:[%s525 + $0xa0] sm:$0xff] %v2826
          %2934 = vst [vmem:[%s525 + $0xa8] sm:$0xff] %v2828
          %2935 = vst [vmem:[%s525 + $0xb0] sm:$0xff] %v2830
          %2936 = vst [vmem:[%s525 + $0xb8] sm:$0xff] %v2832
          %2937 = vst [vmem:[%s525 + $0xc0] sm:$0xff] %v2834
          %2938 = vst [vmem:[%s525 + $0xc8] sm:$0xff] %v2836
          %2939 = vst [vmem:[%s525 + $0xd0] sm:$0xff] %v2838
          %2940 = vst [vmem:[%s525 + $0xd8] sm:$0xff] %v2840
          %2941 = vst [vmem:[%s525 + $0xe0] sm:$0xff] %v2842
          %2942 = vst [vmem:[%s525 + $0xe8] sm:$0xff] %v2844
          %2943 = vst [vmem:[%s525 + $0xf0] sm:$0xff] %v2846
          %2944 = vst [vmem:[%s525 + $0xf8] sm:$0xff] %v2848
          %2945 = vst [vmem:[%s525 + $0x100] sm:$0xff] %v2850
          %2946 = vst [vmem:[%s525 + $0x108] sm:$0xff] %v2852
          %2947 = vst [vmem:[%s525 + $0x110] sm:$0xff] %v2854
          %2948 = vst [vmem:[%s525 + $0x118] sm:$0xff] %v2856
          %2949 = vst [vmem:[%s525 + $0x120] sm:$0xff] %v2858
          %2950 = vst [vmem:[%s525 + $0x128] sm:$0xff] %v2860
          %2951 = vst [vmem:[%s525 + $0x130] sm:$0xff] %v2862
          %2952 = vst [vmem:[%s525 + $0x138] sm:$0xff] %v2864
          %2953 = vst [vmem:[%s525 + $0x140] sm:$0xff] %v2866
          %2954 = vst [vmem:[%s525 + $0x148] sm:$0xff] %v2868
          %2955 = vst [vmem:[%s525 + $0x150] sm:$0xff] %v2870
          %2956 = vst [vmem:[%s525 + $0x158] sm:$0xff] %v2872
          %2957 = vst [vmem:[%s525 + $0x160] sm:$0xff] %v2874
          %2958 = vst [vmem:[%s525 + $0x168] sm:$0xff] %v2876
          %2959 = vst [vmem:[%s525 + $0x170] sm:$0xff] %v2878
          %2960 = vst [vmem:[%s525 + $0x178] sm:$0xff] %v2880
          %2961 = vst [vmem:[%s525 + $0x180] sm:$0xff] %v2882
          %2962 = vst [vmem:[%s525 + $0x188] sm:$0xff] %v2884
          %2963 = vst [vmem:[%s525 + $0x190] sm:$0xff] %v2886
          %2964 = vst [vmem:[%s525 + $0x198] sm:$0xff] %v2888
          %2965 = vst [vmem:[%s525 + $0x1a0] sm:$0xff] %v2890
          %2966 = vst [vmem:[%s525 + $0x1a8] sm:$0xff] %v2892
          %2967 = vst [vmem:[%s525 + $0x1b0] sm:$0xff] %v2894
          %2968 = vst [vmem:[%s525 + $0x1b8] sm:$0xff] %v2896
          %2969 = vst [vmem:[%s525 + $0x1c0] sm:$0xff] %v2898
          %2970 = vst [vmem:[%s525 + $0x1c8] sm:$0xff] %v2900
          %2971 = vst [vmem:[%s525 + $0x1d0] sm:$0xff] %v2902
          %2972 = vst [vmem:[%s525 + $0x1d8] sm:$0xff] %v2904
          %2973 = vst [vmem:[%s525 + $0x1e0] sm:$0xff] %v2906
          %2974 = vst [vmem:[%s525 + $0x1e8] sm:$0xff] %v2908
          %2975 = vst [vmem:[%s525 + $0x1f0] sm:$0xff] %v2910
          %2976 = vst [vmem:[%s525 + $0x1f8] sm:$0xff] %v2912
        $region63: #{edgenet.97} parent=50 // pred_fallthru
          _
        %s2977 = smul.u32 64, %s19
        %p2978 = scmp.lt.s32.totalorder %s2977, 63
        %s2979 = scalar_select %p2978, %s2977, 63
        %p2980 = scmp.lt.s32.totalorder %s20, 0
        %s2981 = scalar_select %p2980, %s20, 0
        %s2982 = sadd.s32 %s2981, %s2979
        %s2983 = smul.addr %s2982, 8
        %s2984 = scalar_lea.vmem %s3, %s2983
        // Predicated region
        $region64: #{edgenet.97} parent=50 // pred_check
          %p2985 = pneg %p135
        $region65: #{edgenet.97} parent=50 // pred_check_branch
          %2987 = sbr.rel (%p2985) target = $region67
        $region66: #{edgenet.97} parent=50 // pred_region
          %s2988 = smul.u32 64, %s19
        $region67: #{edgenet.97} parent=50 // pred_fallthru
          _
        // Predicated region
        $region68: #{edgenet.97} parent=50 // pred_check
          %p2989 = pneg %p135
        $region69: #{edgenet.97} parent=50 // pred_check_branch
          %2991 = sbr.rel (%p2989) target = $region71
        $region70: #{edgenet.97} parent=50 // pred_region
          %s2992 = smul.u32 64, %s19
          %p2993 = scmp.lt.s32.totalorder %s2992, 63
          %s2994 = scalar_select %p2993, %s2992, 63
          %p2995 = scmp.lt.s32.totalorder %s20, 0
          %s2996 = scalar_select %p2995, %s20, 0
          %s2997 = sadd.s32 %s2996, %s2994
          %s2998 = smul.addr %s2997, 8
          %s2999 = scalar_lea.vmem %s3, %s2998
        $region71: #{edgenet.97} parent=50 // pred_fallthru
          _
      $region51: #{edgenet.97} parent=5 // pred_fallthru
        _
      %p3000 = scmp.le.s32.totalorder 2, %s9
      // Predicated region
      $region72: #{edgenet.97} parent=5 // pred_check
        %p3001 = pneg %p3000
      $region73: #{edgenet.97} parent=5 // pred_check_branch
        %3003 = sbr.rel (%p3001) target = $region75
      $region74: #{edgenet.97} parent=5 // pred_region
        %s3004 = ssub.s32 %s9, 2
      $region75: #{edgenet.97} parent=5 // pred_fallthru
        _
    $region6: #{edgenet.97} parent=1 // loop_footer
      %s13 = sadd.s32 1, %s9
    $region7: #{edgenet.97} parent=1 // loop_footer_branch
      %8 = sbr.rel target = $region3
    $region8: #{edgenet.97} parent=1 // loop_exit
      _

</llo_original>
